<compile_context>
chip_gen: v7x
topology: tpu7x:2x2x1
jax: 0.10.0
libtpu: 0.0.40
codegen_flags: <defaults>
</compile_context>

<pallas_src>
import jax
import jax.numpy as jnp
from jax.experimental import pallas as pl
from jax.experimental.pallas import tpu as pltpu


# ----------------------------- model dimensions -----------------------------
CIN, C1, C2, FEAT, NUM_CLASSES = 3, 8, 16, 32, 10
C1P = 16                                 # C1 zero-padded to 16 -> 128-lane interior tiles
NUM_BLOCKS = 2                           # conv blocks per branch
NUM_BRANCHES = 3
B, H, W = 2, 16, 16                      # batch / input resolution (NCHW input)
HO = WO = (H + 2 - 3) // 2 + 1           # = 8 : spatial size after stride-2 first conv
HP, WP = HO + 2, WO + 2                  # = 10: zero-padded extents for the 3x3 s1 p1 convs
K1 = 9 * CIN                             # 27  : first-conv patch length per w position
WPC = WP * C1P                           # 160 : padded activation row width (lanes)
WOC2 = WO * C2                           # 128 : last-conv output row width (lanes)
BHP = B * HP                             # 20  : both images stacked along rows (matmul M)
BN_EPS = 1e-5                            # set_bn_param(0.98, 1e-05)

_VMEM = pl.BlockSpec(memory_space=pltpu.MemorySpace.VMEM)


# ------------------------------- Pallas kernel -------------------------------

def _forward_kernel(p_ref, rsel_ref, psel_ref, wf_ref, bfp_ref, wblk_ref,
                    bblk_ref, wl_ref, bl_ref, wh_ref, bh_ref, wc_ref, bc_ref,
                    o_ref):
    """Whole forward: 3 branches (first conv -> blocks -> last conv -> pool ->
    head) + classifier + exact softmax.  Activations are plain values; padding,
    BN, pool scale and the concat are folded into the packed weights, so the
    body is just dense matmuls + bias + ReLU."""
    f32 = jnp.float32
    r0, r1, r2 = rsel_ref[0], rsel_ref[1], rsel_ref[2]      # (BHP, BHP) row shifts
    psel = psel_ref[...]                                    # (B, BHP) pool row selector

    logits = jnp.zeros((B, NUM_CLASSES), f32)
    for br in range(NUM_BRANCHES):
        # ---- first conv (stride 2) + folded BN + ReLU; both images in M -----
        # patches already contain zero rows at the pad positions, and the bias
        # plane is zero there too, so h keeps the zero-padded border for free.
        h = jnp.maximum(
            jnp.dot(p_ref[br], wf_ref[br], preferred_element_type=f32)
            + bfp_ref[br], 0.0)                              # (BHP, WPC)

        # ---- blocks: 3x3 s1 p1 conv + BN + ReLU as banded matmuls -----------
        # y_i folds the three w-taps of kernel row i; r_i realigns the rows
        # (h-taps) and zeroes the pad rows; the bias plane is zero on pad/border.
        for blk in range(NUM_BLOCKS):
            y0 = jnp.dot(h, wblk_ref[br, 3 * blk + 0], preferred_element_type=f32)
            y1 = jnp.dot(h, wblk_ref[br, 3 * blk + 1], preferred_element_type=f32)
            y2 = jnp.dot(h, wblk_ref[br, 3 * blk + 2], preferred_element_type=f32)
            conv = (jnp.dot(r0, y0, preferred_element_type=f32)
                    + jnp.dot(r1, y1, preferred_element_type=f32)
                    + jnp.dot(r2, y2, preferred_element_type=f32))
            h = jnp.maximum(conv + bblk_ref[br, blk], 0.0)   # (BHP, WPC)

        # ---- 1x1 last conv + BN + ReLU, avg pool, head Linear + ReLU --------
        a = jnp.maximum(
            jnp.dot(h, wl_ref[br], preferred_element_type=f32) + bl_ref[br],
            0.0)                                             # (BHP, WOC2)  128 lanes
        rs = jnp.dot(psel, a, preferred_element_type=f32)    # (B, WOC2) sum over interior rows
        f = jnp.maximum(
            jnp.dot(rs, wh_ref[br], preferred_element_type=f32) + bh_ref[br],
            0.0)                                             # (B, FEAT)  pool scale folded in

        # ---- classifier fold: cat(f1,f2,f2,f3) @ Wc == sum_br f_br @ Wc_eff[br]
        logits = logits + jnp.dot(f, wc_ref[br], preferred_element_type=f32)

    logits = logits + bc_ref[...]
    m = jnp.max(logits, axis=1, keepdims=True)
    e = jnp.exp(logits - m)
    o_ref[...] = e / jnp.sum(e, axis=1, keepdims=True)       # exact divide


# -------------------- wrapper-side first-conv patch gather -------------------

def first_conv_patches(x_all):
    """(NUM_BRANCHES*B, CIN, H, W) NCHW -> (NUM_BRANCHES, B*HP, WO*K1) stride-2
    3x3 patch rows with zero pad rows inserted.  Per w position the taps are
    (i,j)-major, channel-minor, matching the packed first-conv weight.  This
    tiny gather is the only plain-JAX compute feeding the kernel."""
    x = jnp.transpose(x_all, (0, 2, 3, 1)).astype(jnp.float32)     # NHWC
    xp = jnp.pad(x, ((0, 0), (1, 1), (1, 1), (0, 0)))
    taps = [xp[:, i:i + 2 * HO:2, j:j + 2 * WO:2, :]
            for i in range(3) for j in range(3)]                   # (3B,HO,WO,CIN)
    t = jnp.stack(taps, axis=3)                                    # (3B,HO,WO,9,CIN)
    t = t.reshape(NUM_BRANCHES, B, HO, WO * K1)
    t = jnp.pad(t, ((0, 0), (0, 0), (1, 1), (0, 0)))               # HO -> HP zero rows
    return t.reshape(NUM_BRANCHES, BHP, WO * K1)


# ------------------------------ pallas wrapper --------------------------------

def triple_etmonas_forward(x, x2, x3, packed, rsel, psel, wc_eff, bc):
    x_all = jnp.concatenate([x, x2, x3], axis=0)             # (3B, CIN, H, W)
    patches = first_conv_patches(x_all)                      # (3, BHP, WO*K1)
    return pl.pallas_call(
        _forward_kernel,
        out_shape=jax.ShapeDtypeStruct((B, NUM_CLASSES), jnp.float32),
        in_specs=[_VMEM] * 13,
        out_specs=_VMEM,
        cost_estimate=pl.CostEstimate(flops=37_000_000, transcendentals=32,
                                      bytes_accessed=3_000_000),
    )(patches, rsel, psel, *packed, wc_eff, bc.reshape(1, NUM_CLASSES))


# ----------------------------- parameter creation ----------------------------

def make_conv_bn(key, k, cin, cout):
    """Conv(kxk, no bias) + BN(eps=1e-5, inference), BN folded into the conv.
    Returns (w_hwio_folded, bias_folded)."""
    kw, kg, kb = jax.random.split(key, 3)
    w_hwio = jax.random.normal(kw, (k, k, cin, cout), jnp.float32) * 0.1
    gamma = 1.0 + 0.1 * jax.random.normal(kg, (cout,), jnp.float32)
    beta = 0.05 * jax.random.normal(kb, (cout,), jnp.float32)
    running_mean = jnp.zeros((cout,), jnp.float32)
    running_var = jnp.ones((cout,), jnp.float32)
    scale = gamma / jnp.sqrt(running_var + BN_EPS)
    return w_hwio * scale[None, None, None, :], beta - running_mean * scale


def make_linear(key, din, dout):
    kw, kb = jax.random.split(key, 2)
    return (jax.random.normal(kw, (din, dout), jnp.float32) * 0.1,
            0.05 * jax.random.normal(kb, (dout,), jnp.float32))


def make_branch_params(key):
    keys = jax.random.split(key, 3 + NUM_BLOCKS)
    return {
        "first": make_conv_bn(keys[0], 3, CIN, C1),
        "blocks": [make_conv_bn(keys[1 + i], 3, C1, C1) for i in range(NUM_BLOCKS)],
        "last": make_conv_bn(keys[1 + NUM_BLOCKS], 1, C1, C2),
        "head": make_linear(keys[2 + NUM_BLOCKS], C2, FEAT),
    }


# --------------------------- weight packing for TPU --------------------------

def _interior_row_mask():
    rm = jnp.zeros((BHP, 1), jnp.float32)
    for b in range(B):
        rm = rm.at[b * HP + 1:b * HP + 1 + HO].set(1.0)
    return rm


def _interior_col_bias(bias_c1):
    """(C1,) -> (1, WPC) row with the bias at interior w positions / real
    channels and zeros on the border / padded channels."""
    cb = jnp.zeros((WP, C1P), jnp.float32)
    cb = cb.at[1:1 + WO, :C1].set(jnp.broadcast_to(bias_c1, (WO, C1)))
    return cb.reshape(1, WPC)


def pack_branch(p):
    """Rearrange BN-folded weights into the lane-dense banded matmul forms."""
    rmask = _interior_row_mask()

    # first conv (stride 2): block-diagonal over output w; zero border cols.
    wf, bf = p["first"]
    wf_rp = jnp.zeros((K1, C1P), jnp.float32).at[:, :C1].set(wf.reshape(K1, C1))
    s_first = jnp.zeros((WO, WP), jnp.float32).at[
        jnp.arange(WO), jnp.arange(WO) + 1].set(1.0)
    wf_big = jnp.kron(s_first, wf_rp)                       # (WO*K1, WPC)
    bfp = rmask * _interior_col_bias(bf)                    # (BHP, WPC) bias plane

    # block convs: per kernel row i, a banded (WPC, WPC) matrix folding the
    # three w-taps (zeros elsewhere provide the conv zero padding).
    wblk, bblkp = [], []
    for (wb, bb) in p["blocks"]:
        wb_p = jnp.zeros((3, 3, C1P, C1P), jnp.float32).at[:, :, :C1, :C1].set(wb)
        for i in range(3):
            bw = jnp.zeros((WPC, WPC), jnp.float32)
            for j in range(3):
                sj = jnp.zeros((WP, WP), jnp.float32).at[
                    jnp.arange(WO) + j, jnp.arange(WO) + 1].set(1.0)
                bw = bw + jnp.kron(sj, wb_p[i, j])
            wblk.append(bw)
        bblkp.append(rmask * _interior_col_bias(bb))
    wblk = jnp.stack(wblk, axis=0)                          # (NUM_BLOCKS*3, WPC, WPC)
    bblkp = jnp.stack(bblkp, axis=0)                        # (NUM_BLOCKS, BHP, WPC)

    # 1x1 last conv: block-diagonal over interior w -> 128-lane output rows.
    wl, bl = p["last"]
    wl_p = jnp.zeros((C1P, C2), jnp.float32).at[:C1, :].set(wl.reshape(C1, C2))
    s_last = jnp.zeros((WP, WO), jnp.float32).at[
        jnp.arange(WO) + 1, jnp.arange(WO)].set(1.0)
    wl_bd = jnp.kron(s_last, wl_p)                          # (WPC, WO*C2)
    bl_row = jnp.tile(bl, WO).reshape(1, WOC2)

    # head: fold the global-average-pool scale into a w-tiled Linear weight.
    wh, bh = p["head"]
    wh_pool = jnp.tile(wh, (WO, 1)) / float(HO * WO)        # (WO*C2, FEAT)
    return (wf_big, bfp, wblk, bblkp, wl_bd, bl_row, wh_pool, bh.reshape(1, FEAT))


def pack_params(branch_params):
    per_branch = [pack_branch(p) for p in branch_params]
    return tuple(jnp.stack([pb[i] for pb in per_branch], axis=0)
                 for i in range(len(per_branch[0])))


def make_row_selectors():
    """rsel[i][b*HP+1+h, b*HP+h+i] = 1 : realigns the h-taps and zeroes pad rows."""
    rs = jnp.zeros((3, BHP, BHP), jnp.float32)
    for i in range(3):
        for b in range(B):
            rows = jnp.arange(HO) + b * HP + 1
            cols = jnp.arange(HO) + b * HP + i
            rs = rs.at[i, rows, cols].set(1.0)
    return rs


def make_pool_selector():
    """psel[b, g] = 1 for the HO interior rows of image b (pad rows excluded)."""
    ps = jnp.zeros((B, BHP), jnp.float32)
    for b in range(B):
        ps = ps.at[b, b * HP + 1:b * HP + 1 + HO].set(1.0)
    return ps


def pack_classifier(wc, bc):
    # cat(f1,f2,f2,f3) @ Wc == f1@Wc[:F] + f2@(Wc[F:2F]+Wc[2F:3F]) + f3@Wc[3F:]
    wc_eff = jnp.stack([wc[0:FEAT],
                        wc[FEAT:2 * FEAT] + wc[2 * FEAT:3 * FEAT],
                        wc[3 * FEAT:4 * FEAT]], axis=0)     # (3, FEAT, NC)
    return wc_eff, bc


# ---------------------------- pure-JAX reference ------------------------------

def _ref_conv_bn_relu(x, w_hwio, b, stride, pad):
    y = jax.lax.conv_general_dilated(
        x, w_hwio, window_strides=(stride, stride),
        padding=[(pad, pad), (pad, pad)],
        dimension_numbers=("NHWC", "HWIO", "NHWC"))
    return jnp.maximum(y + b, 0.0)


def ref_forward(x, x2, x3, params, wc, bc):
    def branch(x_nchw, p):
        h = jnp.transpose(x_nchw, (0, 2, 3, 1)).astype(jnp.float32)
        h = _ref_conv_bn_relu(h, p["first"][0], p["first"][1], 2, 1)
        for (wb, bb) in p["blocks"]:
            h = _ref_conv_bn_relu(h, wb, bb, 1, 1)
        h = _ref_conv_bn_relu(h, p["last"][0], p["last"][1], 1, 0)
        pooled = jnp.mean(h, axis=(1, 2))
        return jnp.maximum(pooled @ p["head"][0] + p["head"][1], 0.0)

    f1 = branch(x, params["b1"])
    f2 = branch(x2, params["b2"])
    f3 = branch(x3, params["b3"])
    cat = jnp.concatenate((f1, f2, f2, f3), axis=1)          # x2 appears twice
    return jax.nn.softmax(cat @ wc + bc, axis=1)


# ----------------------------------- main -------------------------------------

if __name__ == "__main__":
    key = jax.random.PRNGKey(0)
    k_in1, k_in2, k_in3, k_p1, k_p2, k_p3, k_cls = jax.random.split(key, 7)

    x = jax.random.normal(k_in1, (B, CIN, H, W), jnp.float32)   # NCHW like PyTorch
    x2 = jax.random.normal(k_in2, (B, CIN, H, W), jnp.float32)
    x3 = jax.random.normal(k_in3, (B, CIN, H, W), jnp.float32)

    params = {"b1": make_branch_params(k_p1),
              "b2": make_branch_params(k_p2),
              "b3": make_branch_params(k_p3)}
    wc, bc = make_linear(k_cls, 4 * FEAT, NUM_CLASSES)

    packed = pack_params([params["b1"], params["b2"], params["b3"]])
    rsel = make_row_selectors()
    psel = make_pool_selector()
    wc_eff, bc_eff = pack_classifier(wc, bc)

    fwd = jax.jit(triple_etmonas_forward)
    out = jax.block_until_ready(fwd(x, x2, x3, packed, rsel, psel, wc_eff, bc_eff))

    assert out.shape == (B, NUM_CLASSES)
    # exact softmax divide -> rows sum to 1 up to float rounding
    assert jnp.allclose(jnp.sum(out, axis=1), 1.0, atol=1e-3)

    ref = jax.block_until_ready(ref_forward(x, x2, x3, params, wc, bc))
    err = float(jnp.max(jnp.abs(out - ref)))
    # loose-but-meaningful bound on probabilities (MXU default f32 precision)
    assert err < 1e-2, f"mismatch vs pure-JAX reference: {err}"

    print("KERNEL_OK")
</pallas_src>

<mosaic_0001>
module attributes {stable_mosaic.version = 11 : i64} {
  func.func @_forward_kernel(%arg0: memref<3x20x216xf32, #tpu.memory_space<vmem>>, %arg1: memref<3x20x20xf32, #tpu.memory_space<vmem>>, %arg2: memref<2x20xf32, #tpu.memory_space<vmem>>, %arg3: memref<3x216x160xf32, #tpu.memory_space<vmem>>, %arg4: memref<3x20x160xf32, #tpu.memory_space<vmem>>, %arg5: memref<3x6x160x160xf32, #tpu.memory_space<vmem>>, %arg6: memref<3x2x20x160xf32, #tpu.memory_space<vmem>>, %arg7: memref<3x160x128xf32, #tpu.memory_space<vmem>>, %arg8: memref<3x1x128xf32, #tpu.memory_space<vmem>>, %arg9: memref<3x128x32xf32, #tpu.memory_space<vmem>>, %arg10: memref<3x1x32xf32, #tpu.memory_space<vmem>>, %arg11: memref<3x32x10xf32, #tpu.memory_space<vmem>>, %arg12: memref<1x10xf32, #tpu.memory_space<vmem>>, %arg13: memref<2x10xf32, #tpu.memory_space<vmem>>) attributes {dimension_semantics = [], scalar_prefetch = 0 : i64, scratch_operands = 0 : i64, tpu.core_type = #tpu.core_type<tc>} {
    %c0 = arith.constant 0 : index
    %c0_0 = arith.constant 0 : index
    %c0_1 = arith.constant 0 : index
    %0 = vector.load %arg1[%c0, %c0_0, %c0_1] : memref<3x20x20xf32, #tpu.memory_space<vmem>>, vector<1x20x20xf32>
    %1 = vector.shape_cast %0 : vector<1x20x20xf32> to vector<20x20xf32>
    %c1 = arith.constant 1 : index
    %c0_2 = arith.constant 0 : index
    %c0_3 = arith.constant 0 : index
    %2 = vector.load %arg1[%c1, %c0_2, %c0_3] : memref<3x20x20xf32, #tpu.memory_space<vmem>>, vector<1x20x20xf32>
    %3 = vector.shape_cast %2 : vector<1x20x20xf32> to vector<20x20xf32>
    %c2 = arith.constant 2 : index
    %c0_4 = arith.constant 0 : index
    %c0_5 = arith.constant 0 : index
    %4 = vector.load %arg1[%c2, %c0_4, %c0_5] : memref<3x20x20xf32, #tpu.memory_space<vmem>>, vector<1x20x20xf32>
    %5 = vector.shape_cast %4 : vector<1x20x20xf32> to vector<20x20xf32>
    %c0_6 = arith.constant 0 : index
    %c0_7 = arith.constant 0 : index
    %6 = vector.load %arg2[%c0_6, %c0_7] : memref<2x20xf32, #tpu.memory_space<vmem>>, vector<2x20xf32>
    %cst = arith.constant 0.000000e+00 : f32
    %7 = vector.broadcast %cst : f32 to vector<2x10xf32>
    %c0_8 = arith.constant 0 : index
    %c0_9 = arith.constant 0 : index
    %c0_10 = arith.constant 0 : index
    %8 = vector.load %arg0[%c0_8, %c0_9, %c0_10] : memref<3x20x216xf32, #tpu.memory_space<vmem>>, vector<1x20x216xf32>
    %9 = vector.shape_cast %8 : vector<1x20x216xf32> to vector<20x216xf32>
    %c0_11 = arith.constant 0 : index
    %c0_12 = arith.constant 0 : index
    %c0_13 = arith.constant 0 : index
    %10 = vector.load %arg3[%c0_11, %c0_12, %c0_13] : memref<3x216x160xf32, #tpu.memory_space<vmem>>, vector<1x216x160xf32>
    %11 = vector.shape_cast %10 : vector<1x216x160xf32> to vector<216x160xf32>
    %cst_14 = arith.constant dense<0.000000e+00> : vector<20x160xf32>
    %12 = tpu.matmul %9, %11, %cst_14 {dimension_numbers = #tpu.dot_dimension_numbers<[1], [0], [0], [1], [0, 0, 1, 1], [], []>} : vector<20x216xf32>, vector<216x160xf32>, vector<20x160xf32> -> vector<20x160xf32>
    %c0_15 = arith.constant 0 : index
    %c0_16 = arith.constant 0 : index
    %c0_17 = arith.constant 0 : index
    %13 = vector.load %arg4[%c0_15, %c0_16, %c0_17] : memref<3x20x160xf32, #tpu.memory_space<vmem>>, vector<1x20x160xf32>
    %14 = vector.shape_cast %13 : vector<1x20x160xf32> to vector<20x160xf32>
    %15 = arith.addf %12, %14 : vector<20x160xf32>
    %cst_18 = arith.constant 0.000000e+00 : f32
    %16 = vector.broadcast %cst_18 : f32 to vector<20x160xf32>
    %17 = arith.maximumf %15, %16 : vector<20x160xf32>
    %c0_19 = arith.constant 0 : index
    %c0_20 = arith.constant 0 : index
    %c0_21 = arith.constant 0 : index
    %c0_22 = arith.constant 0 : index
    %18 = vector.load %arg5[%c0_19, %c0_20, %c0_21, %c0_22] : memref<3x6x160x160xf32, #tpu.memory_space<vmem>>, vector<1x1x160x160xf32>
    %19 = vector.shape_cast %18 : vector<1x1x160x160xf32> to vector<160x160xf32>
    %cst_23 = arith.constant dense<0.000000e+00> : vector<20x160xf32>
    %20 = tpu.matmul %17, %19, %cst_23 {dimension_numbers = #tpu.dot_dimension_numbers<[1], [0], [0], [1], [0, 0, 1, 1], [], []>} : vector<20x160xf32>, vector<160x160xf32>, vector<20x160xf32> -> vector<20x160xf32>
    %c0_24 = arith.constant 0 : index
    %c1_25 = arith.constant 1 : index
    %c0_26 = arith.constant 0 : index
    %c0_27 = arith.constant 0 : index
    %21 = vector.load %arg5[%c0_24, %c1_25, %c0_26, %c0_27] : memref<3x6x160x160xf32, #tpu.memory_space<vmem>>, vector<1x1x160x160xf32>
    %22 = vector.shape_cast %21 : vector<1x1x160x160xf32> to vector<160x160xf32>
    %cst_28 = arith.constant dense<0.000000e+00> : vector<20x160xf32>
    %23 = tpu.matmul %17, %22, %cst_28 {dimension_numbers = #tpu.dot_dimension_numbers<[1], [0], [0], [1], [0, 0, 1, 1], [], []>} : vector<20x160xf32>, vector<160x160xf32>, vector<20x160xf32> -> vector<20x160xf32>
    %c0_29 = arith.constant 0 : index
    %c2_30 = arith.constant 2 : index
    %c0_31 = arith.constant 0 : index
    %c0_32 = arith.constant 0 : index
    %24 = vector.load %arg5[%c0_29, %c2_30, %c0_31, %c0_32] : memref<3x6x160x160xf32, #tpu.memory_space<vmem>>, vector<1x1x160x160xf32>
    %25 = vector.shape_cast %24 : vector<1x1x160x160xf32> to vector<160x160xf32>
    %cst_33 = arith.constant dense<0.000000e+00> : vector<20x160xf32>
    %26 = tpu.matmul %17, %25, %cst_33 {dimension_numbers = #tpu.dot_dimension_numbers<[1], [0], [0], [1], [0, 0, 1, 1], [], []>} : vector<20x160xf32>, vector<160x160xf32>, vector<20x160xf32> -> vector<20x160xf32>
    %cst_34 = arith.constant dense<0.000000e+00> : vector<20x160xf32>
    %27 = tpu.matmul %1, %20, %cst_34 {dimension_numbers = #tpu.dot_dimension_numbers<[1], [0], [0], [1], [0, 0, 1, 1], [], []>} : vector<20x20xf32>, vector<20x160xf32>, vector<20x160xf32> -> vector<20x160xf32>
    %cst_35 = arith.constant dense<0.000000e+00> : vector<20x160xf32>
    %28 = tpu.matmul %3, %23, %cst_35 {dimension_numbers = #tpu.dot_dimension_numbers<[1], [0], [0], [1], [0, 0, 1, 1], [], []>} : vector<20x20xf32>, vector<20x160xf32>, vector<20x160xf32> -> vector<20x160xf32>
    %29 = arith.addf %27, %28 : vector<20x160xf32>
    %cst_36 = arith.constant dense<0.000000e+00> : vector<20x160xf32>
    %30 = tpu.matmul %5, %26, %cst_36 {dimension_numbers = #tpu.dot_dimension_numbers<[1], [0], [0], [1], [0, 0, 1, 1], [], []>} : vector<20x20xf32>, vector<20x160xf32>, vector<20x160xf32> -> vector<20x160xf32>
    %31 = arith.addf %29, %30 : vector<20x160xf32>
    %c0_37 = arith.constant 0 : index
    %c0_38 = arith.constant 0 : index
    %c0_39 = arith.constant 0 : index
    %c0_40 = arith.constant 0 : index
    %32 = vector.load %arg6[%c0_37, %c0_38, %c0_39, %c0_40] : memref<3x2x20x160xf32, #tpu.memory_space<vmem>>, vector<1x1x20x160xf32>
    %33 = vector.shape_cast %32 : vector<1x1x20x160xf32> to vector<20x160xf32>
    %34 = arith.addf %31, %33 : vector<20x160xf32>
    %cst_41 = arith.constant 0.000000e+00 : f32
    %35 = vector.broadcast %cst_41 : f32 to vector<20x160xf32>
    %36 = arith.maximumf %34, %35 : vector<20x160xf32>
    %c0_42 = arith.constant 0 : index
    %c3 = arith.constant 3 : index
    %c0_43 = arith.constant 0 : index
    %c0_44 = arith.constant 0 : index
    %37 = vector.load %arg5[%c0_42, %c3, %c0_43, %c0_44] : memref<3x6x160x160xf32, #tpu.memory_space<vmem>>, vector<1x1x160x160xf32>
    %38 = vector.shape_cast %37 : vector<1x1x160x160xf32> to vector<160x160xf32>
    %cst_45 = arith.constant dense<0.000000e+00> : vector<20x160xf32>
    %39 = tpu.matmul %36, %38, %cst_45 {dimension_numbers = #tpu.dot_dimension_numbers<[1], [0], [0], [1], [0, 0, 1, 1], [], []>} : vector<20x160xf32>, vector<160x160xf32>, vector<20x160xf32> -> vector<20x160xf32>
    %c0_46 = arith.constant 0 : index
    %c4 = arith.constant 4 : index
    %c0_47 = arith.constant 0 : index
    %c0_48 = arith.constant 0 : index
    %40 = vector.load %arg5[%c0_46, %c4, %c0_47, %c0_48] : memref<3x6x160x160xf32, #tpu.memory_space<vmem>>, vector<1x1x160x160xf32>
    %41 = vector.shape_cast %40 : vector<1x1x160x160xf32> to vector<160x160xf32>
    %cst_49 = arith.constant dense<0.000000e+00> : vector<20x160xf32>
    %42 = tpu.matmul %36, %41, %cst_49 {dimension_numbers = #tpu.dot_dimension_numbers<[1], [0], [0], [1], [0, 0, 1, 1], [], []>} : vector<20x160xf32>, vector<160x160xf32>, vector<20x160xf32> -> vector<20x160xf32>
    %c0_50 = arith.constant 0 : index
    %c5 = arith.constant 5 : index
    %c0_51 = arith.constant 0 : index
    %c0_52 = arith.constant 0 : index
    %43 = vector.load %arg5[%c0_50, %c5, %c0_51, %c0_52] : memref<3x6x160x160xf32, #tpu.memory_space<vmem>>, vector<1x1x160x160xf32>
    %44 = vector.shape_cast %43 : vector<1x1x160x160xf32> to vector<160x160xf32>
    %cst_53 = arith.constant dense<0.000000e+00> : vector<20x160xf32>
    %45 = tpu.matmul %36, %44, %cst_53 {dimension_numbers = #tpu.dot_dimension_numbers<[1], [0], [0], [1], [0, 0, 1, 1], [], []>} : vector<20x160xf32>, vector<160x160xf32>, vector<20x160xf32> -> vector<20x160xf32>
    %cst_54 = arith.constant dense<0.000000e+00> : vector<20x160xf32>
    %46 = tpu.matmul %1, %39, %cst_54 {dimension_numbers = #tpu.dot_dimension_numbers<[1], [0], [0], [1], [0, 0, 1, 1], [], []>} : vector<20x20xf32>, vector<20x160xf32>, vector<20x160xf32> -> vector<20x160xf32>
    %cst_55 = arith.constant dense<0.000000e+00> : vector<20x160xf32>
    %47 = tpu.matmul %3, %42, %cst_55 {dimension_numbers = #tpu.dot_dimension_numbers<[1], [0], [0], [1], [0, 0, 1, 1], [], []>} : vector<20x20xf32>, vector<20x160xf32>, vector<20x160xf32> -> vector<20x160xf32>
    %48 = arith.addf %46, %47 : vector<20x160xf32>
    %cst_56 = arith.constant dense<0.000000e+00> : vector<20x160xf32>
    %49 = tpu.matmul %5, %45, %cst_56 {dimension_numbers = #tpu.dot_dimension_numbers<[1], [0], [0], [1], [0, 0, 1, 1], [], []>} : vector<20x20xf32>, vector<20x160xf32>, vector<20x160xf32> -> vector<20x160xf32>
    %50 = arith.addf %48, %49 : vector<20x160xf32>
    %c0_57 = arith.constant 0 : index
    %c1_58 = arith.constant 1 : index
    %c0_59 = arith.constant 0 : index
    %c0_60 = arith.constant 0 : index
    %51 = vector.load %arg6[%c0_57, %c1_58, %c0_59, %c0_60] : memref<3x2x20x160xf32, #tpu.memory_space<vmem>>, vector<1x1x20x160xf32>
    %52 = vector.shape_cast %51 : vector<1x1x20x160xf32> to vector<20x160xf32>
    %53 = arith.addf %50, %52 : vector<20x160xf32>
    %cst_61 = arith.constant 0.000000e+00 : f32
    %54 = vector.broadcast %cst_61 : f32 to vector<20x160xf32>
    %55 = arith.maximumf %53, %54 : vector<20x160xf32>
    %c0_62 = arith.constant 0 : index
    %c0_63 = arith.constant 0 : index
    %c0_64 = arith.constant 0 : index
    %56 = vector.load %arg7[%c0_62, %c0_63, %c0_64] : memref<3x160x128xf32, #tpu.memory_space<vmem>>, vector<1x160x128xf32>
    %57 = vector.shape_cast %56 : vector<1x160x128xf32> to vector<160x128xf32>
    %cst_65 = arith.constant dense<0.000000e+00> : vector<20x128xf32>
    %58 = tpu.matmul %55, %57, %cst_65 {dimension_numbers = #tpu.dot_dimension_numbers<[1], [0], [0], [1], [0, 0, 1, 1], [], []>} : vector<20x160xf32>, vector<160x128xf32>, vector<20x128xf32> -> vector<20x128xf32>
    %c0_66 = arith.constant 0 : index
    %c0_67 = arith.constant 0 : index
    %c0_68 = arith.constant 0 : index
    %59 = vector.load %arg8[%c0_66, %c0_67, %c0_68] : memref<3x1x128xf32, #tpu.memory_space<vmem>>, vector<1x1x128xf32>
    %60 = vector.shape_cast %59 : vector<1x1x128xf32> to vector<1x128xf32>
    %61 = vector.broadcast %60 : vector<1x128xf32> to vector<20x128xf32>
    %62 = arith.addf %58, %61 : vector<20x128xf32>
    %cst_69 = arith.constant 0.000000e+00 : f32
    %63 = vector.broadcast %cst_69 : f32 to vector<20x128xf32>
    %64 = arith.maximumf %62, %63 : vector<20x128xf32>
    %cst_70 = arith.constant dense<0.000000e+00> : vector<2x128xf32>
    %65 = tpu.matmul %6, %64, %cst_70 {dimension_numbers = #tpu.dot_dimension_numbers<[1], [0], [0], [1], [0, 0, 1, 1], [], []>} : vector<2x20xf32>, vector<20x128xf32>, vector<2x128xf32> -> vector<2x128xf32>
    %c0_71 = arith.constant 0 : index
    %c0_72 = arith.constant 0 : index
    %c0_73 = arith.constant 0 : index
    %66 = vector.load %arg9[%c0_71, %c0_72, %c0_73] : memref<3x128x32xf32, #tpu.memory_space<vmem>>, vector<1x128x32xf32>
    %67 = vector.shape_cast %66 : vector<1x128x32xf32> to vector<128x32xf32>
    %cst_74 = arith.constant dense<0.000000e+00> : vector<2x32xf32>
    %68 = tpu.matmul %65, %67, %cst_74 {dimension_numbers = #tpu.dot_dimension_numbers<[1], [0], [0], [1], [0, 0, 1, 1], [], []>} : vector<2x128xf32>, vector<128x32xf32>, vector<2x32xf32> -> vector<2x32xf32>
    %c0_75 = arith.constant 0 : index
    %c0_76 = arith.constant 0 : index
    %c0_77 = arith.constant 0 : index
    %69 = vector.load %arg10[%c0_75, %c0_76, %c0_77] : memref<3x1x32xf32, #tpu.memory_space<vmem>>, vector<1x1x32xf32>
    %70 = vector.shape_cast %69 : vector<1x1x32xf32> to vector<1x32xf32>
    %71 = vector.broadcast %70 : vector<1x32xf32> to vector<2x32xf32>
    %72 = arith.addf %68, %71 : vector<2x32xf32>
    %cst_78 = arith.constant 0.000000e+00 : f32
    %73 = vector.broadcast %cst_78 : f32 to vector<2x32xf32>
    %74 = arith.maximumf %72, %73 : vector<2x32xf32>
    %c0_79 = arith.constant 0 : index
    %c0_80 = arith.constant 0 : index
    %c0_81 = arith.constant 0 : index
    %75 = vector.load %arg11[%c0_79, %c0_80, %c0_81] : memref<3x32x10xf32, #tpu.memory_space<vmem>>, vector<1x32x10xf32>
    %76 = vector.shape_cast %75 : vector<1x32x10xf32> to vector<32x10xf32>
    %cst_82 = arith.constant dense<0.000000e+00> : vector<2x10xf32>
    %77 = tpu.matmul %74, %76, %cst_82 {dimension_numbers = #tpu.dot_dimension_numbers<[1], [0], [0], [1], [0, 0, 1, 1], [], []>} : vector<2x32xf32>, vector<32x10xf32>, vector<2x10xf32> -> vector<2x10xf32>
    %78 = arith.addf %7, %77 : vector<2x10xf32>
    %c1_83 = arith.constant 1 : index
    %c0_84 = arith.constant 0 : index
    %c0_85 = arith.constant 0 : index
    %79 = vector.load %arg0[%c1_83, %c0_84, %c0_85] : memref<3x20x216xf32, #tpu.memory_space<vmem>>, vector<1x20x216xf32>
    %80 = vector.shape_cast %79 : vector<1x20x216xf32> to vector<20x216xf32>
    %c1_86 = arith.constant 1 : index
    %c0_87 = arith.constant 0 : index
    %c0_88 = arith.constant 0 : index
    %81 = vector.load %arg3[%c1_86, %c0_87, %c0_88] : memref<3x216x160xf32, #tpu.memory_space<vmem>>, vector<1x216x160xf32>
    %82 = vector.shape_cast %81 : vector<1x216x160xf32> to vector<216x160xf32>
    %cst_89 = arith.constant dense<0.000000e+00> : vector<20x160xf32>
    %83 = tpu.matmul %80, %82, %cst_89 {dimension_numbers = #tpu.dot_dimension_numbers<[1], [0], [0], [1], [0, 0, 1, 1], [], []>} : vector<20x216xf32>, vector<216x160xf32>, vector<20x160xf32> -> vector<20x160xf32>
    %c1_90 = arith.constant 1 : index
    %c0_91 = arith.constant 0 : index
    %c0_92 = arith.constant 0 : index
    %84 = vector.load %arg4[%c1_90, %c0_91, %c0_92] : memref<3x20x160xf32, #tpu.memory_space<vmem>>, vector<1x20x160xf32>
    %85 = vector.shape_cast %84 : vector<1x20x160xf32> to vector<20x160xf32>
    %86 = arith.addf %83, %85 : vector<20x160xf32>
    %cst_93 = arith.constant 0.000000e+00 : f32
    %87 = vector.broadcast %cst_93 : f32 to vector<20x160xf32>
    %88 = arith.maximumf %86, %87 : vector<20x160xf32>
    %c1_94 = arith.constant 1 : index
    %c0_95 = arith.constant 0 : index
    %c0_96 = arith.constant 0 : index
    %c0_97 = arith.constant 0 : index
    %89 = vector.load %arg5[%c1_94, %c0_95, %c0_96, %c0_97] : memref<3x6x160x160xf32, #tpu.memory_space<vmem>>, vector<1x1x160x160xf32>
    %90 = vector.shape_cast %89 : vector<1x1x160x160xf32> to vector<160x160xf32>
    %cst_98 = arith.constant dense<0.000000e+00> : vector<20x160xf32>
    %91 = tpu.matmul %88, %90, %cst_98 {dimension_numbers = #tpu.dot_dimension_numbers<[1], [0], [0], [1], [0, 0, 1, 1], [], []>} : vector<20x160xf32>, vector<160x160xf32>, vector<20x160xf32> -> vector<20x160xf32>
    %c1_99 = arith.constant 1 : index
    %c1_100 = arith.constant 1 : index
    %c0_101 = arith.constant 0 : index
    %c0_102 = arith.constant 0 : index
    %92 = vector.load %arg5[%c1_99, %c1_100, %c0_101, %c0_102] : memref<3x6x160x160xf32, #tpu.memory_space<vmem>>, vector<1x1x160x160xf32>
    %93 = vector.shape_cast %92 : vector<1x1x160x160xf32> to vector<160x160xf32>
    %cst_103 = arith.constant dense<0.000000e+00> : vector<20x160xf32>
    %94 = tpu.matmul %88, %93, %cst_103 {dimension_numbers = #tpu.dot_dimension_numbers<[1], [0], [0], [1], [0, 0, 1, 1], [], []>} : vector<20x160xf32>, vector<160x160xf32>, vector<20x160xf32> -> vector<20x160xf32>
    %c1_104 = arith.constant 1 : index
    %c2_105 = arith.constant 2 : index
    %c0_106 = arith.constant 0 : index
    %c0_107 = arith.constant 0 : index
    %95 = vector.load %arg5[%c1_104, %c2_105, %c0_106, %c0_107] : memref<3x6x160x160xf32, #tpu.memory_space<vmem>>, vector<1x1x160x160xf32>
    %96 = vector.shape_cast %95 : vector<1x1x160x160xf32> to vector<160x160xf32>
    %cst_108 = arith.constant dense<0.000000e+00> : vector<20x160xf32>
    %97 = tpu.matmul %88, %96, %cst_108 {dimension_numbers = #tpu.dot_dimension_numbers<[1], [0], [0], [1], [0, 0, 1, 1], [], []>} : vector<20x160xf32>, vector<160x160xf32>, vector<20x160xf32> -> vector<20x160xf32>
    %cst_109 = arith.constant dense<0.000000e+00> : vector<20x160xf32>
    %98 = tpu.matmul %1, %91, %cst_109 {dimension_numbers = #tpu.dot_dimension_numbers<[1], [0], [0], [1], [0, 0, 1, 1], [], []>} : vector<20x20xf32>, vector<20x160xf32>, vector<20x160xf32> -> vector<20x160xf32>
    %cst_110 = arith.constant dense<0.000000e+00> : vector<20x160xf32>
    %99 = tpu.matmul %3, %94, %cst_110 {dimension_numbers = #tpu.dot_dimension_numbers<[1], [0], [0], [1], [0, 0, 1, 1], [], []>} : vector<20x20xf32>, vector<20x160xf32>, vector<20x160xf32> -> vector<20x160xf32>
    %100 = arith.addf %98, %99 : vector<20x160xf32>
    %cst_111 = arith.constant dense<0.000000e+00> : vector<20x160xf32>
    %101 = tpu.matmul %5, %97, %cst_111 {dimension_numbers = #tpu.dot_dimension_numbers<[1], [0], [0], [1], [0, 0, 1, 1], [], []>} : vector<20x20xf32>, vector<20x160xf32>, vector<20x160xf32> -> vector<20x160xf32>
    %102 = arith.addf %100, %101 : vector<20x160xf32>
    %c1_112 = arith.constant 1 : index
    %c0_113 = arith.constant 0 : index
    %c0_114 = arith.constant 0 : index
    %c0_115 = arith.constant 0 : index
    %103 = vector.load %arg6[%c1_112, %c0_113, %c0_114, %c0_115] : memref<3x2x20x160xf32, #tpu.memory_space<vmem>>, vector<1x1x20x160xf32>
    %104 = vector.shape_cast %103 : vector<1x1x20x160xf32> to vector<20x160xf32>
    %105 = arith.addf %102, %104 : vector<20x160xf32>
    %cst_116 = arith.constant 0.000000e+00 : f32
    %106 = vector.broadcast %cst_116 : f32 to vector<20x160xf32>
    %107 = arith.maximumf %105, %106 : vector<20x160xf32>
    %c1_117 = arith.constant 1 : index
    %c3_118 = arith.constant 3 : index
    %c0_119 = arith.constant 0 : index
    %c0_120 = arith.constant 0 : index
    %108 = vector.load %arg5[%c1_117, %c3_118, %c0_119, %c0_120] : memref<3x6x160x160xf32, #tpu.memory_space<vmem>>, vector<1x1x160x160xf32>
    %109 = vector.shape_cast %108 : vector<1x1x160x160xf32> to vector<160x160xf32>
    %cst_121 = arith.constant dense<0.000000e+00> : vector<20x160xf32>
    %110 = tpu.matmul %107, %109, %cst_121 {dimension_numbers = #tpu.dot_dimension_numbers<[1], [0], [0], [1], [0, 0, 1, 1], [], []>} : vector<20x160xf32>, vector<160x160xf32>, vector<20x160xf32> -> vector<20x160xf32>
    %c1_122 = arith.constant 1 : index
    %c4_123 = arith.constant 4 : index
    %c0_124 = arith.constant 0 : index
    %c0_125 = arith.constant 0 : index
    %111 = vector.load %arg5[%c1_122, %c4_123, %c0_124, %c0_125] : memref<3x6x160x160xf32, #tpu.memory_space<vmem>>, vector<1x1x160x160xf32>
    %112 = vector.shape_cast %111 : vector<1x1x160x160xf32> to vector<160x160xf32>
    %cst_126 = arith.constant dense<0.000000e+00> : vector<20x160xf32>
    %113 = tpu.matmul %107, %112, %cst_126 {dimension_numbers = #tpu.dot_dimension_numbers<[1], [0], [0], [1], [0, 0, 1, 1], [], []>} : vector<20x160xf32>, vector<160x160xf32>, vector<20x160xf32> -> vector<20x160xf32>
    %c1_127 = arith.constant 1 : index
    %c5_128 = arith.constant 5 : index
    %c0_129 = arith.constant 0 : index
    %c0_130 = arith.constant 0 : index
    %114 = vector.load %arg5[%c1_127, %c5_128, %c0_129, %c0_130] : memref<3x6x160x160xf32, #tpu.memory_space<vmem>>, vector<1x1x160x160xf32>
    %115 = vector.shape_cast %114 : vector<1x1x160x160xf32> to vector<160x160xf32>
    %cst_131 = arith.constant dense<0.000000e+00> : vector<20x160xf32>
    %116 = tpu.matmul %107, %115, %cst_131 {dimension_numbers = #tpu.dot_dimension_numbers<[1], [0], [0], [1], [0, 0, 1, 1], [], []>} : vector<20x160xf32>, vector<160x160xf32>, vector<20x160xf32> -> vector<20x160xf32>
    %cst_132 = arith.constant dense<0.000000e+00> : vector<20x160xf32>
    %117 = tpu.matmul %1, %110, %cst_132 {dimension_numbers = #tpu.dot_dimension_numbers<[1], [0], [0], [1], [0, 0, 1, 1], [], []>} : vector<20x20xf32>, vector<20x160xf32>, vector<20x160xf32> -> vector<20x160xf32>
    %cst_133 = arith.constant dense<0.000000e+00> : vector<20x160xf32>
    %118 = tpu.matmul %3, %113, %cst_133 {dimension_numbers = #tpu.dot_dimension_numbers<[1], [0], [0], [1], [0, 0, 1, 1], [], []>} : vector<20x20xf32>, vector<20x160xf32>, vector<20x160xf32> -> vector<20x160xf32>
    %119 = arith.addf %117, %118 : vector<20x160xf32>
    %cst_134 = arith.constant dense<0.000000e+00> : vector<20x160xf32>
    %120 = tpu.matmul %5, %116, %cst_134 {dimension_numbers = #tpu.dot_dimension_numbers<[1], [0], [0], [1], [0, 0, 1, 1], [], []>} : vector<20x20xf32>, vector<20x160xf32>, vector<20x160xf32> -> vector<20x160xf32>
    %121 = arith.addf %119, %120 : vector<20x160xf32>
    %c1_135 = arith.constant 1 : index
    %c1_136 = arith.constant 1 : index
    %c0_137 = arith.constant 0 : index
    %c0_138 = arith.constant 0 : index
    %122 = vector.load %arg6[%c1_135, %c1_136, %c0_137, %c0_138] : memref<3x2x20x160xf32, #tpu.memory_space<vmem>>, vector<1x1x20x160xf32>
    %123 = vector.shape_cast %122 : vector<1x1x20x160xf32> to vector<20x160xf32>
    %124 = arith.addf %121, %123 : vector<20x160xf32>
    %cst_139 = arith.constant 0.000000e+00 : f32
    %125 = vector.broadcast %cst_139 : f32 to vector<20x160xf32>
    %126 = arith.maximumf %124, %125 : vector<20x160xf32>
    %c1_140 = arith.constant 1 : index
    %c0_141 = arith.constant 0 : index
    %c0_142 = arith.constant 0 : index
    %127 = vector.load %arg7[%c1_140, %c0_141, %c0_142] : memref<3x160x128xf32, #tpu.memory_space<vmem>>, vector<1x160x128xf32>
    %128 = vector.shape_cast %127 : vector<1x160x128xf32> to vector<160x128xf32>
    %cst_143 = arith.constant dense<0.000000e+00> : vector<20x128xf32>
    %129 = tpu.matmul %126, %128, %cst_143 {dimension_numbers = #tpu.dot_dimension_numbers<[1], [0], [0], [1], [0, 0, 1, 1], [], []>} : vector<20x160xf32>, vector<160x128xf32>, vector<20x128xf32> -> vector<20x128xf32>
    %c1_144 = arith.constant 1 : index
    %c0_145 = arith.constant 0 : index
    %c0_146 = arith.constant 0 : index
    %130 = vector.load %arg8[%c1_144, %c0_145, %c0_146] : memref<3x1x128xf32, #tpu.memory_space<vmem>>, vector<1x1x128xf32>
    %131 = vector.shape_cast %130 : vector<1x1x128xf32> to vector<1x128xf32>
    %132 = vector.broadcast %131 : vector<1x128xf32> to vector<20x128xf32>
    %133 = arith.addf %129, %132 : vector<20x128xf32>
    %cst_147 = arith.constant 0.000000e+00 : f32
    %134 = vector.broadcast %cst_147 : f32 to vector<20x128xf32>
    %135 = arith.maximumf %133, %134 : vector<20x128xf32>
    %cst_148 = arith.constant dense<0.000000e+00> : vector<2x128xf32>
    %136 = tpu.matmul %6, %135, %cst_148 {dimension_numbers = #tpu.dot_dimension_numbers<[1], [0], [0], [1], [0, 0, 1, 1], [], []>} : vector<2x20xf32>, vector<20x128xf32>, vector<2x128xf32> -> vector<2x128xf32>
    %c1_149 = arith.constant 1 : index
    %c0_150 = arith.constant 0 : index
    %c0_151 = arith.constant 0 : index
    %137 = vector.load %arg9[%c1_149, %c0_150, %c0_151] : memref<3x128x32xf32, #tpu.memory_space<vmem>>, vector<1x128x32xf32>
    %138 = vector.shape_cast %137 : vector<1x128x32xf32> to vector<128x32xf32>
    %cst_152 = arith.constant dense<0.000000e+00> : vector<2x32xf32>
    %139 = tpu.matmul %136, %138, %cst_152 {dimension_numbers = #tpu.dot_dimension_numbers<[1], [0], [0], [1], [0, 0, 1, 1], [], []>} : vector<2x128xf32>, vector<128x32xf32>, vector<2x32xf32> -> vector<2x32xf32>
    %c1_153 = arith.constant 1 : index
    %c0_154 = arith.constant 0 : index
    %c0_155 = arith.constant 0 : index
    %140 = vector.load %arg10[%c1_153, %c0_154, %c0_155] : memref<3x1x32xf32, #tpu.memory_space<vmem>>, vector<1x1x32xf32>
    %141 = vector.shape_cast %140 : vector<1x1x32xf32> to vector<1x32xf32>
    %142 = vector.broadcast %141 : vector<1x32xf32> to vector<2x32xf32>
    %143 = arith.addf %139, %142 : vector<2x32xf32>
    %cst_156 = arith.constant 0.000000e+00 : f32
    %144 = vector.broadcast %cst_156 : f32 to vector<2x32xf32>
    %145 = arith.maximumf %143, %144 : vector<2x32xf32>
    %c1_157 = arith.constant 1 : index
    %c0_158 = arith.constant 0 : index
    %c0_159 = arith.constant 0 : index
    %146 = vector.load %arg11[%c1_157, %c0_158, %c0_159] : memref<3x32x10xf32, #tpu.memory_space<vmem>>, vector<1x32x10xf32>
    %147 = vector.shape_cast %146 : vector<1x32x10xf32> to vector<32x10xf32>
    %cst_160 = arith.constant dense<0.000000e+00> : vector<2x10xf32>
    %148 = tpu.matmul %145, %147, %cst_160 {dimension_numbers = #tpu.dot_dimension_numbers<[1], [0], [0], [1], [0, 0, 1, 1], [], []>} : vector<2x32xf32>, vector<32x10xf32>, vector<2x10xf32> -> vector<2x10xf32>
    %149 = arith.addf %78, %148 : vector<2x10xf32>
    %c2_161 = arith.constant 2 : index
    %c0_162 = arith.constant 0 : index
    %c0_163 = arith.constant 0 : index
    %150 = vector.load %arg0[%c2_161, %c0_162, %c0_163] : memref<3x20x216xf32, #tpu.memory_space<vmem>>, vector<1x20x216xf32>
    %151 = vector.shape_cast %150 : vector<1x20x216xf32> to vector<20x216xf32>
    %c2_164 = arith.constant 2 : index
    %c0_165 = arith.constant 0 : index
    %c0_166 = arith.constant 0 : index
    %152 = vector.load %arg3[%c2_164, %c0_165, %c0_166] : memref<3x216x160xf32, #tpu.memory_space<vmem>>, vector<1x216x160xf32>
    %153 = vector.shape_cast %152 : vector<1x216x160xf32> to vector<216x160xf32>
    %cst_167 = arith.constant dense<0.000000e+00> : vector<20x160xf32>
    %154 = tpu.matmul %151, %153, %cst_167 {dimension_numbers = #tpu.dot_dimension_numbers<[1], [0], [0], [1], [0, 0, 1, 1], [], []>} : vector<20x216xf32>, vector<216x160xf32>, vector<20x160xf32> -> vector<20x160xf32>
    %c2_168 = arith.constant 2 : index
    %c0_169 = arith.constant 0 : index
    %c0_170 = arith.constant 0 : index
    %155 = vector.load %arg4[%c2_168, %c0_169, %c0_170] : memref<3x20x160xf32, #tpu.memory_space<vmem>>, vector<1x20x160xf32>
    %156 = vector.shape_cast %155 : vector<1x20x160xf32> to vector<20x160xf32>
    %157 = arith.addf %154, %156 : vector<20x160xf32>
    %cst_171 = arith.constant 0.000000e+00 : f32
    %158 = vector.broadcast %cst_171 : f32 to vector<20x160xf32>
    %159 = arith.maximumf %157, %158 : vector<20x160xf32>
    %c2_172 = arith.constant 2 : index
    %c0_173 = arith.constant 0 : index
    %c0_174 = arith.constant 0 : index
    %c0_175 = arith.constant 0 : index
    %160 = vector.load %arg5[%c2_172, %c0_173, %c0_174, %c0_175] : memref<3x6x160x160xf32, #tpu.memory_space<vmem>>, vector<1x1x160x160xf32>
    %161 = vector.shape_cast %160 : vector<1x1x160x160xf32> to vector<160x160xf32>
    %cst_176 = arith.constant dense<0.000000e+00> : vector<20x160xf32>
    %162 = tpu.matmul %159, %161, %cst_176 {dimension_numbers = #tpu.dot_dimension_numbers<[1], [0], [0], [1], [0, 0, 1, 1], [], []>} : vector<20x160xf32>, vector<160x160xf32>, vector<20x160xf32> -> vector<20x160xf32>
    %c2_177 = arith.constant 2 : index
    %c1_178 = arith.constant 1 : index
    %c0_179 = arith.constant 0 : index
    %c0_180 = arith.constant 0 : index
    %163 = vector.load %arg5[%c2_177, %c1_178, %c0_179, %c0_180] : memref<3x6x160x160xf32, #tpu.memory_space<vmem>>, vector<1x1x160x160xf32>
    %164 = vector.shape_cast %163 : vector<1x1x160x160xf32> to vector<160x160xf32>
    %cst_181 = arith.constant dense<0.000000e+00> : vector<20x160xf32>
    %165 = tpu.matmul %159, %164, %cst_181 {dimension_numbers = #tpu.dot_dimension_numbers<[1], [0], [0], [1], [0, 0, 1, 1], [], []>} : vector<20x160xf32>, vector<160x160xf32>, vector<20x160xf32> -> vector<20x160xf32>
    %c2_182 = arith.constant 2 : index
    %c2_183 = arith.constant 2 : index
    %c0_184 = arith.constant 0 : index
    %c0_185 = arith.constant 0 : index
    %166 = vector.load %arg5[%c2_182, %c2_183, %c0_184, %c0_185] : memref<3x6x160x160xf32, #tpu.memory_space<vmem>>, vector<1x1x160x160xf32>
    %167 = vector.shape_cast %166 : vector<1x1x160x160xf32> to vector<160x160xf32>
    %cst_186 = arith.constant dense<0.000000e+00> : vector<20x160xf32>
    %168 = tpu.matmul %159, %167, %cst_186 {dimension_numbers = #tpu.dot_dimension_numbers<[1], [0], [0], [1], [0, 0, 1, 1], [], []>} : vector<20x160xf32>, vector<160x160xf32>, vector<20x160xf32> -> vector<20x160xf32>
    %cst_187 = arith.constant dense<0.000000e+00> : vector<20x160xf32>
    %169 = tpu.matmul %1, %162, %cst_187 {dimension_numbers = #tpu.dot_dimension_numbers<[1], [0], [0], [1], [0, 0, 1, 1], [], []>} : vector<20x20xf32>, vector<20x160xf32>, vector<20x160xf32> -> vector<20x160xf32>
    %cst_188 = arith.constant dense<0.000000e+00> : vector<20x160xf32>
    %170 = tpu.matmul %3, %165, %cst_188 {dimension_numbers = #tpu.dot_dimension_numbers<[1], [0], [0], [1], [0, 0, 1, 1], [], []>} : vector<20x20xf32>, vector<20x160xf32>, vector<20x160xf32> -> vector<20x160xf32>
    %171 = arith.addf %169, %170 : vector<20x160xf32>
    %cst_189 = arith.constant dense<0.000000e+00> : vector<20x160xf32>
    %172 = tpu.matmul %5, %168, %cst_189 {dimension_numbers = #tpu.dot_dimension_numbers<[1], [0], [0], [1], [0, 0, 1, 1], [], []>} : vector<20x20xf32>, vector<20x160xf32>, vector<20x160xf32> -> vector<20x160xf32>
    %173 = arith.addf %171, %172 : vector<20x160xf32>
    %c2_190 = arith.constant 2 : index
    %c0_191 = arith.constant 0 : index
    %c0_192 = arith.constant 0 : index
    %c0_193 = arith.constant 0 : index
    %174 = vector.load %arg6[%c2_190, %c0_191, %c0_192, %c0_193] : memref<3x2x20x160xf32, #tpu.memory_space<vmem>>, vector<1x1x20x160xf32>
    %175 = vector.shape_cast %174 : vector<1x1x20x160xf32> to vector<20x160xf32>
    %176 = arith.addf %173, %175 : vector<20x160xf32>
    %cst_194 = arith.constant 0.000000e+00 : f32
    %177 = vector.broadcast %cst_194 : f32 to vector<20x160xf32>
    %178 = arith.maximumf %176, %177 : vector<20x160xf32>
    %c2_195 = arith.constant 2 : index
    %c3_196 = arith.constant 3 : index
    %c0_197 = arith.constant 0 : index
    %c0_198 = arith.constant 0 : index
    %179 = vector.load %arg5[%c2_195, %c3_196, %c0_197, %c0_198] : memref<3x6x160x160xf32, #tpu.memory_space<vmem>>, vector<1x1x160x160xf32>
    %180 = vector.shape_cast %179 : vector<1x1x160x160xf32> to vector<160x160xf32>
    %cst_199 = arith.constant dense<0.000000e+00> : vector<20x160xf32>
    %181 = tpu.matmul %178, %180, %cst_199 {dimension_numbers = #tpu.dot_dimension_numbers<[1], [0], [0], [1], [0, 0, 1, 1], [], []>} : vector<20x160xf32>, vector<160x160xf32>, vector<20x160xf32> -> vector<20x160xf32>
    %c2_200 = arith.constant 2 : index
    %c4_201 = arith.constant 4 : index
    %c0_202 = arith.constant 0 : index
    %c0_203 = arith.constant 0 : index
    %182 = vector.load %arg5[%c2_200, %c4_201, %c0_202, %c0_203] : memref<3x6x160x160xf32, #tpu.memory_space<vmem>>, vector<1x1x160x160xf32>
    %183 = vector.shape_cast %182 : vector<1x1x160x160xf32> to vector<160x160xf32>
    %cst_204 = arith.constant dense<0.000000e+00> : vector<20x160xf32>
    %184 = tpu.matmul %178, %183, %cst_204 {dimension_numbers = #tpu.dot_dimension_numbers<[1], [0], [0], [1], [0, 0, 1, 1], [], []>} : vector<20x160xf32>, vector<160x160xf32>, vector<20x160xf32> -> vector<20x160xf32>
    %c2_205 = arith.constant 2 : index
    %c5_206 = arith.constant 5 : index
    %c0_207 = arith.constant 0 : index
    %c0_208 = arith.constant 0 : index
    %185 = vector.load %arg5[%c2_205, %c5_206, %c0_207, %c0_208] : memref<3x6x160x160xf32, #tpu.memory_space<vmem>>, vector<1x1x160x160xf32>
    %186 = vector.shape_cast %185 : vector<1x1x160x160xf32> to vector<160x160xf32>
    %cst_209 = arith.constant dense<0.000000e+00> : vector<20x160xf32>
    %187 = tpu.matmul %178, %186, %cst_209 {dimension_numbers = #tpu.dot_dimension_numbers<[1], [0], [0], [1], [0, 0, 1, 1], [], []>} : vector<20x160xf32>, vector<160x160xf32>, vector<20x160xf32> -> vector<20x160xf32>
    %cst_210 = arith.constant dense<0.000000e+00> : vector<20x160xf32>
    %188 = tpu.matmul %1, %181, %cst_210 {dimension_numbers = #tpu.dot_dimension_numbers<[1], [0], [0], [1], [0, 0, 1, 1], [], []>} : vector<20x20xf32>, vector<20x160xf32>, vector<20x160xf32> -> vector<20x160xf32>
    %cst_211 = arith.constant dense<0.000000e+00> : vector<20x160xf32>
    %189 = tpu.matmul %3, %184, %cst_211 {dimension_numbers = #tpu.dot_dimension_numbers<[1], [0], [0], [1], [0, 0, 1, 1], [], []>} : vector<20x20xf32>, vector<20x160xf32>, vector<20x160xf32> -> vector<20x160xf32>
    %190 = arith.addf %188, %189 : vector<20x160xf32>
    %cst_212 = arith.constant dense<0.000000e+00> : vector<20x160xf32>
    %191 = tpu.matmul %5, %187, %cst_212 {dimension_numbers = #tpu.dot_dimension_numbers<[1], [0], [0], [1], [0, 0, 1, 1], [], []>} : vector<20x20xf32>, vector<20x160xf32>, vector<20x160xf32> -> vector<20x160xf32>
    %192 = arith.addf %190, %191 : vector<20x160xf32>
    %c2_213 = arith.constant 2 : index
    %c1_214 = arith.constant 1 : index
    %c0_215 = arith.constant 0 : index
    %c0_216 = arith.constant 0 : index
    %193 = vector.load %arg6[%c2_213, %c1_214, %c0_215, %c0_216] : memref<3x2x20x160xf32, #tpu.memory_space<vmem>>, vector<1x1x20x160xf32>
    %194 = vector.shape_cast %193 : vector<1x1x20x160xf32> to vector<20x160xf32>
    %195 = arith.addf %192, %194 : vector<20x160xf32>
    %cst_217 = arith.constant 0.000000e+00 : f32
    %196 = vector.broadcast %cst_217 : f32 to vector<20x160xf32>
    %197 = arith.maximumf %195, %196 : vector<20x160xf32>
    %c2_218 = arith.constant 2 : index
    %c0_219 = arith.constant 0 : index
    %c0_220 = arith.constant 0 : index
    %198 = vector.load %arg7[%c2_218, %c0_219, %c0_220] : memref<3x160x128xf32, #tpu.memory_space<vmem>>, vector<1x160x128xf32>
    %199 = vector.shape_cast %198 : vector<1x160x128xf32> to vector<160x128xf32>
    %cst_221 = arith.constant dense<0.000000e+00> : vector<20x128xf32>
    %200 = tpu.matmul %197, %199, %cst_221 {dimension_numbers = #tpu.dot_dimension_numbers<[1], [0], [0], [1], [0, 0, 1, 1], [], []>} : vector<20x160xf32>, vector<160x128xf32>, vector<20x128xf32> -> vector<20x128xf32>
    %c2_222 = arith.constant 2 : index
    %c0_223 = arith.constant 0 : index
    %c0_224 = arith.constant 0 : index
    %201 = vector.load %arg8[%c2_222, %c0_223, %c0_224] : memref<3x1x128xf32, #tpu.memory_space<vmem>>, vector<1x1x128xf32>
    %202 = vector.shape_cast %201 : vector<1x1x128xf32> to vector<1x128xf32>
    %203 = vector.broadcast %202 : vector<1x128xf32> to vector<20x128xf32>
    %204 = arith.addf %200, %203 : vector<20x128xf32>
    %cst_225 = arith.constant 0.000000e+00 : f32
    %205 = vector.broadcast %cst_225 : f32 to vector<20x128xf32>
    %206 = arith.maximumf %204, %205 : vector<20x128xf32>
    %cst_226 = arith.constant dense<0.000000e+00> : vector<2x128xf32>
    %207 = tpu.matmul %6, %206, %cst_226 {dimension_numbers = #tpu.dot_dimension_numbers<[1], [0], [0], [1], [0, 0, 1, 1], [], []>} : vector<2x20xf32>, vector<20x128xf32>, vector<2x128xf32> -> vector<2x128xf32>
    %c2_227 = arith.constant 2 : index
    %c0_228 = arith.constant 0 : index
    %c0_229 = arith.constant 0 : index
    %208 = vector.load %arg9[%c2_227, %c0_228, %c0_229] : memref<3x128x32xf32, #tpu.memory_space<vmem>>, vector<1x128x32xf32>
    %209 = vector.shape_cast %208 : vector<1x128x32xf32> to vector<128x32xf32>
    %cst_230 = arith.constant dense<0.000000e+00> : vector<2x32xf32>
    %210 = tpu.matmul %207, %209, %cst_230 {dimension_numbers = #tpu.dot_dimension_numbers<[1], [0], [0], [1], [0, 0, 1, 1], [], []>} : vector<2x128xf32>, vector<128x32xf32>, vector<2x32xf32> -> vector<2x32xf32>
    %c2_231 = arith.constant 2 : index
    %c0_232 = arith.constant 0 : index
    %c0_233 = arith.constant 0 : index
    %211 = vector.load %arg10[%c2_231, %c0_232, %c0_233] : memref<3x1x32xf32, #tpu.memory_space<vmem>>, vector<1x1x32xf32>
    %212 = vector.shape_cast %211 : vector<1x1x32xf32> to vector<1x32xf32>
    %213 = vector.broadcast %212 : vector<1x32xf32> to vector<2x32xf32>
    %214 = arith.addf %210, %213 : vector<2x32xf32>
    %cst_234 = arith.constant 0.000000e+00 : f32
    %215 = vector.broadcast %cst_234 : f32 to vector<2x32xf32>
    %216 = arith.maximumf %214, %215 : vector<2x32xf32>
    %c2_235 = arith.constant 2 : index
    %c0_236 = arith.constant 0 : index
    %c0_237 = arith.constant 0 : index
    %217 = vector.load %arg11[%c2_235, %c0_236, %c0_237] : memref<3x32x10xf32, #tpu.memory_space<vmem>>, vector<1x32x10xf32>
    %218 = vector.shape_cast %217 : vector<1x32x10xf32> to vector<32x10xf32>
    %cst_238 = arith.constant dense<0.000000e+00> : vector<2x10xf32>
    %219 = tpu.matmul %216, %218, %cst_238 {dimension_numbers = #tpu.dot_dimension_numbers<[1], [0], [0], [1], [0, 0, 1, 1], [], []>} : vector<2x32xf32>, vector<32x10xf32>, vector<2x10xf32> -> vector<2x10xf32>
    %220 = arith.addf %149, %219 : vector<2x10xf32>
    %c0_239 = arith.constant 0 : index
    %c0_240 = arith.constant 0 : index
    %221 = vector.load %arg12[%c0_239, %c0_240] : memref<1x10xf32, #tpu.memory_space<vmem>>, vector<1x10xf32>
    %222 = vector.broadcast %221 : vector<1x10xf32> to vector<2x10xf32>
    %223 = arith.addf %220, %222 : vector<2x10xf32>
    %cst_241 = arith.constant dense<0xFF800000> : vector<2xf32>
    %224 = vector.multi_reduction <maximumf>, %223, %cst_241 [1] : vector<2x10xf32> to vector<2xf32>
    %225 = vector.shape_cast %224 : vector<2xf32> to vector<2x1xf32>
    %226 = vector.broadcast %225 : vector<2x1xf32> to vector<2x10xf32>
    %227 = arith.subf %223, %226 : vector<2x10xf32>
    %228 = math.exp %227 : vector<2x10xf32>
    %cst_242 = arith.constant dense<0.000000e+00> : vector<2xf32>
    %229 = vector.multi_reduction <add>, %228, %cst_242 [1] : vector<2x10xf32> to vector<2xf32>
    %230 = vector.shape_cast %229 : vector<2xf32> to vector<2x1xf32>
    %231 = vector.broadcast %230 : vector<2x1xf32> to vector<2x10xf32>
    %232 = arith.divf %228, %231 : vector<2x10xf32>
    %c0_243 = arith.constant 0 : index
    %c0_244 = arith.constant 0 : index
    %233 = vector.load %arg13[%c0_243, %c0_244] : memref<2x10xf32, #tpu.memory_space<vmem>>, vector<2x10xf32>
    tpu.vector_store %arg13[%c0_243, %c0_244], %232 {strides = array<i32>} : memref<2x10xf32, #tpu.memory_space<vmem>>, vector<2x10xf32>,
    return
  }
}

</mosaic_0001>

<llo_original>
// kernel: triple_etmonas_forward.1
$region0: #{triple_etmonas_forward.1}
  #allocation0 [shape = 'u32[]', space=smem, size = 0x4, offset = 0x4, fixed_abs, tag = 'smem constant byte address 0x4 - core index']
  #allocation1 [shape = 'u32[144,128]{1,0:T(1,128)}', space=vmem, size = 0x12000, scoped, tag = 'internal scratch']
  %s0 = inlined_call_operand.vmem [shape: f32[3,20,216], index: 0, kind: input, shape index: {}]
  %s1 = inlined_call_operand.vmem [shape: f32[3,20,20], index: 1, kind: input, shape index: {}]
  %s2 = inlined_call_operand.vmem [shape: f32[2,20], index: 2, kind: input, shape index: {}]
  %s3 = inlined_call_operand.vmem [shape: f32[3,216,160], index: 3, kind: input, shape index: {}]
  %s4 = inlined_call_operand.vmem [shape: f32[3,20,160], index: 4, kind: input, shape index: {}]
  %s5 = inlined_call_operand.vmem [shape: f32[3,6,160,160], index: 5, kind: input, shape index: {}]
  %s6 = inlined_call_operand.vmem [shape: f32[3,2,20,160], index: 6, kind: input, shape index: {}]
  %s7 = inlined_call_operand.vmem [shape: f32[3,160,128], index: 7, kind: input, shape index: {}]
  %s8 = inlined_call_operand.vmem [shape: f32[3,1,128], index: 8, kind: input, shape index: {}]
  %s9 = inlined_call_operand.vmem [shape: f32[3,128,32], index: 9, kind: input, shape index: {}]
  %s10 = inlined_call_operand.vmem [shape: f32[3,1,32], index: 10, kind: input, shape index: {}]
  %s11 = inlined_call_operand.vmem [shape: f32[3,32,10], index: 11, kind: input, shape index: {}]
  %s12 = inlined_call_operand.vmem [shape: f32[1,10], index: 12, kind: input, shape index: {}]
  %s13 = inlined_call_operand.hbm [shape: f32[2,10], index: 13, kind: output, shape index: {}]
  %s14 = sld [smem:[#allocation0]]
  $region62: #{triple_etmonas_forward.1} parent=0
    _
  %s16 = ssub.s32 1, %s14
  %s17 = scalar_select 0, %s16, %s14
  $region1: #{triple_etmonas_forward.1} parent=0
    #allocation2 [shape = 'u8[1024]{0}', space=vmem, size = 0x400, scoped, tag = 'output window, operand 0, single buffered']
    #allocation3 [shape = 's32[1]{0}', space=sflag, size = 0x4, scoped, tag = 'scoped memory for triple_etmonas_forward.1']
    %18 = vsyncpa [#allocation3], 0
    // Predicated region
    $region2: #{triple_etmonas_forward.1} parent=1 // pred_check
      _
    $region3: #{triple_etmonas_forward.1} parent=1 // pred_check_branch
      %20 = sbr.rel (0) target = $region5
    $region4: #{triple_etmonas_forward.1} parent=1 // pred_region
      _
    $region5: #{triple_etmonas_forward.1} parent=1 // pred_fallthru
      _
    // Predicated region
    $region6: #{triple_etmonas_forward.1} parent=1 // pred_check
      _
    $region7: #{triple_etmonas_forward.1} parent=1 // pred_check_branch
      %22 = sbr.rel (0) target = $region9
    $region8: #{triple_etmonas_forward.1} parent=1 // pred_region
      _
    $region9: #{triple_etmonas_forward.1} parent=1 // pred_fallthru
      _
    // Predicated region
    $region10: #{triple_etmonas_forward.1} parent=1 // pred_check
      _
    $region11: #{triple_etmonas_forward.1} parent=1 // pred_check_branch
      %24 = sbr.rel (0) target = $region13
    $region12: #{triple_etmonas_forward.1} parent=1 // pred_region
      _
    $region13: #{triple_etmonas_forward.1} parent=1 // pred_fallthru
      _
    // Predicated region
    $region14: #{triple_etmonas_forward.1} parent=1 // pred_check
      _
    $region15: #{triple_etmonas_forward.1} parent=1 // pred_check_branch
      %26 = sbr.rel (0) target = $region17
    $region16: #{triple_etmonas_forward.1} parent=1 // pred_region
      _
    $region17: #{triple_etmonas_forward.1} parent=1 // pred_fallthru
      _
    // Predicated region
    $region18: #{triple_etmonas_forward.1} parent=1 // pred_check
      _
    $region19: #{triple_etmonas_forward.1} parent=1 // pred_check_branch
      %28 = sbr.rel (0) target = $region21
    $region20: #{triple_etmonas_forward.1} parent=1 // pred_region
      _
    $region21: #{triple_etmonas_forward.1} parent=1 // pred_fallthru
      _
    // Predicated region
    $region22: #{triple_etmonas_forward.1} parent=1 // pred_check
      _
    $region23: #{triple_etmonas_forward.1} parent=1 // pred_check_branch
      %30 = sbr.rel (0) target = $region25
    $region24: #{triple_etmonas_forward.1} parent=1 // pred_region
      _
    $region25: #{triple_etmonas_forward.1} parent=1 // pred_fallthru
      _
    // Predicated region
    $region26: #{triple_etmonas_forward.1} parent=1 // pred_check
      _
    $region27: #{triple_etmonas_forward.1} parent=1 // pred_check_branch
      %32 = sbr.rel (0) target = $region29
    $region28: #{triple_etmonas_forward.1} parent=1 // pred_region
      _
    $region29: #{triple_etmonas_forward.1} parent=1 // pred_fallthru
      _
    // Predicated region
    $region30: #{triple_etmonas_forward.1} parent=1 // pred_check
      _
    $region31: #{triple_etmonas_forward.1} parent=1 // pred_check_branch
      %34 = sbr.rel (0) target = $region33
    $region32: #{triple_etmonas_forward.1} parent=1 // pred_region
      _
    $region33: #{triple_etmonas_forward.1} parent=1 // pred_fallthru
      _
    // Predicated region
    $region34: #{triple_etmonas_forward.1} parent=1 // pred_check
      _
    $region35: #{triple_etmonas_forward.1} parent=1 // pred_check_branch
      %36 = sbr.rel (0) target = $region37
    $region36: #{triple_etmonas_forward.1} parent=1 // pred_region
      _
    $region37: #{triple_etmonas_forward.1} parent=1 // pred_fallthru
      _
    // Predicated region
    $region38: #{triple_etmonas_forward.1} parent=1 // pred_check
      _
    $region39: #{triple_etmonas_forward.1} parent=1 // pred_check_branch
      %38 = sbr.rel (0) target = $region41
    $region40: #{triple_etmonas_forward.1} parent=1 // pred_region
      _
    $region41: #{triple_etmonas_forward.1} parent=1 // pred_fallthru
      _
    // Predicated region
    $region42: #{triple_etmonas_forward.1} parent=1 // pred_check
      _
    $region43: #{triple_etmonas_forward.1} parent=1 // pred_check_branch
      %40 = sbr.rel (0) target = $region45
    $region44: #{triple_etmonas_forward.1} parent=1 // pred_region
      _
    $region45: #{triple_etmonas_forward.1} parent=1 // pred_fallthru
      _
    // Predicated region
    $region46: #{triple_etmonas_forward.1} parent=1 // pred_check
      _
    $region47: #{triple_etmonas_forward.1} parent=1 // pred_check_branch
      %42 = sbr.rel (0) target = $region49
    $region48: #{triple_etmonas_forward.1} parent=1 // pred_region
      _
    $region49: #{triple_etmonas_forward.1} parent=1 // pred_fallthru
      _
    // Predicated region
    $region50: #{triple_etmonas_forward.1} parent=1 // pred_check
      _
    $region51: #{triple_etmonas_forward.1} parent=1 // pred_check_branch
      %44 = sbr.rel (0) target = $region53
    $region52: #{triple_etmonas_forward.1} parent=1 // pred_region
      _
    $region53: #{triple_etmonas_forward.1} parent=1 // pred_fallthru
      _
    %v45 = vld [vmem:[%s1] sm:$0xff]
    %v46 = vld [vmem:[%s1 + $0x8] sm:$0xff]
    %v47 = vld [vmem:[%s1 + $0x10] sm:$0xf]
    %s48 = scalar_lea.vmem %s1, 24
    %v49 = vld [vmem:[%s48] sm:$0xff]
    %v50 = vld [vmem:[%s48 + $0x8] sm:$0xff]
    %v51 = vld [vmem:[%s48 + $0x10] sm:$0xf]
    %s52 = scalar_lea.vmem %s1, 48
    %v53 = vld [vmem:[%s52] sm:$0xff]
    %v54 = vld [vmem:[%s52 + $0x8] sm:$0xff]
    %v55 = vld [vmem:[%s52 + $0x10] sm:$0xf]
    %v56 = vld [vmem:[%s2] sm:$0x3]
    %v57 = vld [vmem:[%s0] sm:$0xff]
    %v58 = vld [vmem:[%s0 + $0x8] sm:$0xff]
    %v59 = vld [vmem:[%s0 + $0x10] sm:$0xff]
    %v60 = vld [vmem:[%s0 + $0x18] sm:$0xff]
    %v61 = vld [vmem:[%s0 + $0x20] sm:$0xf]
    %v62 = vld [vmem:[%s0 + $0x28] sm:$0xf]
    %v63 = vld [vmem:[%s3] sm:$0xff]
    %v64 = vld [vmem:[%s3 + $0x8] sm:$0xff]
    %v65 = vld [vmem:[%s3 + $0x10] sm:$0xff]
    %v66 = vld [vmem:[%s3 + $0x18] sm:$0xff]
    %v67 = vld [vmem:[%s3 + $0x20] sm:$0xff]
    %v68 = vld [vmem:[%s3 + $0x28] sm:$0xff]
    %v69 = vld [vmem:[%s3 + $0x30] sm:$0xff]
    %v70 = vld [vmem:[%s3 + $0x38] sm:$0xff]
    %v71 = vld [vmem:[%s3 + $0x40] sm:$0xff]
    %v72 = vld [vmem:[%s3 + $0x48] sm:$0xff]
    %v73 = vld [vmem:[%s3 + $0x50] sm:$0xff]
    %v74 = vld [vmem:[%s3 + $0x58] sm:$0xff]
    %v75 = vld [vmem:[%s3 + $0x60] sm:$0xff]
    %v76 = vld [vmem:[%s3 + $0x68] sm:$0xff]
    %v77 = vld [vmem:[%s3 + $0x70] sm:$0xff]
    %v78 = vld [vmem:[%s3 + $0x78] sm:$0xff]
    %v79 = vld [vmem:[%s3 + $0x80] sm:$0xff]
    %v80 = vld [vmem:[%s3 + $0x88] sm:$0xff]
    %v81 = vld [vmem:[%s3 + $0x90] sm:$0xff]
    %v82 = vld [vmem:[%s3 + $0x98] sm:$0xff]
    %v83 = vld [vmem:[%s3 + $0xa0] sm:$0xff]
    %v84 = vld [vmem:[%s3 + $0xa8] sm:$0xff]
    %v85 = vld [vmem:[%s3 + $0xb0] sm:$0xff]
    %v86 = vld [vmem:[%s3 + $0xb8] sm:$0xff]
    %v87 = vld [vmem:[%s3 + $0xc0] sm:$0xff]
    %v88 = vld [vmem:[%s3 + $0xc8] sm:$0xff]
    %v89 = vld [vmem:[%s3 + $0xd0] sm:$0xff]
    %v90 = vld [vmem:[%s3 + $0xd8] sm:$0xff]
    %v91 = vld [vmem:[%s3 + $0xe0] sm:$0xff]
    %v92 = vld [vmem:[%s3 + $0xe8] sm:$0xff]
    %v93 = vld [vmem:[%s3 + $0xf0] sm:$0xff]
    %v94 = vld [vmem:[%s3 + $0xf8] sm:$0xff]
    %v95 = vld [vmem:[%s3 + $0x100] sm:$0xff]
    %v96 = vld [vmem:[%s3 + $0x108] sm:$0xff]
    %v97 = vld [vmem:[%s3 + $0x110] sm:$0xff]
    %v98 = vld [vmem:[%s3 + $0x118] sm:$0xff]
    %v99 = vld [vmem:[%s3 + $0x120] sm:$0xff]
    %v100 = vld [vmem:[%s3 + $0x128] sm:$0xff]
    %v101 = vld [vmem:[%s3 + $0x130] sm:$0xff]
    %v102 = vld [vmem:[%s3 + $0x138] sm:$0xff]
    %v103 = vld [vmem:[%s3 + $0x140] sm:$0xff]
    %v104 = vld [vmem:[%s3 + $0x148] sm:$0xff]
    %v105 = vld [vmem:[%s3 + $0x150] sm:$0xff]
    %v106 = vld [vmem:[%s3 + $0x158] sm:$0xff]
    %v107 = vld [vmem:[%s3 + $0x160] sm:$0xff]
    %v108 = vld [vmem:[%s3 + $0x168] sm:$0xff]
    %v109 = vld [vmem:[%s3 + $0x170] sm:$0xff]
    %v110 = vld [vmem:[%s3 + $0x178] sm:$0xff]
    %v111 = vld [vmem:[%s3 + $0x180] sm:$0xff]
    %v112 = vld [vmem:[%s3 + $0x188] sm:$0xff]
    %v113 = vld [vmem:[%s3 + $0x190] sm:$0xff]
    %v114 = vld [vmem:[%s3 + $0x198] sm:$0xff]
    %v115 = vld [vmem:[%s3 + $0x1a0] sm:$0xff]
    %v116 = vld [vmem:[%s3 + $0x1a8] sm:$0xff]
    %v117 = vld [vmem:[%s4] sm:$0xff]
    %v118 = vld [vmem:[%s4 + $0x8] sm:$0xff]
    %v119 = vld [vmem:[%s4 + $0x10] sm:$0xff]
    %v120 = vld [vmem:[%s4 + $0x18] sm:$0xff]
    %v121 = vld [vmem:[%s4 + $0x20] sm:$0xf]
    %v122 = vld [vmem:[%s4 + $0x28] sm:$0xf]
    %vm123 = vcmask 719872
    %v125 = vsel %vm123, %v58, 0
    %v128 = vsel %vm123, %v60, 0
    %v131 = vsel %vm123, %v62, 0
    %133 = vmatprep.subr.mxu0 %v64
    %134 = vmatpush1.msra.mxu0 %v63
    %135 = vmatprep.subr.mxu0 %v66
    %136 = vmatpush1.msra.mxu0 %v65
    %137 = vmatprep.subr.mxu0 %v68
    %138 = vmatpush1.msra.mxu0 %v67
    %139 = vmatprep.subr.mxu0 %v70
    %140 = vmatpush1.msra.mxu0 %v69
    %141 = vmatprep.subr.mxu0 %v72
    %142 = vmatpush1.msra.mxu0 %v71
    %143 = vmatprep.subr.mxu0 %v74
    %144 = vmatpush1.msra.mxu0 %v73
    %145 = vmatprep.subr.mxu0 %v76
    %146 = vmatpush1.msra.mxu0 %v75
    %147 = vmatprep.subr.mxu0 %v78
    %148 = vmatpush1.msra.mxu0 %v77
    %149 = vmatprep.subr.mxu0 %v80
    %150 = vmatpush1.msra.mxu0 %v79
    %151 = vmatprep.subr.mxu0 %v82
    %152 = vmatpush1.msra.mxu0 %v81
    %153 = vmatprep.subr.mxu0 %v84
    %154 = vmatpush1.msra.mxu0 %v83
    %155 = vmatprep.subr.mxu0 %v86
    %156 = vmatpush1.msra.mxu0 %v85
    %157 = vmatprep.subr.mxu0 %v88
    %158 = vmatpush1.msra.mxu0 %v87
    %159 = vmatprep.subr.mxu0 %v90
    %160 = vmatpush1.msra.mxu0 %v89
    %161 = vmatprep.subr.mxu0 %v92
    %162 = vmatpush1.msra.mxu0 %v91
    %163 = vmatprep.subr.mxu0 %v94
    %164 = vmatpush1.msra.mxu0 %v93
    %165 = vmatprep.subr.mxu0 %v96
    %166 = vmatpush1.msra.mxu0 %v95
    %167 = vmatprep.subr.mxu0 %v98
    %168 = vmatpush1.msra.mxu0 %v97
    %169 = vmatprep.subr.mxu0 %v100
    %170 = vmatpush1.msra.mxu0 %v99
    %171 = vmatprep.subr.mxu0 %v102
    %172 = vmatpush1.msra.mxu0 %v101
    %173 = vmatprep.subr.mxu0 %v104
    %174 = vmatpush1.msra.mxu0 %v103
    %175 = vmatprep.subr.mxu0 %v106
    %176 = vmatpush1.msra.mxu0 %v105
    %177 = vmatprep.subr.mxu0 %v108
    %178 = vmatpush1.msra.mxu0 %v107
    %179 = vmatprep.subr.mxu0 %v110
    %180 = vmatpush1.msra.mxu0 %v109
    %181 = vmatprep.subr.mxu0 %v112
    %182 = vmatpush1.msra.mxu0 %v111
    %183 = vmatprep.subr.mxu0 %v114
    %184 = vmatpush1.msra.mxu0 %v113
    %185 = vmatprep.subr.mxu0 %v116
    %186 = vmatpush1.msra.mxu0 %v115
    %187 = vmatprep.subr.mxu0 0.0
    %188 = vmatpush1.msra.mxu0 0.0
    %189 = vmatprep.subr.mxu0 0.0
    %190 = vmatpush1.msra.mxu0 0.0
    %191 = vmatprep.subr.mxu0 0.0
    %192 = vmatpush1.msra.mxu0 0.0
    %193 = vmatprep.subr.mxu0 0.0
    %194 = vmatpush1.msra.mxu0 0.0
    %195 = vmatprep.subr.mxu0 0.0
    %196 = vmatpush1.msra.mxu0 0.0
    %197 = vmatprep.mubr.f32.mxu0 %v125
    %198 = vmatmul.mubr.f32.gmra.mrb[0].mxu0 %v57
    %v199 = vpop.f32.mrb[0].mxu0
    %v200 = vadd.f32 %v117, %v199
    %v201 = vpop.f32.mrb[0].mxu0
    %v202 = vadd.f32 %v118, %v201
    %203 = vmatprep.mubr.f32.mxu0 %v128
    %204 = vmatmul.mubr.f32.gmra.mrb[0].mxu0 %v59
    %v205 = vpop.f32.mrb[0].mxu0
    %v206 = vadd.f32 %v119, %v205
    %v207 = vpop.f32.mrb[0].mxu0
    %v208 = vadd.f32 %v120, %v207
    %209 = vmatprep.mubr.f32.mxu0 %v131
    %210 = vmatmul.mubr.f32.gmra.mrb[0].mxu0 %v61
    %v211 = vpop.f32.mrb[0].mxu0
    %v212 = vadd.f32 %v121, %v211
    %v213 = vpop.f32.mrb[0].mxu0
    %v214 = vadd.f32 %v122, %v213
    %215 = vdwg.mxu0
    %v216 = vmax.f32 %v200, 0.0
    %v217 = vmax.f32 %v202, 0.0
    %v218 = vmax.f32 %v206, 0.0
    %v219 = vmax.f32 %v208, 0.0
    %v220 = vmax.f32 %v212, 0.0
    %v221 = vmax.f32 %v214, 0.0
    %v222 = vld [vmem:[%s5] sm:$0xff]
    %v223 = vld [vmem:[%s5 + $0x8] sm:$0xff]
    %v224 = vld [vmem:[%s5 + $0x10] sm:$0xff]
    %v225 = vld [vmem:[%s5 + $0x18] sm:$0xff]
    %v226 = vld [vmem:[%s5 + $0x20] sm:$0xff]
    %v227 = vld [vmem:[%s5 + $0x28] sm:$0xff]
    %v228 = vld [vmem:[%s5 + $0x30] sm:$0xff]
    %v229 = vld [vmem:[%s5 + $0x38] sm:$0xff]
    %v230 = vld [vmem:[%s5 + $0x40] sm:$0xff]
    %v231 = vld [vmem:[%s5 + $0x48] sm:$0xff]
    %v232 = vld [vmem:[%s5 + $0x50] sm:$0xff]
    %v233 = vld [vmem:[%s5 + $0x58] sm:$0xff]
    %v234 = vld [vmem:[%s5 + $0x60] sm:$0xff]
    %v235 = vld [vmem:[%s5 + $0x68] sm:$0xff]
    %v236 = vld [vmem:[%s5 + $0x70] sm:$0xff]
    %v237 = vld [vmem:[%s5 + $0x78] sm:$0xff]
    %v238 = vld [vmem:[%s5 + $0x80] sm:$0xff]
    %v239 = vld [vmem:[%s5 + $0x88] sm:$0xff]
    %v240 = vld [vmem:[%s5 + $0x90] sm:$0xff]
    %v241 = vld [vmem:[%s5 + $0x98] sm:$0xff]
    %v242 = vld [vmem:[%s5 + $0xa0] sm:$0xff]
    %v243 = vld [vmem:[%s5 + $0xa8] sm:$0xff]
    %v244 = vld [vmem:[%s5 + $0xb0] sm:$0xff]
    %v245 = vld [vmem:[%s5 + $0xb8] sm:$0xff]
    %v246 = vld [vmem:[%s5 + $0xc0] sm:$0xff]
    %v247 = vld [vmem:[%s5 + $0xc8] sm:$0xff]
    %v248 = vld [vmem:[%s5 + $0xd0] sm:$0xff]
    %v249 = vld [vmem:[%s5 + $0xd8] sm:$0xff]
    %v250 = vld [vmem:[%s5 + $0xe0] sm:$0xff]
    %v251 = vld [vmem:[%s5 + $0xe8] sm:$0xff]
    %v252 = vld [vmem:[%s5 + $0xf0] sm:$0xff]
    %v253 = vld [vmem:[%s5 + $0xf8] sm:$0xff]
    %v254 = vld [vmem:[%s5 + $0x100] sm:$0xff]
    %v255 = vld [vmem:[%s5 + $0x108] sm:$0xff]
    %v256 = vld [vmem:[%s5 + $0x110] sm:$0xff]
    %v257 = vld [vmem:[%s5 + $0x118] sm:$0xff]
    %v258 = vld [vmem:[%s5 + $0x120] sm:$0xff]
    %v259 = vld [vmem:[%s5 + $0x128] sm:$0xff]
    %v260 = vld [vmem:[%s5 + $0x130] sm:$0xff]
    %v261 = vld [vmem:[%s5 + $0x138] sm:$0xff]
    %vm262 = vcmask 261120
    %v264 = vsel %vm262, %v217, 0
    %v267 = vsel %vm262, %v219, 0
    %v270 = vsel %vm262, %v221, 0
    %272 = vmatprep.subr.mxu0 %v223
    %273 = vmatpush1.msra.mxu0 %v222
    %274 = vmatprep.subr.mxu0 %v225
    %275 = vmatpush1.msra.mxu0 %v224
    %276 = vmatprep.subr.mxu0 %v227
    %277 = vmatpush1.msra.mxu0 %v226
    %278 = vmatprep.subr.mxu0 %v229
    %279 = vmatpush1.msra.mxu0 %v228
    %280 = vmatprep.subr.mxu0 %v231
    %281 = vmatpush1.msra.mxu0 %v230
    %282 = vmatprep.subr.mxu0 %v233
    %283 = vmatpush1.msra.mxu0 %v232
    %284 = vmatprep.subr.mxu0 %v235
    %285 = vmatpush1.msra.mxu0 %v234
    %286 = vmatprep.subr.mxu0 %v237
    %287 = vmatpush1.msra.mxu0 %v236
    %288 = vmatprep.subr.mxu0 %v239
    %289 = vmatpush1.msra.mxu0 %v238
    %290 = vmatprep.subr.mxu0 %v241
    %291 = vmatpush1.msra.mxu0 %v240
    %292 = vmatprep.subr.mxu0 %v243
    %293 = vmatpush1.msra.mxu0 %v242
    %294 = vmatprep.subr.mxu0 %v245
    %295 = vmatpush1.msra.mxu0 %v244
    %296 = vmatprep.subr.mxu0 %v247
    %297 = vmatpush1.msra.mxu0 %v246
    %298 = vmatprep.subr.mxu0 %v249
    %299 = vmatpush1.msra.mxu0 %v248
    %300 = vmatprep.subr.mxu0 %v251
    %301 = vmatpush1.msra.mxu0 %v250
    %302 = vmatprep.subr.mxu0 %v253
    %303 = vmatpush1.msra.mxu0 %v252
    %304 = vmatprep.subr.mxu0 %v255
    %305 = vmatpush1.msra.mxu0 %v254
    %306 = vmatprep.subr.mxu0 %v257
    %307 = vmatpush1.msra.mxu0 %v256
    %308 = vmatprep.subr.mxu0 %v259
    %309 = vmatpush1.msra.mxu0 %v258
    %310 = vmatprep.subr.mxu0 %v261
    %311 = vmatpush1.msra.mxu0 %v260
    %312 = vmatprep.subr.mxu0 0.0
    %313 = vmatpush1.msra.mxu0 0.0
    %314 = vmatprep.subr.mxu0 0.0
    %315 = vmatpush1.msra.mxu0 0.0
    %316 = vmatprep.subr.mxu0 0.0
    %317 = vmatpush1.msra.mxu0 0.0
    %318 = vmatprep.subr.mxu0 0.0
    %319 = vmatpush1.msra.mxu0 0.0
    %320 = vmatprep.subr.mxu0 0.0
    %321 = vmatpush1.msra.mxu0 0.0
    %322 = vmatprep.subr.mxu0 0.0
    %323 = vmatpush1.msra.mxu0 0.0
    %324 = vmatprep.subr.mxu0 0.0
    %325 = vmatpush1.msra.mxu0 0.0
    %326 = vmatprep.subr.mxu0 0.0
    %327 = vmatpush1.msra.mxu0 0.0
    %328 = vmatprep.subr.mxu0 0.0
    %329 = vmatpush1.msra.mxu0 0.0
    %330 = vmatprep.subr.mxu0 0.0
    %331 = vmatpush1.msra.mxu0 0.0
    %332 = vmatprep.subr.mxu0 0.0
    %333 = vmatpush1.msra.mxu0 0.0
    %334 = vmatprep.subr.mxu0 0.0
    %335 = vmatpush1.msra.mxu0 0.0
    %336 = vmatprep.mubr.f32.mxu0 %v264
    %337 = vmatmul.mubr.f32.gmra.mrb[0].mxu0 %v216
    %v338 = vpop.f32.mrb[0].mxu0
    %v339 = vadd.f32 0.0, %v338
    %v340 = vpop.f32.mrb[0].mxu0
    %v341 = vadd.f32 0.0, %v340
    %342 = vmatprep.mubr.f32.mxu0 %v267
    %343 = vmatmul.mubr.f32.gmra.mrb[0].mxu0 %v218
    %v344 = vpop.f32.mrb[0].mxu0
    %v345 = vadd.f32 0.0, %v344
    %v346 = vpop.f32.mrb[0].mxu0
    %v347 = vadd.f32 0.0, %v346
    %348 = vmatprep.mubr.f32.mxu0 %v270
    %349 = vmatmul.mubr.f32.gmra.mrb[0].mxu0 %v220
    %v350 = vpop.f32.mrb[0].mxu0
    %v351 = vadd.f32 0.0, %v350
    %v352 = vpop.f32.mrb[0].mxu0
    %v353 = vadd.f32 0.0, %v352
    %354 = vdwg.mxu0
    %s355 = scalar_lea.vmem %s5, 320
    %v356 = vld [vmem:[%s355] sm:$0xff]
    %v357 = vld [vmem:[%s355 + $0x8] sm:$0xff]
    %v358 = vld [vmem:[%s355 + $0x10] sm:$0xff]
    %v359 = vld [vmem:[%s355 + $0x18] sm:$0xff]
    %v360 = vld [vmem:[%s355 + $0x20] sm:$0xff]
    %v361 = vld [vmem:[%s355 + $0x28] sm:$0xff]
    %v362 = vld [vmem:[%s355 + $0x30] sm:$0xff]
    %v363 = vld [vmem:[%s355 + $0x38] sm:$0xff]
    %v364 = vld [vmem:[%s355 + $0x40] sm:$0xff]
    %v365 = vld [vmem:[%s355 + $0x48] sm:$0xff]
    %v366 = vld [vmem:[%s355 + $0x50] sm:$0xff]
    %v367 = vld [vmem:[%s355 + $0x58] sm:$0xff]
    %v368 = vld [vmem:[%s355 + $0x60] sm:$0xff]
    %v369 = vld [vmem:[%s355 + $0x68] sm:$0xff]
    %v370 = vld [vmem:[%s355 + $0x70] sm:$0xff]
    %v371 = vld [vmem:[%s355 + $0x78] sm:$0xff]
    %v372 = vld [vmem:[%s355 + $0x80] sm:$0xff]
    %v373 = vld [vmem:[%s355 + $0x88] sm:$0xff]
    %v374 = vld [vmem:[%s355 + $0x90] sm:$0xff]
    %v375 = vld [vmem:[%s355 + $0x98] sm:$0xff]
    %v376 = vld [vmem:[%s355 + $0xa0] sm:$0xff]
    %v377 = vld [vmem:[%s355 + $0xa8] sm:$0xff]
    %v378 = vld [vmem:[%s355 + $0xb0] sm:$0xff]
    %v379 = vld [vmem:[%s355 + $0xb8] sm:$0xff]
    %v380 = vld [vmem:[%s355 + $0xc0] sm:$0xff]
    %v381 = vld [vmem:[%s355 + $0xc8] sm:$0xff]
    %v382 = vld [vmem:[%s355 + $0xd0] sm:$0xff]
    %v383 = vld [vmem:[%s355 + $0xd8] sm:$0xff]
    %v384 = vld [vmem:[%s355 + $0xe0] sm:$0xff]
    %v385 = vld [vmem:[%s355 + $0xe8] sm:$0xff]
    %v386 = vld [vmem:[%s355 + $0xf0] sm:$0xff]
    %v387 = vld [vmem:[%s355 + $0xf8] sm:$0xff]
    %v388 = vld [vmem:[%s355 + $0x100] sm:$0xff]
    %v389 = vld [vmem:[%s355 + $0x108] sm:$0xff]
    %v390 = vld [vmem:[%s355 + $0x110] sm:$0xff]
    %v391 = vld [vmem:[%s355 + $0x118] sm:$0xff]
    %v392 = vld [vmem:[%s355 + $0x120] sm:$0xff]
    %v393 = vld [vmem:[%s355 + $0x128] sm:$0xff]
    %v394 = vld [vmem:[%s355 + $0x130] sm:$0xff]
    %v395 = vld [vmem:[%s355 + $0x138] sm:$0xff]
    %396 = vmatprep.subr.mxu0 %v357
    %397 = vmatpush1.msra.mxu0 %v356
    %398 = vmatprep.subr.mxu0 %v359
    %399 = vmatpush1.msra.mxu0 %v358
    %400 = vmatprep.subr.mxu0 %v361
    %401 = vmatpush1.msra.mxu0 %v360
    %402 = vmatprep.subr.mxu0 %v363
    %403 = vmatpush1.msra.mxu0 %v362
    %404 = vmatprep.subr.mxu0 %v365
    %405 = vmatpush1.msra.mxu0 %v364
    %406 = vmatprep.subr.mxu0 %v367
    %407 = vmatpush1.msra.mxu0 %v366
    %408 = vmatprep.subr.mxu0 %v369
    %409 = vmatpush1.msra.mxu0 %v368
    %410 = vmatprep.subr.mxu0 %v371
    %411 = vmatpush1.msra.mxu0 %v370
    %412 = vmatprep.subr.mxu0 %v373
    %413 = vmatpush1.msra.mxu0 %v372
    %414 = vmatprep.subr.mxu0 %v375
    %415 = vmatpush1.msra.mxu0 %v374
    %416 = vmatprep.subr.mxu0 %v377
    %417 = vmatpush1.msra.mxu0 %v376
    %418 = vmatprep.subr.mxu0 %v379
    %419 = vmatpush1.msra.mxu0 %v378
    %420 = vmatprep.subr.mxu0 %v381
    %421 = vmatpush1.msra.mxu0 %v380
    %422 = vmatprep.subr.mxu0 %v383
    %423 = vmatpush1.msra.mxu0 %v382
    %424 = vmatprep.subr.mxu0 %v385
    %425 = vmatpush1.msra.mxu0 %v384
    %426 = vmatprep.subr.mxu0 %v387
    %427 = vmatpush1.msra.mxu0 %v386
    %428 = vmatprep.subr.mxu0 %v389
    %429 = vmatpush1.msra.mxu0 %v388
    %430 = vmatprep.subr.mxu0 %v391
    %431 = vmatpush1.msra.mxu0 %v390
    %432 = vmatprep.subr.mxu0 %v393
    %433 = vmatpush1.msra.mxu0 %v392
    %434 = vmatprep.subr.mxu0 %v395
    %435 = vmatpush1.msra.mxu0 %v394
    %436 = vmatprep.subr.mxu0 0.0
    %437 = vmatpush1.msra.mxu0 0.0
    %438 = vmatprep.subr.mxu0 0.0
    %439 = vmatpush1.msra.mxu0 0.0
    %440 = vmatprep.subr.mxu0 0.0
    %441 = vmatpush1.msra.mxu0 0.0
    %442 = vmatprep.subr.mxu0 0.0
    %443 = vmatpush1.msra.mxu0 0.0
    %444 = vmatprep.subr.mxu0 0.0
    %445 = vmatpush1.msra.mxu0 0.0
    %446 = vmatprep.subr.mxu0 0.0
    %447 = vmatpush1.msra.mxu0 0.0
    %448 = vmatprep.subr.mxu0 0.0
    %449 = vmatpush1.msra.mxu0 0.0
    %450 = vmatprep.subr.mxu0 0.0
    %451 = vmatpush1.msra.mxu0 0.0
    %452 = vmatprep.subr.mxu0 0.0
    %453 = vmatpush1.msra.mxu0 0.0
    %454 = vmatprep.subr.mxu0 0.0
    %455 = vmatpush1.msra.mxu0 0.0
    %456 = vmatprep.subr.mxu0 0.0
    %457 = vmatpush1.msra.mxu0 0.0
    %458 = vmatprep.subr.mxu0 0.0
    %459 = vmatpush1.msra.mxu0 0.0
    %460 = vmatprep.mubr.f32.mxu0 %v264
    %461 = vmatmul.mubr.f32.gmra.mrb[0].mxu0 %v216
    %v462 = vpop.f32.mrb[0].mxu0
    %v463 = vadd.f32 0.0, %v462
    %v464 = vpop.f32.mrb[0].mxu0
    %v465 = vadd.f32 0.0, %v464
    %466 = vmatprep.mubr.f32.mxu0 %v267
    %467 = vmatmul.mubr.f32.gmra.mrb[0].mxu0 %v218
    %v468 = vpop.f32.mrb[0].mxu0
    %v469 = vadd.f32 0.0, %v468
    %v470 = vpop.f32.mrb[0].mxu0
    %v471 = vadd.f32 0.0, %v470
    %472 = vmatprep.mubr.f32.mxu0 %v270
    %473 = vmatmul.mubr.f32.gmra.mrb[0].mxu0 %v220
    %v474 = vpop.f32.mrb[0].mxu0
    %v475 = vadd.f32 0.0, %v474
    %v476 = vpop.f32.mrb[0].mxu0
    %v477 = vadd.f32 0.0, %v476
    %478 = vdwg.mxu0
    %s479 = scalar_lea.vmem %s5, 640
    %v480 = vld [vmem:[%s479] sm:$0xff]
    %v481 = vld [vmem:[%s479 + $0x8] sm:$0xff]
    %v482 = vld [vmem:[%s479 + $0x10] sm:$0xff]
    %v483 = vld [vmem:[%s479 + $0x18] sm:$0xff]
    %v484 = vld [vmem:[%s479 + $0x20] sm:$0xff]
    %v485 = vld [vmem:[%s479 + $0x28] sm:$0xff]
    %v486 = vld [vmem:[%s479 + $0x30] sm:$0xff]
    %v487 = vld [vmem:[%s479 + $0x38] sm:$0xff]
    %v488 = vld [vmem:[%s479 + $0x40] sm:$0xff]
    %v489 = vld [vmem:[%s479 + $0x48] sm:$0xff]
    %v490 = vld [vmem:[%s479 + $0x50] sm:$0xff]
    %v491 = vld [vmem:[%s479 + $0x58] sm:$0xff]
    %v492 = vld [vmem:[%s479 + $0x60] sm:$0xff]
    %v493 = vld [vmem:[%s479 + $0x68] sm:$0xff]
    %v494 = vld [vmem:[%s479 + $0x70] sm:$0xff]
    %v495 = vld [vmem:[%s479 + $0x78] sm:$0xff]
    %v496 = vld [vmem:[%s479 + $0x80] sm:$0xff]
    %v497 = vld [vmem:[%s479 + $0x88] sm:$0xff]
    %v498 = vld [vmem:[%s479 + $0x90] sm:$0xff]
    %v499 = vld [vmem:[%s479 + $0x98] sm:$0xff]
    %v500 = vld [vmem:[%s479 + $0xa0] sm:$0xff]
    %v501 = vld [vmem:[%s479 + $0xa8] sm:$0xff]
    %v502 = vld [vmem:[%s479 + $0xb0] sm:$0xff]
    %v503 = vld [vmem:[%s479 + $0xb8] sm:$0xff]
    %v504 = vld [vmem:[%s479 + $0xc0] sm:$0xff]
    %v505 = vld [vmem:[%s479 + $0xc8] sm:$0xff]
    %v506 = vld [vmem:[%s479 + $0xd0] sm:$0xff]
    %v507 = vld [vmem:[%s479 + $0xd8] sm:$0xff]
    %v508 = vld [vmem:[%s479 + $0xe0] sm:$0xff]
    %v509 = vld [vmem:[%s479 + $0xe8] sm:$0xff]
    %v510 = vld [vmem:[%s479 + $0xf0] sm:$0xff]
    %v511 = vld [vmem:[%s479 + $0xf8] sm:$0xff]
    %v512 = vld [vmem:[%s479 + $0x100] sm:$0xff]
    %v513 = vld [vmem:[%s479 + $0x108] sm:$0xff]
    %v514 = vld [vmem:[%s479 + $0x110] sm:$0xff]
    %v515 = vld [vmem:[%s479 + $0x118] sm:$0xff]
    %v516 = vld [vmem:[%s479 + $0x120] sm:$0xff]
    %v517 = vld [vmem:[%s479 + $0x128] sm:$0xff]
    %v518 = vld [vmem:[%s479 + $0x130] sm:$0xff]
    %v519 = vld [vmem:[%s479 + $0x138] sm:$0xff]
    %520 = vmatprep.subr.mxu0 %v481
    %521 = vmatpush1.msra.mxu0 %v480
    %522 = vmatprep.subr.mxu0 %v483
    %523 = vmatpush1.msra.mxu0 %v482
    %524 = vmatprep.subr.mxu0 %v485
    %525 = vmatpush1.msra.mxu0 %v484
    %526 = vmatprep.subr.mxu0 %v487
    %527 = vmatpush1.msra.mxu0 %v486
    %528 = vmatprep.subr.mxu0 %v489
    %529 = vmatpush1.msra.mxu0 %v488
    %530 = vmatprep.subr.mxu0 %v491
    %531 = vmatpush1.msra.mxu0 %v490
    %532 = vmatprep.subr.mxu0 %v493
    %533 = vmatpush1.msra.mxu0 %v492
    %534 = vmatprep.subr.mxu0 %v495
    %535 = vmatpush1.msra.mxu0 %v494
    %536 = vmatprep.subr.mxu0 %v497
    %537 = vmatpush1.msra.mxu0 %v496
    %538 = vmatprep.subr.mxu0 %v499
    %539 = vmatpush1.msra.mxu0 %v498
    %540 = vmatprep.subr.mxu0 %v501
    %541 = vmatpush1.msra.mxu0 %v500
    %542 = vmatprep.subr.mxu0 %v503
    %543 = vmatpush1.msra.mxu0 %v502
    %544 = vmatprep.subr.mxu0 %v505
    %545 = vmatpush1.msra.mxu0 %v504
    %546 = vmatprep.subr.mxu0 %v507
    %547 = vmatpush1.msra.mxu0 %v506
    %548 = vmatprep.subr.mxu0 %v509
    %549 = vmatpush1.msra.mxu0 %v508
    %550 = vmatprep.subr.mxu0 %v511
    %551 = vmatpush1.msra.mxu0 %v510
    %552 = vmatprep.subr.mxu0 %v513
    %553 = vmatpush1.msra.mxu0 %v512
    %554 = vmatprep.subr.mxu0 %v515
    %555 = vmatpush1.msra.mxu0 %v514
    %556 = vmatprep.subr.mxu0 %v517
    %557 = vmatpush1.msra.mxu0 %v516
    %558 = vmatprep.subr.mxu0 %v519
    %559 = vmatpush1.msra.mxu0 %v518
    %560 = vmatprep.subr.mxu0 0.0
    %561 = vmatpush1.msra.mxu0 0.0
    %562 = vmatprep.subr.mxu0 0.0
    %563 = vmatpush1.msra.mxu0 0.0
    %564 = vmatprep.subr.mxu0 0.0
    %565 = vmatpush1.msra.mxu0 0.0
    %566 = vmatprep.subr.mxu0 0.0
    %567 = vmatpush1.msra.mxu0 0.0
    %568 = vmatprep.subr.mxu0 0.0
    %569 = vmatpush1.msra.mxu0 0.0
    %570 = vmatprep.subr.mxu0 0.0
    %571 = vmatpush1.msra.mxu0 0.0
    %572 = vmatprep.subr.mxu0 0.0
    %573 = vmatpush1.msra.mxu0 0.0
    %574 = vmatprep.subr.mxu0 0.0
    %575 = vmatpush1.msra.mxu0 0.0
    %576 = vmatprep.subr.mxu0 0.0
    %577 = vmatpush1.msra.mxu0 0.0
    %578 = vmatprep.subr.mxu0 0.0
    %579 = vmatpush1.msra.mxu0 0.0
    %580 = vmatprep.subr.mxu0 0.0
    %581 = vmatpush1.msra.mxu0 0.0
    %582 = vmatprep.subr.mxu0 0.0
    %583 = vmatpush1.msra.mxu0 0.0
    %584 = vmatprep.mubr.f32.mxu0 %v264
    %585 = vmatmul.mubr.f32.gmra.mrb[0].mxu0 %v216
    %v586 = vpop.f32.mrb[0].mxu0
    %v587 = vadd.f32 0.0, %v586
    %v588 = vpop.f32.mrb[0].mxu0
    %v589 = vadd.f32 0.0, %v588
    %590 = vmatprep.mubr.f32.mxu0 %v267
    %591 = vmatmul.mubr.f32.gmra.mrb[0].mxu0 %v218
    %v592 = vpop.f32.mrb[0].mxu0
    %v593 = vadd.f32 0.0, %v592
    %v594 = vpop.f32.mrb[0].mxu0
    %v595 = vadd.f32 0.0, %v594
    %596 = vmatprep.mubr.f32.mxu0 %v270
    %597 = vmatmul.mubr.f32.gmra.mrb[0].mxu0 %v220
    %v598 = vpop.f32.mrb[0].mxu0
    %v599 = vadd.f32 0.0, %v598
    %v600 = vpop.f32.mrb[0].mxu0
    %v601 = vadd.f32 0.0, %v600
    %602 = vdwg.mxu0
    %vm603 = vcmask 162816
    %v605 = vsel %vm603, %v49, 0
    %v608 = vsel %vm603, %v50, 0
    %v611 = vsel %vm603, %v51, 0
    %vm613 = vcmask 1043456
    %v615 = vsel %vm613, %v475, 0
    %v618 = vsel %vm613, %v477, 0
    %620 = vmatprep.subr.mxu0 %v465
    %621 = vmatpush1.msra.mxu0 %v463
    %622 = vmatprep.subr.mxu0 %v471
    %623 = vmatpush1.msra.mxu0 %v469
    %624 = vmatprep.subr.mxu0 %v618
    %625 = vmatpush1.msra.mxu0 %v615
    %626 = vmatprep.subr.mxu0 0.0
    %627 = vmatpush1.msra.mxu0 0.0
    %628 = vmatprep.subr.mxu0 0.0
    %629 = vmatpush1.msra.mxu0 0.0
    %630 = vmatprep.subr.mxu0 0.0
    %631 = vmatpush1.msra.mxu0 0.0
    %632 = vmatprep.subr.mxu0 0.0
    %633 = vmatpush1.msra.mxu0 0.0
    %634 = vmatprep.subr.mxu0 0.0
    %635 = vmatpush1.msra.mxu0 0.0
    %636 = vmatprep.subr.mxu0 0.0
    %637 = vmatpush1.msra.mxu0 0.0
    %638 = vmatprep.subr.mxu0 0.0
    %639 = vmatpush1.msra.mxu0 0.0
    %640 = vmatprep.subr.mxu0 0.0
    %641 = vmatpush1.msra.mxu0 0.0
    %642 = vmatprep.subr.mxu0 0.0
    %643 = vmatpush1.msra.mxu0 0.0
    %644 = vmatprep.subr.mxu0 0.0
    %645 = vmatpush1.msra.mxu0 0.0
    %646 = vmatprep.subr.mxu0 0.0
    %647 = vmatpush1.msra.mxu0 0.0
    %648 = vmatprep.subr.mxu0 0.0
    %649 = vmatpush1.msra.mxu0 0.0
    %650 = vmatprep.subr.mxu0 0.0
    %651 = vmatpush1.msra.mxu0 0.0
    %652 = vmatprep.subr.mxu0 0.0
    %653 = vmatpush1.msra.mxu0 0.0
    %654 = vmatprep.subr.mxu0 0.0
    %655 = vmatpush1.msra.mxu0 0.0
    %656 = vmatprep.subr.mxu0 0.0
    %657 = vmatpush1.msra.mxu0 0.0
    %658 = vmatprep.subr.mxu0 0.0
    %659 = vmatpush1.msra.mxu0 0.0
    %660 = vmatprep.subr.mxu0 0.0
    %661 = vmatpush1.msra.mxu0 0.0
    %662 = vmatprep.subr.mxu0 0.0
    %663 = vmatpush1.msra.mxu0 0.0
    %664 = vmatprep.subr.mxu0 0.0
    %665 = vmatpush1.msra.mxu0 0.0
    %666 = vmatprep.subr.mxu0 0.0
    %667 = vmatpush1.msra.mxu0 0.0
    %668 = vmatprep.subr.mxu0 0.0
    %669 = vmatpush1.msra.mxu0 0.0
    %670 = vmatprep.subr.mxu0 0.0
    %671 = vmatpush1.msra.mxu0 0.0
    %672 = vmatprep.subr.mxu0 0.0
    %673 = vmatpush1.msra.mxu0 0.0
    %674 = vmatprep.subr.mxu0 0.0
    %675 = vmatpush1.msra.mxu0 0.0
    %676 = vmatprep.subr.mxu0 0.0
    %677 = vmatpush1.msra.mxu0 0.0
    %678 = vmatprep.subr.mxu0 0.0
    %679 = vmatpush1.msra.mxu0 0.0
    %680 = vmatprep.subr.mxu0 0.0
    %681 = vmatpush1.msra.mxu0 0.0
    %682 = vmatprep.subr.mxu0 0.0
    %683 = vmatpush1.msra.mxu0 0.0
    %684 = vmatprep.mubr.f32.mxu0 0.0
    %685 = vmatmul.mubr.f32.gmra.mrb[0].mxu0 %v605
    %v686 = vpop.f32.mrb[0].mxu0
    %v687 = vadd.f32 0.0, %v686
    %v688 = vpop.f32.mrb[0].mxu0
    %v689 = vadd.f32 0.0, %v688
    %690 = vmatprep.mubr.f32.mxu0 0.0
    %691 = vmatmul.mubr.f32.gmra.mrb[0].mxu0 %v608
    %v692 = vpop.f32.mrb[0].mxu0
    %v693 = vadd.f32 0.0, %v692
    %v694 = vpop.f32.mrb[0].mxu0
    %v695 = vadd.f32 0.0, %v694
    %696 = vmatprep.mubr.f32.mxu0 0.0
    %697 = vmatmul.mubr.f32.gmra.mrb[0].mxu0 %v611
    %v698 = vpop.f32.mrb[0].mxu0
    %v699 = vadd.f32 0.0, %v698
    %v700 = vpop.f32.mrb[0].mxu0
    %v701 = vadd.f32 0.0, %v700
    %702 = vdwg.mxu0
    %v704 = vsel %vm603, %v45, 0
    %v707 = vsel %vm603, %v46, 0
    %v710 = vsel %vm603, %v47, 0
    %v713 = vsel %vm613, %v351, 0
    %v716 = vsel %vm613, %v353, 0
    %718 = vmatprep.subr.mxu0 %v341
    %719 = vmatpush1.msra.mxu0 %v339
    %720 = vmatprep.subr.mxu0 %v347
    %721 = vmatpush1.msra.mxu0 %v345
    %722 = vmatprep.subr.mxu0 %v716
    %723 = vmatpush1.msra.mxu0 %v713
    %724 = vmatprep.subr.mxu0 0.0
    %725 = vmatpush1.msra.mxu0 0.0
    %726 = vmatprep.subr.mxu0 0.0
    %727 = vmatpush1.msra.mxu0 0.0
    %728 = vmatprep.subr.mxu0 0.0
    %729 = vmatpush1.msra.mxu0 0.0
    %730 = vmatprep.subr.mxu0 0.0
    %731 = vmatpush1.msra.mxu0 0.0
    %732 = vmatprep.subr.mxu0 0.0
    %733 = vmatpush1.msra.mxu0 0.0
    %734 = vmatprep.subr.mxu0 0.0
    %735 = vmatpush1.msra.mxu0 0.0
    %736 = vmatprep.subr.mxu0 0.0
    %737 = vmatpush1.msra.mxu0 0.0
    %738 = vmatprep.subr.mxu0 0.0
    %739 = vmatpush1.msra.mxu0 0.0
    %740 = vmatprep.subr.mxu0 0.0
    %741 = vmatpush1.msra.mxu0 0.0
    %742 = vmatprep.subr.mxu0 0.0
    %743 = vmatpush1.msra.mxu0 0.0
    %744 = vmatprep.subr.mxu0 0.0
    %745 = vmatpush1.msra.mxu0 0.0
    %746 = vmatprep.subr.mxu0 0.0
    %747 = vmatpush1.msra.mxu0 0.0
    %748 = vmatprep.subr.mxu0 0.0
    %749 = vmatpush1.msra.mxu0 0.0
    %750 = vmatprep.subr.mxu0 0.0
    %751 = vmatpush1.msra.mxu0 0.0
    %752 = vmatprep.subr.mxu0 0.0
    %753 = vmatpush1.msra.mxu0 0.0
    %754 = vmatprep.subr.mxu0 0.0
    %755 = vmatpush1.msra.mxu0 0.0
    %756 = vmatprep.subr.mxu0 0.0
    %757 = vmatpush1.msra.mxu0 0.0
    %758 = vmatprep.subr.mxu0 0.0
    %759 = vmatpush1.msra.mxu0 0.0
    %760 = vmatprep.subr.mxu0 0.0
    %761 = vmatpush1.msra.mxu0 0.0
    %762 = vmatprep.subr.mxu0 0.0
    %763 = vmatpush1.msra.mxu0 0.0
    %764 = vmatprep.subr.mxu0 0.0
    %765 = vmatpush1.msra.mxu0 0.0
    %766 = vmatprep.subr.mxu0 0.0
    %767 = vmatpush1.msra.mxu0 0.0
    %768 = vmatprep.subr.mxu0 0.0
    %769 = vmatpush1.msra.mxu0 0.0
    %770 = vmatprep.subr.mxu0 0.0
    %771 = vmatpush1.msra.mxu0 0.0
    %772 = vmatprep.subr.mxu0 0.0
    %773 = vmatpush1.msra.mxu0 0.0
    %774 = vmatprep.subr.mxu0 0.0
    %775 = vmatpush1.msra.mxu0 0.0
    %776 = vmatprep.subr.mxu0 0.0
    %777 = vmatpush1.msra.mxu0 0.0
    %778 = vmatprep.subr.mxu0 0.0
    %779 = vmatpush1.msra.mxu0 0.0
    %780 = vmatprep.subr.mxu0 0.0
    %781 = vmatpush1.msra.mxu0 0.0
    %782 = vmatprep.mubr.f32.mxu0 0.0
    %783 = vmatmul.mubr.f32.gmra.mrb[0].mxu0 %v704
    %v784 = vpop.f32.mrb[0].mxu0
    %v785 = vadd.f32 %v687, %v784
    %v786 = vpop.f32.mrb[0].mxu0
    %v787 = vadd.f32 %v689, %v786
    %788 = vmatprep.mubr.f32.mxu0 0.0
    %789 = vmatmul.mubr.f32.gmra.mrb[0].mxu0 %v707
    %v790 = vpop.f32.mrb[0].mxu0
    %v791 = vadd.f32 %v693, %v790
    %v792 = vpop.f32.mrb[0].mxu0
    %v793 = vadd.f32 %v695, %v792
    %794 = vmatprep.mubr.f32.mxu0 0.0
    %795 = vmatmul.mubr.f32.gmra.mrb[0].mxu0 %v710
    %v796 = vpop.f32.mrb[0].mxu0
    %v797 = vadd.f32 %v699, %v796
    %v798 = vpop.f32.mrb[0].mxu0
    %v799 = vadd.f32 %v701, %v798
    %800 = vdwg.mxu0
    %v802 = vsel %vm603, %v53, 0
    %v805 = vsel %vm603, %v54, 0
    %v808 = vsel %vm603, %v55, 0
    %v811 = vsel %vm613, %v599, 0
    %v814 = vsel %vm613, %v601, 0
    %816 = vmatprep.subr.mxu0 %v589
    %817 = vmatpush1.msra.mxu0 %v587
    %818 = vmatprep.subr.mxu0 %v595
    %819 = vmatpush1.msra.mxu0 %v593
    %820 = vmatprep.subr.mxu0 %v814
    %821 = vmatpush1.msra.mxu0 %v811
    %822 = vmatprep.subr.mxu0 0.0
    %823 = vmatpush1.msra.mxu0 0.0
    %824 = vmatprep.subr.mxu0 0.0
    %825 = vmatpush1.msra.mxu0 0.0
    %826 = vmatprep.subr.mxu0 0.0
    %827 = vmatpush1.msra.mxu0 0.0
    %828 = vmatprep.subr.mxu0 0.0
    %829 = vmatpush1.msra.mxu0 0.0
    %830 = vmatprep.subr.mxu0 0.0
    %831 = vmatpush1.msra.mxu0 0.0
    %832 = vmatprep.subr.mxu0 0.0
    %833 = vmatpush1.msra.mxu0 0.0
    %834 = vmatprep.subr.mxu0 0.0
    %835 = vmatpush1.msra.mxu0 0.0
    %836 = vmatprep.subr.mxu0 0.0
    %837 = vmatpush1.msra.mxu0 0.0
    %838 = vmatprep.subr.mxu0 0.0
    %839 = vmatpush1.msra.mxu0 0.0
    %840 = vmatprep.subr.mxu0 0.0
    %841 = vmatpush1.msra.mxu0 0.0
    %842 = vmatprep.subr.mxu0 0.0
    %843 = vmatpush1.msra.mxu0 0.0
    %844 = vmatprep.subr.mxu0 0.0
    %845 = vmatpush1.msra.mxu0 0.0
    %846 = vmatprep.subr.mxu0 0.0
    %847 = vmatpush1.msra.mxu0 0.0
    %848 = vmatprep.subr.mxu0 0.0
    %849 = vmatpush1.msra.mxu0 0.0
    %850 = vmatprep.subr.mxu0 0.0
    %851 = vmatpush1.msra.mxu0 0.0
    %852 = vmatprep.subr.mxu0 0.0
    %853 = vmatpush1.msra.mxu0 0.0
    %854 = vmatprep.subr.mxu0 0.0
    %855 = vmatpush1.msra.mxu0 0.0
    %856 = vmatprep.subr.mxu0 0.0
    %857 = vmatpush1.msra.mxu0 0.0
    %858 = vmatprep.subr.mxu0 0.0
    %859 = vmatpush1.msra.mxu0 0.0
    %860 = vmatprep.subr.mxu0 0.0
    %861 = vmatpush1.msra.mxu0 0.0
    %862 = vmatprep.subr.mxu0 0.0
    %863 = vmatpush1.msra.mxu0 0.0
    %864 = vmatprep.subr.mxu0 0.0
    %865 = vmatpush1.msra.mxu0 0.0
    %866 = vmatprep.subr.mxu0 0.0
    %867 = vmatpush1.msra.mxu0 0.0
    %868 = vmatprep.subr.mxu0 0.0
    %869 = vmatpush1.msra.mxu0 0.0
    %870 = vmatprep.subr.mxu0 0.0
    %871 = vmatpush1.msra.mxu0 0.0
    %872 = vmatprep.subr.mxu0 0.0
    %873 = vmatpush1.msra.mxu0 0.0
    %874 = vmatprep.subr.mxu0 0.0
    %875 = vmatpush1.msra.mxu0 0.0
    %876 = vmatprep.subr.mxu0 0.0
    %877 = vmatpush1.msra.mxu0 0.0
    %878 = vmatprep.subr.mxu0 0.0
    %879 = vmatpush1.msra.mxu0 0.0
    %880 = vmatprep.mubr.f32.mxu0 0.0
    %881 = vmatmul.mubr.f32.gmra.mrb[0].mxu0 %v802
    %v882 = vpop.f32.mrb[0].mxu0
    %v883 = vadd.f32 0.0, %v882
    %v884 = vpop.f32.mrb[0].mxu0
    %v885 = vadd.f32 0.0, %v884
    %886 = vmatprep.mubr.f32.mxu0 0.0
    %887 = vmatmul.mubr.f32.gmra.mrb[0].mxu0 %v805
    %v888 = vpop.f32.mrb[0].mxu0
    %v889 = vadd.f32 0.0, %v888
    %v890 = vpop.f32.mrb[0].mxu0
    %v891 = vadd.f32 0.0, %v890
    %892 = vmatprep.mubr.f32.mxu0 0.0
    %893 = vmatmul.mubr.f32.gmra.mrb[0].mxu0 %v808
    %v894 = vpop.f32.mrb[0].mxu0
    %v895 = vadd.f32 0.0, %v894
    %v896 = vpop.f32.mrb[0].mxu0
    %v897 = vadd.f32 0.0, %v896
    %898 = vdwg.mxu0
    %v899 = vadd.f32 %v785, %v883
    %v900 = vadd.f32 %v787, %v885
    %v901 = vadd.f32 %v791, %v889
    %v902 = vadd.f32 %v793, %v891
    %v903 = vadd.f32 %v797, %v895
    %v904 = vadd.f32 %v799, %v897
    %v905 = vld [vmem:[%s6] sm:$0xff]
    %v906 = vld [vmem:[%s6 + $0x8] sm:$0xff]
    %v907 = vld [vmem:[%s6 + $0x10] sm:$0xff]
    %v908 = vld [vmem:[%s6 + $0x18] sm:$0xff]
    %v909 = vld [vmem:[%s6 + $0x20] sm:$0xf]
    %v910 = vld [vmem:[%s6 + $0x28] sm:$0xf]
    %v911 = vadd.f32 %v899, %v905
    %v912 = vadd.f32 %v900, %v906
    %v913 = vadd.f32 %v901, %v907
    %v914 = vadd.f32 %v902, %v908
    %v915 = vadd.f32 %v903, %v909
    %v916 = vadd.f32 %v904, %v910
    %v917 = vmax.f32 %v911, 0.0
    %v918 = vmax.f32 %v912, 0.0
    %v919 = vmax.f32 %v913, 0.0
    %v920 = vmax.f32 %v914, 0.0
    %v921 = vmax.f32 %v915, 0.0
    %v922 = vmax.f32 %v916, 0.0
    %s923 = scalar_lea.vmem %s5, 960
    %v924 = vld [vmem:[%s923] sm:$0xff]
    %v925 = vld [vmem:[%s923 + $0x8] sm:$0xff]
    %v926 = vld [vmem:[%s923 + $0x10] sm:$0xff]
    %v927 = vld [vmem:[%s923 + $0x18] sm:$0xff]
    %v928 = vld [vmem:[%s923 + $0x20] sm:$0xff]
    %v929 = vld [vmem:[%s923 + $0x28] sm:$0xff]
    %v930 = vld [vmem:[%s923 + $0x30] sm:$0xff]
    %v931 = vld [vmem:[%s923 + $0x38] sm:$0xff]
    %v932 = vld [vmem:[%s923 + $0x40] sm:$0xff]
    %v933 = vld [vmem:[%s923 + $0x48] sm:$0xff]
    %v934 = vld [vmem:[%s923 + $0x50] sm:$0xff]
    %v935 = vld [vmem:[%s923 + $0x58] sm:$0xff]
    %v936 = vld [vmem:[%s923 + $0x60] sm:$0xff]
    %v937 = vld [vmem:[%s923 + $0x68] sm:$0xff]
    %v938 = vld [vmem:[%s923 + $0x70] sm:$0xff]
    %v939 = vld [vmem:[%s923 + $0x78] sm:$0xff]
    %v940 = vld [vmem:[%s923 + $0x80] sm:$0xff]
    %v941 = vld [vmem:[%s923 + $0x88] sm:$0xff]
    %v942 = vld [vmem:[%s923 + $0x90] sm:$0xff]
    %v943 = vld [vmem:[%s923 + $0x98] sm:$0xff]
    %v944 = vld [vmem:[%s923 + $0xa0] sm:$0xff]
    %v945 = vld [vmem:[%s923 + $0xa8] sm:$0xff]
    %v946 = vld [vmem:[%s923 + $0xb0] sm:$0xff]
    %v947 = vld [vmem:[%s923 + $0xb8] sm:$0xff]
    %v948 = vld [vmem:[%s923 + $0xc0] sm:$0xff]
    %v949 = vld [vmem:[%s923 + $0xc8] sm:$0xff]
    %v950 = vld [vmem:[%s923 + $0xd0] sm:$0xff]
    %v951 = vld [vmem:[%s923 + $0xd8] sm:$0xff]
    %v952 = vld [vmem:[%s923 + $0xe0] sm:$0xff]
    %v953 = vld [vmem:[%s923 + $0xe8] sm:$0xff]
    %v954 = vld [vmem:[%s923 + $0xf0] sm:$0xff]
    %v955 = vld [vmem:[%s923 + $0xf8] sm:$0xff]
    %v956 = vld [vmem:[%s923 + $0x100] sm:$0xff]
    %v957 = vld [vmem:[%s923 + $0x108] sm:$0xff]
    %v958 = vld [vmem:[%s923 + $0x110] sm:$0xff]
    %v959 = vld [vmem:[%s923 + $0x118] sm:$0xff]
    %v960 = vld [vmem:[%s923 + $0x120] sm:$0xff]
    %v961 = vld [vmem:[%s923 + $0x128] sm:$0xff]
    %v962 = vld [vmem:[%s923 + $0x130] sm:$0xff]
    %v963 = vld [vmem:[%s923 + $0x138] sm:$0xff]
    %v965 = vsel %vm262, %v918, 0
    %v968 = vsel %vm262, %v920, 0
    %v971 = vsel %vm262, %v922, 0
    %973 = vmatprep.subr.mxu0 %v925
    %974 = vmatpush1.msra.mxu0 %v924
    %975 = vmatprep.subr.mxu0 %v927
    %976 = vmatpush1.msra.mxu0 %v926
    %977 = vmatprep.subr.mxu0 %v929
    %978 = vmatpush1.msra.mxu0 %v928
    %979 = vmatprep.subr.mxu0 %v931
    %980 = vmatpush1.msra.mxu0 %v930
    %981 = vmatprep.subr.mxu0 %v933
    %982 = vmatpush1.msra.mxu0 %v932
    %983 = vmatprep.subr.mxu0 %v935
    %984 = vmatpush1.msra.mxu0 %v934
    %985 = vmatprep.subr.mxu0 %v937
    %986 = vmatpush1.msra.mxu0 %v936
    %987 = vmatprep.subr.mxu0 %v939
    %988 = vmatpush1.msra.mxu0 %v938
    %989 = vmatprep.subr.mxu0 %v941
    %990 = vmatpush1.msra.mxu0 %v940
    %991 = vmatprep.subr.mxu0 %v943
    %992 = vmatpush1.msra.mxu0 %v942
    %993 = vmatprep.subr.mxu0 %v945
    %994 = vmatpush1.msra.mxu0 %v944
    %995 = vmatprep.subr.mxu0 %v947
    %996 = vmatpush1.msra.mxu0 %v946
    %997 = vmatprep.subr.mxu0 %v949
    %998 = vmatpush1.msra.mxu0 %v948
    %999 = vmatprep.subr.mxu0 %v951
    %1000 = vmatpush1.msra.mxu0 %v950
    %1001 = vmatprep.subr.mxu0 %v953
    %1002 = vmatpush1.msra.mxu0 %v952
    %1003 = vmatprep.subr.mxu0 %v955
    %1004 = vmatpush1.msra.mxu0 %v954
    %1005 = vmatprep.subr.mxu0 %v957
    %1006 = vmatpush1.msra.mxu0 %v956
    %1007 = vmatprep.subr.mxu0 %v959
    %1008 = vmatpush1.msra.mxu0 %v958
    %1009 = vmatprep.subr.mxu0 %v961
    %1010 = vmatpush1.msra.mxu0 %v960
    %1011 = vmatprep.subr.mxu0 %v963
    %1012 = vmatpush1.msra.mxu0 %v962
    %1013 = vmatprep.subr.mxu0 0.0
    %1014 = vmatpush1.msra.mxu0 0.0
    %1015 = vmatprep.subr.mxu0 0.0
    %1016 = vmatpush1.msra.mxu0 0.0
    %1017 = vmatprep.subr.mxu0 0.0
    %1018 = vmatpush1.msra.mxu0 0.0
    %1019 = vmatprep.subr.mxu0 0.0
    %1020 = vmatpush1.msra.mxu0 0.0
    %1021 = vmatprep.subr.mxu0 0.0
    %1022 = vmatpush1.msra.mxu0 0.0
    %1023 = vmatprep.subr.mxu0 0.0
    %1024 = vmatpush1.msra.mxu0 0.0
    %1025 = vmatprep.subr.mxu0 0.0
    %1026 = vmatpush1.msra.mxu0 0.0
    %1027 = vmatprep.subr.mxu0 0.0
    %1028 = vmatpush1.msra.mxu0 0.0
    %1029 = vmatprep.subr.mxu0 0.0
    %1030 = vmatpush1.msra.mxu0 0.0
    %1031 = vmatprep.subr.mxu0 0.0
    %1032 = vmatpush1.msra.mxu0 0.0
    %1033 = vmatprep.subr.mxu0 0.0
    %1034 = vmatpush1.msra.mxu0 0.0
    %1035 = vmatprep.subr.mxu0 0.0
    %1036 = vmatpush1.msra.mxu0 0.0
    %1037 = vmatprep.mubr.f32.mxu0 %v965
    %1038 = vmatmul.mubr.f32.gmra.mrb[0].mxu0 %v917
    %v1039 = vpop.f32.mrb[0].mxu0
    %v1040 = vadd.f32 0.0, %v1039
    %v1041 = vpop.f32.mrb[0].mxu0
    %v1042 = vadd.f32 0.0, %v1041
    %1043 = vmatprep.mubr.f32.mxu0 %v968
    %1044 = vmatmul.mubr.f32.gmra.mrb[0].mxu0 %v919
    %v1045 = vpop.f32.mrb[0].mxu0
    %v1046 = vadd.f32 0.0, %v1045
    %v1047 = vpop.f32.mrb[0].mxu0
    %v1048 = vadd.f32 0.0, %v1047
    %1049 = vmatprep.mubr.f32.mxu0 %v971
    %1050 = vmatmul.mubr.f32.gmra.mrb[0].mxu0 %v921
    %v1051 = vpop.f32.mrb[0].mxu0
    %v1052 = vadd.f32 0.0, %v1051
    %v1053 = vpop.f32.mrb[0].mxu0
    %v1054 = vadd.f32 0.0, %v1053
    %1055 = vdwg.mxu0
    %s1056 = scalar_lea.vmem %s5, 1280
    %v1057 = vld [vmem:[%s1056] sm:$0xff]
    %v1058 = vld [vmem:[%s1056 + $0x8] sm:$0xff]
    %v1059 = vld [vmem:[%s1056 + $0x10] sm:$0xff]
    %v1060 = vld [vmem:[%s1056 + $0x18] sm:$0xff]
    %v1061 = vld [vmem:[%s1056 + $0x20] sm:$0xff]
    %v1062 = vld [vmem:[%s1056 + $0x28] sm:$0xff]
    %v1063 = vld [vmem:[%s1056 + $0x30] sm:$0xff]
    %v1064 = vld [vmem:[%s1056 + $0x38] sm:$0xff]
    %v1065 = vld [vmem:[%s1056 + $0x40] sm:$0xff]
    %v1066 = vld [vmem:[%s1056 + $0x48] sm:$0xff]
    %v1067 = vld [vmem:[%s1056 + $0x50] sm:$0xff]
    %v1068 = vld [vmem:[%s1056 + $0x58] sm:$0xff]
    %v1069 = vld [vmem:[%s1056 + $0x60] sm:$0xff]
    %v1070 = vld [vmem:[%s1056 + $0x68] sm:$0xff]
    %v1071 = vld [vmem:[%s1056 + $0x70] sm:$0xff]
    %v1072 = vld [vmem:[%s1056 + $0x78] sm:$0xff]
    %v1073 = vld [vmem:[%s1056 + $0x80] sm:$0xff]
    %v1074 = vld [vmem:[%s1056 + $0x88] sm:$0xff]
    %v1075 = vld [vmem:[%s1056 + $0x90] sm:$0xff]
    %v1076 = vld [vmem:[%s1056 + $0x98] sm:$0xff]
    %v1077 = vld [vmem:[%s1056 + $0xa0] sm:$0xff]
    %v1078 = vld [vmem:[%s1056 + $0xa8] sm:$0xff]
    %v1079 = vld [vmem:[%s1056 + $0xb0] sm:$0xff]
    %v1080 = vld [vmem:[%s1056 + $0xb8] sm:$0xff]
    %v1081 = vld [vmem:[%s1056 + $0xc0] sm:$0xff]
    %v1082 = vld [vmem:[%s1056 + $0xc8] sm:$0xff]
    %v1083 = vld [vmem:[%s1056 + $0xd0] sm:$0xff]
    %v1084 = vld [vmem:[%s1056 + $0xd8] sm:$0xff]
    %v1085 = vld [vmem:[%s1056 + $0xe0] sm:$0xff]
    %v1086 = vld [vmem:[%s1056 + $0xe8] sm:$0xff]
    %v1087 = vld [vmem:[%s1056 + $0xf0] sm:$0xff]
    %v1088 = vld [vmem:[%s1056 + $0xf8] sm:$0xff]
    %v1089 = vld [vmem:[%s1056 + $0x100] sm:$0xff]
    %v1090 = vld [vmem:[%s1056 + $0x108] sm:$0xff]
    %v1091 = vld [vmem:[%s1056 + $0x110] sm:$0xff]
    %v1092 = vld [vmem:[%s1056 + $0x118] sm:$0xff]
    %v1093 = vld [vmem:[%s1056 + $0x120] sm:$0xff]
    %v1094 = vld [vmem:[%s1056 + $0x128] sm:$0xff]
    %v1095 = vld [vmem:[%s1056 + $0x130] sm:$0xff]
    %v1096 = vld [vmem:[%s1056 + $0x138] sm:$0xff]
    %1097 = vmatprep.subr.mxu0 %v1058
    %1098 = vmatpush1.msra.mxu0 %v1057
    %1099 = vmatprep.subr.mxu0 %v1060
    %1100 = vmatpush1.msra.mxu0 %v1059
    %1101 = vmatprep.subr.mxu0 %v1062
    %1102 = vmatpush1.msra.mxu0 %v1061
    %1103 = vmatprep.subr.mxu0 %v1064
    %1104 = vmatpush1.msra.mxu0 %v1063
    %1105 = vmatprep.subr.mxu0 %v1066
    %1106 = vmatpush1.msra.mxu0 %v1065
    %1107 = vmatprep.subr.mxu0 %v1068
    %1108 = vmatpush1.msra.mxu0 %v1067
    %1109 = vmatprep.subr.mxu0 %v1070
    %1110 = vmatpush1.msra.mxu0 %v1069
    %1111 = vmatprep.subr.mxu0 %v1072
    %1112 = vmatpush1.msra.mxu0 %v1071
    %1113 = vmatprep.subr.mxu0 %v1074
    %1114 = vmatpush1.msra.mxu0 %v1073
    %1115 = vmatprep.subr.mxu0 %v1076
    %1116 = vmatpush1.msra.mxu0 %v1075
    %1117 = vmatprep.subr.mxu0 %v1078
    %1118 = vmatpush1.msra.mxu0 %v1077
    %1119 = vmatprep.subr.mxu0 %v1080
    %1120 = vmatpush1.msra.mxu0 %v1079
    %1121 = vmatprep.subr.mxu0 %v1082
    %1122 = vmatpush1.msra.mxu0 %v1081
    %1123 = vmatprep.subr.mxu0 %v1084
    %1124 = vmatpush1.msra.mxu0 %v1083
    %1125 = vmatprep.subr.mxu0 %v1086
    %1126 = vmatpush1.msra.mxu0 %v1085
    %1127 = vmatprep.subr.mxu0 %v1088
    %1128 = vmatpush1.msra.mxu0 %v1087
    %1129 = vmatprep.subr.mxu0 %v1090
    %1130 = vmatpush1.msra.mxu0 %v1089
    %1131 = vmatprep.subr.mxu0 %v1092
    %1132 = vmatpush1.msra.mxu0 %v1091
    %1133 = vmatprep.subr.mxu0 %v1094
    %1134 = vmatpush1.msra.mxu0 %v1093
    %1135 = vmatprep.subr.mxu0 %v1096
    %1136 = vmatpush1.msra.mxu0 %v1095
    %1137 = vmatprep.subr.mxu0 0.0
    %1138 = vmatpush1.msra.mxu0 0.0
    %1139 = vmatprep.subr.mxu0 0.0
    %1140 = vmatpush1.msra.mxu0 0.0
    %1141 = vmatprep.subr.mxu0 0.0
    %1142 = vmatpush1.msra.mxu0 0.0
    %1143 = vmatprep.subr.mxu0 0.0
    %1144 = vmatpush1.msra.mxu0 0.0
    %1145 = vmatprep.subr.mxu0 0.0
    %1146 = vmatpush1.msra.mxu0 0.0
    %1147 = vmatprep.subr.mxu0 0.0
    %1148 = vmatpush1.msra.mxu0 0.0
    %1149 = vmatprep.subr.mxu0 0.0
    %1150 = vmatpush1.msra.mxu0 0.0
    %1151 = vmatprep.subr.mxu0 0.0
    %1152 = vmatpush1.msra.mxu0 0.0
    %1153 = vmatprep.subr.mxu0 0.0
    %1154 = vmatpush1.msra.mxu0 0.0
    %1155 = vmatprep.subr.mxu0 0.0
    %1156 = vmatpush1.msra.mxu0 0.0
    %1157 = vmatprep.subr.mxu0 0.0
    %1158 = vmatpush1.msra.mxu0 0.0
    %1159 = vmatprep.subr.mxu0 0.0
    %1160 = vmatpush1.msra.mxu0 0.0
    %1161 = vmatprep.mubr.f32.mxu0 %v965
    %1162 = vmatmul.mubr.f32.gmra.mrb[0].mxu0 %v917
    %v1163 = vpop.f32.mrb[0].mxu0
    %v1164 = vadd.f32 0.0, %v1163
    %v1165 = vpop.f32.mrb[0].mxu0
    %v1166 = vadd.f32 0.0, %v1165
    %1167 = vmatprep.mubr.f32.mxu0 %v968
    %1168 = vmatmul.mubr.f32.gmra.mrb[0].mxu0 %v919
    %v1169 = vpop.f32.mrb[0].mxu0
    %v1170 = vadd.f32 0.0, %v1169
    %v1171 = vpop.f32.mrb[0].mxu0
    %v1172 = vadd.f32 0.0, %v1171
    %1173 = vmatprep.mubr.f32.mxu0 %v971
    %1174 = vmatmul.mubr.f32.gmra.mrb[0].mxu0 %v921
    %v1175 = vpop.f32.mrb[0].mxu0
    %v1176 = vadd.f32 0.0, %v1175
    %v1177 = vpop.f32.mrb[0].mxu0
    %v1178 = vadd.f32 0.0, %v1177
    %1179 = vdwg.mxu0
    %s1180 = scalar_lea.vmem %s5, 1600
    %v1181 = vld [vmem:[%s1180] sm:$0xff]
    %v1182 = vld [vmem:[%s1180 + $0x8] sm:$0xff]
    %v1183 = vld [vmem:[%s1180 + $0x10] sm:$0xff]
    %v1184 = vld [vmem:[%s1180 + $0x18] sm:$0xff]
    %v1185 = vld [vmem:[%s1180 + $0x20] sm:$0xff]
    %v1186 = vld [vmem:[%s1180 + $0x28] sm:$0xff]
    %v1187 = vld [vmem:[%s1180 + $0x30] sm:$0xff]
    %v1188 = vld [vmem:[%s1180 + $0x38] sm:$0xff]
    %v1189 = vld [vmem:[%s1180 + $0x40] sm:$0xff]
    %v1190 = vld [vmem:[%s1180 + $0x48] sm:$0xff]
    %v1191 = vld [vmem:[%s1180 + $0x50] sm:$0xff]
    %v1192 = vld [vmem:[%s1180 + $0x58] sm:$0xff]
    %v1193 = vld [vmem:[%s1180 + $0x60] sm:$0xff]
    %v1194 = vld [vmem:[%s1180 + $0x68] sm:$0xff]
    %v1195 = vld [vmem:[%s1180 + $0x70] sm:$0xff]
    %v1196 = vld [vmem:[%s1180 + $0x78] sm:$0xff]
    %v1197 = vld [vmem:[%s1180 + $0x80] sm:$0xff]
    %v1198 = vld [vmem:[%s1180 + $0x88] sm:$0xff]
    %v1199 = vld [vmem:[%s1180 + $0x90] sm:$0xff]
    %v1200 = vld [vmem:[%s1180 + $0x98] sm:$0xff]
    %v1201 = vld [vmem:[%s1180 + $0xa0] sm:$0xff]
    %v1202 = vld [vmem:[%s1180 + $0xa8] sm:$0xff]
    %v1203 = vld [vmem:[%s1180 + $0xb0] sm:$0xff]
    %v1204 = vld [vmem:[%s1180 + $0xb8] sm:$0xff]
    %v1205 = vld [vmem:[%s1180 + $0xc0] sm:$0xff]
    %v1206 = vld [vmem:[%s1180 + $0xc8] sm:$0xff]
    %v1207 = vld [vmem:[%s1180 + $0xd0] sm:$0xff]
    %v1208 = vld [vmem:[%s1180 + $0xd8] sm:$0xff]
    %v1209 = vld [vmem:[%s1180 + $0xe0] sm:$0xff]
    %v1210 = vld [vmem:[%s1180 + $0xe8] sm:$0xff]
    %v1211 = vld [vmem:[%s1180 + $0xf0] sm:$0xff]
    %v1212 = vld [vmem:[%s1180 + $0xf8] sm:$0xff]
    %v1213 = vld [vmem:[%s1180 + $0x100] sm:$0xff]
    %v1214 = vld [vmem:[%s1180 + $0x108] sm:$0xff]
    %v1215 = vld [vmem:[%s1180 + $0x110] sm:$0xff]
    %v1216 = vld [vmem:[%s1180 + $0x118] sm:$0xff]
    %v1217 = vld [vmem:[%s1180 + $0x120] sm:$0xff]
    %v1218 = vld [vmem:[%s1180 + $0x128] sm:$0xff]
    %v1219 = vld [vmem:[%s1180 + $0x130] sm:$0xff]
    %v1220 = vld [vmem:[%s1180 + $0x138] sm:$0xff]
    %1221 = vmatprep.subr.mxu0 %v1182
    %1222 = vmatpush1.msra.mxu0 %v1181
    %1223 = vmatprep.subr.mxu0 %v1184
    %1224 = vmatpush1.msra.mxu0 %v1183
    %1225 = vmatprep.subr.mxu0 %v1186
    %1226 = vmatpush1.msra.mxu0 %v1185
    %1227 = vmatprep.subr.mxu0 %v1188
    %1228 = vmatpush1.msra.mxu0 %v1187
    %1229 = vmatprep.subr.mxu0 %v1190
    %1230 = vmatpush1.msra.mxu0 %v1189
    %1231 = vmatprep.subr.mxu0 %v1192
    %1232 = vmatpush1.msra.mxu0 %v1191
    %1233 = vmatprep.subr.mxu0 %v1194
    %1234 = vmatpush1.msra.mxu0 %v1193
    %1235 = vmatprep.subr.mxu0 %v1196
    %1236 = vmatpush1.msra.mxu0 %v1195
    %1237 = vmatprep.subr.mxu0 %v1198
    %1238 = vmatpush1.msra.mxu0 %v1197
    %1239 = vmatprep.subr.mxu0 %v1200
    %1240 = vmatpush1.msra.mxu0 %v1199
    %1241 = vmatprep.subr.mxu0 %v1202
    %1242 = vmatpush1.msra.mxu0 %v1201
    %1243 = vmatprep.subr.mxu0 %v1204
    %1244 = vmatpush1.msra.mxu0 %v1203
    %1245 = vmatprep.subr.mxu0 %v1206
    %1246 = vmatpush1.msra.mxu0 %v1205
    %1247 = vmatprep.subr.mxu0 %v1208
    %1248 = vmatpush1.msra.mxu0 %v1207
    %1249 = vmatprep.subr.mxu0 %v1210
    %1250 = vmatpush1.msra.mxu0 %v1209
    %1251 = vmatprep.subr.mxu0 %v1212
    %1252 = vmatpush1.msra.mxu0 %v1211
    %1253 = vmatprep.subr.mxu0 %v1214
    %1254 = vmatpush1.msra.mxu0 %v1213
    %1255 = vmatprep.subr.mxu0 %v1216
    %1256 = vmatpush1.msra.mxu0 %v1215
    %1257 = vmatprep.subr.mxu0 %v1218
    %1258 = vmatpush1.msra.mxu0 %v1217
    %1259 = vmatprep.subr.mxu0 %v1220
    %1260 = vmatpush1.msra.mxu0 %v1219
    %1261 = vmatprep.subr.mxu0 0.0
    %1262 = vmatpush1.msra.mxu0 0.0
    %1263 = vmatprep.subr.mxu0 0.0
    %1264 = vmatpush1.msra.mxu0 0.0
    %1265 = vmatprep.subr.mxu0 0.0
    %1266 = vmatpush1.msra.mxu0 0.0
    %1267 = vmatprep.subr.mxu0 0.0
    %1268 = vmatpush1.msra.mxu0 0.0
    %1269 = vmatprep.subr.mxu0 0.0
    %1270 = vmatpush1.msra.mxu0 0.0
    %1271 = vmatprep.subr.mxu0 0.0
    %1272 = vmatpush1.msra.mxu0 0.0
    %1273 = vmatprep.subr.mxu0 0.0
    %1274 = vmatpush1.msra.mxu0 0.0
    %1275 = vmatprep.subr.mxu0 0.0
    %1276 = vmatpush1.msra.mxu0 0.0
    %1277 = vmatprep.subr.mxu0 0.0
    %1278 = vmatpush1.msra.mxu0 0.0
    %1279 = vmatprep.subr.mxu0 0.0
    %1280 = vmatpush1.msra.mxu0 0.0
    %1281 = vmatprep.subr.mxu0 0.0
    %1282 = vmatpush1.msra.mxu0 0.0
    %1283 = vmatprep.subr.mxu0 0.0
    %1284 = vmatpush1.msra.mxu0 0.0
    %1285 = vmatprep.mubr.f32.mxu0 %v965
    %1286 = vmatmul.mubr.f32.gmra.mrb[0].mxu0 %v917
    %v1287 = vpop.f32.mrb[0].mxu0
    %v1288 = vadd.f32 0.0, %v1287
    %v1289 = vpop.f32.mrb[0].mxu0
    %v1290 = vadd.f32 0.0, %v1289
    %1291 = vmatprep.mubr.f32.mxu0 %v968
    %1292 = vmatmul.mubr.f32.gmra.mrb[0].mxu0 %v919
    %v1293 = vpop.f32.mrb[0].mxu0
    %v1294 = vadd.f32 0.0, %v1293
    %v1295 = vpop.f32.mrb[0].mxu0
    %v1296 = vadd.f32 0.0, %v1295
    %1297 = vmatprep.mubr.f32.mxu0 %v971
    %1298 = vmatmul.mubr.f32.gmra.mrb[0].mxu0 %v921
    %v1299 = vpop.f32.mrb[0].mxu0
    %v1300 = vadd.f32 0.0, %v1299
    %v1301 = vpop.f32.mrb[0].mxu0
    %v1302 = vadd.f32 0.0, %v1301
    %1303 = vdwg.mxu0
    %v1305 = vsel %vm613, %v1176, 0
    %v1308 = vsel %vm613, %v1178, 0
    %1310 = vmatprep.subr.mxu0 %v1166
    %1311 = vmatpush1.msra.mxu0 %v1164
    %1312 = vmatprep.subr.mxu0 %v1172
    %1313 = vmatpush1.msra.mxu0 %v1170
    %1314 = vmatprep.subr.mxu0 %v1308
    %1315 = vmatpush1.msra.mxu0 %v1305
    %1316 = vmatprep.subr.mxu0 0.0
    %1317 = vmatpush1.msra.mxu0 0.0
    %1318 = vmatprep.subr.mxu0 0.0
    %1319 = vmatpush1.msra.mxu0 0.0
    %1320 = vmatprep.subr.mxu0 0.0
    %1321 = vmatpush1.msra.mxu0 0.0
    %1322 = vmatprep.subr.mxu0 0.0
    %1323 = vmatpush1.msra.mxu0 0.0
    %1324 = vmatprep.subr.mxu0 0.0
    %1325 = vmatpush1.msra.mxu0 0.0
    %1326 = vmatprep.subr.mxu0 0.0
    %1327 = vmatpush1.msra.mxu0 0.0
    %1328 = vmatprep.subr.mxu0 0.0
    %1329 = vmatpush1.msra.mxu0 0.0
    %1330 = vmatprep.subr.mxu0 0.0
    %1331 = vmatpush1.msra.mxu0 0.0
    %1332 = vmatprep.subr.mxu0 0.0
    %1333 = vmatpush1.msra.mxu0 0.0
    %1334 = vmatprep.subr.mxu0 0.0
    %1335 = vmatpush1.msra.mxu0 0.0
    %1336 = vmatprep.subr.mxu0 0.0
    %1337 = vmatpush1.msra.mxu0 0.0
    %1338 = vmatprep.subr.mxu0 0.0
    %1339 = vmatpush1.msra.mxu0 0.0
    %1340 = vmatprep.subr.mxu0 0.0
    %1341 = vmatpush1.msra.mxu0 0.0
    %1342 = vmatprep.subr.mxu0 0.0
    %1343 = vmatpush1.msra.mxu0 0.0
    %1344 = vmatprep.subr.mxu0 0.0
    %1345 = vmatpush1.msra.mxu0 0.0
    %1346 = vmatprep.subr.mxu0 0.0
    %1347 = vmatpush1.msra.mxu0 0.0
    %1348 = vmatprep.subr.mxu0 0.0
    %1349 = vmatpush1.msra.mxu0 0.0
    %1350 = vmatprep.subr.mxu0 0.0
    %1351 = vmatpush1.msra.mxu0 0.0
    %1352 = vmatprep.subr.mxu0 0.0
    %1353 = vmatpush1.msra.mxu0 0.0
    %1354 = vmatprep.subr.mxu0 0.0
    %1355 = vmatpush1.msra.mxu0 0.0
    %1356 = vmatprep.subr.mxu0 0.0
    %1357 = vmatpush1.msra.mxu0 0.0
    %1358 = vmatprep.subr.mxu0 0.0
    %1359 = vmatpush1.msra.mxu0 0.0
    %1360 = vmatprep.subr.mxu0 0.0
    %1361 = vmatpush1.msra.mxu0 0.0
    %1362 = vmatprep.subr.mxu0 0.0
    %1363 = vmatpush1.msra.mxu0 0.0
    %1364 = vmatprep.subr.mxu0 0.0
    %1365 = vmatpush1.msra.mxu0 0.0
    %1366 = vmatprep.subr.mxu0 0.0
    %1367 = vmatpush1.msra.mxu0 0.0
    %1368 = vmatprep.subr.mxu0 0.0
    %1369 = vmatpush1.msra.mxu0 0.0
    %1370 = vmatprep.subr.mxu0 0.0
    %1371 = vmatpush1.msra.mxu0 0.0
    %1372 = vmatprep.subr.mxu0 0.0
    %1373 = vmatpush1.msra.mxu0 0.0
    %1374 = vmatprep.mubr.f32.mxu0 0.0
    %1375 = vmatmul.mubr.f32.gmra.mrb[0].mxu0 %v605
    %v1376 = vpop.f32.mrb[0].mxu0
    %v1377 = vadd.f32 0.0, %v1376
    %v1378 = vpop.f32.mrb[0].mxu0
    %v1379 = vadd.f32 0.0, %v1378
    %1380 = vmatprep.mubr.f32.mxu0 0.0
    %1381 = vmatmul.mubr.f32.gmra.mrb[0].mxu0 %v608
    %v1382 = vpop.f32.mrb[0].mxu0
    %v1383 = vadd.f32 0.0, %v1382
    %v1384 = vpop.f32.mrb[0].mxu0
    %v1385 = vadd.f32 0.0, %v1384
    %1386 = vmatprep.mubr.f32.mxu0 0.0
    %1387 = vmatmul.mubr.f32.gmra.mrb[0].mxu0 %v611
    %v1388 = vpop.f32.mrb[0].mxu0
    %v1389 = vadd.f32 0.0, %v1388
    %v1390 = vpop.f32.mrb[0].mxu0
    %v1391 = vadd.f32 0.0, %v1390
    %1392 = vdwg.mxu0
    %v1394 = vsel %vm613, %v1052, 0
    %v1397 = vsel %vm613, %v1054, 0
    %1399 = vmatprep.subr.mxu0 %v1042
    %1400 = vmatpush1.msra.mxu0 %v1040
    %1401 = vmatprep.subr.mxu0 %v1048
    %1402 = vmatpush1.msra.mxu0 %v1046
    %1403 = vmatprep.subr.mxu0 %v1397
    %1404 = vmatpush1.msra.mxu0 %v1394
    %1405 = vmatprep.subr.mxu0 0.0
    %1406 = vmatpush1.msra.mxu0 0.0
    %1407 = vmatprep.subr.mxu0 0.0
    %1408 = vmatpush1.msra.mxu0 0.0
    %1409 = vmatprep.subr.mxu0 0.0
    %1410 = vmatpush1.msra.mxu0 0.0
    %1411 = vmatprep.subr.mxu0 0.0
    %1412 = vmatpush1.msra.mxu0 0.0
    %1413 = vmatprep.subr.mxu0 0.0
    %1414 = vmatpush1.msra.mxu0 0.0
    %1415 = vmatprep.subr.mxu0 0.0
    %1416 = vmatpush1.msra.mxu0 0.0
    %1417 = vmatprep.subr.mxu0 0.0
    %1418 = vmatpush1.msra.mxu0 0.0
    %1419 = vmatprep.subr.mxu0 0.0
    %1420 = vmatpush1.msra.mxu0 0.0
    %1421 = vmatprep.subr.mxu0 0.0
    %1422 = vmatpush1.msra.mxu0 0.0
    %1423 = vmatprep.subr.mxu0 0.0
    %1424 = vmatpush1.msra.mxu0 0.0
    %1425 = vmatprep.subr.mxu0 0.0
    %1426 = vmatpush1.msra.mxu0 0.0
    %1427 = vmatprep.subr.mxu0 0.0
    %1428 = vmatpush1.msra.mxu0 0.0
    %1429 = vmatprep.subr.mxu0 0.0
    %1430 = vmatpush1.msra.mxu0 0.0
    %1431 = vmatprep.subr.mxu0 0.0
    %1432 = vmatpush1.msra.mxu0 0.0
    %1433 = vmatprep.subr.mxu0 0.0
    %1434 = vmatpush1.msra.mxu0 0.0
    %1435 = vmatprep.subr.mxu0 0.0
    %1436 = vmatpush1.msra.mxu0 0.0
    %1437 = vmatprep.subr.mxu0 0.0
    %1438 = vmatpush1.msra.mxu0 0.0
    %1439 = vmatprep.subr.mxu0 0.0
    %1440 = vmatpush1.msra.mxu0 0.0
    %1441 = vmatprep.subr.mxu0 0.0
    %1442 = vmatpush1.msra.mxu0 0.0
    %1443 = vmatprep.subr.mxu0 0.0
    %1444 = vmatpush1.msra.mxu0 0.0
    %1445 = vmatprep.subr.mxu0 0.0
    %1446 = vmatpush1.msra.mxu0 0.0
    %1447 = vmatprep.subr.mxu0 0.0
    %1448 = vmatpush1.msra.mxu0 0.0
    %1449 = vmatprep.subr.mxu0 0.0
    %1450 = vmatpush1.msra.mxu0 0.0
    %1451 = vmatprep.subr.mxu0 0.0
    %1452 = vmatpush1.msra.mxu0 0.0
    %1453 = vmatprep.subr.mxu0 0.0
    %1454 = vmatpush1.msra.mxu0 0.0
    %1455 = vmatprep.subr.mxu0 0.0
    %1456 = vmatpush1.msra.mxu0 0.0
    %1457 = vmatprep.subr.mxu0 0.0
    %1458 = vmatpush1.msra.mxu0 0.0
    %1459 = vmatprep.subr.mxu0 0.0
    %1460 = vmatpush1.msra.mxu0 0.0
    %1461 = vmatprep.subr.mxu0 0.0
    %1462 = vmatpush1.msra.mxu0 0.0
    %1463 = vmatprep.mubr.f32.mxu0 0.0
    %1464 = vmatmul.mubr.f32.gmra.mrb[0].mxu0 %v704
    %v1465 = vpop.f32.mrb[0].mxu0
    %v1466 = vadd.f32 %v1377, %v1465
    %v1467 = vpop.f32.mrb[0].mxu0
    %v1468 = vadd.f32 %v1379, %v1467
    %1469 = vmatprep.mubr.f32.mxu0 0.0
    %1470 = vmatmul.mubr.f32.gmra.mrb[0].mxu0 %v707
    %v1471 = vpop.f32.mrb[0].mxu0
    %v1472 = vadd.f32 %v1383, %v1471
    %v1473 = vpop.f32.mrb[0].mxu0
    %v1474 = vadd.f32 %v1385, %v1473
    %1475 = vmatprep.mubr.f32.mxu0 0.0
    %1476 = vmatmul.mubr.f32.gmra.mrb[0].mxu0 %v710
    %v1477 = vpop.f32.mrb[0].mxu0
    %v1478 = vadd.f32 %v1389, %v1477
    %v1479 = vpop.f32.mrb[0].mxu0
    %v1480 = vadd.f32 %v1391, %v1479
    %1481 = vdwg.mxu0
    %v1483 = vsel %vm613, %v1300, 0
    %v1486 = vsel %vm613, %v1302, 0
    %1488 = vmatprep.subr.mxu0 %v1290
    %1489 = vmatpush1.msra.mxu0 %v1288
    %1490 = vmatprep.subr.mxu0 %v1296
    %1491 = vmatpush1.msra.mxu0 %v1294
    %1492 = vmatprep.subr.mxu0 %v1486
    %1493 = vmatpush1.msra.mxu0 %v1483
    %1494 = vmatprep.subr.mxu0 0.0
    %1495 = vmatpush1.msra.mxu0 0.0
    %1496 = vmatprep.subr.mxu0 0.0
    %1497 = vmatpush1.msra.mxu0 0.0
    %1498 = vmatprep.subr.mxu0 0.0
    %1499 = vmatpush1.msra.mxu0 0.0
    %1500 = vmatprep.subr.mxu0 0.0
    %1501 = vmatpush1.msra.mxu0 0.0
    %1502 = vmatprep.subr.mxu0 0.0
    %1503 = vmatpush1.msra.mxu0 0.0
    %1504 = vmatprep.subr.mxu0 0.0
    %1505 = vmatpush1.msra.mxu0 0.0
    %1506 = vmatprep.subr.mxu0 0.0
    %1507 = vmatpush1.msra.mxu0 0.0
    %1508 = vmatprep.subr.mxu0 0.0
    %1509 = vmatpush1.msra.mxu0 0.0
    %1510 = vmatprep.subr.mxu0 0.0
    %1511 = vmatpush1.msra.mxu0 0.0
    %1512 = vmatprep.subr.mxu0 0.0
    %1513 = vmatpush1.msra.mxu0 0.0
    %1514 = vmatprep.subr.mxu0 0.0
    %1515 = vmatpush1.msra.mxu0 0.0
    %1516 = vmatprep.subr.mxu0 0.0
    %1517 = vmatpush1.msra.mxu0 0.0
    %1518 = vmatprep.subr.mxu0 0.0
    %1519 = vmatpush1.msra.mxu0 0.0
    %1520 = vmatprep.subr.mxu0 0.0
    %1521 = vmatpush1.msra.mxu0 0.0
    %1522 = vmatprep.subr.mxu0 0.0
    %1523 = vmatpush1.msra.mxu0 0.0
    %1524 = vmatprep.subr.mxu0 0.0
    %1525 = vmatpush1.msra.mxu0 0.0
    %1526 = vmatprep.subr.mxu0 0.0
    %1527 = vmatpush1.msra.mxu0 0.0
    %1528 = vmatprep.subr.mxu0 0.0
    %1529 = vmatpush1.msra.mxu0 0.0
    %1530 = vmatprep.subr.mxu0 0.0
    %1531 = vmatpush1.msra.mxu0 0.0
    %1532 = vmatprep.subr.mxu0 0.0
    %1533 = vmatpush1.msra.mxu0 0.0
    %1534 = vmatprep.subr.mxu0 0.0
    %1535 = vmatpush1.msra.mxu0 0.0
    %1536 = vmatprep.subr.mxu0 0.0
    %1537 = vmatpush1.msra.mxu0 0.0
    %1538 = vmatprep.subr.mxu0 0.0
    %1539 = vmatpush1.msra.mxu0 0.0
    %1540 = vmatprep.subr.mxu0 0.0
    %1541 = vmatpush1.msra.mxu0 0.0
    %1542 = vmatprep.subr.mxu0 0.0
    %1543 = vmatpush1.msra.mxu0 0.0
    %1544 = vmatprep.subr.mxu0 0.0
    %1545 = vmatpush1.msra.mxu0 0.0
    %1546 = vmatprep.subr.mxu0 0.0
    %1547 = vmatpush1.msra.mxu0 0.0
    %1548 = vmatprep.subr.mxu0 0.0
    %1549 = vmatpush1.msra.mxu0 0.0
    %1550 = vmatprep.subr.mxu0 0.0
    %1551 = vmatpush1.msra.mxu0 0.0
    %1552 = vmatprep.mubr.f32.mxu0 0.0
    %1553 = vmatmul.mubr.f32.gmra.mrb[0].mxu0 %v802
    %v1554 = vpop.f32.mrb[0].mxu0
    %v1555 = vadd.f32 0.0, %v1554
    %v1556 = vpop.f32.mrb[0].mxu0
    %v1557 = vadd.f32 0.0, %v1556
    %1558 = vmatprep.mubr.f32.mxu0 0.0
    %1559 = vmatmul.mubr.f32.gmra.mrb[0].mxu0 %v805
    %v1560 = vpop.f32.mrb[0].mxu0
    %v1561 = vadd.f32 0.0, %v1560
    %v1562 = vpop.f32.mrb[0].mxu0
    %v1563 = vadd.f32 0.0, %v1562
    %1564 = vmatprep.mubr.f32.mxu0 0.0
    %1565 = vmatmul.mubr.f32.gmra.mrb[0].mxu0 %v808
    %v1566 = vpop.f32.mrb[0].mxu0
    %v1567 = vadd.f32 0.0, %v1566
    %v1568 = vpop.f32.mrb[0].mxu0
    %v1569 = vadd.f32 0.0, %v1568
    %1570 = vdwg.mxu0
    %v1571 = vadd.f32 %v1466, %v1555
    %v1572 = vadd.f32 %v1468, %v1557
    %v1573 = vadd.f32 %v1472, %v1561
    %v1574 = vadd.f32 %v1474, %v1563
    %v1575 = vadd.f32 %v1478, %v1567
    %v1576 = vadd.f32 %v1480, %v1569
    %s1577 = scalar_lea.vmem %s6, 48
    %v1578 = vld [vmem:[%s1577] sm:$0xff]
    %v1579 = vld [vmem:[%s1577 + $0x8] sm:$0xff]
    %v1580 = vld [vmem:[%s1577 + $0x10] sm:$0xff]
    %v1581 = vld [vmem:[%s1577 + $0x18] sm:$0xff]
    %v1582 = vld [vmem:[%s1577 + $0x20] sm:$0xf]
    %v1583 = vld [vmem:[%s1577 + $0x28] sm:$0xf]
    %v1584 = vadd.f32 %v1571, %v1578
    %v1585 = vadd.f32 %v1572, %v1579
    %v1586 = vadd.f32 %v1573, %v1580
    %v1587 = vadd.f32 %v1574, %v1581
    %v1588 = vadd.f32 %v1575, %v1582
    %v1589 = vadd.f32 %v1576, %v1583
    %v1590 = vmax.f32 %v1584, 0.0
    %v1591 = vmax.f32 %v1585, 0.0
    %v1592 = vmax.f32 %v1586, 0.0
    %v1593 = vmax.f32 %v1587, 0.0
    %v1594 = vmax.f32 %v1588, 0.0
    %v1595 = vmax.f32 %v1589, 0.0
    %v1596 = vld [vmem:[%s7] sm:$0xff]
    %v1597 = vld [vmem:[%s7 + $0x8] sm:$0xff]
    %v1598 = vld [vmem:[%s7 + $0x10] sm:$0xff]
    %v1599 = vld [vmem:[%s7 + $0x18] sm:$0xff]
    %v1600 = vld [vmem:[%s7 + $0x20] sm:$0xff]
    %v1601 = vld [vmem:[%s7 + $0x28] sm:$0xff]
    %v1602 = vld [vmem:[%s7 + $0x30] sm:$0xff]
    %v1603 = vld [vmem:[%s7 + $0x38] sm:$0xff]
    %v1604 = vld [vmem:[%s7 + $0x40] sm:$0xff]
    %v1605 = vld [vmem:[%s7 + $0x48] sm:$0xff]
    %v1606 = vld [vmem:[%s7 + $0x50] sm:$0xff]
    %v1607 = vld [vmem:[%s7 + $0x58] sm:$0xff]
    %v1608 = vld [vmem:[%s7 + $0x60] sm:$0xff]
    %v1609 = vld [vmem:[%s7 + $0x68] sm:$0xff]
    %v1610 = vld [vmem:[%s7 + $0x70] sm:$0xff]
    %v1611 = vld [vmem:[%s7 + $0x78] sm:$0xff]
    %v1612 = vld [vmem:[%s7 + $0x80] sm:$0xff]
    %v1613 = vld [vmem:[%s7 + $0x88] sm:$0xff]
    %v1614 = vld [vmem:[%s7 + $0x90] sm:$0xff]
    %v1615 = vld [vmem:[%s7 + $0x98] sm:$0xff]
    %v1616 = vld [vmem:[%s8] sm:$0x1]
    %v1618 = vlaneseq
    %v1619 = vshrl.u32 %v1618, 7
    %v1620 = vsub.s32 0, %v1619
    %v1621 = vrot.slane %v1616, %v1620
    %v1624 = vsel %vm262, %v1591, 0
    %v1627 = vsel %vm262, %v1593, 0
    %v1630 = vsel %vm262, %v1595, 0
    %1632 = vmatprep.subr.mxu0 0.0
    %1633 = vmatpush1.msra.mxu0 %v1596
    %1634 = vmatprep.subr.mxu0 0.0
    %1635 = vmatpush1.msra.mxu0 %v1597
    %1636 = vmatprep.subr.mxu0 0.0
    %1637 = vmatpush1.msra.mxu0 %v1598
    %1638 = vmatprep.subr.mxu0 0.0
    %1639 = vmatpush1.msra.mxu0 %v1599
    %1640 = vmatprep.subr.mxu0 0.0
    %1641 = vmatpush1.msra.mxu0 %v1600
    %1642 = vmatprep.subr.mxu0 0.0
    %1643 = vmatpush1.msra.mxu0 %v1601
    %1644 = vmatprep.subr.mxu0 0.0
    %1645 = vmatpush1.msra.mxu0 %v1602
    %1646 = vmatprep.subr.mxu0 0.0
    %1647 = vmatpush1.msra.mxu0 %v1603
    %1648 = vmatprep.subr.mxu0 0.0
    %1649 = vmatpush1.msra.mxu0 %v1604
    %1650 = vmatprep.subr.mxu0 0.0
    %1651 = vmatpush1.msra.mxu0 %v1605
    %1652 = vmatprep.subr.mxu0 0.0
    %1653 = vmatpush1.msra.mxu0 %v1606
    %1654 = vmatprep.subr.mxu0 0.0
    %1655 = vmatpush1.msra.mxu0 %v1607
    %1656 = vmatprep.subr.mxu0 0.0
    %1657 = vmatpush1.msra.mxu0 %v1608
    %1658 = vmatprep.subr.mxu0 0.0
    %1659 = vmatpush1.msra.mxu0 %v1609
    %1660 = vmatprep.subr.mxu0 0.0
    %1661 = vmatpush1.msra.mxu0 %v1610
    %1662 = vmatprep.subr.mxu0 0.0
    %1663 = vmatpush1.msra.mxu0 %v1611
    %1664 = vmatprep.subr.mxu0 0.0
    %1665 = vmatpush1.msra.mxu0 %v1612
    %1666 = vmatprep.subr.mxu0 0.0
    %1667 = vmatpush1.msra.mxu0 %v1613
    %1668 = vmatprep.subr.mxu0 0.0
    %1669 = vmatpush1.msra.mxu0 %v1614
    %1670 = vmatprep.subr.mxu0 0.0
    %1671 = vmatpush1.msra.mxu0 %v1615
    %1672 = vmatprep.subr.mxu0 0.0
    %1673 = vmatpush1.msra.mxu0 0.0
    %1674 = vmatprep.subr.mxu0 0.0
    %1675 = vmatpush1.msra.mxu0 0.0
    %1676 = vmatprep.subr.mxu0 0.0
    %1677 = vmatpush1.msra.mxu0 0.0
    %1678 = vmatprep.subr.mxu0 0.0
    %1679 = vmatpush1.msra.mxu0 0.0
    %1680 = vmatprep.subr.mxu0 0.0
    %1681 = vmatpush1.msra.mxu0 0.0
    %1682 = vmatprep.subr.mxu0 0.0
    %1683 = vmatpush1.msra.mxu0 0.0
    %1684 = vmatprep.subr.mxu0 0.0
    %1685 = vmatpush1.msra.mxu0 0.0
    %1686 = vmatprep.subr.mxu0 0.0
    %1687 = vmatpush1.msra.mxu0 0.0
    %1688 = vmatprep.subr.mxu0 0.0
    %1689 = vmatpush1.msra.mxu0 0.0
    %1690 = vmatprep.subr.mxu0 0.0
    %1691 = vmatpush1.msra.mxu0 0.0
    %1692 = vmatprep.subr.mxu0 0.0
    %1693 = vmatpush1.msra.mxu0 0.0
    %1694 = vmatprep.subr.mxu0 0.0
    %1695 = vmatpush1.msra.mxu0 0.0
    %1696 = vmatprep.mubr.f32.mxu0 %v1624
    %1697 = vmatmul.mubr.f32.gmra.mrb[0].mxu0 %v1590
    %v1698 = vpop.f32.mrb[0].mxu0
    %v1699 = vadd.f32 %v1621, %v1698
    %v1700 = vpop.f32.mrb[0].mxu0
    %1701 = vmatprep.mubr.f32.mxu0 %v1627
    %1702 = vmatmul.mubr.f32.gmra.mrb[0].mxu0 %v1592
    %v1703 = vpop.f32.mrb[0].mxu0
    %v1704 = vadd.f32 %v1621, %v1703
    %v1705 = vpop.f32.mrb[0].mxu0
    %1706 = vmatprep.mubr.f32.mxu0 %v1630
    %1707 = vmatmul.mubr.f32.gmra.mrb[0].mxu0 %v1594
    %v1708 = vpop.f32.mrb[0].mxu0
    %v1709 = vadd.f32 %v1621, %v1708
    %v1710 = vpop.f32.mrb[0].mxu0
    %1711 = vdwg.mxu0
    %v1712 = vmax.f32 %v1699, 0.0
    %v1713 = vmax.f32 %v1704, 0.0
    %v1714 = vmax.f32 %v1709, 0.0
    %v1716 = vsel %vm603, %v56, 0
    %v1719 = vsel %vm613, %v1714, 0
    %1721 = vmatprep.subr.mxu0 0.0
    %1722 = vmatpush1.msra.mxu0 %v1712
    %1723 = vmatprep.subr.mxu0 0.0
    %1724 = vmatpush1.msra.mxu0 %v1713
    %1725 = vmatprep.subr.mxu0 0.0
    %1726 = vmatpush1.msra.mxu0 %v1719
    %1727 = vmatprep.subr.mxu0 0.0
    %1728 = vmatpush1.msra.mxu0 0.0
    %1729 = vmatprep.subr.mxu0 0.0
    %1730 = vmatpush1.msra.mxu0 0.0
    %1731 = vmatprep.subr.mxu0 0.0
    %1732 = vmatpush1.msra.mxu0 0.0
    %1733 = vmatprep.subr.mxu0 0.0
    %1734 = vmatpush1.msra.mxu0 0.0
    %1735 = vmatprep.subr.mxu0 0.0
    %1736 = vmatpush1.msra.mxu0 0.0
    %1737 = vmatprep.subr.mxu0 0.0
    %1738 = vmatpush1.msra.mxu0 0.0
    %1739 = vmatprep.subr.mxu0 0.0
    %1740 = vmatpush1.msra.mxu0 0.0
    %1741 = vmatprep.subr.mxu0 0.0
    %1742 = vmatpush1.msra.mxu0 0.0
    %1743 = vmatprep.subr.mxu0 0.0
    %1744 = vmatpush1.msra.mxu0 0.0
    %1745 = vmatprep.subr.mxu0 0.0
    %1746 = vmatpush1.msra.mxu0 0.0
    %1747 = vmatprep.subr.mxu0 0.0
    %1748 = vmatpush1.msra.mxu0 0.0
    %1749 = vmatprep.subr.mxu0 0.0
    %1750 = vmatpush1.msra.mxu0 0.0
    %1751 = vmatprep.subr.mxu0 0.0
    %1752 = vmatpush1.msra.mxu0 0.0
    %1753 = vmatprep.subr.mxu0 0.0
    %1754 = vmatpush1.msra.mxu0 0.0
    %1755 = vmatprep.subr.mxu0 0.0
    %1756 = vmatpush1.msra.mxu0 0.0
    %1757 = vmatprep.subr.mxu0 0.0
    %1758 = vmatpush1.msra.mxu0 0.0
    %1759 = vmatprep.subr.mxu0 0.0
    %1760 = vmatpush1.msra.mxu0 0.0
    %1761 = vmatprep.subr.mxu0 0.0
    %1762 = vmatpush1.msra.mxu0 0.0
    %1763 = vmatprep.subr.mxu0 0.0
    %1764 = vmatpush1.msra.mxu0 0.0
    %1765 = vmatprep.subr.mxu0 0.0
    %1766 = vmatpush1.msra.mxu0 0.0
    %1767 = vmatprep.subr.mxu0 0.0
    %1768 = vmatpush1.msra.mxu0 0.0
    %1769 = vmatprep.subr.mxu0 0.0
    %1770 = vmatpush1.msra.mxu0 0.0
    %1771 = vmatprep.subr.mxu0 0.0
    %1772 = vmatpush1.msra.mxu0 0.0
    %1773 = vmatprep.subr.mxu0 0.0
    %1774 = vmatpush1.msra.mxu0 0.0
    %1775 = vmatprep.subr.mxu0 0.0
    %1776 = vmatpush1.msra.mxu0 0.0
    %1777 = vmatprep.subr.mxu0 0.0
    %1778 = vmatpush1.msra.mxu0 0.0
    %1779 = vmatprep.subr.mxu0 0.0
    %1780 = vmatpush1.msra.mxu0 0.0
    %1781 = vmatprep.subr.mxu0 0.0
    %1782 = vmatpush1.msra.mxu0 0.0
    %1783 = vmatprep.subr.mxu0 0.0
    %1784 = vmatpush1.msra.mxu0 0.0
    %1785 = vmatprep.mubr.f32.mxu0 0.0
    %1786 = vmatmul.mubr.f32.gmra.mrb[0].mxu0 %v1716
    %v1787 = vpop.f32.mrb[0].mxu0
    %v1788 = vadd.f32 0.0, %v1787
    %v1789 = vpop.f32.mrb[0].mxu0
    %1790 = vdwg.mxu0
    %v1791 = vld [vmem:[%s9] sm:$0xff]
    %v1792 = vld [vmem:[%s9 + $0x8] sm:$0xff]
    %v1793 = vld [vmem:[%s9 + $0x10] sm:$0xff]
    %v1794 = vld [vmem:[%s9 + $0x18] sm:$0xff]
    %v1795 = vld [vmem:[%s9 + $0x20] sm:$0xff]
    %v1796 = vld [vmem:[%s9 + $0x28] sm:$0xff]
    %v1797 = vld [vmem:[%s9 + $0x30] sm:$0xff]
    %v1798 = vld [vmem:[%s9 + $0x38] sm:$0xff]
    %v1799 = vld [vmem:[%s9 + $0x40] sm:$0xff]
    %v1800 = vld [vmem:[%s9 + $0x48] sm:$0xff]
    %v1801 = vld [vmem:[%s9 + $0x50] sm:$0xff]
    %v1802 = vld [vmem:[%s9 + $0x58] sm:$0xff]
    %v1803 = vld [vmem:[%s9 + $0x60] sm:$0xff]
    %v1804 = vld [vmem:[%s9 + $0x68] sm:$0xff]
    %v1805 = vld [vmem:[%s9 + $0x70] sm:$0xff]
    %v1806 = vld [vmem:[%s9 + $0x78] sm:$0xff]
    %v1807 = vld [vmem:[%s10] sm:$0x1]
    %v1809 = vlaneseq
    %v1810 = vshrl.u32 %v1809, 7
    %v1811 = vsub.s32 0, %v1810
    %v1812 = vrot.slane %v1807, %v1811
    %1814 = vmatprep.subr.mxu0 0.0
    %1815 = vmatpush1.msra.mxu0 %v1791
    %1816 = vmatprep.subr.mxu0 0.0
    %1817 = vmatpush1.msra.mxu0 %v1792
    %1818 = vmatprep.subr.mxu0 0.0
    %1819 = vmatpush1.msra.mxu0 %v1793
    %1820 = vmatprep.subr.mxu0 0.0
    %1821 = vmatpush1.msra.mxu0 %v1794
    %1822 = vmatprep.subr.mxu0 0.0
    %1823 = vmatpush1.msra.mxu0 %v1795
    %1824 = vmatprep.subr.mxu0 0.0
    %1825 = vmatpush1.msra.mxu0 %v1796
    %1826 = vmatprep.subr.mxu0 0.0
    %1827 = vmatpush1.msra.mxu0 %v1797
    %1828 = vmatprep.subr.mxu0 0.0
    %1829 = vmatpush1.msra.mxu0 %v1798
    %1830 = vmatprep.subr.mxu0 0.0
    %1831 = vmatpush1.msra.mxu0 %v1799
    %1832 = vmatprep.subr.mxu0 0.0
    %1833 = vmatpush1.msra.mxu0 %v1800
    %1834 = vmatprep.subr.mxu0 0.0
    %1835 = vmatpush1.msra.mxu0 %v1801
    %1836 = vmatprep.subr.mxu0 0.0
    %1837 = vmatpush1.msra.mxu0 %v1802
    %1838 = vmatprep.subr.mxu0 0.0
    %1839 = vmatpush1.msra.mxu0 %v1803
    %1840 = vmatprep.subr.mxu0 0.0
    %1841 = vmatpush1.msra.mxu0 %v1804
    %1842 = vmatprep.subr.mxu0 0.0
    %1843 = vmatpush1.msra.mxu0 %v1805
    %1844 = vmatprep.subr.mxu0 0.0
    %1845 = vmatpush1.msra.mxu0 %v1806
    %1846 = vmatprep.subr.mxu0 0.0
    %1847 = vmatpush1.msra.mxu0 0.0
    %1848 = vmatprep.subr.mxu0 0.0
    %1849 = vmatpush1.msra.mxu0 0.0
    %1850 = vmatprep.subr.mxu0 0.0
    %1851 = vmatpush1.msra.mxu0 0.0
    %1852 = vmatprep.subr.mxu0 0.0
    %1853 = vmatpush1.msra.mxu0 0.0
    %1854 = vmatprep.subr.mxu0 0.0
    %1855 = vmatpush1.msra.mxu0 0.0
    %1856 = vmatprep.subr.mxu0 0.0
    %1857 = vmatpush1.msra.mxu0 0.0
    %1858 = vmatprep.subr.mxu0 0.0
    %1859 = vmatpush1.msra.mxu0 0.0
    %1860 = vmatprep.subr.mxu0 0.0
    %1861 = vmatpush1.msra.mxu0 0.0
    %1862 = vmatprep.subr.mxu0 0.0
    %1863 = vmatpush1.msra.mxu0 0.0
    %1864 = vmatprep.subr.mxu0 0.0
    %1865 = vmatpush1.msra.mxu0 0.0
    %1866 = vmatprep.subr.mxu0 0.0
    %1867 = vmatpush1.msra.mxu0 0.0
    %1868 = vmatprep.subr.mxu0 0.0
    %1869 = vmatpush1.msra.mxu0 0.0
    %1870 = vmatprep.subr.mxu0 0.0
    %1871 = vmatpush1.msra.mxu0 0.0
    %1872 = vmatprep.subr.mxu0 0.0
    %1873 = vmatpush1.msra.mxu0 0.0
    %1874 = vmatprep.subr.mxu0 0.0
    %1875 = vmatpush1.msra.mxu0 0.0
    %1876 = vmatprep.subr.mxu0 0.0
    %1877 = vmatpush1.msra.mxu0 0.0
    %1878 = vmatprep.mubr.f32.mxu0 0.0
    %1879 = vmatmul.mubr.f32.gmra.mrb[0].mxu0 %v1788
    %v1880 = vpop.f32.mrb[0].mxu0
    %v1881 = vadd.f32 %v1812, %v1880
    %v1882 = vpop.f32.mrb[0].mxu0
    %1883 = vdwg.mxu0
    %v1884 = vmax.f32 %v1881, 0.0
    %v1885 = vld [vmem:[%s11] sm:$0xff]
    %v1886 = vld [vmem:[%s11 + $0x8] sm:$0xff]
    %v1887 = vld [vmem:[%s11 + $0x10] sm:$0xff]
    %v1888 = vld [vmem:[%s11 + $0x18] sm:$0xff]
    %s1889 = scalar_lea.vmem %s0, 48
    %v1890 = vld [vmem:[%s1889] sm:$0xff]
    %v1891 = vld [vmem:[%s1889 + $0x8] sm:$0xff]
    %v1892 = vld [vmem:[%s1889 + $0x10] sm:$0xff]
    %v1893 = vld [vmem:[%s1889 + $0x18] sm:$0xff]
    %v1894 = vld [vmem:[%s1889 + $0x20] sm:$0xf]
    %v1895 = vld [vmem:[%s1889 + $0x28] sm:$0xf]
    %s1896 = scalar_lea.vmem %s3, 432
    %v1897 = vld [vmem:[%s1896] sm:$0xff]
    %v1898 = vld [vmem:[%s1896 + $0x8] sm:$0xff]
    %v1899 = vld [vmem:[%s1896 + $0x10] sm:$0xff]
    %v1900 = vld [vmem:[%s1896 + $0x18] sm:$0xff]
    %v1901 = vld [vmem:[%s1896 + $0x20] sm:$0xff]
    %v1902 = vld [vmem:[%s1896 + $0x28] sm:$0xff]
    %v1903 = vld [vmem:[%s1896 + $0x30] sm:$0xff]
    %v1904 = vld [vmem:[%s1896 + $0x38] sm:$0xff]
    %v1905 = vld [vmem:[%s1896 + $0x40] sm:$0xff]
    %v1906 = vld [vmem:[%s1896 + $0x48] sm:$0xff]
    %v1907 = vld [vmem:[%s1896 + $0x50] sm:$0xff]
    %v1908 = vld [vmem:[%s1896 + $0x58] sm:$0xff]
    %v1909 = vld [vmem:[%s1896 + $0x60] sm:$0xff]
    %v1910 = vld [vmem:[%s1896 + $0x68] sm:$0xff]
    %v1911 = vld [vmem:[%s1896 + $0x70] sm:$0xff]
    %v1912 = vld [vmem:[%s1896 + $0x78] sm:$0xff]
    %v1913 = vld [vmem:[%s1896 + $0x80] sm:$0xff]
    %v1914 = vld [vmem:[%s1896 + $0x88] sm:$0xff]
    %v1915 = vld [vmem:[%s1896 + $0x90] sm:$0xff]
    %v1916 = vld [vmem:[%s1896 + $0x98] sm:$0xff]
    %v1917 = vld [vmem:[%s1896 + $0xa0] sm:$0xff]
    %v1918 = vld [vmem:[%s1896 + $0xa8] sm:$0xff]
    %v1919 = vld [vmem:[%s1896 + $0xb0] sm:$0xff]
    %v1920 = vld [vmem:[%s1896 + $0xb8] sm:$0xff]
    %v1921 = vld [vmem:[%s1896 + $0xc0] sm:$0xff]
    %v1922 = vld [vmem:[%s1896 + $0xc8] sm:$0xff]
    %v1923 = vld [vmem:[%s1896 + $0xd0] sm:$0xff]
    %v1924 = vld [vmem:[%s1896 + $0xd8] sm:$0xff]
    %v1925 = vld [vmem:[%s1896 + $0xe0] sm:$0xff]
    %v1926 = vld [vmem:[%s1896 + $0xe8] sm:$0xff]
    %v1927 = vld [vmem:[%s1896 + $0xf0] sm:$0xff]
    %v1928 = vld [vmem:[%s1896 + $0xf8] sm:$0xff]
    %v1929 = vld [vmem:[%s1896 + $0x100] sm:$0xff]
    %v1930 = vld [vmem:[%s1896 + $0x108] sm:$0xff]
    %v1931 = vld [vmem:[%s1896 + $0x110] sm:$0xff]
    %v1932 = vld [vmem:[%s1896 + $0x118] sm:$0xff]
    %v1933 = vld [vmem:[%s1896 + $0x120] sm:$0xff]
    %v1934 = vld [vmem:[%s1896 + $0x128] sm:$0xff]
    %v1935 = vld [vmem:[%s1896 + $0x130] sm:$0xff]
    %v1936 = vld [vmem:[%s1896 + $0x138] sm:$0xff]
    %v1937 = vld [vmem:[%s1896 + $0x140] sm:$0xff]
    %v1938 = vld [vmem:[%s1896 + $0x148] sm:$0xff]
    %v1939 = vld [vmem:[%s1896 + $0x150] sm:$0xff]
    %v1940 = vld [vmem:[%s1896 + $0x158] sm:$0xff]
    %v1941 = vld [vmem:[%s1896 + $0x160] sm:$0xff]
    %v1942 = vld [vmem:[%s1896 + $0x168] sm:$0xff]
    %v1943 = vld [vmem:[%s1896 + $0x170] sm:$0xff]
    %v1944 = vld [vmem:[%s1896 + $0x178] sm:$0xff]
    %v1945 = vld [vmem:[%s1896 + $0x180] sm:$0xff]
    %v1946 = vld [vmem:[%s1896 + $0x188] sm:$0xff]
    %v1947 = vld [vmem:[%s1896 + $0x190] sm:$0xff]
    %v1948 = vld [vmem:[%s1896 + $0x198] sm:$0xff]
    %v1949 = vld [vmem:[%s1896 + $0x1a0] sm:$0xff]
    %v1950 = vld [vmem:[%s1896 + $0x1a8] sm:$0xff]
    %s1951 = scalar_lea.vmem %s4, 48
    %v1952 = vld [vmem:[%s1951] sm:$0xff]
    %v1953 = vld [vmem:[%s1951 + $0x8] sm:$0xff]
    %v1954 = vld [vmem:[%s1951 + $0x10] sm:$0xff]
    %v1955 = vld [vmem:[%s1951 + $0x18] sm:$0xff]
    %v1956 = vld [vmem:[%s1951 + $0x20] sm:$0xf]
    %v1957 = vld [vmem:[%s1951 + $0x28] sm:$0xf]
    %v1959 = vsel %vm123, %v1891, 0
    %v1962 = vsel %vm123, %v1893, 0
    %v1965 = vsel %vm123, %v1895, 0
    %1967 = vmatprep.subr.mxu0 %v1898
    %1968 = vmatpush1.msra.mxu0 %v1897
    %1969 = vmatprep.subr.mxu0 %v1900
    %1970 = vmatpush1.msra.mxu0 %v1899
    %1971 = vmatprep.subr.mxu0 %v1902
    %1972 = vmatpush1.msra.mxu0 %v1901
    %1973 = vmatprep.subr.mxu0 %v1904
    %1974 = vmatpush1.msra.mxu0 %v1903
    %1975 = vmatprep.subr.mxu0 %v1906
    %1976 = vmatpush1.msra.mxu0 %v1905
    %1977 = vmatprep.subr.mxu0 %v1908
    %1978 = vmatpush1.msra.mxu0 %v1907
    %1979 = vmatprep.subr.mxu0 %v1910
    %1980 = vmatpush1.msra.mxu0 %v1909
    %1981 = vmatprep.subr.mxu0 %v1912
    %1982 = vmatpush1.msra.mxu0 %v1911
    %1983 = vmatprep.subr.mxu0 %v1914
    %1984 = vmatpush1.msra.mxu0 %v1913
    %1985 = vmatprep.subr.mxu0 %v1916
    %1986 = vmatpush1.msra.mxu0 %v1915
    %1987 = vmatprep.subr.mxu0 %v1918
    %1988 = vmatpush1.msra.mxu0 %v1917
    %1989 = vmatprep.subr.mxu0 %v1920
    %1990 = vmatpush1.msra.mxu0 %v1919
    %1991 = vmatprep.subr.mxu0 %v1922
    %1992 = vmatpush1.msra.mxu0 %v1921
    %1993 = vmatprep.subr.mxu0 %v1924
    %1994 = vmatpush1.msra.mxu0 %v1923
    %1995 = vmatprep.subr.mxu0 %v1926
    %1996 = vmatpush1.msra.mxu0 %v1925
    %1997 = vmatprep.subr.mxu0 %v1928
    %1998 = vmatpush1.msra.mxu0 %v1927
    %1999 = vmatprep.subr.mxu0 %v1930
    %2000 = vmatpush1.msra.mxu0 %v1929
    %2001 = vmatprep.subr.mxu0 %v1932
    %2002 = vmatpush1.msra.mxu0 %v1931
    %2003 = vmatprep.subr.mxu0 %v1934
    %2004 = vmatpush1.msra.mxu0 %v1933
    %2005 = vmatprep.subr.mxu0 %v1936
    %2006 = vmatpush1.msra.mxu0 %v1935
    %2007 = vmatprep.subr.mxu0 %v1938
    %2008 = vmatpush1.msra.mxu0 %v1937
    %2009 = vmatprep.subr.mxu0 %v1940
    %2010 = vmatpush1.msra.mxu0 %v1939
    %2011 = vmatprep.subr.mxu0 %v1942
    %2012 = vmatpush1.msra.mxu0 %v1941
    %2013 = vmatprep.subr.mxu0 %v1944
    %2014 = vmatpush1.msra.mxu0 %v1943
    %2015 = vmatprep.subr.mxu0 %v1946
    %2016 = vmatpush1.msra.mxu0 %v1945
    %2017 = vmatprep.subr.mxu0 %v1948
    %2018 = vmatpush1.msra.mxu0 %v1947
    %2019 = vmatprep.subr.mxu0 %v1950
    %2020 = vmatpush1.msra.mxu0 %v1949
    %2021 = vmatprep.subr.mxu0 0.0
    %2022 = vmatpush1.msra.mxu0 0.0
    %2023 = vmatprep.subr.mxu0 0.0
    %2024 = vmatpush1.msra.mxu0 0.0
    %2025 = vmatprep.subr.mxu0 0.0
    %2026 = vmatpush1.msra.mxu0 0.0
    %2027 = vmatprep.subr.mxu0 0.0
    %2028 = vmatpush1.msra.mxu0 0.0
    %2029 = vmatprep.subr.mxu0 0.0
    %2030 = vmatpush1.msra.mxu0 0.0
    %2031 = vmatprep.mubr.f32.mxu0 %v1959
    %2032 = vmatmul.mubr.f32.gmra.mrb[0].mxu0 %v1890
    %v2033 = vpop.f32.mrb[0].mxu0
    %v2034 = vadd.f32 %v1952, %v2033
    %v2035 = vpop.f32.mrb[0].mxu0
    %v2036 = vadd.f32 %v1953, %v2035
    %2037 = vmatprep.mubr.f32.mxu0 %v1962
    %2038 = vmatmul.mubr.f32.gmra.mrb[0].mxu0 %v1892
    %v2039 = vpop.f32.mrb[0].mxu0
    %v2040 = vadd.f32 %v1954, %v2039
    %v2041 = vpop.f32.mrb[0].mxu0
    %v2042 = vadd.f32 %v1955, %v2041
    %2043 = vmatprep.mubr.f32.mxu0 %v1965
    %2044 = vmatmul.mubr.f32.gmra.mrb[0].mxu0 %v1894
    %v2045 = vpop.f32.mrb[0].mxu0
    %v2046 = vadd.f32 %v1956, %v2045
    %v2047 = vpop.f32.mrb[0].mxu0
    %v2048 = vadd.f32 %v1957, %v2047
    %2049 = vdwg.mxu0
    %v2050 = vmax.f32 %v2034, 0.0
    %v2051 = vmax.f32 %v2036, 0.0
    %v2052 = vmax.f32 %v2040, 0.0
    %v2053 = vmax.f32 %v2042, 0.0
    %v2054 = vmax.f32 %v2046, 0.0
    %v2055 = vmax.f32 %v2048, 0.0
    %s2056 = scalar_lea.vmem %s5, 1920
    %v2057 = vld [vmem:[%s2056] sm:$0xff]
    %v2058 = vld [vmem:[%s2056 + $0x8] sm:$0xff]
    %v2059 = vld [vmem:[%s2056 + $0x10] sm:$0xff]
    %v2060 = vld [vmem:[%s2056 + $0x18] sm:$0xff]
    %v2061 = vld [vmem:[%s2056 + $0x20] sm:$0xff]
    %v2062 = vld [vmem:[%s2056 + $0x28] sm:$0xff]
    %v2063 = vld [vmem:[%s2056 + $0x30] sm:$0xff]
    %v2064 = vld [vmem:[%s2056 + $0x38] sm:$0xff]
    %v2065 = vld [vmem:[%s2056 + $0x40] sm:$0xff]
    %v2066 = vld [vmem:[%s2056 + $0x48] sm:$0xff]
    %v2067 = vld [vmem:[%s2056 + $0x50] sm:$0xff]
    %v2068 = vld [vmem:[%s2056 + $0x58] sm:$0xff]
    %v2069 = vld [vmem:[%s2056 + $0x60] sm:$0xff]
    %v2070 = vld [vmem:[%s2056 + $0x68] sm:$0xff]
    %v2071 = vld [vmem:[%s2056 + $0x70] sm:$0xff]
    %v2072 = vld [vmem:[%s2056 + $0x78] sm:$0xff]
    %v2073 = vld [vmem:[%s2056 + $0x80] sm:$0xff]
    %v2074 = vld [vmem:[%s2056 + $0x88] sm:$0xff]
    %v2075 = vld [vmem:[%s2056 + $0x90] sm:$0xff]
    %v2076 = vld [vmem:[%s2056 + $0x98] sm:$0xff]
    %v2077 = vld [vmem:[%s2056 + $0xa0] sm:$0xff]
    %v2078 = vld [vmem:[%s2056 + $0xa8] sm:$0xff]
    %v2079 = vld [vmem:[%s2056 + $0xb0] sm:$0xff]
    %v2080 = vld [vmem:[%s2056 + $0xb8] sm:$0xff]
    %v2081 = vld [vmem:[%s2056 + $0xc0] sm:$0xff]
    %v2082 = vld [vmem:[%s2056 + $0xc8] sm:$0xff]
    %v2083 = vld [vmem:[%s2056 + $0xd0] sm:$0xff]
    %v2084 = vld [vmem:[%s2056 + $0xd8] sm:$0xff]
    %v2085 = vld [vmem:[%s2056 + $0xe0] sm:$0xff]
    %v2086 = vld [vmem:[%s2056 + $0xe8] sm:$0xff]
    %v2087 = vld [vmem:[%s2056 + $0xf0] sm:$0xff]
    %v2088 = vld [vmem:[%s2056 + $0xf8] sm:$0xff]
    %v2089 = vld [vmem:[%s2056 + $0x100] sm:$0xff]
    %v2090 = vld [vmem:[%s2056 + $0x108] sm:$0xff]
    %v2091 = vld [vmem:[%s2056 + $0x110] sm:$0xff]
    %v2092 = vld [vmem:[%s2056 + $0x118] sm:$0xff]
    %v2093 = vld [vmem:[%s2056 + $0x120] sm:$0xff]
    %v2094 = vld [vmem:[%s2056 + $0x128] sm:$0xff]
    %v2095 = vld [vmem:[%s2056 + $0x130] sm:$0xff]
    %v2096 = vld [vmem:[%s2056 + $0x138] sm:$0xff]
    %v2098 = vsel %vm262, %v2051, 0
    %v2101 = vsel %vm262, %v2053, 0
    %v2104 = vsel %vm262, %v2055, 0
    %2106 = vmatprep.subr.mxu0 %v2058
    %2107 = vmatpush1.msra.mxu0 %v2057
    %2108 = vmatprep.subr.mxu0 %v2060
    %2109 = vmatpush1.msra.mxu0 %v2059
    %2110 = vmatprep.subr.mxu0 %v2062
    %2111 = vmatpush1.msra.mxu0 %v2061
    %2112 = vmatprep.subr.mxu0 %v2064
    %2113 = vmatpush1.msra.mxu0 %v2063
    %2114 = vmatprep.subr.mxu0 %v2066
    %2115 = vmatpush1.msra.mxu0 %v2065
    %2116 = vmatprep.subr.mxu0 %v2068
    %2117 = vmatpush1.msra.mxu0 %v2067
    %2118 = vmatprep.subr.mxu0 %v2070
    %2119 = vmatpush1.msra.mxu0 %v2069
    %2120 = vmatprep.subr.mxu0 %v2072
    %2121 = vmatpush1.msra.mxu0 %v2071
    %2122 = vmatprep.subr.mxu0 %v2074
    %2123 = vmatpush1.msra.mxu0 %v2073
    %2124 = vmatprep.subr.mxu0 %v2076
    %2125 = vmatpush1.msra.mxu0 %v2075
    %2126 = vmatprep.subr.mxu0 %v2078
    %2127 = vmatpush1.msra.mxu0 %v2077
    %2128 = vmatprep.subr.mxu0 %v2080
    %2129 = vmatpush1.msra.mxu0 %v2079
    %2130 = vmatprep.subr.mxu0 %v2082
    %2131 = vmatpush1.msra.mxu0 %v2081
    %2132 = vmatprep.subr.mxu0 %v2084
    %2133 = vmatpush1.msra.mxu0 %v2083
    %2134 = vmatprep.subr.mxu0 %v2086
    %2135 = vmatpush1.msra.mxu0 %v2085
    %2136 = vmatprep.subr.mxu0 %v2088
    %2137 = vmatpush1.msra.mxu0 %v2087
    %2138 = vmatprep.subr.mxu0 %v2090
    %2139 = vmatpush1.msra.mxu0 %v2089
    %2140 = vmatprep.subr.mxu0 %v2092
    %2141 = vmatpush1.msra.mxu0 %v2091
    %2142 = vmatprep.subr.mxu0 %v2094
    %2143 = vmatpush1.msra.mxu0 %v2093
    %2144 = vmatprep.subr.mxu0 %v2096
    %2145 = vmatpush1.msra.mxu0 %v2095
    %2146 = vmatprep.subr.mxu0 0.0
    %2147 = vmatpush1.msra.mxu0 0.0
    %2148 = vmatprep.subr.mxu0 0.0
    %2149 = vmatpush1.msra.mxu0 0.0
    %2150 = vmatprep.subr.mxu0 0.0
    %2151 = vmatpush1.msra.mxu0 0.0
    %2152 = vmatprep.subr.mxu0 0.0
    %2153 = vmatpush1.msra.mxu0 0.0
    %2154 = vmatprep.subr.mxu0 0.0
    %2155 = vmatpush1.msra.mxu0 0.0
    %2156 = vmatprep.subr.mxu0 0.0
    %2157 = vmatpush1.msra.mxu0 0.0
    %2158 = vmatprep.subr.mxu0 0.0
    %2159 = vmatpush1.msra.mxu0 0.0
    %2160 = vmatprep.subr.mxu0 0.0
    %2161 = vmatpush1.msra.mxu0 0.0
    %2162 = vmatprep.subr.mxu0 0.0
    %2163 = vmatpush1.msra.mxu0 0.0
    %2164 = vmatprep.subr.mxu0 0.0
    %2165 = vmatpush1.msra.mxu0 0.0
    %2166 = vmatprep.subr.mxu0 0.0
    %2167 = vmatpush1.msra.mxu0 0.0
    %2168 = vmatprep.subr.mxu0 0.0
    %2169 = vmatpush1.msra.mxu0 0.0
    %2170 = vmatprep.mubr.f32.mxu0 %v2098
    %2171 = vmatmul.mubr.f32.gmra.mrb[0].mxu0 %v2050
    %v2172 = vpop.f32.mrb[0].mxu0
    %v2173 = vadd.f32 0.0, %v2172
    %v2174 = vpop.f32.mrb[0].mxu0
    %v2175 = vadd.f32 0.0, %v2174
    %2176 = vmatprep.mubr.f32.mxu0 %v2101
    %2177 = vmatmul.mubr.f32.gmra.mrb[0].mxu0 %v2052
    %v2178 = vpop.f32.mrb[0].mxu0
    %v2179 = vadd.f32 0.0, %v2178
    %v2180 = vpop.f32.mrb[0].mxu0
    %v2181 = vadd.f32 0.0, %v2180
    %2182 = vmatprep.mubr.f32.mxu0 %v2104
    %2183 = vmatmul.mubr.f32.gmra.mrb[0].mxu0 %v2054
    %v2184 = vpop.f32.mrb[0].mxu0
    %v2185 = vadd.f32 0.0, %v2184
    %v2186 = vpop.f32.mrb[0].mxu0
    %v2187 = vadd.f32 0.0, %v2186
    %2188 = vdwg.mxu0
    %s2189 = scalar_lea.vmem %s5, 2240
    %v2190 = vld [vmem:[%s2189] sm:$0xff]
    %v2191 = vld [vmem:[%s2189 + $0x8] sm:$0xff]
    %v2192 = vld [vmem:[%s2189 + $0x10] sm:$0xff]
    %v2193 = vld [vmem:[%s2189 + $0x18] sm:$0xff]
    %v2194 = vld [vmem:[%s2189 + $0x20] sm:$0xff]
    %v2195 = vld [vmem:[%s2189 + $0x28] sm:$0xff]
    %v2196 = vld [vmem:[%s2189 + $0x30] sm:$0xff]
    %v2197 = vld [vmem:[%s2189 + $0x38] sm:$0xff]
    %v2198 = vld [vmem:[%s2189 + $0x40] sm:$0xff]
    %v2199 = vld [vmem:[%s2189 + $0x48] sm:$0xff]
    %v2200 = vld [vmem:[%s2189 + $0x50] sm:$0xff]
    %v2201 = vld [vmem:[%s2189 + $0x58] sm:$0xff]
    %v2202 = vld [vmem:[%s2189 + $0x60] sm:$0xff]
    %v2203 = vld [vmem:[%s2189 + $0x68] sm:$0xff]
    %v2204 = vld [vmem:[%s2189 + $0x70] sm:$0xff]
    %v2205 = vld [vmem:[%s2189 + $0x78] sm:$0xff]
    %v2206 = vld [vmem:[%s2189 + $0x80] sm:$0xff]
    %v2207 = vld [vmem:[%s2189 + $0x88] sm:$0xff]
    %v2208 = vld [vmem:[%s2189 + $0x90] sm:$0xff]
    %v2209 = vld [vmem:[%s2189 + $0x98] sm:$0xff]
    %v2210 = vld [vmem:[%s2189 + $0xa0] sm:$0xff]
    %v2211 = vld [vmem:[%s2189 + $0xa8] sm:$0xff]
    %v2212 = vld [vmem:[%s2189 + $0xb0] sm:$0xff]
    %v2213 = vld [vmem:[%s2189 + $0xb8] sm:$0xff]
    %v2214 = vld [vmem:[%s2189 + $0xc0] sm:$0xff]
    %v2215 = vld [vmem:[%s2189 + $0xc8] sm:$0xff]
    %v2216 = vld [vmem:[%s2189 + $0xd0] sm:$0xff]
    %v2217 = vld [vmem:[%s2189 + $0xd8] sm:$0xff]
    %v2218 = vld [vmem:[%s2189 + $0xe0] sm:$0xff]
    %v2219 = vld [vmem:[%s2189 + $0xe8] sm:$0xff]
    %v2220 = vld [vmem:[%s2189 + $0xf0] sm:$0xff]
    %v2221 = vld [vmem:[%s2189 + $0xf8] sm:$0xff]
    %v2222 = vld [vmem:[%s2189 + $0x100] sm:$0xff]
    %v2223 = vld [vmem:[%s2189 + $0x108] sm:$0xff]
    %v2224 = vld [vmem:[%s2189 + $0x110] sm:$0xff]
    %v2225 = vld [vmem:[%s2189 + $0x118] sm:$0xff]
    %v2226 = vld [vmem:[%s2189 + $0x120] sm:$0xff]
    %v2227 = vld [vmem:[%s2189 + $0x128] sm:$0xff]
    %v2228 = vld [vmem:[%s2189 + $0x130] sm:$0xff]
    %v2229 = vld [vmem:[%s2189 + $0x138] sm:$0xff]
    %2230 = vmatprep.subr.mxu0 %v2191
    %2231 = vmatpush1.msra.mxu0 %v2190
    %2232 = vmatprep.subr.mxu0 %v2193
    %2233 = vmatpush1.msra.mxu0 %v2192
    %2234 = vmatprep.subr.mxu0 %v2195
    %2235 = vmatpush1.msra.mxu0 %v2194
    %2236 = vmatprep.subr.mxu0 %v2197
    %2237 = vmatpush1.msra.mxu0 %v2196
    %2238 = vmatprep.subr.mxu0 %v2199
    %2239 = vmatpush1.msra.mxu0 %v2198
    %2240 = vmatprep.subr.mxu0 %v2201
    %2241 = vmatpush1.msra.mxu0 %v2200
    %2242 = vmatprep.subr.mxu0 %v2203
    %2243 = vmatpush1.msra.mxu0 %v2202
    %2244 = vmatprep.subr.mxu0 %v2205
    %2245 = vmatpush1.msra.mxu0 %v2204
    %2246 = vmatprep.subr.mxu0 %v2207
    %2247 = vmatpush1.msra.mxu0 %v2206
    %2248 = vmatprep.subr.mxu0 %v2209
    %2249 = vmatpush1.msra.mxu0 %v2208
    %2250 = vmatprep.subr.mxu0 %v2211
    %2251 = vmatpush1.msra.mxu0 %v2210
    %2252 = vmatprep.subr.mxu0 %v2213
    %2253 = vmatpush1.msra.mxu0 %v2212
    %2254 = vmatprep.subr.mxu0 %v2215
    %2255 = vmatpush1.msra.mxu0 %v2214
    %2256 = vmatprep.subr.mxu0 %v2217
    %2257 = vmatpush1.msra.mxu0 %v2216
    %2258 = vmatprep.subr.mxu0 %v2219
    %2259 = vmatpush1.msra.mxu0 %v2218
    %2260 = vmatprep.subr.mxu0 %v2221
    %2261 = vmatpush1.msra.mxu0 %v2220
    %2262 = vmatprep.subr.mxu0 %v2223
    %2263 = vmatpush1.msra.mxu0 %v2222
    %2264 = vmatprep.subr.mxu0 %v2225
    %2265 = vmatpush1.msra.mxu0 %v2224
    %2266 = vmatprep.subr.mxu0 %v2227
    %2267 = vmatpush1.msra.mxu0 %v2226
    %2268 = vmatprep.subr.mxu0 %v2229
    %2269 = vmatpush1.msra.mxu0 %v2228
    %2270 = vmatprep.subr.mxu0 0.0
    %2271 = vmatpush1.msra.mxu0 0.0
    %2272 = vmatprep.subr.mxu0 0.0
    %2273 = vmatpush1.msra.mxu0 0.0
    %2274 = vmatprep.subr.mxu0 0.0
    %2275 = vmatpush1.msra.mxu0 0.0
    %2276 = vmatprep.subr.mxu0 0.0
    %2277 = vmatpush1.msra.mxu0 0.0
    %2278 = vmatprep.subr.mxu0 0.0
    %2279 = vmatpush1.msra.mxu0 0.0
    %2280 = vmatprep.subr.mxu0 0.0
    %2281 = vmatpush1.msra.mxu0 0.0
    %2282 = vmatprep.subr.mxu0 0.0
    %2283 = vmatpush1.msra.mxu0 0.0
    %2284 = vmatprep.subr.mxu0 0.0
    %2285 = vmatpush1.msra.mxu0 0.0
    %2286 = vmatprep.subr.mxu0 0.0
    %2287 = vmatpush1.msra.mxu0 0.0
    %2288 = vmatprep.subr.mxu0 0.0
    %2289 = vmatpush1.msra.mxu0 0.0
    %2290 = vmatprep.subr.mxu0 0.0
    %2291 = vmatpush1.msra.mxu0 0.0
    %2292 = vmatprep.subr.mxu0 0.0
    %2293 = vmatpush1.msra.mxu0 0.0
    %2294 = vmatprep.mubr.f32.mxu0 %v2098
    %2295 = vmatmul.mubr.f32.gmra.mrb[0].mxu0 %v2050
    %v2296 = vpop.f32.mrb[0].mxu0
    %v2297 = vadd.f32 0.0, %v2296
    %v2298 = vpop.f32.mrb[0].mxu0
    %v2299 = vadd.f32 0.0, %v2298
    %2300 = vmatprep.mubr.f32.mxu0 %v2101
    %2301 = vmatmul.mubr.f32.gmra.mrb[0].mxu0 %v2052
    %v2302 = vpop.f32.mrb[0].mxu0
    %v2303 = vadd.f32 0.0, %v2302
    %v2304 = vpop.f32.mrb[0].mxu0
    %v2305 = vadd.f32 0.0, %v2304
    %2306 = vmatprep.mubr.f32.mxu0 %v2104
    %2307 = vmatmul.mubr.f32.gmra.mrb[0].mxu0 %v2054
    %v2308 = vpop.f32.mrb[0].mxu0
    %v2309 = vadd.f32 0.0, %v2308
    %v2310 = vpop.f32.mrb[0].mxu0
    %v2311 = vadd.f32 0.0, %v2310
    %2312 = vdwg.mxu0
    %s2313 = scalar_lea.vmem %s5, 2560
    %v2314 = vld [vmem:[%s2313] sm:$0xff]
    %v2315 = vld [vmem:[%s2313 + $0x8] sm:$0xff]
    %v2316 = vld [vmem:[%s2313 + $0x10] sm:$0xff]
    %v2317 = vld [vmem:[%s2313 + $0x18] sm:$0xff]
    %v2318 = vld [vmem:[%s2313 + $0x20] sm:$0xff]
    %v2319 = vld [vmem:[%s2313 + $0x28] sm:$0xff]
    %v2320 = vld [vmem:[%s2313 + $0x30] sm:$0xff]
    %v2321 = vld [vmem:[%s2313 + $0x38] sm:$0xff]
    %v2322 = vld [vmem:[%s2313 + $0x40] sm:$0xff]
    %v2323 = vld [vmem:[%s2313 + $0x48] sm:$0xff]
    %v2324 = vld [vmem:[%s2313 + $0x50] sm:$0xff]
    %v2325 = vld [vmem:[%s2313 + $0x58] sm:$0xff]
    %v2326 = vld [vmem:[%s2313 + $0x60] sm:$0xff]
    %v2327 = vld [vmem:[%s2313 + $0x68] sm:$0xff]
    %v2328 = vld [vmem:[%s2313 + $0x70] sm:$0xff]
    %v2329 = vld [vmem:[%s2313 + $0x78] sm:$0xff]
    %v2330 = vld [vmem:[%s2313 + $0x80] sm:$0xff]
    %v2331 = vld [vmem:[%s2313 + $0x88] sm:$0xff]
    %v2332 = vld [vmem:[%s2313 + $0x90] sm:$0xff]
    %v2333 = vld [vmem:[%s2313 + $0x98] sm:$0xff]
    %v2334 = vld [vmem:[%s2313 + $0xa0] sm:$0xff]
    %v2335 = vld [vmem:[%s2313 + $0xa8] sm:$0xff]
    %v2336 = vld [vmem:[%s2313 + $0xb0] sm:$0xff]
    %v2337 = vld [vmem:[%s2313 + $0xb8] sm:$0xff]
    %v2338 = vld [vmem:[%s2313 + $0xc0] sm:$0xff]
    %v2339 = vld [vmem:[%s2313 + $0xc8] sm:$0xff]
    %v2340 = vld [vmem:[%s2313 + $0xd0] sm:$0xff]
    %v2341 = vld [vmem:[%s2313 + $0xd8] sm:$0xff]
    %v2342 = vld [vmem:[%s2313 + $0xe0] sm:$0xff]
    %v2343 = vld [vmem:[%s2313 + $0xe8] sm:$0xff]
    %v2344 = vld [vmem:[%s2313 + $0xf0] sm:$0xff]
    %v2345 = vld [vmem:[%s2313 + $0xf8] sm:$0xff]
    %v2346 = vld [vmem:[%s2313 + $0x100] sm:$0xff]
    %v2347 = vld [vmem:[%s2313 + $0x108] sm:$0xff]
    %v2348 = vld [vmem:[%s2313 + $0x110] sm:$0xff]
    %v2349 = vld [vmem:[%s2313 + $0x118] sm:$0xff]
    %v2350 = vld [vmem:[%s2313 + $0x120] sm:$0xff]
    %v2351 = vld [vmem:[%s2313 + $0x128] sm:$0xff]
    %v2352 = vld [vmem:[%s2313 + $0x130] sm:$0xff]
    %v2353 = vld [vmem:[%s2313 + $0x138] sm:$0xff]
    %2354 = vmatprep.subr.mxu0 %v2315
    %2355 = vmatpush1.msra.mxu0 %v2314
    %2356 = vmatprep.subr.mxu0 %v2317
    %2357 = vmatpush1.msra.mxu0 %v2316
    %2358 = vmatprep.subr.mxu0 %v2319
    %2359 = vmatpush1.msra.mxu0 %v2318
    %2360 = vmatprep.subr.mxu0 %v2321
    %2361 = vmatpush1.msra.mxu0 %v2320
    %2362 = vmatprep.subr.mxu0 %v2323
    %2363 = vmatpush1.msra.mxu0 %v2322
    %2364 = vmatprep.subr.mxu0 %v2325
    %2365 = vmatpush1.msra.mxu0 %v2324
    %2366 = vmatprep.subr.mxu0 %v2327
    %2367 = vmatpush1.msra.mxu0 %v2326
    %2368 = vmatprep.subr.mxu0 %v2329
    %2369 = vmatpush1.msra.mxu0 %v2328
    %2370 = vmatprep.subr.mxu0 %v2331
    %2371 = vmatpush1.msra.mxu0 %v2330
    %2372 = vmatprep.subr.mxu0 %v2333
    %2373 = vmatpush1.msra.mxu0 %v2332
    %2374 = vmatprep.subr.mxu0 %v2335
    %2375 = vmatpush1.msra.mxu0 %v2334
    %2376 = vmatprep.subr.mxu0 %v2337
    %2377 = vmatpush1.msra.mxu0 %v2336
    %2378 = vmatprep.subr.mxu0 %v2339
    %2379 = vmatpush1.msra.mxu0 %v2338
    %2380 = vmatprep.subr.mxu0 %v2341
    %2381 = vmatpush1.msra.mxu0 %v2340
    %2382 = vmatprep.subr.mxu0 %v2343
    %2383 = vmatpush1.msra.mxu0 %v2342
    %2384 = vmatprep.subr.mxu0 %v2345
    %2385 = vmatpush1.msra.mxu0 %v2344
    %2386 = vmatprep.subr.mxu0 %v2347
    %2387 = vmatpush1.msra.mxu0 %v2346
    %2388 = vmatprep.subr.mxu0 %v2349
    %2389 = vmatpush1.msra.mxu0 %v2348
    %2390 = vmatprep.subr.mxu0 %v2351
    %2391 = vmatpush1.msra.mxu0 %v2350
    %2392 = vmatprep.subr.mxu0 %v2353
    %2393 = vmatpush1.msra.mxu0 %v2352
    %2394 = vmatprep.subr.mxu0 0.0
    %2395 = vmatpush1.msra.mxu0 0.0
    %2396 = vmatprep.subr.mxu0 0.0
    %2397 = vmatpush1.msra.mxu0 0.0
    %2398 = vmatprep.subr.mxu0 0.0
    %2399 = vmatpush1.msra.mxu0 0.0
    %2400 = vmatprep.subr.mxu0 0.0
    %2401 = vmatpush1.msra.mxu0 0.0
    %2402 = vmatprep.subr.mxu0 0.0
    %2403 = vmatpush1.msra.mxu0 0.0
    %2404 = vmatprep.subr.mxu0 0.0
    %2405 = vmatpush1.msra.mxu0 0.0
    %2406 = vmatprep.subr.mxu0 0.0
    %2407 = vmatpush1.msra.mxu0 0.0
    %2408 = vmatprep.subr.mxu0 0.0
    %2409 = vmatpush1.msra.mxu0 0.0
    %2410 = vmatprep.subr.mxu0 0.0
    %2411 = vmatpush1.msra.mxu0 0.0
    %2412 = vmatprep.subr.mxu0 0.0
    %2413 = vmatpush1.msra.mxu0 0.0
    %2414 = vmatprep.subr.mxu0 0.0
    %2415 = vmatpush1.msra.mxu0 0.0
    %2416 = vmatprep.subr.mxu0 0.0
    %2417 = vmatpush1.msra.mxu0 0.0
    %2418 = vmatprep.mubr.f32.mxu0 %v2098
    %2419 = vmatmul.mubr.f32.gmra.mrb[0].mxu0 %v2050
    %v2420 = vpop.f32.mrb[0].mxu0
    %v2421 = vadd.f32 0.0, %v2420
    %v2422 = vpop.f32.mrb[0].mxu0
    %v2423 = vadd.f32 0.0, %v2422
    %2424 = vmatprep.mubr.f32.mxu0 %v2101
    %2425 = vmatmul.mubr.f32.gmra.mrb[0].mxu0 %v2052
    %v2426 = vpop.f32.mrb[0].mxu0
    %v2427 = vadd.f32 0.0, %v2426
    %v2428 = vpop.f32.mrb[0].mxu0
    %v2429 = vadd.f32 0.0, %v2428
    %2430 = vmatprep.mubr.f32.mxu0 %v2104
    %2431 = vmatmul.mubr.f32.gmra.mrb[0].mxu0 %v2054
    %v2432 = vpop.f32.mrb[0].mxu0
    %v2433 = vadd.f32 0.0, %v2432
    %v2434 = vpop.f32.mrb[0].mxu0
    %v2435 = vadd.f32 0.0, %v2434
    %2436 = vdwg.mxu0
    %v2438 = vsel %vm613, %v2309, 0
    %v2441 = vsel %vm613, %v2311, 0
    %2443 = vmatprep.subr.mxu0 %v2299
    %2444 = vmatpush1.msra.mxu0 %v2297
    %2445 = vmatprep.subr.mxu0 %v2305
    %2446 = vmatpush1.msra.mxu0 %v2303
    %2447 = vmatprep.subr.mxu0 %v2441
    %2448 = vmatpush1.msra.mxu0 %v2438
    %2449 = vmatprep.subr.mxu0 0.0
    %2450 = vmatpush1.msra.mxu0 0.0
    %2451 = vmatprep.subr.mxu0 0.0
    %2452 = vmatpush1.msra.mxu0 0.0
    %2453 = vmatprep.subr.mxu0 0.0
    %2454 = vmatpush1.msra.mxu0 0.0
    %2455 = vmatprep.subr.mxu0 0.0
    %2456 = vmatpush1.msra.mxu0 0.0
    %2457 = vmatprep.subr.mxu0 0.0
    %2458 = vmatpush1.msra.mxu0 0.0
    %2459 = vmatprep.subr.mxu0 0.0
    %2460 = vmatpush1.msra.mxu0 0.0
    %2461 = vmatprep.subr.mxu0 0.0
    %2462 = vmatpush1.msra.mxu0 0.0
    %2463 = vmatprep.subr.mxu0 0.0
    %2464 = vmatpush1.msra.mxu0 0.0
    %2465 = vmatprep.subr.mxu0 0.0
    %2466 = vmatpush1.msra.mxu0 0.0
    %2467 = vmatprep.subr.mxu0 0.0
    %2468 = vmatpush1.msra.mxu0 0.0
    %2469 = vmatprep.subr.mxu0 0.0
    %2470 = vmatpush1.msra.mxu0 0.0
    %2471 = vmatprep.subr.mxu0 0.0
    %2472 = vmatpush1.msra.mxu0 0.0
    %2473 = vmatprep.subr.mxu0 0.0
    %2474 = vmatpush1.msra.mxu0 0.0
    %2475 = vmatprep.subr.mxu0 0.0
    %2476 = vmatpush1.msra.mxu0 0.0
    %2477 = vmatprep.subr.mxu0 0.0
    %2478 = vmatpush1.msra.mxu0 0.0
    %2479 = vmatprep.subr.mxu0 0.0
    %2480 = vmatpush1.msra.mxu0 0.0
    %2481 = vmatprep.subr.mxu0 0.0
    %2482 = vmatpush1.msra.mxu0 0.0
    %2483 = vmatprep.subr.mxu0 0.0
    %2484 = vmatpush1.msra.mxu0 0.0
    %2485 = vmatprep.subr.mxu0 0.0
    %2486 = vmatpush1.msra.mxu0 0.0
    %2487 = vmatprep.subr.mxu0 0.0
    %2488 = vmatpush1.msra.mxu0 0.0
    %2489 = vmatprep.subr.mxu0 0.0
    %2490 = vmatpush1.msra.mxu0 0.0
    %2491 = vmatprep.subr.mxu0 0.0
    %2492 = vmatpush1.msra.mxu0 0.0
    %2493 = vmatprep.subr.mxu0 0.0
    %2494 = vmatpush1.msra.mxu0 0.0
    %2495 = vmatprep.subr.mxu0 0.0
    %2496 = vmatpush1.msra.mxu0 0.0
    %2497 = vmatprep.subr.mxu0 0.0
    %2498 = vmatpush1.msra.mxu0 0.0
    %2499 = vmatprep.subr.mxu0 0.0
    %2500 = vmatpush1.msra.mxu0 0.0
    %2501 = vmatprep.subr.mxu0 0.0
    %2502 = vmatpush1.msra.mxu0 0.0
    %2503 = vmatprep.subr.mxu0 0.0
    %2504 = vmatpush1.msra.mxu0 0.0
    %2505 = vmatprep.subr.mxu0 0.0
    %2506 = vmatpush1.msra.mxu0 0.0
    %2507 = vmatprep.mubr.f32.mxu0 0.0
    %2508 = vmatmul.mubr.f32.gmra.mrb[0].mxu0 %v605
    %v2509 = vpop.f32.mrb[0].mxu0
    %v2510 = vadd.f32 0.0, %v2509
    %v2511 = vpop.f32.mrb[0].mxu0
    %v2512 = vadd.f32 0.0, %v2511
    %2513 = vmatprep.mubr.f32.mxu0 0.0
    %2514 = vmatmul.mubr.f32.gmra.mrb[0].mxu0 %v608
    %v2515 = vpop.f32.mrb[0].mxu0
    %v2516 = vadd.f32 0.0, %v2515
    %v2517 = vpop.f32.mrb[0].mxu0
    %v2518 = vadd.f32 0.0, %v2517
    %2519 = vmatprep.mubr.f32.mxu0 0.0
    %2520 = vmatmul.mubr.f32.gmra.mrb[0].mxu0 %v611
    %v2521 = vpop.f32.mrb[0].mxu0
    %v2522 = vadd.f32 0.0, %v2521
    %v2523 = vpop.f32.mrb[0].mxu0
    %v2524 = vadd.f32 0.0, %v2523
    %2525 = vdwg.mxu0
    %v2527 = vsel %vm613, %v2185, 0
    %v2530 = vsel %vm613, %v2187, 0
    %2532 = vmatprep.subr.mxu0 %v2175
    %2533 = vmatpush1.msra.mxu0 %v2173
    %2534 = vmatprep.subr.mxu0 %v2181
    %2535 = vmatpush1.msra.mxu0 %v2179
    %2536 = vmatprep.subr.mxu0 %v2530
    %2537 = vmatpush1.msra.mxu0 %v2527
    %2538 = vmatprep.subr.mxu0 0.0
    %2539 = vmatpush1.msra.mxu0 0.0
    %2540 = vmatprep.subr.mxu0 0.0
    %2541 = vmatpush1.msra.mxu0 0.0
    %2542 = vmatprep.subr.mxu0 0.0
    %2543 = vmatpush1.msra.mxu0 0.0
    %2544 = vmatprep.subr.mxu0 0.0
    %2545 = vmatpush1.msra.mxu0 0.0
    %2546 = vmatprep.subr.mxu0 0.0
    %2547 = vmatpush1.msra.mxu0 0.0
    %2548 = vmatprep.subr.mxu0 0.0
    %2549 = vmatpush1.msra.mxu0 0.0
    %2550 = vmatprep.subr.mxu0 0.0
    %2551 = vmatpush1.msra.mxu0 0.0
    %2552 = vmatprep.subr.mxu0 0.0
    %2553 = vmatpush1.msra.mxu0 0.0
    %2554 = vmatprep.subr.mxu0 0.0
    %2555 = vmatpush1.msra.mxu0 0.0
    %2556 = vmatprep.subr.mxu0 0.0
    %2557 = vmatpush1.msra.mxu0 0.0
    %2558 = vmatprep.subr.mxu0 0.0
    %2559 = vmatpush1.msra.mxu0 0.0
    %2560 = vmatprep.subr.mxu0 0.0
    %2561 = vmatpush1.msra.mxu0 0.0
    %2562 = vmatprep.subr.mxu0 0.0
    %2563 = vmatpush1.msra.mxu0 0.0
    %2564 = vmatprep.subr.mxu0 0.0
    %2565 = vmatpush1.msra.mxu0 0.0
    %2566 = vmatprep.subr.mxu0 0.0
    %2567 = vmatpush1.msra.mxu0 0.0
    %2568 = vmatprep.subr.mxu0 0.0
    %2569 = vmatpush1.msra.mxu0 0.0
    %2570 = vmatprep.subr.mxu0 0.0
    %2571 = vmatpush1.msra.mxu0 0.0
    %2572 = vmatprep.subr.mxu0 0.0
    %2573 = vmatpush1.msra.mxu0 0.0
    %2574 = vmatprep.subr.mxu0 0.0
    %2575 = vmatpush1.msra.mxu0 0.0
    %2576 = vmatprep.subr.mxu0 0.0
    %2577 = vmatpush1.msra.mxu0 0.0
    %2578 = vmatprep.subr.mxu0 0.0
    %2579 = vmatpush1.msra.mxu0 0.0
    %2580 = vmatprep.subr.mxu0 0.0
    %2581 = vmatpush1.msra.mxu0 0.0
    %2582 = vmatprep.subr.mxu0 0.0
    %2583 = vmatpush1.msra.mxu0 0.0
    %2584 = vmatprep.subr.mxu0 0.0
    %2585 = vmatpush1.msra.mxu0 0.0
    %2586 = vmatprep.subr.mxu0 0.0
    %2587 = vmatpush1.msra.mxu0 0.0
    %2588 = vmatprep.subr.mxu0 0.0
    %2589 = vmatpush1.msra.mxu0 0.0
    %2590 = vmatprep.subr.mxu0 0.0
    %2591 = vmatpush1.msra.mxu0 0.0
    %2592 = vmatprep.subr.mxu0 0.0
    %2593 = vmatpush1.msra.mxu0 0.0
    %2594 = vmatprep.subr.mxu0 0.0
    %2595 = vmatpush1.msra.mxu0 0.0
    %2596 = vmatprep.mubr.f32.mxu0 0.0
    %2597 = vmatmul.mubr.f32.gmra.mrb[0].mxu0 %v704
    %v2598 = vpop.f32.mrb[0].mxu0
    %v2599 = vadd.f32 %v2510, %v2598
    %v2600 = vpop.f32.mrb[0].mxu0
    %v2601 = vadd.f32 %v2512, %v2600
    %2602 = vmatprep.mubr.f32.mxu0 0.0
    %2603 = vmatmul.mubr.f32.gmra.mrb[0].mxu0 %v707
    %v2604 = vpop.f32.mrb[0].mxu0
    %v2605 = vadd.f32 %v2516, %v2604
    %v2606 = vpop.f32.mrb[0].mxu0
    %v2607 = vadd.f32 %v2518, %v2606
    %2608 = vmatprep.mubr.f32.mxu0 0.0
    %2609 = vmatmul.mubr.f32.gmra.mrb[0].mxu0 %v710
    %v2610 = vpop.f32.mrb[0].mxu0
    %v2611 = vadd.f32 %v2522, %v2610
    %v2612 = vpop.f32.mrb[0].mxu0
    %v2613 = vadd.f32 %v2524, %v2612
    %2614 = vdwg.mxu0
    %v2616 = vsel %vm613, %v2433, 0
    %v2619 = vsel %vm613, %v2435, 0
    %2621 = vmatprep.subr.mxu0 %v2423
    %2622 = vmatpush1.msra.mxu0 %v2421
    %2623 = vmatprep.subr.mxu0 %v2429
    %2624 = vmatpush1.msra.mxu0 %v2427
    %2625 = vmatprep.subr.mxu0 %v2619
    %2626 = vmatpush1.msra.mxu0 %v2616
    %2627 = vmatprep.subr.mxu0 0.0
    %2628 = vmatpush1.msra.mxu0 0.0
    %2629 = vmatprep.subr.mxu0 0.0
    %2630 = vmatpush1.msra.mxu0 0.0
    %2631 = vmatprep.subr.mxu0 0.0
    %2632 = vmatpush1.msra.mxu0 0.0
    %2633 = vmatprep.subr.mxu0 0.0
    %2634 = vmatpush1.msra.mxu0 0.0
    %2635 = vmatprep.subr.mxu0 0.0
    %2636 = vmatpush1.msra.mxu0 0.0
    %2637 = vmatprep.subr.mxu0 0.0
    %2638 = vmatpush1.msra.mxu0 0.0
    %2639 = vmatprep.subr.mxu0 0.0
    %2640 = vmatpush1.msra.mxu0 0.0
    %2641 = vmatprep.subr.mxu0 0.0
    %2642 = vmatpush1.msra.mxu0 0.0
    %2643 = vmatprep.subr.mxu0 0.0
    %2644 = vmatpush1.msra.mxu0 0.0
    %2645 = vmatprep.subr.mxu0 0.0
    %2646 = vmatpush1.msra.mxu0 0.0
    %2647 = vmatprep.subr.mxu0 0.0
    %2648 = vmatpush1.msra.mxu0 0.0
    %2649 = vmatprep.subr.mxu0 0.0
    %2650 = vmatpush1.msra.mxu0 0.0
    %2651 = vmatprep.subr.mxu0 0.0
    %2652 = vmatpush1.msra.mxu0 0.0
    %2653 = vmatprep.subr.mxu0 0.0
    %2654 = vmatpush1.msra.mxu0 0.0
    %2655 = vmatprep.subr.mxu0 0.0
    %2656 = vmatpush1.msra.mxu0 0.0
    %2657 = vmatprep.subr.mxu0 0.0
    %2658 = vmatpush1.msra.mxu0 0.0
    %2659 = vmatprep.subr.mxu0 0.0
    %2660 = vmatpush1.msra.mxu0 0.0
    %2661 = vmatprep.subr.mxu0 0.0
    %2662 = vmatpush1.msra.mxu0 0.0
    %2663 = vmatprep.subr.mxu0 0.0
    %2664 = vmatpush1.msra.mxu0 0.0
    %2665 = vmatprep.subr.mxu0 0.0
    %2666 = vmatpush1.msra.mxu0 0.0
    %2667 = vmatprep.subr.mxu0 0.0
    %2668 = vmatpush1.msra.mxu0 0.0
    %2669 = vmatprep.subr.mxu0 0.0
    %2670 = vmatpush1.msra.mxu0 0.0
    %2671 = vmatprep.subr.mxu0 0.0
    %2672 = vmatpush1.msra.mxu0 0.0
    %2673 = vmatprep.subr.mxu0 0.0
    %2674 = vmatpush1.msra.mxu0 0.0
    %2675 = vmatprep.subr.mxu0 0.0
    %2676 = vmatpush1.msra.mxu0 0.0
    %2677 = vmatprep.subr.mxu0 0.0
    %2678 = vmatpush1.msra.mxu0 0.0
    %2679 = vmatprep.subr.mxu0 0.0
    %2680 = vmatpush1.msra.mxu0 0.0
    %2681 = vmatprep.subr.mxu0 0.0
    %2682 = vmatpush1.msra.mxu0 0.0
    %2683 = vmatprep.subr.mxu0 0.0
    %2684 = vmatpush1.msra.mxu0 0.0
    %2685 = vmatprep.mubr.f32.mxu0 0.0
    %2686 = vmatmul.mubr.f32.gmra.mrb[0].mxu0 %v802
    %v2687 = vpop.f32.mrb[0].mxu0
    %v2688 = vadd.f32 0.0, %v2687
    %v2689 = vpop.f32.mrb[0].mxu0
    %v2690 = vadd.f32 0.0, %v2689
    %2691 = vmatprep.mubr.f32.mxu0 0.0
    %2692 = vmatmul.mubr.f32.gmra.mrb[0].mxu0 %v805
    %v2693 = vpop.f32.mrb[0].mxu0
    %v2694 = vadd.f32 0.0, %v2693
    %v2695 = vpop.f32.mrb[0].mxu0
    %v2696 = vadd.f32 0.0, %v2695
    %2697 = vmatprep.mubr.f32.mxu0 0.0
    %2698 = vmatmul.mubr.f32.gmra.mrb[0].mxu0 %v808
    %v2699 = vpop.f32.mrb[0].mxu0
    %v2700 = vadd.f32 0.0, %v2699
    %v2701 = vpop.f32.mrb[0].mxu0
    %v2702 = vadd.f32 0.0, %v2701
    %2703 = vdwg.mxu0
    %v2704 = vadd.f32 %v2599, %v2688
    %v2705 = vadd.f32 %v2601, %v2690
    %v2706 = vadd.f32 %v2605, %v2694
    %v2707 = vadd.f32 %v2607, %v2696
    %v2708 = vadd.f32 %v2611, %v2700
    %v2709 = vadd.f32 %v2613, %v2702
    %s2710 = scalar_lea.vmem %s6, 96
    %v2711 = vld [vmem:[%s2710] sm:$0xff]
    %v2712 = vld [vmem:[%s2710 + $0x8] sm:$0xff]
    %v2713 = vld [vmem:[%s2710 + $0x10] sm:$0xff]
    %v2714 = vld [vmem:[%s2710 + $0x18] sm:$0xff]
    %v2715 = vld [vmem:[%s2710 + $0x20] sm:$0xf]
    %v2716 = vld [vmem:[%s2710 + $0x28] sm:$0xf]
    %v2717 = vadd.f32 %v2704, %v2711
    %v2718 = vadd.f32 %v2705, %v2712
    %v2719 = vadd.f32 %v2706, %v2713
    %v2720 = vadd.f32 %v2707, %v2714
    %v2721 = vadd.f32 %v2708, %v2715
    %v2722 = vadd.f32 %v2709, %v2716
    %v2723 = vmax.f32 %v2717, 0.0
    %v2724 = vmax.f32 %v2718, 0.0
    %v2725 = vmax.f32 %v2719, 0.0
    %v2726 = vmax.f32 %v2720, 0.0
    %v2727 = vmax.f32 %v2721, 0.0
    %v2728 = vmax.f32 %v2722, 0.0
    %s2729 = scalar_lea.vmem %s5, 2880
    %v2730 = vld [vmem:[%s2729] sm:$0xff]
    %v2731 = vld [vmem:[%s2729 + $0x8] sm:$0xff]
    %v2732 = vld [vmem:[%s2729 + $0x10] sm:$0xff]
    %v2733 = vld [vmem:[%s2729 + $0x18] sm:$0xff]
    %v2734 = vld [vmem:[%s2729 + $0x20] sm:$0xff]
    %v2735 = vld [vmem:[%s2729 + $0x28] sm:$0xff]
    %v2736 = vld [vmem:[%s2729 + $0x30] sm:$0xff]
    %v2737 = vld [vmem:[%s2729 + $0x38] sm:$0xff]
    %v2738 = vld [vmem:[%s2729 + $0x40] sm:$0xff]
    %v2739 = vld [vmem:[%s2729 + $0x48] sm:$0xff]
    %v2740 = vld [vmem:[%s2729 + $0x50] sm:$0xff]
    %v2741 = vld [vmem:[%s2729 + $0x58] sm:$0xff]
    %v2742 = vld [vmem:[%s2729 + $0x60] sm:$0xff]
    %v2743 = vld [vmem:[%s2729 + $0x68] sm:$0xff]
    %v2744 = vld [vmem:[%s2729 + $0x70] sm:$0xff]
    %v2745 = vld [vmem:[%s2729 + $0x78] sm:$0xff]
    %v2746 = vld [vmem:[%s2729 + $0x80] sm:$0xff]
    %v2747 = vld [vmem:[%s2729 + $0x88] sm:$0xff]
    %v2748 = vld [vmem:[%s2729 + $0x90] sm:$0xff]
    %v2749 = vld [vmem:[%s2729 + $0x98] sm:$0xff]
    %v2750 = vld [vmem:[%s2729 + $0xa0] sm:$0xff]
    %v2751 = vld [vmem:[%s2729 + $0xa8] sm:$0xff]
    %v2752 = vld [vmem:[%s2729 + $0xb0] sm:$0xff]
    %v2753 = vld [vmem:[%s2729 + $0xb8] sm:$0xff]
    %v2754 = vld [vmem:[%s2729 + $0xc0] sm:$0xff]
    %v2755 = vld [vmem:[%s2729 + $0xc8] sm:$0xff]
    %v2756 = vld [vmem:[%s2729 + $0xd0] sm:$0xff]
    %v2757 = vld [vmem:[%s2729 + $0xd8] sm:$0xff]
    %v2758 = vld [vmem:[%s2729 + $0xe0] sm:$0xff]
    %v2759 = vld [vmem:[%s2729 + $0xe8] sm:$0xff]
    %v2760 = vld [vmem:[%s2729 + $0xf0] sm:$0xff]
    %v2761 = vld [vmem:[%s2729 + $0xf8] sm:$0xff]
    %v2762 = vld [vmem:[%s2729 + $0x100] sm:$0xff]
    %v2763 = vld [vmem:[%s2729 + $0x108] sm:$0xff]
    %v2764 = vld [vmem:[%s2729 + $0x110] sm:$0xff]
    %v2765 = vld [vmem:[%s2729 + $0x118] sm:$0xff]
    %v2766 = vld [vmem:[%s2729 + $0x120] sm:$0xff]
    %v2767 = vld [vmem:[%s2729 + $0x128] sm:$0xff]
    %v2768 = vld [vmem:[%s2729 + $0x130] sm:$0xff]
    %v2769 = vld [vmem:[%s2729 + $0x138] sm:$0xff]
    %v2771 = vsel %vm262, %v2724, 0
    %v2774 = vsel %vm262, %v2726, 0
    %v2777 = vsel %vm262, %v2728, 0
    %2779 = vmatprep.subr.mxu0 %v2731
    %2780 = vmatpush1.msra.mxu0 %v2730
    %2781 = vmatprep.subr.mxu0 %v2733
    %2782 = vmatpush1.msra.mxu0 %v2732
    %2783 = vmatprep.subr.mxu0 %v2735
    %2784 = vmatpush1.msra.mxu0 %v2734
    %2785 = vmatprep.subr.mxu0 %v2737
    %2786 = vmatpush1.msra.mxu0 %v2736
    %2787 = vmatprep.subr.mxu0 %v2739
    %2788 = vmatpush1.msra.mxu0 %v2738
    %2789 = vmatprep.subr.mxu0 %v2741
    %2790 = vmatpush1.msra.mxu0 %v2740
    %2791 = vmatprep.subr.mxu0 %v2743
    %2792 = vmatpush1.msra.mxu0 %v2742
    %2793 = vmatprep.subr.mxu0 %v2745
    %2794 = vmatpush1.msra.mxu0 %v2744
    %2795 = vmatprep.subr.mxu0 %v2747
    %2796 = vmatpush1.msra.mxu0 %v2746
    %2797 = vmatprep.subr.mxu0 %v2749
    %2798 = vmatpush1.msra.mxu0 %v2748
    %2799 = vmatprep.subr.mxu0 %v2751
    %2800 = vmatpush1.msra.mxu0 %v2750
    %2801 = vmatprep.subr.mxu0 %v2753
    %2802 = vmatpush1.msra.mxu0 %v2752
    %2803 = vmatprep.subr.mxu0 %v2755
    %2804 = vmatpush1.msra.mxu0 %v2754
    %2805 = vmatprep.subr.mxu0 %v2757
    %2806 = vmatpush1.msra.mxu0 %v2756
    %2807 = vmatprep.subr.mxu0 %v2759
    %2808 = vmatpush1.msra.mxu0 %v2758
    %2809 = vmatprep.subr.mxu0 %v2761
    %2810 = vmatpush1.msra.mxu0 %v2760
    %2811 = vmatprep.subr.mxu0 %v2763
    %2812 = vmatpush1.msra.mxu0 %v2762
    %2813 = vmatprep.subr.mxu0 %v2765
    %2814 = vmatpush1.msra.mxu0 %v2764
    %2815 = vmatprep.subr.mxu0 %v2767
    %2816 = vmatpush1.msra.mxu0 %v2766
    %2817 = vmatprep.subr.mxu0 %v2769
    %2818 = vmatpush1.msra.mxu0 %v2768
    %2819 = vmatprep.subr.mxu0 0.0
    %2820 = vmatpush1.msra.mxu0 0.0
    %2821 = vmatprep.subr.mxu0 0.0
    %2822 = vmatpush1.msra.mxu0 0.0
    %2823 = vmatprep.subr.mxu0 0.0
    %2824 = vmatpush1.msra.mxu0 0.0
    %2825 = vmatprep.subr.mxu0 0.0
    %2826 = vmatpush1.msra.mxu0 0.0
    %2827 = vmatprep.subr.mxu0 0.0
    %2828 = vmatpush1.msra.mxu0 0.0
    %2829 = vmatprep.subr.mxu0 0.0
    %2830 = vmatpush1.msra.mxu0 0.0
    %2831 = vmatprep.subr.mxu0 0.0
    %2832 = vmatpush1.msra.mxu0 0.0
    %2833 = vmatprep.subr.mxu0 0.0
    %2834 = vmatpush1.msra.mxu0 0.0
    %2835 = vmatprep.subr.mxu0 0.0
    %2836 = vmatpush1.msra.mxu0 0.0
    %2837 = vmatprep.subr.mxu0 0.0
    %2838 = vmatpush1.msra.mxu0 0.0
    %2839 = vmatprep.subr.mxu0 0.0
    %2840 = vmatpush1.msra.mxu0 0.0
    %2841 = vmatprep.subr.mxu0 0.0
    %2842 = vmatpush1.msra.mxu0 0.0
    %2843 = vmatprep.mubr.f32.mxu0 %v2771
    %2844 = vmatmul.mubr.f32.gmra.mrb[0].mxu0 %v2723
    %v2845 = vpop.f32.mrb[0].mxu0
    %v2846 = vadd.f32 0.0, %v2845
    %v2847 = vpop.f32.mrb[0].mxu0
    %v2848 = vadd.f32 0.0, %v2847
    %2849 = vmatprep.mubr.f32.mxu0 %v2774
    %2850 = vmatmul.mubr.f32.gmra.mrb[0].mxu0 %v2725
    %v2851 = vpop.f32.mrb[0].mxu0
    %v2852 = vadd.f32 0.0, %v2851
    %v2853 = vpop.f32.mrb[0].mxu0
    %v2854 = vadd.f32 0.0, %v2853
    %2855 = vmatprep.mubr.f32.mxu0 %v2777
    %2856 = vmatmul.mubr.f32.gmra.mrb[0].mxu0 %v2727
    %v2857 = vpop.f32.mrb[0].mxu0
    %v2858 = vadd.f32 0.0, %v2857
    %v2859 = vpop.f32.mrb[0].mxu0
    %v2860 = vadd.f32 0.0, %v2859
    %2861 = vdwg.mxu0
    %s2862 = scalar_lea.vmem %s5, 3200
    %v2863 = vld [vmem:[%s2862] sm:$0xff]
    %v2864 = vld [vmem:[%s2862 + $0x8] sm:$0xff]
    %v2865 = vld [vmem:[%s2862 + $0x10] sm:$0xff]
    %v2866 = vld [vmem:[%s2862 + $0x18] sm:$0xff]
    %v2867 = vld [vmem:[%s2862 + $0x20] sm:$0xff]
    %v2868 = vld [vmem:[%s2862 + $0x28] sm:$0xff]
    %v2869 = vld [vmem:[%s2862 + $0x30] sm:$0xff]
    %v2870 = vld [vmem:[%s2862 + $0x38] sm:$0xff]
    %v2871 = vld [vmem:[%s2862 + $0x40] sm:$0xff]
    %v2872 = vld [vmem:[%s2862 + $0x48] sm:$0xff]
    %v2873 = vld [vmem:[%s2862 + $0x50] sm:$0xff]
    %v2874 = vld [vmem:[%s2862 + $0x58] sm:$0xff]
    %v2875 = vld [vmem:[%s2862 + $0x60] sm:$0xff]
    %v2876 = vld [vmem:[%s2862 + $0x68] sm:$0xff]
    %v2877 = vld [vmem:[%s2862 + $0x70] sm:$0xff]
    %v2878 = vld [vmem:[%s2862 + $0x78] sm:$0xff]
    %v2879 = vld [vmem:[%s2862 + $0x80] sm:$0xff]
    %v2880 = vld [vmem:[%s2862 + $0x88] sm:$0xff]
    %v2881 = vld [vmem:[%s2862 + $0x90] sm:$0xff]
    %v2882 = vld [vmem:[%s2862 + $0x98] sm:$0xff]
    %v2883 = vld [vmem:[%s2862 + $0xa0] sm:$0xff]
    %v2884 = vld [vmem:[%s2862 + $0xa8] sm:$0xff]
    %v2885 = vld [vmem:[%s2862 + $0xb0] sm:$0xff]
    %v2886 = vld [vmem:[%s2862 + $0xb8] sm:$0xff]
    %v2887 = vld [vmem:[%s2862 + $0xc0] sm:$0xff]
    %v2888 = vld [vmem:[%s2862 + $0xc8] sm:$0xff]
    %v2889 = vld [vmem:[%s2862 + $0xd0] sm:$0xff]
    %v2890 = vld [vmem:[%s2862 + $0xd8] sm:$0xff]
    %v2891 = vld [vmem:[%s2862 + $0xe0] sm:$0xff]
    %v2892 = vld [vmem:[%s2862 + $0xe8] sm:$0xff]
    %v2893 = vld [vmem:[%s2862 + $0xf0] sm:$0xff]
    %v2894 = vld [vmem:[%s2862 + $0xf8] sm:$0xff]
    %v2895 = vld [vmem:[%s2862 + $0x100] sm:$0xff]
    %v2896 = vld [vmem:[%s2862 + $0x108] sm:$0xff]
    %v2897 = vld [vmem:[%s2862 + $0x110] sm:$0xff]
    %v2898 = vld [vmem:[%s2862 + $0x118] sm:$0xff]
    %v2899 = vld [vmem:[%s2862 + $0x120] sm:$0xff]
    %v2900 = vld [vmem:[%s2862 + $0x128] sm:$0xff]
    %v2901 = vld [vmem:[%s2862 + $0x130] sm:$0xff]
    %v2902 = vld [vmem:[%s2862 + $0x138] sm:$0xff]
    %2903 = vmatprep.subr.mxu0 %v2864
    %2904 = vmatpush1.msra.mxu0 %v2863
    %2905 = vmatprep.subr.mxu0 %v2866
    %2906 = vmatpush1.msra.mxu0 %v2865
    %2907 = vmatprep.subr.mxu0 %v2868
    %2908 = vmatpush1.msra.mxu0 %v2867
    %2909 = vmatprep.subr.mxu0 %v2870
    %2910 = vmatpush1.msra.mxu0 %v2869
    %2911 = vmatprep.subr.mxu0 %v2872
    %2912 = vmatpush1.msra.mxu0 %v2871
    %2913 = vmatprep.subr.mxu0 %v2874
    %2914 = vmatpush1.msra.mxu0 %v2873
    %2915 = vmatprep.subr.mxu0 %v2876
    %2916 = vmatpush1.msra.mxu0 %v2875
    %2917 = vmatprep.subr.mxu0 %v2878
    %2918 = vmatpush1.msra.mxu0 %v2877
    %2919 = vmatprep.subr.mxu0 %v2880
    %2920 = vmatpush1.msra.mxu0 %v2879
    %2921 = vmatprep.subr.mxu0 %v2882
    %2922 = vmatpush1.msra.mxu0 %v2881
    %2923 = vmatprep.subr.mxu0 %v2884
    %2924 = vmatpush1.msra.mxu0 %v2883
    %2925 = vmatprep.subr.mxu0 %v2886
    %2926 = vmatpush1.msra.mxu0 %v2885
    %2927 = vmatprep.subr.mxu0 %v2888
    %2928 = vmatpush1.msra.mxu0 %v2887
    %2929 = vmatprep.subr.mxu0 %v2890
    %2930 = vmatpush1.msra.mxu0 %v2889
    %2931 = vmatprep.subr.mxu0 %v2892
    %2932 = vmatpush1.msra.mxu0 %v2891
    %2933 = vmatprep.subr.mxu0 %v2894
    %2934 = vmatpush1.msra.mxu0 %v2893
    %2935 = vmatprep.subr.mxu0 %v2896
    %2936 = vmatpush1.msra.mxu0 %v2895
    %2937 = vmatprep.subr.mxu0 %v2898
    %2938 = vmatpush1.msra.mxu0 %v2897
    %2939 = vmatprep.subr.mxu0 %v2900
    %2940 = vmatpush1.msra.mxu0 %v2899
    %2941 = vmatprep.subr.mxu0 %v2902
    %2942 = vmatpush1.msra.mxu0 %v2901
    %2943 = vmatprep.subr.mxu0 0.0
    %2944 = vmatpush1.msra.mxu0 0.0
    %2945 = vmatprep.subr.mxu0 0.0
    %2946 = vmatpush1.msra.mxu0 0.0
    %2947 = vmatprep.subr.mxu0 0.0
    %2948 = vmatpush1.msra.mxu0 0.0
    %2949 = vmatprep.subr.mxu0 0.0
    %2950 = vmatpush1.msra.mxu0 0.0
    %2951 = vmatprep.subr.mxu0 0.0
    %2952 = vmatpush1.msra.mxu0 0.0
    %2953 = vmatprep.subr.mxu0 0.0
    %2954 = vmatpush1.msra.mxu0 0.0
    %2955 = vmatprep.subr.mxu0 0.0
    %2956 = vmatpush1.msra.mxu0 0.0
    %2957 = vmatprep.subr.mxu0 0.0
    %2958 = vmatpush1.msra.mxu0 0.0
    %2959 = vmatprep.subr.mxu0 0.0
    %2960 = vmatpush1.msra.mxu0 0.0
    %2961 = vmatprep.subr.mxu0 0.0
    %2962 = vmatpush1.msra.mxu0 0.0
    %2963 = vmatprep.subr.mxu0 0.0
    %2964 = vmatpush1.msra.mxu0 0.0
    %2965 = vmatprep.subr.mxu0 0.0
    %2966 = vmatpush1.msra.mxu0 0.0
    %2967 = vmatprep.mubr.f32.mxu0 %v2771
    %2968 = vmatmul.mubr.f32.gmra.mrb[0].mxu0 %v2723
    %v2969 = vpop.f32.mrb[0].mxu0
    %v2970 = vadd.f32 0.0, %v2969
    %v2971 = vpop.f32.mrb[0].mxu0
    %v2972 = vadd.f32 0.0, %v2971
    %2973 = vmatprep.mubr.f32.mxu0 %v2774
    %2974 = vmatmul.mubr.f32.gmra.mrb[0].mxu0 %v2725
    %v2975 = vpop.f32.mrb[0].mxu0
    %v2976 = vadd.f32 0.0, %v2975
    %v2977 = vpop.f32.mrb[0].mxu0
    %v2978 = vadd.f32 0.0, %v2977
    %2979 = vmatprep.mubr.f32.mxu0 %v2777
    %2980 = vmatmul.mubr.f32.gmra.mrb[0].mxu0 %v2727
    %v2981 = vpop.f32.mrb[0].mxu0
    %v2982 = vadd.f32 0.0, %v2981
    %v2983 = vpop.f32.mrb[0].mxu0
    %v2984 = vadd.f32 0.0, %v2983
    %2985 = vdwg.mxu0
    %s2986 = scalar_lea.vmem %s5, 3520
    %v2987 = vld [vmem:[%s2986] sm:$0xff]
    %v2988 = vld [vmem:[%s2986 + $0x8] sm:$0xff]
    %v2989 = vld [vmem:[%s2986 + $0x10] sm:$0xff]
    %v2990 = vld [vmem:[%s2986 + $0x18] sm:$0xff]
    %v2991 = vld [vmem:[%s2986 + $0x20] sm:$0xff]
    %v2992 = vld [vmem:[%s2986 + $0x28] sm:$0xff]
    %v2993 = vld [vmem:[%s2986 + $0x30] sm:$0xff]
    %v2994 = vld [vmem:[%s2986 + $0x38] sm:$0xff]
    %v2995 = vld [vmem:[%s2986 + $0x40] sm:$0xff]
    %v2996 = vld [vmem:[%s2986 + $0x48] sm:$0xff]
    %v2997 = vld [vmem:[%s2986 + $0x50] sm:$0xff]
    %v2998 = vld [vmem:[%s2986 + $0x58] sm:$0xff]
    %v2999 = vld [vmem:[%s2986 + $0x60] sm:$0xff]
    %v3000 = vld [vmem:[%s2986 + $0x68] sm:$0xff]
    %v3001 = vld [vmem:[%s2986 + $0x70] sm:$0xff]
    %v3002 = vld [vmem:[%s2986 + $0x78] sm:$0xff]
    %v3003 = vld [vmem:[%s2986 + $0x80] sm:$0xff]
    %v3004 = vld [vmem:[%s2986 + $0x88] sm:$0xff]
    %v3005 = vld [vmem:[%s2986 + $0x90] sm:$0xff]
    %v3006 = vld [vmem:[%s2986 + $0x98] sm:$0xff]
    %v3007 = vld [vmem:[%s2986 + $0xa0] sm:$0xff]
    %v3008 = vld [vmem:[%s2986 + $0xa8] sm:$0xff]
    %v3009 = vld [vmem:[%s2986 + $0xb0] sm:$0xff]
    %v3010 = vld [vmem:[%s2986 + $0xb8] sm:$0xff]
    %v3011 = vld [vmem:[%s2986 + $0xc0] sm:$0xff]
    %v3012 = vld [vmem:[%s2986 + $0xc8] sm:$0xff]
    %v3013 = vld [vmem:[%s2986 + $0xd0] sm:$0xff]
    %v3014 = vld [vmem:[%s2986 + $0xd8] sm:$0xff]
    %v3015 = vld [vmem:[%s2986 + $0xe0] sm:$0xff]
    %v3016 = vld [vmem:[%s2986 + $0xe8] sm:$0xff]
    %v3017 = vld [vmem:[%s2986 + $0xf0] sm:$0xff]
    %v3018 = vld [vmem:[%s2986 + $0xf8] sm:$0xff]
    %v3019 = vld [vmem:[%s2986 + $0x100] sm:$0xff]
    %v3020 = vld [vmem:[%s2986 + $0x108] sm:$0xff]
    %v3021 = vld [vmem:[%s2986 + $0x110] sm:$0xff]
    %v3022 = vld [vmem:[%s2986 + $0x118] sm:$0xff]
    %v3023 = vld [vmem:[%s2986 + $0x120] sm:$0xff]
    %v3024 = vld [vmem:[%s2986 + $0x128] sm:$0xff]
    %v3025 = vld [vmem:[%s2986 + $0x130] sm:$0xff]
    %v3026 = vld [vmem:[%s2986 + $0x138] sm:$0xff]
    %3027 = vmatprep.subr.mxu0 %v2988
    %3028 = vmatpush1.msra.mxu0 %v2987
    %3029 = vmatprep.subr.mxu0 %v2990
    %3030 = vmatpush1.msra.mxu0 %v2989
    %3031 = vmatprep.subr.mxu0 %v2992
    %3032 = vmatpush1.msra.mxu0 %v2991
    %3033 = vmatprep.subr.mxu0 %v2994
    %3034 = vmatpush1.msra.mxu0 %v2993
    %3035 = vmatprep.subr.mxu0 %v2996
    %3036 = vmatpush1.msra.mxu0 %v2995
    %3037 = vmatprep.subr.mxu0 %v2998
    %3038 = vmatpush1.msra.mxu0 %v2997
    %3039 = vmatprep.subr.mxu0 %v3000
    %3040 = vmatpush1.msra.mxu0 %v2999
    %3041 = vmatprep.subr.mxu0 %v3002
    %3042 = vmatpush1.msra.mxu0 %v3001
    %3043 = vmatprep.subr.mxu0 %v3004
    %3044 = vmatpush1.msra.mxu0 %v3003
    %3045 = vmatprep.subr.mxu0 %v3006
    %3046 = vmatpush1.msra.mxu0 %v3005
    %3047 = vmatprep.subr.mxu0 %v3008
    %3048 = vmatpush1.msra.mxu0 %v3007
    %3049 = vmatprep.subr.mxu0 %v3010
    %3050 = vmatpush1.msra.mxu0 %v3009
    %3051 = vmatprep.subr.mxu0 %v3012
    %3052 = vmatpush1.msra.mxu0 %v3011
    %3053 = vmatprep.subr.mxu0 %v3014
    %3054 = vmatpush1.msra.mxu0 %v3013
    %3055 = vmatprep.subr.mxu0 %v3016
    %3056 = vmatpush1.msra.mxu0 %v3015
    %3057 = vmatprep.subr.mxu0 %v3018
    %3058 = vmatpush1.msra.mxu0 %v3017
    %3059 = vmatprep.subr.mxu0 %v3020
    %3060 = vmatpush1.msra.mxu0 %v3019
    %3061 = vmatprep.subr.mxu0 %v3022
    %3062 = vmatpush1.msra.mxu0 %v3021
    %3063 = vmatprep.subr.mxu0 %v3024
    %3064 = vmatpush1.msra.mxu0 %v3023
    %3065 = vmatprep.subr.mxu0 %v3026
    %3066 = vmatpush1.msra.mxu0 %v3025
    %3067 = vmatprep.subr.mxu0 0.0
    %3068 = vmatpush1.msra.mxu0 0.0
    %3069 = vmatprep.subr.mxu0 0.0
    %3070 = vmatpush1.msra.mxu0 0.0
    %3071 = vmatprep.subr.mxu0 0.0
    %3072 = vmatpush1.msra.mxu0 0.0
    %3073 = vmatprep.subr.mxu0 0.0
    %3074 = vmatpush1.msra.mxu0 0.0
    %3075 = vmatprep.subr.mxu0 0.0
    %3076 = vmatpush1.msra.mxu0 0.0
    %3077 = vmatprep.subr.mxu0 0.0
    %3078 = vmatpush1.msra.mxu0 0.0
    %3079 = vmatprep.subr.mxu0 0.0
    %3080 = vmatpush1.msra.mxu0 0.0
    %3081 = vmatprep.subr.mxu0 0.0
    %3082 = vmatpush1.msra.mxu0 0.0
    %3083 = vmatprep.subr.mxu0 0.0
    %3084 = vmatpush1.msra.mxu0 0.0
    %3085 = vmatprep.subr.mxu0 0.0
    %3086 = vmatpush1.msra.mxu0 0.0
    %3087 = vmatprep.subr.mxu0 0.0
    %3088 = vmatpush1.msra.mxu0 0.0
    %3089 = vmatprep.subr.mxu0 0.0
    %3090 = vmatpush1.msra.mxu0 0.0
    %3091 = vmatprep.mubr.f32.mxu0 %v2771
    %3092 = vmatmul.mubr.f32.gmra.mrb[0].mxu0 %v2723
    %v3093 = vpop.f32.mrb[0].mxu0
    %v3094 = vadd.f32 0.0, %v3093
    %v3095 = vpop.f32.mrb[0].mxu0
    %v3096 = vadd.f32 0.0, %v3095
    %3097 = vmatprep.mubr.f32.mxu0 %v2774
    %3098 = vmatmul.mubr.f32.gmra.mrb[0].mxu0 %v2725
    %v3099 = vpop.f32.mrb[0].mxu0
    %v3100 = vadd.f32 0.0, %v3099
    %v3101 = vpop.f32.mrb[0].mxu0
    %v3102 = vadd.f32 0.0, %v3101
    %3103 = vmatprep.mubr.f32.mxu0 %v2777
    %3104 = vmatmul.mubr.f32.gmra.mrb[0].mxu0 %v2727
    %v3105 = vpop.f32.mrb[0].mxu0
    %v3106 = vadd.f32 0.0, %v3105
    %v3107 = vpop.f32.mrb[0].mxu0
    %v3108 = vadd.f32 0.0, %v3107
    %3109 = vdwg.mxu0
    %v3111 = vsel %vm613, %v2982, 0
    %v3114 = vsel %vm613, %v2984, 0
    %3116 = vmatprep.subr.mxu0 %v2972
    %3117 = vmatpush1.msra.mxu0 %v2970
    %3118 = vmatprep.subr.mxu0 %v2978
    %3119 = vmatpush1.msra.mxu0 %v2976
    %3120 = vmatprep.subr.mxu0 %v3114
    %3121 = vmatpush1.msra.mxu0 %v3111
    %3122 = vmatprep.subr.mxu0 0.0
    %3123 = vmatpush1.msra.mxu0 0.0
    %3124 = vmatprep.subr.mxu0 0.0
    %3125 = vmatpush1.msra.mxu0 0.0
    %3126 = vmatprep.subr.mxu0 0.0
    %3127 = vmatpush1.msra.mxu0 0.0
    %3128 = vmatprep.subr.mxu0 0.0
    %3129 = vmatpush1.msra.mxu0 0.0
    %3130 = vmatprep.subr.mxu0 0.0
    %3131 = vmatpush1.msra.mxu0 0.0
    %3132 = vmatprep.subr.mxu0 0.0
    %3133 = vmatpush1.msra.mxu0 0.0
    %3134 = vmatprep.subr.mxu0 0.0
    %3135 = vmatpush1.msra.mxu0 0.0
    %3136 = vmatprep.subr.mxu0 0.0
    %3137 = vmatpush1.msra.mxu0 0.0
    %3138 = vmatprep.subr.mxu0 0.0
    %3139 = vmatpush1.msra.mxu0 0.0
    %3140 = vmatprep.subr.mxu0 0.0
    %3141 = vmatpush1.msra.mxu0 0.0
    %3142 = vmatprep.subr.mxu0 0.0
    %3143 = vmatpush1.msra.mxu0 0.0
    %3144 = vmatprep.subr.mxu0 0.0
    %3145 = vmatpush1.msra.mxu0 0.0
    %3146 = vmatprep.subr.mxu0 0.0
    %3147 = vmatpush1.msra.mxu0 0.0
    %3148 = vmatprep.subr.mxu0 0.0
    %3149 = vmatpush1.msra.mxu0 0.0
    %3150 = vmatprep.subr.mxu0 0.0
    %3151 = vmatpush1.msra.mxu0 0.0
    %3152 = vmatprep.subr.mxu0 0.0
    %3153 = vmatpush1.msra.mxu0 0.0
    %3154 = vmatprep.subr.mxu0 0.0
    %3155 = vmatpush1.msra.mxu0 0.0
    %3156 = vmatprep.subr.mxu0 0.0
    %3157 = vmatpush1.msra.mxu0 0.0
    %3158 = vmatprep.subr.mxu0 0.0
    %3159 = vmatpush1.msra.mxu0 0.0
    %3160 = vmatprep.subr.mxu0 0.0
    %3161 = vmatpush1.msra.mxu0 0.0
    %3162 = vmatprep.subr.mxu0 0.0
    %3163 = vmatpush1.msra.mxu0 0.0
    %3164 = vmatprep.subr.mxu0 0.0
    %3165 = vmatpush1.msra.mxu0 0.0
    %3166 = vmatprep.subr.mxu0 0.0
    %3167 = vmatpush1.msra.mxu0 0.0
    %3168 = vmatprep.subr.mxu0 0.0
    %3169 = vmatpush1.msra.mxu0 0.0
    %3170 = vmatprep.subr.mxu0 0.0
    %3171 = vmatpush1.msra.mxu0 0.0
    %3172 = vmatprep.subr.mxu0 0.0
    %3173 = vmatpush1.msra.mxu0 0.0
    %3174 = vmatprep.subr.mxu0 0.0
    %3175 = vmatpush1.msra.mxu0 0.0
    %3176 = vmatprep.subr.mxu0 0.0
    %3177 = vmatpush1.msra.mxu0 0.0
    %3178 = vmatprep.subr.mxu0 0.0
    %3179 = vmatpush1.msra.mxu0 0.0
    %3180 = vmatprep.mubr.f32.mxu0 0.0
    %3181 = vmatmul.mubr.f32.gmra.mrb[0].mxu0 %v605
    %v3182 = vpop.f32.mrb[0].mxu0
    %v3183 = vadd.f32 0.0, %v3182
    %v3184 = vpop.f32.mrb[0].mxu0
    %v3185 = vadd.f32 0.0, %v3184
    %3186 = vmatprep.mubr.f32.mxu0 0.0
    %3187 = vmatmul.mubr.f32.gmra.mrb[0].mxu0 %v608
    %v3188 = vpop.f32.mrb[0].mxu0
    %v3189 = vadd.f32 0.0, %v3188
    %v3190 = vpop.f32.mrb[0].mxu0
    %v3191 = vadd.f32 0.0, %v3190
    %3192 = vmatprep.mubr.f32.mxu0 0.0
    %3193 = vmatmul.mubr.f32.gmra.mrb[0].mxu0 %v611
    %v3194 = vpop.f32.mrb[0].mxu0
    %v3195 = vadd.f32 0.0, %v3194
    %v3196 = vpop.f32.mrb[0].mxu0
    %v3197 = vadd.f32 0.0, %v3196
    %3198 = vdwg.mxu0
    %v3200 = vsel %vm613, %v2858, 0
    %v3203 = vsel %vm613, %v2860, 0
    %3205 = vmatprep.subr.mxu0 %v2848
    %3206 = vmatpush1.msra.mxu0 %v2846
    %3207 = vmatprep.subr.mxu0 %v2854
    %3208 = vmatpush1.msra.mxu0 %v2852
    %3209 = vmatprep.subr.mxu0 %v3203
    %3210 = vmatpush1.msra.mxu0 %v3200
    %3211 = vmatprep.subr.mxu0 0.0
    %3212 = vmatpush1.msra.mxu0 0.0
    %3213 = vmatprep.subr.mxu0 0.0
    %3214 = vmatpush1.msra.mxu0 0.0
    %3215 = vmatprep.subr.mxu0 0.0
    %3216 = vmatpush1.msra.mxu0 0.0
    %3217 = vmatprep.subr.mxu0 0.0
    %3218 = vmatpush1.msra.mxu0 0.0
    %3219 = vmatprep.subr.mxu0 0.0
    %3220 = vmatpush1.msra.mxu0 0.0
    %3221 = vmatprep.subr.mxu0 0.0
    %3222 = vmatpush1.msra.mxu0 0.0
    %3223 = vmatprep.subr.mxu0 0.0
    %3224 = vmatpush1.msra.mxu0 0.0
    %3225 = vmatprep.subr.mxu0 0.0
    %3226 = vmatpush1.msra.mxu0 0.0
    %3227 = vmatprep.subr.mxu0 0.0
    %3228 = vmatpush1.msra.mxu0 0.0
    %3229 = vmatprep.subr.mxu0 0.0
    %3230 = vmatpush1.msra.mxu0 0.0
    %3231 = vmatprep.subr.mxu0 0.0
    %3232 = vmatpush1.msra.mxu0 0.0
    %3233 = vmatprep.subr.mxu0 0.0
    %3234 = vmatpush1.msra.mxu0 0.0
    %3235 = vmatprep.subr.mxu0 0.0
    %3236 = vmatpush1.msra.mxu0 0.0
    %3237 = vmatprep.subr.mxu0 0.0
    %3238 = vmatpush1.msra.mxu0 0.0
    %3239 = vmatprep.subr.mxu0 0.0
    %3240 = vmatpush1.msra.mxu0 0.0
    %3241 = vmatprep.subr.mxu0 0.0
    %3242 = vmatpush1.msra.mxu0 0.0
    %3243 = vmatprep.subr.mxu0 0.0
    %3244 = vmatpush1.msra.mxu0 0.0
    %3245 = vmatprep.subr.mxu0 0.0
    %3246 = vmatpush1.msra.mxu0 0.0
    %3247 = vmatprep.subr.mxu0 0.0
    %3248 = vmatpush1.msra.mxu0 0.0
    %3249 = vmatprep.subr.mxu0 0.0
    %3250 = vmatpush1.msra.mxu0 0.0
    %3251 = vmatprep.subr.mxu0 0.0
    %3252 = vmatpush1.msra.mxu0 0.0
    %3253 = vmatprep.subr.mxu0 0.0
    %3254 = vmatpush1.msra.mxu0 0.0
    %3255 = vmatprep.subr.mxu0 0.0
    %3256 = vmatpush1.msra.mxu0 0.0
    %3257 = vmatprep.subr.mxu0 0.0
    %3258 = vmatpush1.msra.mxu0 0.0
    %3259 = vmatprep.subr.mxu0 0.0
    %3260 = vmatpush1.msra.mxu0 0.0
    %3261 = vmatprep.subr.mxu0 0.0
    %3262 = vmatpush1.msra.mxu0 0.0
    %3263 = vmatprep.subr.mxu0 0.0
    %3264 = vmatpush1.msra.mxu0 0.0
    %3265 = vmatprep.subr.mxu0 0.0
    %3266 = vmatpush1.msra.mxu0 0.0
    %3267 = vmatprep.subr.mxu0 0.0
    %3268 = vmatpush1.msra.mxu0 0.0
    %3269 = vmatprep.mubr.f32.mxu0 0.0
    %3270 = vmatmul.mubr.f32.gmra.mrb[0].mxu0 %v704
    %v3271 = vpop.f32.mrb[0].mxu0
    %v3272 = vadd.f32 %v3183, %v3271
    %v3273 = vpop.f32.mrb[0].mxu0
    %v3274 = vadd.f32 %v3185, %v3273
    %3275 = vmatprep.mubr.f32.mxu0 0.0
    %3276 = vmatmul.mubr.f32.gmra.mrb[0].mxu0 %v707
    %v3277 = vpop.f32.mrb[0].mxu0
    %v3278 = vadd.f32 %v3189, %v3277
    %v3279 = vpop.f32.mrb[0].mxu0
    %v3280 = vadd.f32 %v3191, %v3279
    %3281 = vmatprep.mubr.f32.mxu0 0.0
    %3282 = vmatmul.mubr.f32.gmra.mrb[0].mxu0 %v710
    %v3283 = vpop.f32.mrb[0].mxu0
    %v3284 = vadd.f32 %v3195, %v3283
    %v3285 = vpop.f32.mrb[0].mxu0
    %v3286 = vadd.f32 %v3197, %v3285
    %3287 = vdwg.mxu0
    %v3289 = vsel %vm613, %v3106, 0
    %v3292 = vsel %vm613, %v3108, 0
    %3294 = vmatprep.subr.mxu0 %v3096
    %3295 = vmatpush1.msra.mxu0 %v3094
    %3296 = vmatprep.subr.mxu0 %v3102
    %3297 = vmatpush1.msra.mxu0 %v3100
    %3298 = vmatprep.subr.mxu0 %v3292
    %3299 = vmatpush1.msra.mxu0 %v3289
    %3300 = vmatprep.subr.mxu0 0.0
    %3301 = vmatpush1.msra.mxu0 0.0
    %3302 = vmatprep.subr.mxu0 0.0
    %3303 = vmatpush1.msra.mxu0 0.0
    %3304 = vmatprep.subr.mxu0 0.0
    %3305 = vmatpush1.msra.mxu0 0.0
    %3306 = vmatprep.subr.mxu0 0.0
    %3307 = vmatpush1.msra.mxu0 0.0
    %3308 = vmatprep.subr.mxu0 0.0
    %3309 = vmatpush1.msra.mxu0 0.0
    %3310 = vmatprep.subr.mxu0 0.0
    %3311 = vmatpush1.msra.mxu0 0.0
    %3312 = vmatprep.subr.mxu0 0.0
    %3313 = vmatpush1.msra.mxu0 0.0
    %3314 = vmatprep.subr.mxu0 0.0
    %3315 = vmatpush1.msra.mxu0 0.0
    %3316 = vmatprep.subr.mxu0 0.0
    %3317 = vmatpush1.msra.mxu0 0.0
    %3318 = vmatprep.subr.mxu0 0.0
    %3319 = vmatpush1.msra.mxu0 0.0
    %3320 = vmatprep.subr.mxu0 0.0
    %3321 = vmatpush1.msra.mxu0 0.0
    %3322 = vmatprep.subr.mxu0 0.0
    %3323 = vmatpush1.msra.mxu0 0.0
    %3324 = vmatprep.subr.mxu0 0.0
    %3325 = vmatpush1.msra.mxu0 0.0
    %3326 = vmatprep.subr.mxu0 0.0
    %3327 = vmatpush1.msra.mxu0 0.0
    %3328 = vmatprep.subr.mxu0 0.0
    %3329 = vmatpush1.msra.mxu0 0.0
    %3330 = vmatprep.subr.mxu0 0.0
    %3331 = vmatpush1.msra.mxu0 0.0
    %3332 = vmatprep.subr.mxu0 0.0
    %3333 = vmatpush1.msra.mxu0 0.0
    %3334 = vmatprep.subr.mxu0 0.0
    %3335 = vmatpush1.msra.mxu0 0.0
    %3336 = vmatprep.subr.mxu0 0.0
    %3337 = vmatpush1.msra.mxu0 0.0
    %3338 = vmatprep.subr.mxu0 0.0
    %3339 = vmatpush1.msra.mxu0 0.0
    %3340 = vmatprep.subr.mxu0 0.0
    %3341 = vmatpush1.msra.mxu0 0.0
    %3342 = vmatprep.subr.mxu0 0.0
    %3343 = vmatpush1.msra.mxu0 0.0
    %3344 = vmatprep.subr.mxu0 0.0
    %3345 = vmatpush1.msra.mxu0 0.0
    %3346 = vmatprep.subr.mxu0 0.0
    %3347 = vmatpush1.msra.mxu0 0.0
    %3348 = vmatprep.subr.mxu0 0.0
    %3349 = vmatpush1.msra.mxu0 0.0
    %3350 = vmatprep.subr.mxu0 0.0
    %3351 = vmatpush1.msra.mxu0 0.0
    %3352 = vmatprep.subr.mxu0 0.0
    %3353 = vmatpush1.msra.mxu0 0.0
    %3354 = vmatprep.subr.mxu0 0.0
    %3355 = vmatpush1.msra.mxu0 0.0
    %3356 = vmatprep.subr.mxu0 0.0
    %3357 = vmatpush1.msra.mxu0 0.0
    %3358 = vmatprep.mubr.f32.mxu0 0.0
    %3359 = vmatmul.mubr.f32.gmra.mrb[0].mxu0 %v802
    %v3360 = vpop.f32.mrb[0].mxu0
    %v3361 = vadd.f32 0.0, %v3360
    %v3362 = vpop.f32.mrb[0].mxu0
    %v3363 = vadd.f32 0.0, %v3362
    %3364 = vmatprep.mubr.f32.mxu0 0.0
    %3365 = vmatmul.mubr.f32.gmra.mrb[0].mxu0 %v805
    %v3366 = vpop.f32.mrb[0].mxu0
    %v3367 = vadd.f32 0.0, %v3366
    %v3368 = vpop.f32.mrb[0].mxu0
    %v3369 = vadd.f32 0.0, %v3368
    %3370 = vmatprep.mubr.f32.mxu0 0.0
    %3371 = vmatmul.mubr.f32.gmra.mrb[0].mxu0 %v808
    %v3372 = vpop.f32.mrb[0].mxu0
    %v3373 = vadd.f32 0.0, %v3372
    %v3374 = vpop.f32.mrb[0].mxu0
    %v3375 = vadd.f32 0.0, %v3374
    %3376 = vdwg.mxu0
    %v3377 = vadd.f32 %v3272, %v3361
    %v3378 = vadd.f32 %v3274, %v3363
    %v3379 = vadd.f32 %v3278, %v3367
    %v3380 = vadd.f32 %v3280, %v3369
    %v3381 = vadd.f32 %v3284, %v3373
    %v3382 = vadd.f32 %v3286, %v3375
    %s3383 = scalar_lea.vmem %s6, 144
    %v3384 = vld [vmem:[%s3383] sm:$0xff]
    %v3385 = vld [vmem:[%s3383 + $0x8] sm:$0xff]
    %v3386 = vld [vmem:[%s3383 + $0x10] sm:$0xff]
    %v3387 = vld [vmem:[%s3383 + $0x18] sm:$0xff]
    %v3388 = vld [vmem:[%s3383 + $0x20] sm:$0xf]
    %v3389 = vld [vmem:[%s3383 + $0x28] sm:$0xf]
    %v3390 = vadd.f32 %v3377, %v3384
    %v3391 = vadd.f32 %v3378, %v3385
    %v3392 = vadd.f32 %v3379, %v3386
    %v3393 = vadd.f32 %v3380, %v3387
    %v3394 = vadd.f32 %v3381, %v3388
    %v3395 = vadd.f32 %v3382, %v3389
    %v3396 = vmax.f32 %v3390, 0.0
    %v3397 = vmax.f32 %v3391, 0.0
    %v3398 = vmax.f32 %v3392, 0.0
    %v3399 = vmax.f32 %v3393, 0.0
    %v3400 = vmax.f32 %v3394, 0.0
    %v3401 = vmax.f32 %v3395, 0.0
    %s3402 = scalar_lea.vmem %s7, 160
    %v3403 = vld [vmem:[%s3402] sm:$0xff]
    %v3404 = vld [vmem:[%s3402 + $0x8] sm:$0xff]
    %v3405 = vld [vmem:[%s3402 + $0x10] sm:$0xff]
    %v3406 = vld [vmem:[%s3402 + $0x18] sm:$0xff]
    %v3407 = vld [vmem:[%s3402 + $0x20] sm:$0xff]
    %v3408 = vld [vmem:[%s3402 + $0x28] sm:$0xff]
    %v3409 = vld [vmem:[%s3402 + $0x30] sm:$0xff]
    %v3410 = vld [vmem:[%s3402 + $0x38] sm:$0xff]
    %v3411 = vld [vmem:[%s3402 + $0x40] sm:$0xff]
    %v3412 = vld [vmem:[%s3402 + $0x48] sm:$0xff]
    %v3413 = vld [vmem:[%s3402 + $0x50] sm:$0xff]
    %v3414 = vld [vmem:[%s3402 + $0x58] sm:$0xff]
    %v3415 = vld [vmem:[%s3402 + $0x60] sm:$0xff]
    %v3416 = vld [vmem:[%s3402 + $0x68] sm:$0xff]
    %v3417 = vld [vmem:[%s3402 + $0x70] sm:$0xff]
    %v3418 = vld [vmem:[%s3402 + $0x78] sm:$0xff]
    %v3419 = vld [vmem:[%s3402 + $0x80] sm:$0xff]
    %v3420 = vld [vmem:[%s3402 + $0x88] sm:$0xff]
    %v3421 = vld [vmem:[%s3402 + $0x90] sm:$0xff]
    %v3422 = vld [vmem:[%s3402 + $0x98] sm:$0xff]
    %s3423 = scalar_lea.vmem %s8, 1
    %v3424 = vld [vmem:[%s3423] sm:$0x1]
    %v3426 = vlaneseq
    %v3427 = vshrl.u32 %v3426, 7
    %v3428 = vsub.s32 0, %v3427
    %v3429 = vrot.slane %v3424, %v3428
    %v3432 = vsel %vm262, %v3397, 0
    %v3435 = vsel %vm262, %v3399, 0
    %v3438 = vsel %vm262, %v3401, 0
    %3440 = vmatprep.subr.mxu0 0.0
    %3441 = vmatpush1.msra.mxu0 %v3403
    %3442 = vmatprep.subr.mxu0 0.0
    %3443 = vmatpush1.msra.mxu0 %v3404
    %3444 = vmatprep.subr.mxu0 0.0
    %3445 = vmatpush1.msra.mxu0 %v3405
    %3446 = vmatprep.subr.mxu0 0.0
    %3447 = vmatpush1.msra.mxu0 %v3406
    %3448 = vmatprep.subr.mxu0 0.0
    %3449 = vmatpush1.msra.mxu0 %v3407
    %3450 = vmatprep.subr.mxu0 0.0
    %3451 = vmatpush1.msra.mxu0 %v3408
    %3452 = vmatprep.subr.mxu0 0.0
    %3453 = vmatpush1.msra.mxu0 %v3409
    %3454 = vmatprep.subr.mxu0 0.0
    %3455 = vmatpush1.msra.mxu0 %v3410
    %3456 = vmatprep.subr.mxu0 0.0
    %3457 = vmatpush1.msra.mxu0 %v3411
    %3458 = vmatprep.subr.mxu0 0.0
    %3459 = vmatpush1.msra.mxu0 %v3412
    %3460 = vmatprep.subr.mxu0 0.0
    %3461 = vmatpush1.msra.mxu0 %v3413
    %3462 = vmatprep.subr.mxu0 0.0
    %3463 = vmatpush1.msra.mxu0 %v3414
    %3464 = vmatprep.subr.mxu0 0.0
    %3465 = vmatpush1.msra.mxu0 %v3415
    %3466 = vmatprep.subr.mxu0 0.0
    %3467 = vmatpush1.msra.mxu0 %v3416
    %3468 = vmatprep.subr.mxu0 0.0
    %3469 = vmatpush1.msra.mxu0 %v3417
    %3470 = vmatprep.subr.mxu0 0.0
    %3471 = vmatpush1.msra.mxu0 %v3418
    %3472 = vmatprep.subr.mxu0 0.0
    %3473 = vmatpush1.msra.mxu0 %v3419
    %3474 = vmatprep.subr.mxu0 0.0
    %3475 = vmatpush1.msra.mxu0 %v3420
    %3476 = vmatprep.subr.mxu0 0.0
    %3477 = vmatpush1.msra.mxu0 %v3421
    %3478 = vmatprep.subr.mxu0 0.0
    %3479 = vmatpush1.msra.mxu0 %v3422
    %3480 = vmatprep.subr.mxu0 0.0
    %3481 = vmatpush1.msra.mxu0 0.0
    %3482 = vmatprep.subr.mxu0 0.0
    %3483 = vmatpush1.msra.mxu0 0.0
    %3484 = vmatprep.subr.mxu0 0.0
    %3485 = vmatpush1.msra.mxu0 0.0
    %3486 = vmatprep.subr.mxu0 0.0
    %3487 = vmatpush1.msra.mxu0 0.0
    %3488 = vmatprep.subr.mxu0 0.0
    %3489 = vmatpush1.msra.mxu0 0.0
    %3490 = vmatprep.subr.mxu0 0.0
    %3491 = vmatpush1.msra.mxu0 0.0
    %3492 = vmatprep.subr.mxu0 0.0
    %3493 = vmatpush1.msra.mxu0 0.0
    %3494 = vmatprep.subr.mxu0 0.0
    %3495 = vmatpush1.msra.mxu0 0.0
    %3496 = vmatprep.subr.mxu0 0.0
    %3497 = vmatpush1.msra.mxu0 0.0
    %3498 = vmatprep.subr.mxu0 0.0
    %3499 = vmatpush1.msra.mxu0 0.0
    %3500 = vmatprep.subr.mxu0 0.0
    %3501 = vmatpush1.msra.mxu0 0.0
    %3502 = vmatprep.subr.mxu0 0.0
    %3503 = vmatpush1.msra.mxu0 0.0
    %3504 = vmatprep.mubr.f32.mxu0 %v3432
    %3505 = vmatmul.mubr.f32.gmra.mrb[0].mxu0 %v3396
    %v3506 = vpop.f32.mrb[0].mxu0
    %v3507 = vadd.f32 %v3429, %v3506
    %v3508 = vpop.f32.mrb[0].mxu0
    %3509 = vmatprep.mubr.f32.mxu0 %v3435
    %3510 = vmatmul.mubr.f32.gmra.mrb[0].mxu0 %v3398
    %v3511 = vpop.f32.mrb[0].mxu0
    %v3512 = vadd.f32 %v3429, %v3511
    %v3513 = vpop.f32.mrb[0].mxu0
    %3514 = vmatprep.mubr.f32.mxu0 %v3438
    %3515 = vmatmul.mubr.f32.gmra.mrb[0].mxu0 %v3400
    %v3516 = vpop.f32.mrb[0].mxu0
    %v3517 = vadd.f32 %v3429, %v3516
    %v3518 = vpop.f32.mrb[0].mxu0
    %3519 = vdwg.mxu0
    %v3520 = vmax.f32 %v3507, 0.0
    %v3521 = vmax.f32 %v3512, 0.0
    %v3522 = vmax.f32 %v3517, 0.0
    %v3524 = vsel %vm613, %v3522, 0
    %3526 = vmatprep.subr.mxu0 0.0
    %3527 = vmatpush1.msra.mxu0 %v3520
    %3528 = vmatprep.subr.mxu0 0.0
    %3529 = vmatpush1.msra.mxu0 %v3521
    %3530 = vmatprep.subr.mxu0 0.0
    %3531 = vmatpush1.msra.mxu0 %v3524
    %3532 = vmatprep.subr.mxu0 0.0
    %3533 = vmatpush1.msra.mxu0 0.0
    %3534 = vmatprep.subr.mxu0 0.0
    %3535 = vmatpush1.msra.mxu0 0.0
    %3536 = vmatprep.subr.mxu0 0.0
    %3537 = vmatpush1.msra.mxu0 0.0
    %3538 = vmatprep.subr.mxu0 0.0
    %3539 = vmatpush1.msra.mxu0 0.0
    %3540 = vmatprep.subr.mxu0 0.0
    %3541 = vmatpush1.msra.mxu0 0.0
    %3542 = vmatprep.subr.mxu0 0.0
    %3543 = vmatpush1.msra.mxu0 0.0
    %3544 = vmatprep.subr.mxu0 0.0
    %3545 = vmatpush1.msra.mxu0 0.0
    %3546 = vmatprep.subr.mxu0 0.0
    %3547 = vmatpush1.msra.mxu0 0.0
    %3548 = vmatprep.subr.mxu0 0.0
    %3549 = vmatpush1.msra.mxu0 0.0
    %3550 = vmatprep.subr.mxu0 0.0
    %3551 = vmatpush1.msra.mxu0 0.0
    %3552 = vmatprep.subr.mxu0 0.0
    %3553 = vmatpush1.msra.mxu0 0.0
    %3554 = vmatprep.subr.mxu0 0.0
    %3555 = vmatpush1.msra.mxu0 0.0
    %3556 = vmatprep.subr.mxu0 0.0
    %3557 = vmatpush1.msra.mxu0 0.0
    %3558 = vmatprep.subr.mxu0 0.0
    %3559 = vmatpush1.msra.mxu0 0.0
    %3560 = vmatprep.subr.mxu0 0.0
    %3561 = vmatpush1.msra.mxu0 0.0
    %3562 = vmatprep.subr.mxu0 0.0
    %3563 = vmatpush1.msra.mxu0 0.0
    %3564 = vmatprep.subr.mxu0 0.0
    %3565 = vmatpush1.msra.mxu0 0.0
    %3566 = vmatprep.subr.mxu0 0.0
    %3567 = vmatpush1.msra.mxu0 0.0
    %3568 = vmatprep.subr.mxu0 0.0
    %3569 = vmatpush1.msra.mxu0 0.0
    %3570 = vmatprep.subr.mxu0 0.0
    %3571 = vmatpush1.msra.mxu0 0.0
    %3572 = vmatprep.subr.mxu0 0.0
    %3573 = vmatpush1.msra.mxu0 0.0
    %3574 = vmatprep.subr.mxu0 0.0
    %3575 = vmatpush1.msra.mxu0 0.0
    %3576 = vmatprep.subr.mxu0 0.0
    %3577 = vmatpush1.msra.mxu0 0.0
    %3578 = vmatprep.subr.mxu0 0.0
    %3579 = vmatpush1.msra.mxu0 0.0
    %3580 = vmatprep.subr.mxu0 0.0
    %3581 = vmatpush1.msra.mxu0 0.0
    %3582 = vmatprep.subr.mxu0 0.0
    %3583 = vmatpush1.msra.mxu0 0.0
    %3584 = vmatprep.subr.mxu0 0.0
    %3585 = vmatpush1.msra.mxu0 0.0
    %3586 = vmatprep.subr.mxu0 0.0
    %3587 = vmatpush1.msra.mxu0 0.0
    %3588 = vmatprep.subr.mxu0 0.0
    %3589 = vmatpush1.msra.mxu0 0.0
    %3590 = vmatprep.mubr.f32.mxu0 0.0
    %3591 = vmatmul.mubr.f32.gmra.mrb[0].mxu0 %v1716
    %v3592 = vpop.f32.mrb[0].mxu0
    %v3593 = vadd.f32 0.0, %v3592
    %v3594 = vpop.f32.mrb[0].mxu0
    %3595 = vdwg.mxu0
    %s3596 = scalar_lea.vmem %s9, 128
    %v3597 = vld [vmem:[%s3596] sm:$0xff]
    %v3598 = vld [vmem:[%s3596 + $0x8] sm:$0xff]
    %v3599 = vld [vmem:[%s3596 + $0x10] sm:$0xff]
    %v3600 = vld [vmem:[%s3596 + $0x18] sm:$0xff]
    %v3601 = vld [vmem:[%s3596 + $0x20] sm:$0xff]
    %v3602 = vld [vmem:[%s3596 + $0x28] sm:$0xff]
    %v3603 = vld [vmem:[%s3596 + $0x30] sm:$0xff]
    %v3604 = vld [vmem:[%s3596 + $0x38] sm:$0xff]
    %v3605 = vld [vmem:[%s3596 + $0x40] sm:$0xff]
    %v3606 = vld [vmem:[%s3596 + $0x48] sm:$0xff]
    %v3607 = vld [vmem:[%s3596 + $0x50] sm:$0xff]
    %v3608 = vld [vmem:[%s3596 + $0x58] sm:$0xff]
    %v3609 = vld [vmem:[%s3596 + $0x60] sm:$0xff]
    %v3610 = vld [vmem:[%s3596 + $0x68] sm:$0xff]
    %v3611 = vld [vmem:[%s3596 + $0x70] sm:$0xff]
    %v3612 = vld [vmem:[%s3596 + $0x78] sm:$0xff]
    %s3613 = scalar_lea.vmem %s10, 1
    %v3614 = vld [vmem:[%s3613] sm:$0x1]
    %v3616 = vlaneseq
    %v3617 = vshrl.u32 %v3616, 7
    %v3618 = vsub.s32 0, %v3617
    %v3619 = vrot.slane %v3614, %v3618
    %3621 = vmatprep.subr.mxu0 0.0
    %3622 = vmatpush1.msra.mxu0 %v3597
    %3623 = vmatprep.subr.mxu0 0.0
    %3624 = vmatpush1.msra.mxu0 %v3598
    %3625 = vmatprep.subr.mxu0 0.0
    %3626 = vmatpush1.msra.mxu0 %v3599
    %3627 = vmatprep.subr.mxu0 0.0
    %3628 = vmatpush1.msra.mxu0 %v3600
    %3629 = vmatprep.subr.mxu0 0.0
    %3630 = vmatpush1.msra.mxu0 %v3601
    %3631 = vmatprep.subr.mxu0 0.0
    %3632 = vmatpush1.msra.mxu0 %v3602
    %3633 = vmatprep.subr.mxu0 0.0
    %3634 = vmatpush1.msra.mxu0 %v3603
    %3635 = vmatprep.subr.mxu0 0.0
    %3636 = vmatpush1.msra.mxu0 %v3604
    %3637 = vmatprep.subr.mxu0 0.0
    %3638 = vmatpush1.msra.mxu0 %v3605
    %3639 = vmatprep.subr.mxu0 0.0
    %3640 = vmatpush1.msra.mxu0 %v3606
    %3641 = vmatprep.subr.mxu0 0.0
    %3642 = vmatpush1.msra.mxu0 %v3607
    %3643 = vmatprep.subr.mxu0 0.0
    %3644 = vmatpush1.msra.mxu0 %v3608
    %3645 = vmatprep.subr.mxu0 0.0
    %3646 = vmatpush1.msra.mxu0 %v3609
    %3647 = vmatprep.subr.mxu0 0.0
    %3648 = vmatpush1.msra.mxu0 %v3610
    %3649 = vmatprep.subr.mxu0 0.0
    %3650 = vmatpush1.msra.mxu0 %v3611
    %3651 = vmatprep.subr.mxu0 0.0
    %3652 = vmatpush1.msra.mxu0 %v3612
    %3653 = vmatprep.subr.mxu0 0.0
    %3654 = vmatpush1.msra.mxu0 0.0
    %3655 = vmatprep.subr.mxu0 0.0
    %3656 = vmatpush1.msra.mxu0 0.0
    %3657 = vmatprep.subr.mxu0 0.0
    %3658 = vmatpush1.msra.mxu0 0.0
    %3659 = vmatprep.subr.mxu0 0.0
    %3660 = vmatpush1.msra.mxu0 0.0
    %3661 = vmatprep.subr.mxu0 0.0
    %3662 = vmatpush1.msra.mxu0 0.0
    %3663 = vmatprep.subr.mxu0 0.0
    %3664 = vmatpush1.msra.mxu0 0.0
    %3665 = vmatprep.subr.mxu0 0.0
    %3666 = vmatpush1.msra.mxu0 0.0
    %3667 = vmatprep.subr.mxu0 0.0
    %3668 = vmatpush1.msra.mxu0 0.0
    %3669 = vmatprep.subr.mxu0 0.0
    %3670 = vmatpush1.msra.mxu0 0.0
    %3671 = vmatprep.subr.mxu0 0.0
    %3672 = vmatpush1.msra.mxu0 0.0
    %3673 = vmatprep.subr.mxu0 0.0
    %3674 = vmatpush1.msra.mxu0 0.0
    %3675 = vmatprep.subr.mxu0 0.0
    %3676 = vmatpush1.msra.mxu0 0.0
    %3677 = vmatprep.subr.mxu0 0.0
    %3678 = vmatpush1.msra.mxu0 0.0
    %3679 = vmatprep.subr.mxu0 0.0
    %3680 = vmatpush1.msra.mxu0 0.0
    %3681 = vmatprep.subr.mxu0 0.0
    %3682 = vmatpush1.msra.mxu0 0.0
    %3683 = vmatprep.subr.mxu0 0.0
    %3684 = vmatpush1.msra.mxu0 0.0
    %3685 = vmatprep.mubr.f32.mxu0 0.0
    %3686 = vmatmul.mubr.f32.gmra.mrb[0].mxu0 %v3593
    %v3687 = vpop.f32.mrb[0].mxu0
    %v3688 = vadd.f32 %v3619, %v3687
    %v3689 = vpop.f32.mrb[0].mxu0
    %3690 = vdwg.mxu0
    %v3691 = vmax.f32 %v3688, 0.0
    %s3692 = scalar_lea.vmem %s11, 32
    %v3693 = vld [vmem:[%s3692] sm:$0xff]
    %v3694 = vld [vmem:[%s3692 + $0x8] sm:$0xff]
    %v3695 = vld [vmem:[%s3692 + $0x10] sm:$0xff]
    %v3696 = vld [vmem:[%s3692 + $0x18] sm:$0xff]
    %v3698 = vsel %vm262, %v3691, 0
    %3700 = vmatprep.subr.mxu0 0.0
    %3701 = vmatpush1.msra.mxu0 %v3693
    %3702 = vmatprep.subr.mxu0 0.0
    %3703 = vmatpush1.msra.mxu0 %v3694
    %3704 = vmatprep.subr.mxu0 0.0
    %3705 = vmatpush1.msra.mxu0 %v3695
    %3706 = vmatprep.subr.mxu0 0.0
    %3707 = vmatpush1.msra.mxu0 %v3696
    %3708 = vmatprep.subr.mxu0 0.0
    %3709 = vmatpush1.msra.mxu0 0.0
    %3710 = vmatprep.subr.mxu0 0.0
    %3711 = vmatpush1.msra.mxu0 0.0
    %3712 = vmatprep.subr.mxu0 0.0
    %3713 = vmatpush1.msra.mxu0 0.0
    %3714 = vmatprep.subr.mxu0 0.0
    %3715 = vmatpush1.msra.mxu0 0.0
    %3716 = vmatprep.subr.mxu0 0.0
    %3717 = vmatpush1.msra.mxu0 0.0
    %3718 = vmatprep.subr.mxu0 0.0
    %3719 = vmatpush1.msra.mxu0 0.0
    %3720 = vmatprep.subr.mxu0 0.0
    %3721 = vmatpush1.msra.mxu0 0.0
    %3722 = vmatprep.subr.mxu0 0.0
    %3723 = vmatpush1.msra.mxu0 0.0
    %3724 = vmatprep.subr.mxu0 0.0
    %3725 = vmatpush1.msra.mxu0 0.0
    %3726 = vmatprep.subr.mxu0 0.0
    %3727 = vmatpush1.msra.mxu0 0.0
    %3728 = vmatprep.subr.mxu0 0.0
    %3729 = vmatpush1.msra.mxu0 0.0
    %3730 = vmatprep.subr.mxu0 0.0
    %3731 = vmatpush1.msra.mxu0 0.0
    %3732 = vmatprep.subr.mxu0 0.0
    %3733 = vmatpush1.msra.mxu0 0.0
    %3734 = vmatprep.subr.mxu0 0.0
    %3735 = vmatpush1.msra.mxu0 0.0
    %3736 = vmatprep.subr.mxu0 0.0
    %3737 = vmatpush1.msra.mxu0 0.0
    %3738 = vmatprep.subr.mxu0 0.0
    %3739 = vmatpush1.msra.mxu0 0.0
    %3740 = vmatprep.subr.mxu0 0.0
    %3741 = vmatpush1.msra.mxu0 0.0
    %3742 = vmatprep.subr.mxu0 0.0
    %3743 = vmatpush1.msra.mxu0 0.0
    %3744 = vmatprep.subr.mxu0 0.0
    %3745 = vmatpush1.msra.mxu0 0.0
    %3746 = vmatprep.subr.mxu0 0.0
    %3747 = vmatpush1.msra.mxu0 0.0
    %3748 = vmatprep.subr.mxu0 0.0
    %3749 = vmatpush1.msra.mxu0 0.0
    %3750 = vmatprep.subr.mxu0 0.0
    %3751 = vmatpush1.msra.mxu0 0.0
    %3752 = vmatprep.subr.mxu0 0.0
    %3753 = vmatpush1.msra.mxu0 0.0
    %3754 = vmatprep.subr.mxu0 0.0
    %3755 = vmatpush1.msra.mxu0 0.0
    %3756 = vmatprep.subr.mxu0 0.0
    %3757 = vmatpush1.msra.mxu0 0.0
    %3758 = vmatprep.subr.mxu0 0.0
    %3759 = vmatpush1.msra.mxu0 0.0
    %3760 = vmatprep.subr.mxu0 0.0
    %3761 = vmatpush1.msra.mxu0 0.0
    %3762 = vmatprep.subr.mxu0 0.0
    %3763 = vmatpush1.msra.mxu0 0.0
    %3764 = vmatprep.mubr.f32.mxu0 0.0
    %3765 = vmatmul.mubr.f32.gmra.mrb[0].mxu0 %v3698
    %v3766 = vpop.f32.mrb[0].mxu0
    %v3767 = vadd.f32 0.0, %v3766
    %v3768 = vpop.f32.mrb[0].mxu0
    %3769 = vdwg.mxu0
    %v3771 = vsel %vm262, %v1884, 0
    %3773 = vmatprep.subr.mxu0 0.0
    %3774 = vmatpush1.msra.mxu0 %v1885
    %3775 = vmatprep.subr.mxu0 0.0
    %3776 = vmatpush1.msra.mxu0 %v1886
    %3777 = vmatprep.subr.mxu0 0.0
    %3778 = vmatpush1.msra.mxu0 %v1887
    %3779 = vmatprep.subr.mxu0 0.0
    %3780 = vmatpush1.msra.mxu0 %v1888
    %3781 = vmatprep.subr.mxu0 0.0
    %3782 = vmatpush1.msra.mxu0 0.0
    %3783 = vmatprep.subr.mxu0 0.0
    %3784 = vmatpush1.msra.mxu0 0.0
    %3785 = vmatprep.subr.mxu0 0.0
    %3786 = vmatpush1.msra.mxu0 0.0
    %3787 = vmatprep.subr.mxu0 0.0
    %3788 = vmatpush1.msra.mxu0 0.0
    %3789 = vmatprep.subr.mxu0 0.0
    %3790 = vmatpush1.msra.mxu0 0.0
    %3791 = vmatprep.subr.mxu0 0.0
    %3792 = vmatpush1.msra.mxu0 0.0
    %3793 = vmatprep.subr.mxu0 0.0
    %3794 = vmatpush1.msra.mxu0 0.0
    %3795 = vmatprep.subr.mxu0 0.0
    %3796 = vmatpush1.msra.mxu0 0.0
    %3797 = vmatprep.subr.mxu0 0.0
    %3798 = vmatpush1.msra.mxu0 0.0
    %3799 = vmatprep.subr.mxu0 0.0
    %3800 = vmatpush1.msra.mxu0 0.0
    %3801 = vmatprep.subr.mxu0 0.0
    %3802 = vmatpush1.msra.mxu0 0.0
    %3803 = vmatprep.subr.mxu0 0.0
    %3804 = vmatpush1.msra.mxu0 0.0
    %3805 = vmatprep.subr.mxu0 0.0
    %3806 = vmatpush1.msra.mxu0 0.0
    %3807 = vmatprep.subr.mxu0 0.0
    %3808 = vmatpush1.msra.mxu0 0.0
    %3809 = vmatprep.subr.mxu0 0.0
    %3810 = vmatpush1.msra.mxu0 0.0
    %3811 = vmatprep.subr.mxu0 0.0
    %3812 = vmatpush1.msra.mxu0 0.0
    %3813 = vmatprep.subr.mxu0 0.0
    %3814 = vmatpush1.msra.mxu0 0.0
    %3815 = vmatprep.subr.mxu0 0.0
    %3816 = vmatpush1.msra.mxu0 0.0
    %3817 = vmatprep.subr.mxu0 0.0
    %3818 = vmatpush1.msra.mxu0 0.0
    %3819 = vmatprep.subr.mxu0 0.0
    %3820 = vmatpush1.msra.mxu0 0.0
    %3821 = vmatprep.subr.mxu0 0.0
    %3822 = vmatpush1.msra.mxu0 0.0
    %3823 = vmatprep.subr.mxu0 0.0
    %3824 = vmatpush1.msra.mxu0 0.0
    %3825 = vmatprep.subr.mxu0 0.0
    %3826 = vmatpush1.msra.mxu0 0.0
    %3827 = vmatprep.subr.mxu0 0.0
    %3828 = vmatpush1.msra.mxu0 0.0
    %3829 = vmatprep.subr.mxu0 0.0
    %3830 = vmatpush1.msra.mxu0 0.0
    %3831 = vmatprep.subr.mxu0 0.0
    %3832 = vmatpush1.msra.mxu0 0.0
    %3833 = vmatprep.subr.mxu0 0.0
    %3834 = vmatpush1.msra.mxu0 0.0
    %3835 = vmatprep.subr.mxu0 0.0
    %3836 = vmatpush1.msra.mxu0 0.0
    %3837 = vmatprep.mubr.f32.mxu0 0.0
    %3838 = vmatmul.mubr.f32.gmra.mrb[0].mxu0 %v3771
    %v3839 = vpop.f32.mrb[0].mxu0
    %v3840 = vadd.f32 %v3767, %v3839
    %v3841 = vpop.f32.mrb[0].mxu0
    %3842 = vdwg.mxu0
    %s3843 = scalar_lea.vmem %s0, 96
    %v3844 = vld [vmem:[%s3843] sm:$0xff]
    %v3845 = vld [vmem:[%s3843 + $0x8] sm:$0xff]
    %v3846 = vld [vmem:[%s3843 + $0x10] sm:$0xff]
    %v3847 = vld [vmem:[%s3843 + $0x18] sm:$0xff]
    %v3848 = vld [vmem:[%s3843 + $0x20] sm:$0xf]
    %v3849 = vld [vmem:[%s3843 + $0x28] sm:$0xf]
    %s3850 = scalar_lea.vmem %s3, 864
    %v3851 = vld [vmem:[%s3850] sm:$0xff]
    %v3852 = vld [vmem:[%s3850 + $0x8] sm:$0xff]
    %v3853 = vld [vmem:[%s3850 + $0x10] sm:$0xff]
    %v3854 = vld [vmem:[%s3850 + $0x18] sm:$0xff]
    %v3855 = vld [vmem:[%s3850 + $0x20] sm:$0xff]
    %v3856 = vld [vmem:[%s3850 + $0x28] sm:$0xff]
    %v3857 = vld [vmem:[%s3850 + $0x30] sm:$0xff]
    %v3858 = vld [vmem:[%s3850 + $0x38] sm:$0xff]
    %v3859 = vld [vmem:[%s3850 + $0x40] sm:$0xff]
    %v3860 = vld [vmem:[%s3850 + $0x48] sm:$0xff]
    %v3861 = vld [vmem:[%s3850 + $0x50] sm:$0xff]
    %v3862 = vld [vmem:[%s3850 + $0x58] sm:$0xff]
    %v3863 = vld [vmem:[%s3850 + $0x60] sm:$0xff]
    %v3864 = vld [vmem:[%s3850 + $0x68] sm:$0xff]
    %v3865 = vld [vmem:[%s3850 + $0x70] sm:$0xff]
    %v3866 = vld [vmem:[%s3850 + $0x78] sm:$0xff]
    %v3867 = vld [vmem:[%s3850 + $0x80] sm:$0xff]
    %v3868 = vld [vmem:[%s3850 + $0x88] sm:$0xff]
    %v3869 = vld [vmem:[%s3850 + $0x90] sm:$0xff]
    %v3870 = vld [vmem:[%s3850 + $0x98] sm:$0xff]
    %v3871 = vld [vmem:[%s3850 + $0xa0] sm:$0xff]
    %v3872 = vld [vmem:[%s3850 + $0xa8] sm:$0xff]
    %v3873 = vld [vmem:[%s3850 + $0xb0] sm:$0xff]
    %v3874 = vld [vmem:[%s3850 + $0xb8] sm:$0xff]
    %v3875 = vld [vmem:[%s3850 + $0xc0] sm:$0xff]
    %v3876 = vld [vmem:[%s3850 + $0xc8] sm:$0xff]
    %v3877 = vld [vmem:[%s3850 + $0xd0] sm:$0xff]
    %v3878 = vld [vmem:[%s3850 + $0xd8] sm:$0xff]
    %v3879 = vld [vmem:[%s3850 + $0xe0] sm:$0xff]
    %v3880 = vld [vmem:[%s3850 + $0xe8] sm:$0xff]
    %v3881 = vld [vmem:[%s3850 + $0xf0] sm:$0xff]
    %v3882 = vld [vmem:[%s3850 + $0xf8] sm:$0xff]
    %v3883 = vld [vmem:[%s3850 + $0x100] sm:$0xff]
    %v3884 = vld [vmem:[%s3850 + $0x108] sm:$0xff]
    %v3885 = vld [vmem:[%s3850 + $0x110] sm:$0xff]
    %v3886 = vld [vmem:[%s3850 + $0x118] sm:$0xff]
    %v3887 = vld [vmem:[%s3850 + $0x120] sm:$0xff]
    %v3888 = vld [vmem:[%s3850 + $0x128] sm:$0xff]
    %v3889 = vld [vmem:[%s3850 + $0x130] sm:$0xff]
    %v3890 = vld [vmem:[%s3850 + $0x138] sm:$0xff]
    %v3891 = vld [vmem:[%s3850 + $0x140] sm:$0xff]
    %v3892 = vld [vmem:[%s3850 + $0x148] sm:$0xff]
    %v3893 = vld [vmem:[%s3850 + $0x150] sm:$0xff]
    %v3894 = vld [vmem:[%s3850 + $0x158] sm:$0xff]
    %v3895 = vld [vmem:[%s3850 + $0x160] sm:$0xff]
    %v3896 = vld [vmem:[%s3850 + $0x168] sm:$0xff]
    %v3897 = vld [vmem:[%s3850 + $0x170] sm:$0xff]
    %v3898 = vld [vmem:[%s3850 + $0x178] sm:$0xff]
    %v3899 = vld [vmem:[%s3850 + $0x180] sm:$0xff]
    %v3900 = vld [vmem:[%s3850 + $0x188] sm:$0xff]
    %v3901 = vld [vmem:[%s3850 + $0x190] sm:$0xff]
    %v3902 = vld [vmem:[%s3850 + $0x198] sm:$0xff]
    %v3903 = vld [vmem:[%s3850 + $0x1a0] sm:$0xff]
    %v3904 = vld [vmem:[%s3850 + $0x1a8] sm:$0xff]
    %s3905 = scalar_lea.vmem %s4, 96
    %v3906 = vld [vmem:[%s3905] sm:$0xff]
    %v3907 = vld [vmem:[%s3905 + $0x8] sm:$0xff]
    %v3908 = vld [vmem:[%s3905 + $0x10] sm:$0xff]
    %v3909 = vld [vmem:[%s3905 + $0x18] sm:$0xff]
    %v3910 = vld [vmem:[%s3905 + $0x20] sm:$0xf]
    %v3911 = vld [vmem:[%s3905 + $0x28] sm:$0xf]
    %v3913 = vsel %vm123, %v3845, 0
    %v3916 = vsel %vm123, %v3847, 0
    %v3919 = vsel %vm123, %v3849, 0
    %3921 = vmatprep.subr.mxu0 %v3852
    %3922 = vmatpush1.msra.mxu0 %v3851
    %3923 = vmatprep.subr.mxu0 %v3854
    %3924 = vmatpush1.msra.mxu0 %v3853
    %3925 = vmatprep.subr.mxu0 %v3856
    %3926 = vmatpush1.msra.mxu0 %v3855
    %3927 = vmatprep.subr.mxu0 %v3858
    %3928 = vmatpush1.msra.mxu0 %v3857
    %3929 = vmatprep.subr.mxu0 %v3860
    %3930 = vmatpush1.msra.mxu0 %v3859
    %3931 = vmatprep.subr.mxu0 %v3862
    %3932 = vmatpush1.msra.mxu0 %v3861
    %3933 = vmatprep.subr.mxu0 %v3864
    %3934 = vmatpush1.msra.mxu0 %v3863
    %3935 = vmatprep.subr.mxu0 %v3866
    %3936 = vmatpush1.msra.mxu0 %v3865
    %3937 = vmatprep.subr.mxu0 %v3868
    %3938 = vmatpush1.msra.mxu0 %v3867
    %3939 = vmatprep.subr.mxu0 %v3870
    %3940 = vmatpush1.msra.mxu0 %v3869
    %3941 = vmatprep.subr.mxu0 %v3872
    %3942 = vmatpush1.msra.mxu0 %v3871
    %3943 = vmatprep.subr.mxu0 %v3874
    %3944 = vmatpush1.msra.mxu0 %v3873
    %3945 = vmatprep.subr.mxu0 %v3876
    %3946 = vmatpush1.msra.mxu0 %v3875
    %3947 = vmatprep.subr.mxu0 %v3878
    %3948 = vmatpush1.msra.mxu0 %v3877
    %3949 = vmatprep.subr.mxu0 %v3880
    %3950 = vmatpush1.msra.mxu0 %v3879
    %3951 = vmatprep.subr.mxu0 %v3882
    %3952 = vmatpush1.msra.mxu0 %v3881
    %3953 = vmatprep.subr.mxu0 %v3884
    %3954 = vmatpush1.msra.mxu0 %v3883
    %3955 = vmatprep.subr.mxu0 %v3886
    %3956 = vmatpush1.msra.mxu0 %v3885
    %3957 = vmatprep.subr.mxu0 %v3888
    %3958 = vmatpush1.msra.mxu0 %v3887
    %3959 = vmatprep.subr.mxu0 %v3890
    %3960 = vmatpush1.msra.mxu0 %v3889
    %3961 = vmatprep.subr.mxu0 %v3892
    %3962 = vmatpush1.msra.mxu0 %v3891
    %3963 = vmatprep.subr.mxu0 %v3894
    %3964 = vmatpush1.msra.mxu0 %v3893
    %3965 = vmatprep.subr.mxu0 %v3896
    %3966 = vmatpush1.msra.mxu0 %v3895
    %3967 = vmatprep.subr.mxu0 %v3898
    %3968 = vmatpush1.msra.mxu0 %v3897
    %3969 = vmatprep.subr.mxu0 %v3900
    %3970 = vmatpush1.msra.mxu0 %v3899
    %3971 = vmatprep.subr.mxu0 %v3902
    %3972 = vmatpush1.msra.mxu0 %v3901
    %3973 = vmatprep.subr.mxu0 %v3904
    %3974 = vmatpush1.msra.mxu0 %v3903
    %3975 = vmatprep.subr.mxu0 0.0
    %3976 = vmatpush1.msra.mxu0 0.0
    %3977 = vmatprep.subr.mxu0 0.0
    %3978 = vmatpush1.msra.mxu0 0.0
    %3979 = vmatprep.subr.mxu0 0.0
    %3980 = vmatpush1.msra.mxu0 0.0
    %3981 = vmatprep.subr.mxu0 0.0
    %3982 = vmatpush1.msra.mxu0 0.0
    %3983 = vmatprep.subr.mxu0 0.0
    %3984 = vmatpush1.msra.mxu0 0.0
    %3985 = vmatprep.mubr.f32.mxu0 %v3913
    %3986 = vmatmul.mubr.f32.gmra.mrb[0].mxu0 %v3844
    %v3987 = vpop.f32.mrb[0].mxu0
    %v3988 = vadd.f32 %v3906, %v3987
    %v3989 = vpop.f32.mrb[0].mxu0
    %v3990 = vadd.f32 %v3907, %v3989
    %3991 = vmatprep.mubr.f32.mxu0 %v3916
    %3992 = vmatmul.mubr.f32.gmra.mrb[0].mxu0 %v3846
    %v3993 = vpop.f32.mrb[0].mxu0
    %v3994 = vadd.f32 %v3908, %v3993
    %v3995 = vpop.f32.mrb[0].mxu0
    %v3996 = vadd.f32 %v3909, %v3995
    %3997 = vmatprep.mubr.f32.mxu0 %v3919
    %3998 = vmatmul.mubr.f32.gmra.mrb[0].mxu0 %v3848
    %v3999 = vpop.f32.mrb[0].mxu0
    %v4000 = vadd.f32 %v3910, %v3999
    %v4001 = vpop.f32.mrb[0].mxu0
    %v4002 = vadd.f32 %v3911, %v4001
    %4003 = vdwg.mxu0
    %v4004 = vmax.f32 %v3988, 0.0
    %v4005 = vmax.f32 %v3990, 0.0
    %v4006 = vmax.f32 %v3994, 0.0
    %v4007 = vmax.f32 %v3996, 0.0
    %v4008 = vmax.f32 %v4000, 0.0
    %v4009 = vmax.f32 %v4002, 0.0
    %s4010 = scalar_lea.vmem %s5, 3840
    %v4011 = vld [vmem:[%s4010] sm:$0xff]
    %v4012 = vld [vmem:[%s4010 + $0x8] sm:$0xff]
    %v4013 = vld [vmem:[%s4010 + $0x10] sm:$0xff]
    %v4014 = vld [vmem:[%s4010 + $0x18] sm:$0xff]
    %v4015 = vld [vmem:[%s4010 + $0x20] sm:$0xff]
    %v4016 = vld [vmem:[%s4010 + $0x28] sm:$0xff]
    %v4017 = vld [vmem:[%s4010 + $0x30] sm:$0xff]
    %v4018 = vld [vmem:[%s4010 + $0x38] sm:$0xff]
    %v4019 = vld [vmem:[%s4010 + $0x40] sm:$0xff]
    %v4020 = vld [vmem:[%s4010 + $0x48] sm:$0xff]
    %v4021 = vld [vmem:[%s4010 + $0x50] sm:$0xff]
    %v4022 = vld [vmem:[%s4010 + $0x58] sm:$0xff]
    %v4023 = vld [vmem:[%s4010 + $0x60] sm:$0xff]
    %v4024 = vld [vmem:[%s4010 + $0x68] sm:$0xff]
    %v4025 = vld [vmem:[%s4010 + $0x70] sm:$0xff]
    %v4026 = vld [vmem:[%s4010 + $0x78] sm:$0xff]
    %v4027 = vld [vmem:[%s4010 + $0x80] sm:$0xff]
    %v4028 = vld [vmem:[%s4010 + $0x88] sm:$0xff]
    %v4029 = vld [vmem:[%s4010 + $0x90] sm:$0xff]
    %v4030 = vld [vmem:[%s4010 + $0x98] sm:$0xff]
    %v4031 = vld [vmem:[%s4010 + $0xa0] sm:$0xff]
    %v4032 = vld [vmem:[%s4010 + $0xa8] sm:$0xff]
    %v4033 = vld [vmem:[%s4010 + $0xb0] sm:$0xff]
    %v4034 = vld [vmem:[%s4010 + $0xb8] sm:$0xff]
    %v4035 = vld [vmem:[%s4010 + $0xc0] sm:$0xff]
    %v4036 = vld [vmem:[%s4010 + $0xc8] sm:$0xff]
    %v4037 = vld [vmem:[%s4010 + $0xd0] sm:$0xff]
    %v4038 = vld [vmem:[%s4010 + $0xd8] sm:$0xff]
    %v4039 = vld [vmem:[%s4010 + $0xe0] sm:$0xff]
    %v4040 = vld [vmem:[%s4010 + $0xe8] sm:$0xff]
    %v4041 = vld [vmem:[%s4010 + $0xf0] sm:$0xff]
    %v4042 = vld [vmem:[%s4010 + $0xf8] sm:$0xff]
    %v4043 = vld [vmem:[%s4010 + $0x100] sm:$0xff]
    %v4044 = vld [vmem:[%s4010 + $0x108] sm:$0xff]
    %v4045 = vld [vmem:[%s4010 + $0x110] sm:$0xff]
    %v4046 = vld [vmem:[%s4010 + $0x118] sm:$0xff]
    %v4047 = vld [vmem:[%s4010 + $0x120] sm:$0xff]
    %v4048 = vld [vmem:[%s4010 + $0x128] sm:$0xff]
    %v4049 = vld [vmem:[%s4010 + $0x130] sm:$0xff]
    %v4050 = vld [vmem:[%s4010 + $0x138] sm:$0xff]
    %v4052 = vsel %vm262, %v4005, 0
    %v4055 = vsel %vm262, %v4007, 0
    %v4058 = vsel %vm262, %v4009, 0
    %4060 = vmatprep.subr.mxu0 %v4012
    %4061 = vmatpush1.msra.mxu0 %v4011
    %4062 = vmatprep.subr.mxu0 %v4014
    %4063 = vmatpush1.msra.mxu0 %v4013
    %4064 = vmatprep.subr.mxu0 %v4016
    %4065 = vmatpush1.msra.mxu0 %v4015
    %4066 = vmatprep.subr.mxu0 %v4018
    %4067 = vmatpush1.msra.mxu0 %v4017
    %4068 = vmatprep.subr.mxu0 %v4020
    %4069 = vmatpush1.msra.mxu0 %v4019
    %4070 = vmatprep.subr.mxu0 %v4022
    %4071 = vmatpush1.msra.mxu0 %v4021
    %4072 = vmatprep.subr.mxu0 %v4024
    %4073 = vmatpush1.msra.mxu0 %v4023
    %4074 = vmatprep.subr.mxu0 %v4026
    %4075 = vmatpush1.msra.mxu0 %v4025
    %4076 = vmatprep.subr.mxu0 %v4028
    %4077 = vmatpush1.msra.mxu0 %v4027
    %4078 = vmatprep.subr.mxu0 %v4030
    %4079 = vmatpush1.msra.mxu0 %v4029
    %4080 = vmatprep.subr.mxu0 %v4032
    %4081 = vmatpush1.msra.mxu0 %v4031
    %4082 = vmatprep.subr.mxu0 %v4034
    %4083 = vmatpush1.msra.mxu0 %v4033
    %4084 = vmatprep.subr.mxu0 %v4036
    %4085 = vmatpush1.msra.mxu0 %v4035
    %4086 = vmatprep.subr.mxu0 %v4038
    %4087 = vmatpush1.msra.mxu0 %v4037
    %4088 = vmatprep.subr.mxu0 %v4040
    %4089 = vmatpush1.msra.mxu0 %v4039
    %4090 = vmatprep.subr.mxu0 %v4042
    %4091 = vmatpush1.msra.mxu0 %v4041
    %4092 = vmatprep.subr.mxu0 %v4044
    %4093 = vmatpush1.msra.mxu0 %v4043
    %4094 = vmatprep.subr.mxu0 %v4046
    %4095 = vmatpush1.msra.mxu0 %v4045
    %4096 = vmatprep.subr.mxu0 %v4048
    %4097 = vmatpush1.msra.mxu0 %v4047
    %4098 = vmatprep.subr.mxu0 %v4050
    %4099 = vmatpush1.msra.mxu0 %v4049
    %4100 = vmatprep.subr.mxu0 0.0
    %4101 = vmatpush1.msra.mxu0 0.0
    %4102 = vmatprep.subr.mxu0 0.0
    %4103 = vmatpush1.msra.mxu0 0.0
    %4104 = vmatprep.subr.mxu0 0.0
    %4105 = vmatpush1.msra.mxu0 0.0
    %4106 = vmatprep.subr.mxu0 0.0
    %4107 = vmatpush1.msra.mxu0 0.0
    %4108 = vmatprep.subr.mxu0 0.0
    %4109 = vmatpush1.msra.mxu0 0.0
    %4110 = vmatprep.subr.mxu0 0.0
    %4111 = vmatpush1.msra.mxu0 0.0
    %4112 = vmatprep.subr.mxu0 0.0
    %4113 = vmatpush1.msra.mxu0 0.0
    %4114 = vmatprep.subr.mxu0 0.0
    %4115 = vmatpush1.msra.mxu0 0.0
    %4116 = vmatprep.subr.mxu0 0.0
    %4117 = vmatpush1.msra.mxu0 0.0
    %4118 = vmatprep.subr.mxu0 0.0
    %4119 = vmatpush1.msra.mxu0 0.0
    %4120 = vmatprep.subr.mxu0 0.0
    %4121 = vmatpush1.msra.mxu0 0.0
    %4122 = vmatprep.subr.mxu0 0.0
    %4123 = vmatpush1.msra.mxu0 0.0
    %4124 = vmatprep.mubr.f32.mxu0 %v4052
    %4125 = vmatmul.mubr.f32.gmra.mrb[0].mxu0 %v4004
    %v4126 = vpop.f32.mrb[0].mxu0
    %v4127 = vadd.f32 0.0, %v4126
    %v4128 = vpop.f32.mrb[0].mxu0
    %v4129 = vadd.f32 0.0, %v4128
    %4130 = vmatprep.mubr.f32.mxu0 %v4055
    %4131 = vmatmul.mubr.f32.gmra.mrb[0].mxu0 %v4006
    %v4132 = vpop.f32.mrb[0].mxu0
    %v4133 = vadd.f32 0.0, %v4132
    %v4134 = vpop.f32.mrb[0].mxu0
    %v4135 = vadd.f32 0.0, %v4134
    %4136 = vmatprep.mubr.f32.mxu0 %v4058
    %4137 = vmatmul.mubr.f32.gmra.mrb[0].mxu0 %v4008
    %v4138 = vpop.f32.mrb[0].mxu0
    %v4139 = vadd.f32 0.0, %v4138
    %v4140 = vpop.f32.mrb[0].mxu0
    %v4141 = vadd.f32 0.0, %v4140
    %4142 = vdwg.mxu0
    %s4143 = scalar_lea.vmem %s5, 4160
    %v4144 = vld [vmem:[%s4143] sm:$0xff]
    %v4145 = vld [vmem:[%s4143 + $0x8] sm:$0xff]
    %v4146 = vld [vmem:[%s4143 + $0x10] sm:$0xff]
    %v4147 = vld [vmem:[%s4143 + $0x18] sm:$0xff]
    %v4148 = vld [vmem:[%s4143 + $0x20] sm:$0xff]
    %v4149 = vld [vmem:[%s4143 + $0x28] sm:$0xff]
    %v4150 = vld [vmem:[%s4143 + $0x30] sm:$0xff]
    %v4151 = vld [vmem:[%s4143 + $0x38] sm:$0xff]
    %v4152 = vld [vmem:[%s4143 + $0x40] sm:$0xff]
    %v4153 = vld [vmem:[%s4143 + $0x48] sm:$0xff]
    %v4154 = vld [vmem:[%s4143 + $0x50] sm:$0xff]
    %v4155 = vld [vmem:[%s4143 + $0x58] sm:$0xff]
    %v4156 = vld [vmem:[%s4143 + $0x60] sm:$0xff]
    %v4157 = vld [vmem:[%s4143 + $0x68] sm:$0xff]
    %v4158 = vld [vmem:[%s4143 + $0x70] sm:$0xff]
    %v4159 = vld [vmem:[%s4143 + $0x78] sm:$0xff]
    %v4160 = vld [vmem:[%s4143 + $0x80] sm:$0xff]
    %v4161 = vld [vmem:[%s4143 + $0x88] sm:$0xff]
    %v4162 = vld [vmem:[%s4143 + $0x90] sm:$0xff]
    %v4163 = vld [vmem:[%s4143 + $0x98] sm:$0xff]
    %v4164 = vld [vmem:[%s4143 + $0xa0] sm:$0xff]
    %v4165 = vld [vmem:[%s4143 + $0xa8] sm:$0xff]
    %v4166 = vld [vmem:[%s4143 + $0xb0] sm:$0xff]
    %v4167 = vld [vmem:[%s4143 + $0xb8] sm:$0xff]
    %v4168 = vld [vmem:[%s4143 + $0xc0] sm:$0xff]
    %v4169 = vld [vmem:[%s4143 + $0xc8] sm:$0xff]
    %v4170 = vld [vmem:[%s4143 + $0xd0] sm:$0xff]
    %v4171 = vld [vmem:[%s4143 + $0xd8] sm:$0xff]
    %v4172 = vld [vmem:[%s4143 + $0xe0] sm:$0xff]
    %v4173 = vld [vmem:[%s4143 + $0xe8] sm:$0xff]
    %v4174 = vld [vmem:[%s4143 + $0xf0] sm:$0xff]
    %v4175 = vld [vmem:[%s4143 + $0xf8] sm:$0xff]
    %v4176 = vld [vmem:[%s4143 + $0x100] sm:$0xff]
    %v4177 = vld [vmem:[%s4143 + $0x108] sm:$0xff]
    %v4178 = vld [vmem:[%s4143 + $0x110] sm:$0xff]
    %v4179 = vld [vmem:[%s4143 + $0x118] sm:$0xff]
    %v4180 = vld [vmem:[%s4143 + $0x120] sm:$0xff]
    %v4181 = vld [vmem:[%s4143 + $0x128] sm:$0xff]
    %v4182 = vld [vmem:[%s4143 + $0x130] sm:$0xff]
    %v4183 = vld [vmem:[%s4143 + $0x138] sm:$0xff]
    %4184 = vmatprep.subr.mxu0 %v4145
    %4185 = vmatpush1.msra.mxu0 %v4144
    %4186 = vmatprep.subr.mxu0 %v4147
    %4187 = vmatpush1.msra.mxu0 %v4146
    %4188 = vmatprep.subr.mxu0 %v4149
    %4189 = vmatpush1.msra.mxu0 %v4148
    %4190 = vmatprep.subr.mxu0 %v4151
    %4191 = vmatpush1.msra.mxu0 %v4150
    %4192 = vmatprep.subr.mxu0 %v4153
    %4193 = vmatpush1.msra.mxu0 %v4152
    %4194 = vmatprep.subr.mxu0 %v4155
    %4195 = vmatpush1.msra.mxu0 %v4154
    %4196 = vmatprep.subr.mxu0 %v4157
    %4197 = vmatpush1.msra.mxu0 %v4156
    %4198 = vmatprep.subr.mxu0 %v4159
    %4199 = vmatpush1.msra.mxu0 %v4158
    %4200 = vmatprep.subr.mxu0 %v4161
    %4201 = vmatpush1.msra.mxu0 %v4160
    %4202 = vmatprep.subr.mxu0 %v4163
    %4203 = vmatpush1.msra.mxu0 %v4162
    %4204 = vmatprep.subr.mxu0 %v4165
    %4205 = vmatpush1.msra.mxu0 %v4164
    %4206 = vmatprep.subr.mxu0 %v4167
    %4207 = vmatpush1.msra.mxu0 %v4166
    %4208 = vmatprep.subr.mxu0 %v4169
    %4209 = vmatpush1.msra.mxu0 %v4168
    %4210 = vmatprep.subr.mxu0 %v4171
    %4211 = vmatpush1.msra.mxu0 %v4170
    %4212 = vmatprep.subr.mxu0 %v4173
    %4213 = vmatpush1.msra.mxu0 %v4172
    %4214 = vmatprep.subr.mxu0 %v4175
    %4215 = vmatpush1.msra.mxu0 %v4174
    %4216 = vmatprep.subr.mxu0 %v4177
    %4217 = vmatpush1.msra.mxu0 %v4176
    %4218 = vmatprep.subr.mxu0 %v4179
    %4219 = vmatpush1.msra.mxu0 %v4178
    %4220 = vmatprep.subr.mxu0 %v4181
    %4221 = vmatpush1.msra.mxu0 %v4180
    %4222 = vmatprep.subr.mxu0 %v4183
    %4223 = vmatpush1.msra.mxu0 %v4182
    %4224 = vmatprep.subr.mxu0 0.0
    %4225 = vmatpush1.msra.mxu0 0.0
    %4226 = vmatprep.subr.mxu0 0.0
    %4227 = vmatpush1.msra.mxu0 0.0
    %4228 = vmatprep.subr.mxu0 0.0
    %4229 = vmatpush1.msra.mxu0 0.0
    %4230 = vmatprep.subr.mxu0 0.0
    %4231 = vmatpush1.msra.mxu0 0.0
    %4232 = vmatprep.subr.mxu0 0.0
    %4233 = vmatpush1.msra.mxu0 0.0
    %4234 = vmatprep.subr.mxu0 0.0
    %4235 = vmatpush1.msra.mxu0 0.0
    %4236 = vmatprep.subr.mxu0 0.0
    %4237 = vmatpush1.msra.mxu0 0.0
    %4238 = vmatprep.subr.mxu0 0.0
    %4239 = vmatpush1.msra.mxu0 0.0
    %4240 = vmatprep.subr.mxu0 0.0
    %4241 = vmatpush1.msra.mxu0 0.0
    %4242 = vmatprep.subr.mxu0 0.0
    %4243 = vmatpush1.msra.mxu0 0.0
    %4244 = vmatprep.subr.mxu0 0.0
    %4245 = vmatpush1.msra.mxu0 0.0
    %4246 = vmatprep.subr.mxu0 0.0
    %4247 = vmatpush1.msra.mxu0 0.0
    %4248 = vmatprep.mubr.f32.mxu0 %v4052
    %4249 = vmatmul.mubr.f32.gmra.mrb[0].mxu0 %v4004
    %v4250 = vpop.f32.mrb[0].mxu0
    %v4251 = vadd.f32 0.0, %v4250
    %v4252 = vpop.f32.mrb[0].mxu0
    %v4253 = vadd.f32 0.0, %v4252
    %4254 = vmatprep.mubr.f32.mxu0 %v4055
    %4255 = vmatmul.mubr.f32.gmra.mrb[0].mxu0 %v4006
    %v4256 = vpop.f32.mrb[0].mxu0
    %v4257 = vadd.f32 0.0, %v4256
    %v4258 = vpop.f32.mrb[0].mxu0
    %v4259 = vadd.f32 0.0, %v4258
    %4260 = vmatprep.mubr.f32.mxu0 %v4058
    %4261 = vmatmul.mubr.f32.gmra.mrb[0].mxu0 %v4008
    %v4262 = vpop.f32.mrb[0].mxu0
    %v4263 = vadd.f32 0.0, %v4262
    %v4264 = vpop.f32.mrb[0].mxu0
    %v4265 = vadd.f32 0.0, %v4264
    %4266 = vdwg.mxu0
    %s4267 = scalar_lea.vmem %s5, 4480
    %v4268 = vld [vmem:[%s4267] sm:$0xff]
    %v4269 = vld [vmem:[%s4267 + $0x8] sm:$0xff]
    %v4270 = vld [vmem:[%s4267 + $0x10] sm:$0xff]
    %v4271 = vld [vmem:[%s4267 + $0x18] sm:$0xff]
    %v4272 = vld [vmem:[%s4267 + $0x20] sm:$0xff]
    %v4273 = vld [vmem:[%s4267 + $0x28] sm:$0xff]
    %v4274 = vld [vmem:[%s4267 + $0x30] sm:$0xff]
    %v4275 = vld [vmem:[%s4267 + $0x38] sm:$0xff]
    %v4276 = vld [vmem:[%s4267 + $0x40] sm:$0xff]
    %v4277 = vld [vmem:[%s4267 + $0x48] sm:$0xff]
    %v4278 = vld [vmem:[%s4267 + $0x50] sm:$0xff]
    %v4279 = vld [vmem:[%s4267 + $0x58] sm:$0xff]
    %v4280 = vld [vmem:[%s4267 + $0x60] sm:$0xff]
    %v4281 = vld [vmem:[%s4267 + $0x68] sm:$0xff]
    %v4282 = vld [vmem:[%s4267 + $0x70] sm:$0xff]
    %v4283 = vld [vmem:[%s4267 + $0x78] sm:$0xff]
    %v4284 = vld [vmem:[%s4267 + $0x80] sm:$0xff]
    %v4285 = vld [vmem:[%s4267 + $0x88] sm:$0xff]
    %v4286 = vld [vmem:[%s4267 + $0x90] sm:$0xff]
    %v4287 = vld [vmem:[%s4267 + $0x98] sm:$0xff]
    %v4288 = vld [vmem:[%s4267 + $0xa0] sm:$0xff]
    %v4289 = vld [vmem:[%s4267 + $0xa8] sm:$0xff]
    %v4290 = vld [vmem:[%s4267 + $0xb0] sm:$0xff]
    %v4291 = vld [vmem:[%s4267 + $0xb8] sm:$0xff]
    %v4292 = vld [vmem:[%s4267 + $0xc0] sm:$0xff]
    %v4293 = vld [vmem:[%s4267 + $0xc8] sm:$0xff]
    %v4294 = vld [vmem:[%s4267 + $0xd0] sm:$0xff]
    %v4295 = vld [vmem:[%s4267 + $0xd8] sm:$0xff]
    %v4296 = vld [vmem:[%s4267 + $0xe0] sm:$0xff]
    %v4297 = vld [vmem:[%s4267 + $0xe8] sm:$0xff]
    %v4298 = vld [vmem:[%s4267 + $0xf0] sm:$0xff]
    %v4299 = vld [vmem:[%s4267 + $0xf8] sm:$0xff]
    %v4300 = vld [vmem:[%s4267 + $0x100] sm:$0xff]
    %v4301 = vld [vmem:[%s4267 + $0x108] sm:$0xff]
    %v4302 = vld [vmem:[%s4267 + $0x110] sm:$0xff]
    %v4303 = vld [vmem:[%s4267 + $0x118] sm:$0xff]
    %v4304 = vld [vmem:[%s4267 + $0x120] sm:$0xff]
    %v4305 = vld [vmem:[%s4267 + $0x128] sm:$0xff]
    %v4306 = vld [vmem:[%s4267 + $0x130] sm:$0xff]
    %v4307 = vld [vmem:[%s4267 + $0x138] sm:$0xff]
    %4308 = vmatprep.subr.mxu0 %v4269
    %4309 = vmatpush1.msra.mxu0 %v4268
    %4310 = vmatprep.subr.mxu0 %v4271
    %4311 = vmatpush1.msra.mxu0 %v4270
    %4312 = vmatprep.subr.mxu0 %v4273
    %4313 = vmatpush1.msra.mxu0 %v4272
    %4314 = vmatprep.subr.mxu0 %v4275
    %4315 = vmatpush1.msra.mxu0 %v4274
    %4316 = vmatprep.subr.mxu0 %v4277
    %4317 = vmatpush1.msra.mxu0 %v4276
    %4318 = vmatprep.subr.mxu0 %v4279
    %4319 = vmatpush1.msra.mxu0 %v4278
    %4320 = vmatprep.subr.mxu0 %v4281
    %4321 = vmatpush1.msra.mxu0 %v4280
    %4322 = vmatprep.subr.mxu0 %v4283
    %4323 = vmatpush1.msra.mxu0 %v4282
    %4324 = vmatprep.subr.mxu0 %v4285
    %4325 = vmatpush1.msra.mxu0 %v4284
    %4326 = vmatprep.subr.mxu0 %v4287
    %4327 = vmatpush1.msra.mxu0 %v4286
    %4328 = vmatprep.subr.mxu0 %v4289
    %4329 = vmatpush1.msra.mxu0 %v4288
    %4330 = vmatprep.subr.mxu0 %v4291
    %4331 = vmatpush1.msra.mxu0 %v4290
    %4332 = vmatprep.subr.mxu0 %v4293
    %4333 = vmatpush1.msra.mxu0 %v4292
    %4334 = vmatprep.subr.mxu0 %v4295
    %4335 = vmatpush1.msra.mxu0 %v4294
    %4336 = vmatprep.subr.mxu0 %v4297
    %4337 = vmatpush1.msra.mxu0 %v4296
    %4338 = vmatprep.subr.mxu0 %v4299
    %4339 = vmatpush1.msra.mxu0 %v4298
    %4340 = vmatprep.subr.mxu0 %v4301
    %4341 = vmatpush1.msra.mxu0 %v4300
    %4342 = vmatprep.subr.mxu0 %v4303
    %4343 = vmatpush1.msra.mxu0 %v4302
    %4344 = vmatprep.subr.mxu0 %v4305
    %4345 = vmatpush1.msra.mxu0 %v4304
    %4346 = vmatprep.subr.mxu0 %v4307
    %4347 = vmatpush1.msra.mxu0 %v4306
    %4348 = vmatprep.subr.mxu0 0.0
    %4349 = vmatpush1.msra.mxu0 0.0
    %4350 = vmatprep.subr.mxu0 0.0
    %4351 = vmatpush1.msra.mxu0 0.0
    %4352 = vmatprep.subr.mxu0 0.0
    %4353 = vmatpush1.msra.mxu0 0.0
    %4354 = vmatprep.subr.mxu0 0.0
    %4355 = vmatpush1.msra.mxu0 0.0
    %4356 = vmatprep.subr.mxu0 0.0
    %4357 = vmatpush1.msra.mxu0 0.0
    %4358 = vmatprep.subr.mxu0 0.0
    %4359 = vmatpush1.msra.mxu0 0.0
    %4360 = vmatprep.subr.mxu0 0.0
    %4361 = vmatpush1.msra.mxu0 0.0
    %4362 = vmatprep.subr.mxu0 0.0
    %4363 = vmatpush1.msra.mxu0 0.0
    %4364 = vmatprep.subr.mxu0 0.0
    %4365 = vmatpush1.msra.mxu0 0.0
    %4366 = vmatprep.subr.mxu0 0.0
    %4367 = vmatpush1.msra.mxu0 0.0
    %4368 = vmatprep.subr.mxu0 0.0
    %4369 = vmatpush1.msra.mxu0 0.0
    %4370 = vmatprep.subr.mxu0 0.0
    %4371 = vmatpush1.msra.mxu0 0.0
    %4372 = vmatprep.mubr.f32.mxu0 %v4052
    %4373 = vmatmul.mubr.f32.gmra.mrb[0].mxu0 %v4004
    %v4374 = vpop.f32.mrb[0].mxu0
    %v4375 = vadd.f32 0.0, %v4374
    %v4376 = vpop.f32.mrb[0].mxu0
    %v4377 = vadd.f32 0.0, %v4376
    %4378 = vmatprep.mubr.f32.mxu0 %v4055
    %4379 = vmatmul.mubr.f32.gmra.mrb[0].mxu0 %v4006
    %v4380 = vpop.f32.mrb[0].mxu0
    %v4381 = vadd.f32 0.0, %v4380
    %v4382 = vpop.f32.mrb[0].mxu0
    %v4383 = vadd.f32 0.0, %v4382
    %4384 = vmatprep.mubr.f32.mxu0 %v4058
    %4385 = vmatmul.mubr.f32.gmra.mrb[0].mxu0 %v4008
    %v4386 = vpop.f32.mrb[0].mxu0
    %v4387 = vadd.f32 0.0, %v4386
    %v4388 = vpop.f32.mrb[0].mxu0
    %v4389 = vadd.f32 0.0, %v4388
    %4390 = vdwg.mxu0
    %v4392 = vsel %vm613, %v4263, 0
    %v4395 = vsel %vm613, %v4265, 0
    %4397 = vmatprep.subr.mxu0 %v4253
    %4398 = vmatpush1.msra.mxu0 %v4251
    %4399 = vmatprep.subr.mxu0 %v4259
    %4400 = vmatpush1.msra.mxu0 %v4257
    %4401 = vmatprep.subr.mxu0 %v4395
    %4402 = vmatpush1.msra.mxu0 %v4392
    %4403 = vmatprep.subr.mxu0 0.0
    %4404 = vmatpush1.msra.mxu0 0.0
    %4405 = vmatprep.subr.mxu0 0.0
    %4406 = vmatpush1.msra.mxu0 0.0
    %4407 = vmatprep.subr.mxu0 0.0
    %4408 = vmatpush1.msra.mxu0 0.0
    %4409 = vmatprep.subr.mxu0 0.0
    %4410 = vmatpush1.msra.mxu0 0.0
    %4411 = vmatprep.subr.mxu0 0.0
    %4412 = vmatpush1.msra.mxu0 0.0
    %4413 = vmatprep.subr.mxu0 0.0
    %4414 = vmatpush1.msra.mxu0 0.0
    %4415 = vmatprep.subr.mxu0 0.0
    %4416 = vmatpush1.msra.mxu0 0.0
    %4417 = vmatprep.subr.mxu0 0.0
    %4418 = vmatpush1.msra.mxu0 0.0
    %4419 = vmatprep.subr.mxu0 0.0
    %4420 = vmatpush1.msra.mxu0 0.0
    %4421 = vmatprep.subr.mxu0 0.0
    %4422 = vmatpush1.msra.mxu0 0.0
    %4423 = vmatprep.subr.mxu0 0.0
    %4424 = vmatpush1.msra.mxu0 0.0
    %4425 = vmatprep.subr.mxu0 0.0
    %4426 = vmatpush1.msra.mxu0 0.0
    %4427 = vmatprep.subr.mxu0 0.0
    %4428 = vmatpush1.msra.mxu0 0.0
    %4429 = vmatprep.subr.mxu0 0.0
    %4430 = vmatpush1.msra.mxu0 0.0
    %4431 = vmatprep.subr.mxu0 0.0
    %4432 = vmatpush1.msra.mxu0 0.0
    %4433 = vmatprep.subr.mxu0 0.0
    %4434 = vmatpush1.msra.mxu0 0.0
    %4435 = vmatprep.subr.mxu0 0.0
    %4436 = vmatpush1.msra.mxu0 0.0
    %4437 = vmatprep.subr.mxu0 0.0
    %4438 = vmatpush1.msra.mxu0 0.0
    %4439 = vmatprep.subr.mxu0 0.0
    %4440 = vmatpush1.msra.mxu0 0.0
    %4441 = vmatprep.subr.mxu0 0.0
    %4442 = vmatpush1.msra.mxu0 0.0
    %4443 = vmatprep.subr.mxu0 0.0
    %4444 = vmatpush1.msra.mxu0 0.0
    %4445 = vmatprep.subr.mxu0 0.0
    %4446 = vmatpush1.msra.mxu0 0.0
    %4447 = vmatprep.subr.mxu0 0.0
    %4448 = vmatpush1.msra.mxu0 0.0
    %4449 = vmatprep.subr.mxu0 0.0
    %4450 = vmatpush1.msra.mxu0 0.0
    %4451 = vmatprep.subr.mxu0 0.0
    %4452 = vmatpush1.msra.mxu0 0.0
    %4453 = vmatprep.subr.mxu0 0.0
    %4454 = vmatpush1.msra.mxu0 0.0
    %4455 = vmatprep.subr.mxu0 0.0
    %4456 = vmatpush1.msra.mxu0 0.0
    %4457 = vmatprep.subr.mxu0 0.0
    %4458 = vmatpush1.msra.mxu0 0.0
    %4459 = vmatprep.subr.mxu0 0.0
    %4460 = vmatpush1.msra.mxu0 0.0
    %4461 = vmatprep.mubr.f32.mxu0 0.0
    %4462 = vmatmul.mubr.f32.gmra.mrb[0].mxu0 %v605
    %v4463 = vpop.f32.mrb[0].mxu0
    %v4464 = vadd.f32 0.0, %v4463
    %v4465 = vpop.f32.mrb[0].mxu0
    %v4466 = vadd.f32 0.0, %v4465
    %4467 = vmatprep.mubr.f32.mxu0 0.0
    %4468 = vmatmul.mubr.f32.gmra.mrb[0].mxu0 %v608
    %v4469 = vpop.f32.mrb[0].mxu0
    %v4470 = vadd.f32 0.0, %v4469
    %v4471 = vpop.f32.mrb[0].mxu0
    %v4472 = vadd.f32 0.0, %v4471
    %4473 = vmatprep.mubr.f32.mxu0 0.0
    %4474 = vmatmul.mubr.f32.gmra.mrb[0].mxu0 %v611
    %v4475 = vpop.f32.mrb[0].mxu0
    %v4476 = vadd.f32 0.0, %v4475
    %v4477 = vpop.f32.mrb[0].mxu0
    %v4478 = vadd.f32 0.0, %v4477
    %4479 = vdwg.mxu0
    %v4481 = vsel %vm613, %v4139, 0
    %v4484 = vsel %vm613, %v4141, 0
    %4486 = vmatprep.subr.mxu0 %v4129
    %4487 = vmatpush1.msra.mxu0 %v4127
    %4488 = vmatprep.subr.mxu0 %v4135
    %4489 = vmatpush1.msra.mxu0 %v4133
    %4490 = vmatprep.subr.mxu0 %v4484
    %4491 = vmatpush1.msra.mxu0 %v4481
    %4492 = vmatprep.subr.mxu0 0.0
    %4493 = vmatpush1.msra.mxu0 0.0
    %4494 = vmatprep.subr.mxu0 0.0
    %4495 = vmatpush1.msra.mxu0 0.0
    %4496 = vmatprep.subr.mxu0 0.0
    %4497 = vmatpush1.msra.mxu0 0.0
    %4498 = vmatprep.subr.mxu0 0.0
    %4499 = vmatpush1.msra.mxu0 0.0
    %4500 = vmatprep.subr.mxu0 0.0
    %4501 = vmatpush1.msra.mxu0 0.0
    %4502 = vmatprep.subr.mxu0 0.0
    %4503 = vmatpush1.msra.mxu0 0.0
    %4504 = vmatprep.subr.mxu0 0.0
    %4505 = vmatpush1.msra.mxu0 0.0
    %4506 = vmatprep.subr.mxu0 0.0
    %4507 = vmatpush1.msra.mxu0 0.0
    %4508 = vmatprep.subr.mxu0 0.0
    %4509 = vmatpush1.msra.mxu0 0.0
    %4510 = vmatprep.subr.mxu0 0.0
    %4511 = vmatpush1.msra.mxu0 0.0
    %4512 = vmatprep.subr.mxu0 0.0
    %4513 = vmatpush1.msra.mxu0 0.0
    %4514 = vmatprep.subr.mxu0 0.0
    %4515 = vmatpush1.msra.mxu0 0.0
    %4516 = vmatprep.subr.mxu0 0.0
    %4517 = vmatpush1.msra.mxu0 0.0
    %4518 = vmatprep.subr.mxu0 0.0
    %4519 = vmatpush1.msra.mxu0 0.0
    %4520 = vmatprep.subr.mxu0 0.0
    %4521 = vmatpush1.msra.mxu0 0.0
    %4522 = vmatprep.subr.mxu0 0.0
    %4523 = vmatpush1.msra.mxu0 0.0
    %4524 = vmatprep.subr.mxu0 0.0
    %4525 = vmatpush1.msra.mxu0 0.0
    %4526 = vmatprep.subr.mxu0 0.0
    %4527 = vmatpush1.msra.mxu0 0.0
    %4528 = vmatprep.subr.mxu0 0.0
    %4529 = vmatpush1.msra.mxu0 0.0
    %4530 = vmatprep.subr.mxu0 0.0
    %4531 = vmatpush1.msra.mxu0 0.0
    %4532 = vmatprep.subr.mxu0 0.0
    %4533 = vmatpush1.msra.mxu0 0.0
    %4534 = vmatprep.subr.mxu0 0.0
    %4535 = vmatpush1.msra.mxu0 0.0
    %4536 = vmatprep.subr.mxu0 0.0
    %4537 = vmatpush1.msra.mxu0 0.0
    %4538 = vmatprep.subr.mxu0 0.0
    %4539 = vmatpush1.msra.mxu0 0.0
    %4540 = vmatprep.subr.mxu0 0.0
    %4541 = vmatpush1.msra.mxu0 0.0
    %4542 = vmatprep.subr.mxu0 0.0
    %4543 = vmatpush1.msra.mxu0 0.0
    %4544 = vmatprep.subr.mxu0 0.0
    %4545 = vmatpush1.msra.mxu0 0.0
    %4546 = vmatprep.subr.mxu0 0.0
    %4547 = vmatpush1.msra.mxu0 0.0
    %4548 = vmatprep.subr.mxu0 0.0
    %4549 = vmatpush1.msra.mxu0 0.0
    %4550 = vmatprep.mubr.f32.mxu0 0.0
    %4551 = vmatmul.mubr.f32.gmra.mrb[0].mxu0 %v704
    %v4552 = vpop.f32.mrb[0].mxu0
    %v4553 = vadd.f32 %v4464, %v4552
    %v4554 = vpop.f32.mrb[0].mxu0
    %v4555 = vadd.f32 %v4466, %v4554
    %4556 = vmatprep.mubr.f32.mxu0 0.0
    %4557 = vmatmul.mubr.f32.gmra.mrb[0].mxu0 %v707
    %v4558 = vpop.f32.mrb[0].mxu0
    %v4559 = vadd.f32 %v4470, %v4558
    %v4560 = vpop.f32.mrb[0].mxu0
    %v4561 = vadd.f32 %v4472, %v4560
    %4562 = vmatprep.mubr.f32.mxu0 0.0
    %4563 = vmatmul.mubr.f32.gmra.mrb[0].mxu0 %v710
    %v4564 = vpop.f32.mrb[0].mxu0
    %v4565 = vadd.f32 %v4476, %v4564
    %v4566 = vpop.f32.mrb[0].mxu0
    %v4567 = vadd.f32 %v4478, %v4566
    %4568 = vdwg.mxu0
    %v4570 = vsel %vm613, %v4387, 0
    %v4573 = vsel %vm613, %v4389, 0
    %4575 = vmatprep.subr.mxu0 %v4377
    %4576 = vmatpush1.msra.mxu0 %v4375
    %4577 = vmatprep.subr.mxu0 %v4383
    %4578 = vmatpush1.msra.mxu0 %v4381
    %4579 = vmatprep.subr.mxu0 %v4573
    %4580 = vmatpush1.msra.mxu0 %v4570
    %4581 = vmatprep.subr.mxu0 0.0
    %4582 = vmatpush1.msra.mxu0 0.0
    %4583 = vmatprep.subr.mxu0 0.0
    %4584 = vmatpush1.msra.mxu0 0.0
    %4585 = vmatprep.subr.mxu0 0.0
    %4586 = vmatpush1.msra.mxu0 0.0
    %4587 = vmatprep.subr.mxu0 0.0
    %4588 = vmatpush1.msra.mxu0 0.0
    %4589 = vmatprep.subr.mxu0 0.0
    %4590 = vmatpush1.msra.mxu0 0.0
    %4591 = vmatprep.subr.mxu0 0.0
    %4592 = vmatpush1.msra.mxu0 0.0
    %4593 = vmatprep.subr.mxu0 0.0
    %4594 = vmatpush1.msra.mxu0 0.0
    %4595 = vmatprep.subr.mxu0 0.0
    %4596 = vmatpush1.msra.mxu0 0.0
    %4597 = vmatprep.subr.mxu0 0.0
    %4598 = vmatpush1.msra.mxu0 0.0
    %4599 = vmatprep.subr.mxu0 0.0
    %4600 = vmatpush1.msra.mxu0 0.0
    %4601 = vmatprep.subr.mxu0 0.0
    %4602 = vmatpush1.msra.mxu0 0.0
    %4603 = vmatprep.subr.mxu0 0.0
    %4604 = vmatpush1.msra.mxu0 0.0
    %4605 = vmatprep.subr.mxu0 0.0
    %4606 = vmatpush1.msra.mxu0 0.0
    %4607 = vmatprep.subr.mxu0 0.0
    %4608 = vmatpush1.msra.mxu0 0.0
    %4609 = vmatprep.subr.mxu0 0.0
    %4610 = vmatpush1.msra.mxu0 0.0
    %4611 = vmatprep.subr.mxu0 0.0
    %4612 = vmatpush1.msra.mxu0 0.0
    %4613 = vmatprep.subr.mxu0 0.0
    %4614 = vmatpush1.msra.mxu0 0.0
    %4615 = vmatprep.subr.mxu0 0.0
    %4616 = vmatpush1.msra.mxu0 0.0
    %4617 = vmatprep.subr.mxu0 0.0
    %4618 = vmatpush1.msra.mxu0 0.0
    %4619 = vmatprep.subr.mxu0 0.0
    %4620 = vmatpush1.msra.mxu0 0.0
    %4621 = vmatprep.subr.mxu0 0.0
    %4622 = vmatpush1.msra.mxu0 0.0
    %4623 = vmatprep.subr.mxu0 0.0
    %4624 = vmatpush1.msra.mxu0 0.0
    %4625 = vmatprep.subr.mxu0 0.0
    %4626 = vmatpush1.msra.mxu0 0.0
    %4627 = vmatprep.subr.mxu0 0.0
    %4628 = vmatpush1.msra.mxu0 0.0
    %4629 = vmatprep.subr.mxu0 0.0
    %4630 = vmatpush1.msra.mxu0 0.0
    %4631 = vmatprep.subr.mxu0 0.0
    %4632 = vmatpush1.msra.mxu0 0.0
    %4633 = vmatprep.subr.mxu0 0.0
    %4634 = vmatpush1.msra.mxu0 0.0
    %4635 = vmatprep.subr.mxu0 0.0
    %4636 = vmatpush1.msra.mxu0 0.0
    %4637 = vmatprep.subr.mxu0 0.0
    %4638 = vmatpush1.msra.mxu0 0.0
    %4639 = vmatprep.mubr.f32.mxu0 0.0
    %4640 = vmatmul.mubr.f32.gmra.mrb[0].mxu0 %v802
    %v4641 = vpop.f32.mrb[0].mxu0
    %v4642 = vadd.f32 0.0, %v4641
    %v4643 = vpop.f32.mrb[0].mxu0
    %v4644 = vadd.f32 0.0, %v4643
    %4645 = vmatprep.mubr.f32.mxu0 0.0
    %4646 = vmatmul.mubr.f32.gmra.mrb[0].mxu0 %v805
    %v4647 = vpop.f32.mrb[0].mxu0
    %v4648 = vadd.f32 0.0, %v4647
    %v4649 = vpop.f32.mrb[0].mxu0
    %v4650 = vadd.f32 0.0, %v4649
    %4651 = vmatprep.mubr.f32.mxu0 0.0
    %4652 = vmatmul.mubr.f32.gmra.mrb[0].mxu0 %v808
    %v4653 = vpop.f32.mrb[0].mxu0
    %v4654 = vadd.f32 0.0, %v4653
    %v4655 = vpop.f32.mrb[0].mxu0
    %v4656 = vadd.f32 0.0, %v4655
    %4657 = vdwg.mxu0
    %v4658 = vadd.f32 %v4553, %v4642
    %v4659 = vadd.f32 %v4555, %v4644
    %v4660 = vadd.f32 %v4559, %v4648
    %v4661 = vadd.f32 %v4561, %v4650
    %v4662 = vadd.f32 %v4565, %v4654
    %v4663 = vadd.f32 %v4567, %v4656
    %s4664 = scalar_lea.vmem %s6, 192
    %v4665 = vld [vmem:[%s4664] sm:$0xff]
    %v4666 = vld [vmem:[%s4664 + $0x8] sm:$0xff]
    %v4667 = vld [vmem:[%s4664 + $0x10] sm:$0xff]
    %v4668 = vld [vmem:[%s4664 + $0x18] sm:$0xff]
    %v4669 = vld [vmem:[%s4664 + $0x20] sm:$0xf]
    %v4670 = vld [vmem:[%s4664 + $0x28] sm:$0xf]
    %v4671 = vadd.f32 %v4658, %v4665
    %v4672 = vadd.f32 %v4659, %v4666
    %v4673 = vadd.f32 %v4660, %v4667
    %v4674 = vadd.f32 %v4661, %v4668
    %v4675 = vadd.f32 %v4662, %v4669
    %v4676 = vadd.f32 %v4663, %v4670
    %v4677 = vmax.f32 %v4671, 0.0
    %v4678 = vmax.f32 %v4672, 0.0
    %v4679 = vmax.f32 %v4673, 0.0
    %v4680 = vmax.f32 %v4674, 0.0
    %v4681 = vmax.f32 %v4675, 0.0
    %v4682 = vmax.f32 %v4676, 0.0
    %s4683 = scalar_lea.vmem %s5, 4800
    %v4684 = vld [vmem:[%s4683] sm:$0xff]
    %v4685 = vld [vmem:[%s4683 + $0x8] sm:$0xff]
    %v4686 = vld [vmem:[%s4683 + $0x10] sm:$0xff]
    %v4687 = vld [vmem:[%s4683 + $0x18] sm:$0xff]
    %v4688 = vld [vmem:[%s4683 + $0x20] sm:$0xff]
    %v4689 = vld [vmem:[%s4683 + $0x28] sm:$0xff]
    %v4690 = vld [vmem:[%s4683 + $0x30] sm:$0xff]
    %v4691 = vld [vmem:[%s4683 + $0x38] sm:$0xff]
    %v4692 = vld [vmem:[%s4683 + $0x40] sm:$0xff]
    %v4693 = vld [vmem:[%s4683 + $0x48] sm:$0xff]
    %v4694 = vld [vmem:[%s4683 + $0x50] sm:$0xff]
    %v4695 = vld [vmem:[%s4683 + $0x58] sm:$0xff]
    %v4696 = vld [vmem:[%s4683 + $0x60] sm:$0xff]
    %v4697 = vld [vmem:[%s4683 + $0x68] sm:$0xff]
    %v4698 = vld [vmem:[%s4683 + $0x70] sm:$0xff]
    %v4699 = vld [vmem:[%s4683 + $0x78] sm:$0xff]
    %v4700 = vld [vmem:[%s4683 + $0x80] sm:$0xff]
    %v4701 = vld [vmem:[%s4683 + $0x88] sm:$0xff]
    %v4702 = vld [vmem:[%s4683 + $0x90] sm:$0xff]
    %v4703 = vld [vmem:[%s4683 + $0x98] sm:$0xff]
    %v4704 = vld [vmem:[%s4683 + $0xa0] sm:$0xff]
    %v4705 = vld [vmem:[%s4683 + $0xa8] sm:$0xff]
    %v4706 = vld [vmem:[%s4683 + $0xb0] sm:$0xff]
    %v4707 = vld [vmem:[%s4683 + $0xb8] sm:$0xff]
    %v4708 = vld [vmem:[%s4683 + $0xc0] sm:$0xff]
    %v4709 = vld [vmem:[%s4683 + $0xc8] sm:$0xff]
    %v4710 = vld [vmem:[%s4683 + $0xd0] sm:$0xff]
    %v4711 = vld [vmem:[%s4683 + $0xd8] sm:$0xff]
    %v4712 = vld [vmem:[%s4683 + $0xe0] sm:$0xff]
    %v4713 = vld [vmem:[%s4683 + $0xe8] sm:$0xff]
    %v4714 = vld [vmem:[%s4683 + $0xf0] sm:$0xff]
    %v4715 = vld [vmem:[%s4683 + $0xf8] sm:$0xff]
    %v4716 = vld [vmem:[%s4683 + $0x100] sm:$0xff]
    %v4717 = vld [vmem:[%s4683 + $0x108] sm:$0xff]
    %v4718 = vld [vmem:[%s4683 + $0x110] sm:$0xff]
    %v4719 = vld [vmem:[%s4683 + $0x118] sm:$0xff]
    %v4720 = vld [vmem:[%s4683 + $0x120] sm:$0xff]
    %v4721 = vld [vmem:[%s4683 + $0x128] sm:$0xff]
    %v4722 = vld [vmem:[%s4683 + $0x130] sm:$0xff]
    %v4723 = vld [vmem:[%s4683 + $0x138] sm:$0xff]
    %v4725 = vsel %vm262, %v4678, 0
    %v4728 = vsel %vm262, %v4680, 0
    %v4731 = vsel %vm262, %v4682, 0
    %4733 = vmatprep.subr.mxu0 %v4685
    %4734 = vmatpush1.msra.mxu0 %v4684
    %4735 = vmatprep.subr.mxu0 %v4687
    %4736 = vmatpush1.msra.mxu0 %v4686
    %4737 = vmatprep.subr.mxu0 %v4689
    %4738 = vmatpush1.msra.mxu0 %v4688
    %4739 = vmatprep.subr.mxu0 %v4691
    %4740 = vmatpush1.msra.mxu0 %v4690
    %4741 = vmatprep.subr.mxu0 %v4693
    %4742 = vmatpush1.msra.mxu0 %v4692
    %4743 = vmatprep.subr.mxu0 %v4695
    %4744 = vmatpush1.msra.mxu0 %v4694
    %4745 = vmatprep.subr.mxu0 %v4697
    %4746 = vmatpush1.msra.mxu0 %v4696
    %4747 = vmatprep.subr.mxu0 %v4699
    %4748 = vmatpush1.msra.mxu0 %v4698
    %4749 = vmatprep.subr.mxu0 %v4701
    %4750 = vmatpush1.msra.mxu0 %v4700
    %4751 = vmatprep.subr.mxu0 %v4703
    %4752 = vmatpush1.msra.mxu0 %v4702
    %4753 = vmatprep.subr.mxu0 %v4705
    %4754 = vmatpush1.msra.mxu0 %v4704
    %4755 = vmatprep.subr.mxu0 %v4707
    %4756 = vmatpush1.msra.mxu0 %v4706
    %4757 = vmatprep.subr.mxu0 %v4709
    %4758 = vmatpush1.msra.mxu0 %v4708
    %4759 = vmatprep.subr.mxu0 %v4711
    %4760 = vmatpush1.msra.mxu0 %v4710
    %4761 = vmatprep.subr.mxu0 %v4713
    %4762 = vmatpush1.msra.mxu0 %v4712
    %4763 = vmatprep.subr.mxu0 %v4715
    %4764 = vmatpush1.msra.mxu0 %v4714
    %4765 = vmatprep.subr.mxu0 %v4717
    %4766 = vmatpush1.msra.mxu0 %v4716
    %4767 = vmatprep.subr.mxu0 %v4719
    %4768 = vmatpush1.msra.mxu0 %v4718
    %4769 = vmatprep.subr.mxu0 %v4721
    %4770 = vmatpush1.msra.mxu0 %v4720
    %4771 = vmatprep.subr.mxu0 %v4723
    %4772 = vmatpush1.msra.mxu0 %v4722
    %4773 = vmatprep.subr.mxu0 0.0
    %4774 = vmatpush1.msra.mxu0 0.0
    %4775 = vmatprep.subr.mxu0 0.0
    %4776 = vmatpush1.msra.mxu0 0.0
    %4777 = vmatprep.subr.mxu0 0.0
    %4778 = vmatpush1.msra.mxu0 0.0
    %4779 = vmatprep.subr.mxu0 0.0
    %4780 = vmatpush1.msra.mxu0 0.0
    %4781 = vmatprep.subr.mxu0 0.0
    %4782 = vmatpush1.msra.mxu0 0.0
    %4783 = vmatprep.subr.mxu0 0.0
    %4784 = vmatpush1.msra.mxu0 0.0
    %4785 = vmatprep.subr.mxu0 0.0
    %4786 = vmatpush1.msra.mxu0 0.0
    %4787 = vmatprep.subr.mxu0 0.0
    %4788 = vmatpush1.msra.mxu0 0.0
    %4789 = vmatprep.subr.mxu0 0.0
    %4790 = vmatpush1.msra.mxu0 0.0
    %4791 = vmatprep.subr.mxu0 0.0
    %4792 = vmatpush1.msra.mxu0 0.0
    %4793 = vmatprep.subr.mxu0 0.0
    %4794 = vmatpush1.msra.mxu0 0.0
    %4795 = vmatprep.subr.mxu0 0.0
    %4796 = vmatpush1.msra.mxu0 0.0
    %4797 = vmatprep.mubr.f32.mxu0 %v4725
    %4798 = vmatmul.mubr.f32.gmra.mrb[0].mxu0 %v4677
    %v4799 = vpop.f32.mrb[0].mxu0
    %v4800 = vadd.f32 0.0, %v4799
    %v4801 = vpop.f32.mrb[0].mxu0
    %v4802 = vadd.f32 0.0, %v4801
    %4803 = vmatprep.mubr.f32.mxu0 %v4728
    %4804 = vmatmul.mubr.f32.gmra.mrb[0].mxu0 %v4679
    %v4805 = vpop.f32.mrb[0].mxu0
    %v4806 = vadd.f32 0.0, %v4805
    %v4807 = vpop.f32.mrb[0].mxu0
    %v4808 = vadd.f32 0.0, %v4807
    %4809 = vmatprep.mubr.f32.mxu0 %v4731
    %4810 = vmatmul.mubr.f32.gmra.mrb[0].mxu0 %v4681
    %v4811 = vpop.f32.mrb[0].mxu0
    %v4812 = vadd.f32 0.0, %v4811
    %v4813 = vpop.f32.mrb[0].mxu0
    %v4814 = vadd.f32 0.0, %v4813
    %4815 = vdwg.mxu0
    %s4816 = scalar_lea.vmem %s5, 5120
    %v4817 = vld [vmem:[%s4816] sm:$0xff]
    %v4818 = vld [vmem:[%s4816 + $0x8] sm:$0xff]
    %v4819 = vld [vmem:[%s4816 + $0x10] sm:$0xff]
    %v4820 = vld [vmem:[%s4816 + $0x18] sm:$0xff]
    %v4821 = vld [vmem:[%s4816 + $0x20] sm:$0xff]
    %v4822 = vld [vmem:[%s4816 + $0x28] sm:$0xff]
    %v4823 = vld [vmem:[%s4816 + $0x30] sm:$0xff]
    %v4824 = vld [vmem:[%s4816 + $0x38] sm:$0xff]
    %v4825 = vld [vmem:[%s4816 + $0x40] sm:$0xff]
    %v4826 = vld [vmem:[%s4816 + $0x48] sm:$0xff]
    %v4827 = vld [vmem:[%s4816 + $0x50] sm:$0xff]
    %v4828 = vld [vmem:[%s4816 + $0x58] sm:$0xff]
    %v4829 = vld [vmem:[%s4816 + $0x60] sm:$0xff]
    %v4830 = vld [vmem:[%s4816 + $0x68] sm:$0xff]
    %v4831 = vld [vmem:[%s4816 + $0x70] sm:$0xff]
    %v4832 = vld [vmem:[%s4816 + $0x78] sm:$0xff]
    %v4833 = vld [vmem:[%s4816 + $0x80] sm:$0xff]
    %v4834 = vld [vmem:[%s4816 + $0x88] sm:$0xff]
    %v4835 = vld [vmem:[%s4816 + $0x90] sm:$0xff]
    %v4836 = vld [vmem:[%s4816 + $0x98] sm:$0xff]
    %v4837 = vld [vmem:[%s4816 + $0xa0] sm:$0xff]
    %v4838 = vld [vmem:[%s4816 + $0xa8] sm:$0xff]
    %v4839 = vld [vmem:[%s4816 + $0xb0] sm:$0xff]
    %v4840 = vld [vmem:[%s4816 + $0xb8] sm:$0xff]
    %v4841 = vld [vmem:[%s4816 + $0xc0] sm:$0xff]
    %v4842 = vld [vmem:[%s4816 + $0xc8] sm:$0xff]
    %v4843 = vld [vmem:[%s4816 + $0xd0] sm:$0xff]
    %v4844 = vld [vmem:[%s4816 + $0xd8] sm:$0xff]
    %v4845 = vld [vmem:[%s4816 + $0xe0] sm:$0xff]
    %v4846 = vld [vmem:[%s4816 + $0xe8] sm:$0xff]
    %v4847 = vld [vmem:[%s4816 + $0xf0] sm:$0xff]
    %v4848 = vld [vmem:[%s4816 + $0xf8] sm:$0xff]
    %v4849 = vld [vmem:[%s4816 + $0x100] sm:$0xff]
    %v4850 = vld [vmem:[%s4816 + $0x108] sm:$0xff]
    %v4851 = vld [vmem:[%s4816 + $0x110] sm:$0xff]
    %v4852 = vld [vmem:[%s4816 + $0x118] sm:$0xff]
    %v4853 = vld [vmem:[%s4816 + $0x120] sm:$0xff]
    %v4854 = vld [vmem:[%s4816 + $0x128] sm:$0xff]
    %v4855 = vld [vmem:[%s4816 + $0x130] sm:$0xff]
    %v4856 = vld [vmem:[%s4816 + $0x138] sm:$0xff]
    %4857 = vmatprep.subr.mxu0 %v4818
    %4858 = vmatpush1.msra.mxu0 %v4817
    %4859 = vmatprep.subr.mxu0 %v4820
    %4860 = vmatpush1.msra.mxu0 %v4819
    %4861 = vmatprep.subr.mxu0 %v4822
    %4862 = vmatpush1.msra.mxu0 %v4821
    %4863 = vmatprep.subr.mxu0 %v4824
    %4864 = vmatpush1.msra.mxu0 %v4823
    %4865 = vmatprep.subr.mxu0 %v4826
    %4866 = vmatpush1.msra.mxu0 %v4825
    %4867 = vmatprep.subr.mxu0 %v4828
    %4868 = vmatpush1.msra.mxu0 %v4827
    %4869 = vmatprep.subr.mxu0 %v4830
    %4870 = vmatpush1.msra.mxu0 %v4829
    %4871 = vmatprep.subr.mxu0 %v4832
    %4872 = vmatpush1.msra.mxu0 %v4831
    %4873 = vmatprep.subr.mxu0 %v4834
    %4874 = vmatpush1.msra.mxu0 %v4833
    %4875 = vmatprep.subr.mxu0 %v4836
    %4876 = vmatpush1.msra.mxu0 %v4835
    %4877 = vmatprep.subr.mxu0 %v4838
    %4878 = vmatpush1.msra.mxu0 %v4837
    %4879 = vmatprep.subr.mxu0 %v4840
    %4880 = vmatpush1.msra.mxu0 %v4839
    %4881 = vmatprep.subr.mxu0 %v4842
    %4882 = vmatpush1.msra.mxu0 %v4841
    %4883 = vmatprep.subr.mxu0 %v4844
    %4884 = vmatpush1.msra.mxu0 %v4843
    %4885 = vmatprep.subr.mxu0 %v4846
    %4886 = vmatpush1.msra.mxu0 %v4845
    %4887 = vmatprep.subr.mxu0 %v4848
    %4888 = vmatpush1.msra.mxu0 %v4847
    %4889 = vmatprep.subr.mxu0 %v4850
    %4890 = vmatpush1.msra.mxu0 %v4849
    %4891 = vmatprep.subr.mxu0 %v4852
    %4892 = vmatpush1.msra.mxu0 %v4851
    %4893 = vmatprep.subr.mxu0 %v4854
    %4894 = vmatpush1.msra.mxu0 %v4853
    %4895 = vmatprep.subr.mxu0 %v4856
    %4896 = vmatpush1.msra.mxu0 %v4855
    %4897 = vmatprep.subr.mxu0 0.0
    %4898 = vmatpush1.msra.mxu0 0.0
    %4899 = vmatprep.subr.mxu0 0.0
    %4900 = vmatpush1.msra.mxu0 0.0
    %4901 = vmatprep.subr.mxu0 0.0
    %4902 = vmatpush1.msra.mxu0 0.0
    %4903 = vmatprep.subr.mxu0 0.0
    %4904 = vmatpush1.msra.mxu0 0.0
    %4905 = vmatprep.subr.mxu0 0.0
    %4906 = vmatpush1.msra.mxu0 0.0
    %4907 = vmatprep.subr.mxu0 0.0
    %4908 = vmatpush1.msra.mxu0 0.0
    %4909 = vmatprep.subr.mxu0 0.0
    %4910 = vmatpush1.msra.mxu0 0.0
    %4911 = vmatprep.subr.mxu0 0.0
    %4912 = vmatpush1.msra.mxu0 0.0
    %4913 = vmatprep.subr.mxu0 0.0
    %4914 = vmatpush1.msra.mxu0 0.0
    %4915 = vmatprep.subr.mxu0 0.0
    %4916 = vmatpush1.msra.mxu0 0.0
    %4917 = vmatprep.subr.mxu0 0.0
    %4918 = vmatpush1.msra.mxu0 0.0
    %4919 = vmatprep.subr.mxu0 0.0
    %4920 = vmatpush1.msra.mxu0 0.0
    %4921 = vmatprep.mubr.f32.mxu0 %v4725
    %4922 = vmatmul.mubr.f32.gmra.mrb[0].mxu0 %v4677
    %v4923 = vpop.f32.mrb[0].mxu0
    %v4924 = vadd.f32 0.0, %v4923
    %v4925 = vpop.f32.mrb[0].mxu0
    %v4926 = vadd.f32 0.0, %v4925
    %4927 = vmatprep.mubr.f32.mxu0 %v4728
    %4928 = vmatmul.mubr.f32.gmra.mrb[0].mxu0 %v4679
    %v4929 = vpop.f32.mrb[0].mxu0
    %v4930 = vadd.f32 0.0, %v4929
    %v4931 = vpop.f32.mrb[0].mxu0
    %v4932 = vadd.f32 0.0, %v4931
    %4933 = vmatprep.mubr.f32.mxu0 %v4731
    %4934 = vmatmul.mubr.f32.gmra.mrb[0].mxu0 %v4681
    %v4935 = vpop.f32.mrb[0].mxu0
    %v4936 = vadd.f32 0.0, %v4935
    %v4937 = vpop.f32.mrb[0].mxu0
    %v4938 = vadd.f32 0.0, %v4937
    %4939 = vdwg.mxu0
    %s4940 = scalar_lea.vmem %s5, 5440
    %v4941 = vld [vmem:[%s4940] sm:$0xff]
    %v4942 = vld [vmem:[%s4940 + $0x8] sm:$0xff]
    %v4943 = vld [vmem:[%s4940 + $0x10] sm:$0xff]
    %v4944 = vld [vmem:[%s4940 + $0x18] sm:$0xff]
    %v4945 = vld [vmem:[%s4940 + $0x20] sm:$0xff]
    %v4946 = vld [vmem:[%s4940 + $0x28] sm:$0xff]
    %v4947 = vld [vmem:[%s4940 + $0x30] sm:$0xff]
    %v4948 = vld [vmem:[%s4940 + $0x38] sm:$0xff]
    %v4949 = vld [vmem:[%s4940 + $0x40] sm:$0xff]
    %v4950 = vld [vmem:[%s4940 + $0x48] sm:$0xff]
    %v4951 = vld [vmem:[%s4940 + $0x50] sm:$0xff]
    %v4952 = vld [vmem:[%s4940 + $0x58] sm:$0xff]
    %v4953 = vld [vmem:[%s4940 + $0x60] sm:$0xff]
    %v4954 = vld [vmem:[%s4940 + $0x68] sm:$0xff]
    %v4955 = vld [vmem:[%s4940 + $0x70] sm:$0xff]
    %v4956 = vld [vmem:[%s4940 + $0x78] sm:$0xff]
    %v4957 = vld [vmem:[%s4940 + $0x80] sm:$0xff]
    %v4958 = vld [vmem:[%s4940 + $0x88] sm:$0xff]
    %v4959 = vld [vmem:[%s4940 + $0x90] sm:$0xff]
    %v4960 = vld [vmem:[%s4940 + $0x98] sm:$0xff]
    %v4961 = vld [vmem:[%s4940 + $0xa0] sm:$0xff]
    %v4962 = vld [vmem:[%s4940 + $0xa8] sm:$0xff]
    %v4963 = vld [vmem:[%s4940 + $0xb0] sm:$0xff]
    %v4964 = vld [vmem:[%s4940 + $0xb8] sm:$0xff]
    %v4965 = vld [vmem:[%s4940 + $0xc0] sm:$0xff]
    %v4966 = vld [vmem:[%s4940 + $0xc8] sm:$0xff]
    %v4967 = vld [vmem:[%s4940 + $0xd0] sm:$0xff]
    %v4968 = vld [vmem:[%s4940 + $0xd8] sm:$0xff]
    %v4969 = vld [vmem:[%s4940 + $0xe0] sm:$0xff]
    %v4970 = vld [vmem:[%s4940 + $0xe8] sm:$0xff]
    %v4971 = vld [vmem:[%s4940 + $0xf0] sm:$0xff]
    %v4972 = vld [vmem:[%s4940 + $0xf8] sm:$0xff]
    %v4973 = vld [vmem:[%s4940 + $0x100] sm:$0xff]
    %v4974 = vld [vmem:[%s4940 + $0x108] sm:$0xff]
    %v4975 = vld [vmem:[%s4940 + $0x110] sm:$0xff]
    %v4976 = vld [vmem:[%s4940 + $0x118] sm:$0xff]
    %v4977 = vld [vmem:[%s4940 + $0x120] sm:$0xff]
    %v4978 = vld [vmem:[%s4940 + $0x128] sm:$0xff]
    %v4979 = vld [vmem:[%s4940 + $0x130] sm:$0xff]
    %v4980 = vld [vmem:[%s4940 + $0x138] sm:$0xff]
    %4981 = vmatprep.subr.mxu0 %v4942
    %4982 = vmatpush1.msra.mxu0 %v4941
    %4983 = vmatprep.subr.mxu0 %v4944
    %4984 = vmatpush1.msra.mxu0 %v4943
    %4985 = vmatprep.subr.mxu0 %v4946
    %4986 = vmatpush1.msra.mxu0 %v4945
    %4987 = vmatprep.subr.mxu0 %v4948
    %4988 = vmatpush1.msra.mxu0 %v4947
    %4989 = vmatprep.subr.mxu0 %v4950
    %4990 = vmatpush1.msra.mxu0 %v4949
    %4991 = vmatprep.subr.mxu0 %v4952
    %4992 = vmatpush1.msra.mxu0 %v4951
    %4993 = vmatprep.subr.mxu0 %v4954
    %4994 = vmatpush1.msra.mxu0 %v4953
    %4995 = vmatprep.subr.mxu0 %v4956
    %4996 = vmatpush1.msra.mxu0 %v4955
    %4997 = vmatprep.subr.mxu0 %v4958
    %4998 = vmatpush1.msra.mxu0 %v4957
    %4999 = vmatprep.subr.mxu0 %v4960
    %5000 = vmatpush1.msra.mxu0 %v4959
    %5001 = vmatprep.subr.mxu0 %v4962
    %5002 = vmatpush1.msra.mxu0 %v4961
    %5003 = vmatprep.subr.mxu0 %v4964
    %5004 = vmatpush1.msra.mxu0 %v4963
    %5005 = vmatprep.subr.mxu0 %v4966
    %5006 = vmatpush1.msra.mxu0 %v4965
    %5007 = vmatprep.subr.mxu0 %v4968
    %5008 = vmatpush1.msra.mxu0 %v4967
    %5009 = vmatprep.subr.mxu0 %v4970
    %5010 = vmatpush1.msra.mxu0 %v4969
    %5011 = vmatprep.subr.mxu0 %v4972
    %5012 = vmatpush1.msra.mxu0 %v4971
    %5013 = vmatprep.subr.mxu0 %v4974
    %5014 = vmatpush1.msra.mxu0 %v4973
    %5015 = vmatprep.subr.mxu0 %v4976
    %5016 = vmatpush1.msra.mxu0 %v4975
    %5017 = vmatprep.subr.mxu0 %v4978
    %5018 = vmatpush1.msra.mxu0 %v4977
    %5019 = vmatprep.subr.mxu0 %v4980
    %5020 = vmatpush1.msra.mxu0 %v4979
    %5021 = vmatprep.subr.mxu0 0.0
    %5022 = vmatpush1.msra.mxu0 0.0
    %5023 = vmatprep.subr.mxu0 0.0
    %5024 = vmatpush1.msra.mxu0 0.0
    %5025 = vmatprep.subr.mxu0 0.0
    %5026 = vmatpush1.msra.mxu0 0.0
    %5027 = vmatprep.subr.mxu0 0.0
    %5028 = vmatpush1.msra.mxu0 0.0
    %5029 = vmatprep.subr.mxu0 0.0
    %5030 = vmatpush1.msra.mxu0 0.0
    %5031 = vmatprep.subr.mxu0 0.0
    %5032 = vmatpush1.msra.mxu0 0.0
    %5033 = vmatprep.subr.mxu0 0.0
    %5034 = vmatpush1.msra.mxu0 0.0
    %5035 = vmatprep.subr.mxu0 0.0
    %5036 = vmatpush1.msra.mxu0 0.0
    %5037 = vmatprep.subr.mxu0 0.0
    %5038 = vmatpush1.msra.mxu0 0.0
    %5039 = vmatprep.subr.mxu0 0.0
    %5040 = vmatpush1.msra.mxu0 0.0
    %5041 = vmatprep.subr.mxu0 0.0
    %5042 = vmatpush1.msra.mxu0 0.0
    %5043 = vmatprep.subr.mxu0 0.0
    %5044 = vmatpush1.msra.mxu0 0.0
    %5045 = vmatprep.mubr.f32.mxu0 %v4725
    %5046 = vmatmul.mubr.f32.gmra.mrb[0].mxu0 %v4677
    %v5047 = vpop.f32.mrb[0].mxu0
    %v5048 = vadd.f32 0.0, %v5047
    %v5049 = vpop.f32.mrb[0].mxu0
    %v5050 = vadd.f32 0.0, %v5049
    %5051 = vmatprep.mubr.f32.mxu0 %v4728
    %5052 = vmatmul.mubr.f32.gmra.mrb[0].mxu0 %v4679
    %v5053 = vpop.f32.mrb[0].mxu0
    %v5054 = vadd.f32 0.0, %v5053
    %v5055 = vpop.f32.mrb[0].mxu0
    %v5056 = vadd.f32 0.0, %v5055
    %5057 = vmatprep.mubr.f32.mxu0 %v4731
    %5058 = vmatmul.mubr.f32.gmra.mrb[0].mxu0 %v4681
    %v5059 = vpop.f32.mrb[0].mxu0
    %v5060 = vadd.f32 0.0, %v5059
    %v5061 = vpop.f32.mrb[0].mxu0
    %v5062 = vadd.f32 0.0, %v5061
    %5063 = vdwg.mxu0
    %v5065 = vsel %vm613, %v4936, 0
    %v5068 = vsel %vm613, %v4938, 0
    %5070 = vmatprep.subr.mxu0 %v4926
    %5071 = vmatpush1.msra.mxu0 %v4924
    %5072 = vmatprep.subr.mxu0 %v4932
    %5073 = vmatpush1.msra.mxu0 %v4930
    %5074 = vmatprep.subr.mxu0 %v5068
    %5075 = vmatpush1.msra.mxu0 %v5065
    %5076 = vmatprep.subr.mxu0 0.0
    %5077 = vmatpush1.msra.mxu0 0.0
    %5078 = vmatprep.subr.mxu0 0.0
    %5079 = vmatpush1.msra.mxu0 0.0
    %5080 = vmatprep.subr.mxu0 0.0
    %5081 = vmatpush1.msra.mxu0 0.0
    %5082 = vmatprep.subr.mxu0 0.0
    %5083 = vmatpush1.msra.mxu0 0.0
    %5084 = vmatprep.subr.mxu0 0.0
    %5085 = vmatpush1.msra.mxu0 0.0
    %5086 = vmatprep.subr.mxu0 0.0
    %5087 = vmatpush1.msra.mxu0 0.0
    %5088 = vmatprep.subr.mxu0 0.0
    %5089 = vmatpush1.msra.mxu0 0.0
    %5090 = vmatprep.subr.mxu0 0.0
    %5091 = vmatpush1.msra.mxu0 0.0
    %5092 = vmatprep.subr.mxu0 0.0
    %5093 = vmatpush1.msra.mxu0 0.0
    %5094 = vmatprep.subr.mxu0 0.0
    %5095 = vmatpush1.msra.mxu0 0.0
    %5096 = vmatprep.subr.mxu0 0.0
    %5097 = vmatpush1.msra.mxu0 0.0
    %5098 = vmatprep.subr.mxu0 0.0
    %5099 = vmatpush1.msra.mxu0 0.0
    %5100 = vmatprep.subr.mxu0 0.0
    %5101 = vmatpush1.msra.mxu0 0.0
    %5102 = vmatprep.subr.mxu0 0.0
    %5103 = vmatpush1.msra.mxu0 0.0
    %5104 = vmatprep.subr.mxu0 0.0
    %5105 = vmatpush1.msra.mxu0 0.0
    %5106 = vmatprep.subr.mxu0 0.0
    %5107 = vmatpush1.msra.mxu0 0.0
    %5108 = vmatprep.subr.mxu0 0.0
    %5109 = vmatpush1.msra.mxu0 0.0
    %5110 = vmatprep.subr.mxu0 0.0
    %5111 = vmatpush1.msra.mxu0 0.0
    %5112 = vmatprep.subr.mxu0 0.0
    %5113 = vmatpush1.msra.mxu0 0.0
    %5114 = vmatprep.subr.mxu0 0.0
    %5115 = vmatpush1.msra.mxu0 0.0
    %5116 = vmatprep.subr.mxu0 0.0
    %5117 = vmatpush1.msra.mxu0 0.0
    %5118 = vmatprep.subr.mxu0 0.0
    %5119 = vmatpush1.msra.mxu0 0.0
    %5120 = vmatprep.subr.mxu0 0.0
    %5121 = vmatpush1.msra.mxu0 0.0
    %5122 = vmatprep.subr.mxu0 0.0
    %5123 = vmatpush1.msra.mxu0 0.0
    %5124 = vmatprep.subr.mxu0 0.0
    %5125 = vmatpush1.msra.mxu0 0.0
    %5126 = vmatprep.subr.mxu0 0.0
    %5127 = vmatpush1.msra.mxu0 0.0
    %5128 = vmatprep.subr.mxu0 0.0
    %5129 = vmatpush1.msra.mxu0 0.0
    %5130 = vmatprep.subr.mxu0 0.0
    %5131 = vmatpush1.msra.mxu0 0.0
    %5132 = vmatprep.subr.mxu0 0.0
    %5133 = vmatpush1.msra.mxu0 0.0
    %5134 = vmatprep.mubr.f32.mxu0 0.0
    %5135 = vmatmul.mubr.f32.gmra.mrb[0].mxu0 %v605
    %v5136 = vpop.f32.mrb[0].mxu0
    %v5137 = vadd.f32 0.0, %v5136
    %v5138 = vpop.f32.mrb[0].mxu0
    %v5139 = vadd.f32 0.0, %v5138
    %5140 = vmatprep.mubr.f32.mxu0 0.0
    %5141 = vmatmul.mubr.f32.gmra.mrb[0].mxu0 %v608
    %v5142 = vpop.f32.mrb[0].mxu0
    %v5143 = vadd.f32 0.0, %v5142
    %v5144 = vpop.f32.mrb[0].mxu0
    %v5145 = vadd.f32 0.0, %v5144
    %5146 = vmatprep.mubr.f32.mxu0 0.0
    %5147 = vmatmul.mubr.f32.gmra.mrb[0].mxu0 %v611
    %v5148 = vpop.f32.mrb[0].mxu0
    %v5149 = vadd.f32 0.0, %v5148
    %v5150 = vpop.f32.mrb[0].mxu0
    %v5151 = vadd.f32 0.0, %v5150
    %5152 = vdwg.mxu0
    %v5154 = vsel %vm613, %v4812, 0
    %v5157 = vsel %vm613, %v4814, 0
    %5159 = vmatprep.subr.mxu0 %v4802
    %5160 = vmatpush1.msra.mxu0 %v4800
    %5161 = vmatprep.subr.mxu0 %v4808
    %5162 = vmatpush1.msra.mxu0 %v4806
    %5163 = vmatprep.subr.mxu0 %v5157
    %5164 = vmatpush1.msra.mxu0 %v5154
    %5165 = vmatprep.subr.mxu0 0.0
    %5166 = vmatpush1.msra.mxu0 0.0
    %5167 = vmatprep.subr.mxu0 0.0
    %5168 = vmatpush1.msra.mxu0 0.0
    %5169 = vmatprep.subr.mxu0 0.0
    %5170 = vmatpush1.msra.mxu0 0.0
    %5171 = vmatprep.subr.mxu0 0.0
    %5172 = vmatpush1.msra.mxu0 0.0
    %5173 = vmatprep.subr.mxu0 0.0
    %5174 = vmatpush1.msra.mxu0 0.0
    %5175 = vmatprep.subr.mxu0 0.0
    %5176 = vmatpush1.msra.mxu0 0.0
    %5177 = vmatprep.subr.mxu0 0.0
    %5178 = vmatpush1.msra.mxu0 0.0
    %5179 = vmatprep.subr.mxu0 0.0
    %5180 = vmatpush1.msra.mxu0 0.0
    %5181 = vmatprep.subr.mxu0 0.0
    %5182 = vmatpush1.msra.mxu0 0.0
    %5183 = vmatprep.subr.mxu0 0.0
    %5184 = vmatpush1.msra.mxu0 0.0
    %5185 = vmatprep.subr.mxu0 0.0
    %5186 = vmatpush1.msra.mxu0 0.0
    %5187 = vmatprep.subr.mxu0 0.0
    %5188 = vmatpush1.msra.mxu0 0.0
    %5189 = vmatprep.subr.mxu0 0.0
    %5190 = vmatpush1.msra.mxu0 0.0
    %5191 = vmatprep.subr.mxu0 0.0
    %5192 = vmatpush1.msra.mxu0 0.0
    %5193 = vmatprep.subr.mxu0 0.0
    %5194 = vmatpush1.msra.mxu0 0.0
    %5195 = vmatprep.subr.mxu0 0.0
    %5196 = vmatpush1.msra.mxu0 0.0
    %5197 = vmatprep.subr.mxu0 0.0
    %5198 = vmatpush1.msra.mxu0 0.0
    %5199 = vmatprep.subr.mxu0 0.0
    %5200 = vmatpush1.msra.mxu0 0.0
    %5201 = vmatprep.subr.mxu0 0.0
    %5202 = vmatpush1.msra.mxu0 0.0
    %5203 = vmatprep.subr.mxu0 0.0
    %5204 = vmatpush1.msra.mxu0 0.0
    %5205 = vmatprep.subr.mxu0 0.0
    %5206 = vmatpush1.msra.mxu0 0.0
    %5207 = vmatprep.subr.mxu0 0.0
    %5208 = vmatpush1.msra.mxu0 0.0
    %5209 = vmatprep.subr.mxu0 0.0
    %5210 = vmatpush1.msra.mxu0 0.0
    %5211 = vmatprep.subr.mxu0 0.0
    %5212 = vmatpush1.msra.mxu0 0.0
    %5213 = vmatprep.subr.mxu0 0.0
    %5214 = vmatpush1.msra.mxu0 0.0
    %5215 = vmatprep.subr.mxu0 0.0
    %5216 = vmatpush1.msra.mxu0 0.0
    %5217 = vmatprep.subr.mxu0 0.0
    %5218 = vmatpush1.msra.mxu0 0.0
    %5219 = vmatprep.subr.mxu0 0.0
    %5220 = vmatpush1.msra.mxu0 0.0
    %5221 = vmatprep.subr.mxu0 0.0
    %5222 = vmatpush1.msra.mxu0 0.0
    %5223 = vmatprep.mubr.f32.mxu0 0.0
    %5224 = vmatmul.mubr.f32.gmra.mrb[0].mxu0 %v704
    %v5225 = vpop.f32.mrb[0].mxu0
    %v5226 = vadd.f32 %v5137, %v5225
    %v5227 = vpop.f32.mrb[0].mxu0
    %v5228 = vadd.f32 %v5139, %v5227
    %5229 = vmatprep.mubr.f32.mxu0 0.0
    %5230 = vmatmul.mubr.f32.gmra.mrb[0].mxu0 %v707
    %v5231 = vpop.f32.mrb[0].mxu0
    %v5232 = vadd.f32 %v5143, %v5231
    %v5233 = vpop.f32.mrb[0].mxu0
    %v5234 = vadd.f32 %v5145, %v5233
    %5235 = vmatprep.mubr.f32.mxu0 0.0
    %5236 = vmatmul.mubr.f32.gmra.mrb[0].mxu0 %v710
    %v5237 = vpop.f32.mrb[0].mxu0
    %v5238 = vadd.f32 %v5149, %v5237
    %v5239 = vpop.f32.mrb[0].mxu0
    %v5240 = vadd.f32 %v5151, %v5239
    %5241 = vdwg.mxu0
    %v5243 = vsel %vm613, %v5060, 0
    %v5246 = vsel %vm613, %v5062, 0
    %5248 = vmatprep.subr.mxu0 %v5050
    %5249 = vmatpush1.msra.mxu0 %v5048
    %5250 = vmatprep.subr.mxu0 %v5056
    %5251 = vmatpush1.msra.mxu0 %v5054
    %5252 = vmatprep.subr.mxu0 %v5246
    %5253 = vmatpush1.msra.mxu0 %v5243
    %5254 = vmatprep.subr.mxu0 0.0
    %5255 = vmatpush1.msra.mxu0 0.0
    %5256 = vmatprep.subr.mxu0 0.0
    %5257 = vmatpush1.msra.mxu0 0.0
    %5258 = vmatprep.subr.mxu0 0.0
    %5259 = vmatpush1.msra.mxu0 0.0
    %5260 = vmatprep.subr.mxu0 0.0
    %5261 = vmatpush1.msra.mxu0 0.0
    %5262 = vmatprep.subr.mxu0 0.0
    %5263 = vmatpush1.msra.mxu0 0.0
    %5264 = vmatprep.subr.mxu0 0.0
    %5265 = vmatpush1.msra.mxu0 0.0
    %5266 = vmatprep.subr.mxu0 0.0
    %5267 = vmatpush1.msra.mxu0 0.0
    %5268 = vmatprep.subr.mxu0 0.0
    %5269 = vmatpush1.msra.mxu0 0.0
    %5270 = vmatprep.subr.mxu0 0.0
    %5271 = vmatpush1.msra.mxu0 0.0
    %5272 = vmatprep.subr.mxu0 0.0
    %5273 = vmatpush1.msra.mxu0 0.0
    %5274 = vmatprep.subr.mxu0 0.0
    %5275 = vmatpush1.msra.mxu0 0.0
    %5276 = vmatprep.subr.mxu0 0.0
    %5277 = vmatpush1.msra.mxu0 0.0
    %5278 = vmatprep.subr.mxu0 0.0
    %5279 = vmatpush1.msra.mxu0 0.0
    %5280 = vmatprep.subr.mxu0 0.0
    %5281 = vmatpush1.msra.mxu0 0.0
    %5282 = vmatprep.subr.mxu0 0.0
    %5283 = vmatpush1.msra.mxu0 0.0
    %5284 = vmatprep.subr.mxu0 0.0
    %5285 = vmatpush1.msra.mxu0 0.0
    %5286 = vmatprep.subr.mxu0 0.0
    %5287 = vmatpush1.msra.mxu0 0.0
    %5288 = vmatprep.subr.mxu0 0.0
    %5289 = vmatpush1.msra.mxu0 0.0
    %5290 = vmatprep.subr.mxu0 0.0
    %5291 = vmatpush1.msra.mxu0 0.0
    %5292 = vmatprep.subr.mxu0 0.0
    %5293 = vmatpush1.msra.mxu0 0.0
    %5294 = vmatprep.subr.mxu0 0.0
    %5295 = vmatpush1.msra.mxu0 0.0
    %5296 = vmatprep.subr.mxu0 0.0
    %5297 = vmatpush1.msra.mxu0 0.0
    %5298 = vmatprep.subr.mxu0 0.0
    %5299 = vmatpush1.msra.mxu0 0.0
    %5300 = vmatprep.subr.mxu0 0.0
    %5301 = vmatpush1.msra.mxu0 0.0
    %5302 = vmatprep.subr.mxu0 0.0
    %5303 = vmatpush1.msra.mxu0 0.0
    %5304 = vmatprep.subr.mxu0 0.0
    %5305 = vmatpush1.msra.mxu0 0.0
    %5306 = vmatprep.subr.mxu0 0.0
    %5307 = vmatpush1.msra.mxu0 0.0
    %5308 = vmatprep.subr.mxu0 0.0
    %5309 = vmatpush1.msra.mxu0 0.0
    %5310 = vmatprep.subr.mxu0 0.0
    %5311 = vmatpush1.msra.mxu0 0.0
    %5312 = vmatprep.mubr.f32.mxu0 0.0
    %5313 = vmatmul.mubr.f32.gmra.mrb[0].mxu0 %v802
    %v5314 = vpop.f32.mrb[0].mxu0
    %v5315 = vadd.f32 0.0, %v5314
    %v5316 = vpop.f32.mrb[0].mxu0
    %v5317 = vadd.f32 0.0, %v5316
    %5318 = vmatprep.mubr.f32.mxu0 0.0
    %5319 = vmatmul.mubr.f32.gmra.mrb[0].mxu0 %v805
    %v5320 = vpop.f32.mrb[0].mxu0
    %v5321 = vadd.f32 0.0, %v5320
    %v5322 = vpop.f32.mrb[0].mxu0
    %v5323 = vadd.f32 0.0, %v5322
    %5324 = vmatprep.mubr.f32.mxu0 0.0
    %5325 = vmatmul.mubr.f32.gmra.mrb[0].mxu0 %v808
    %v5326 = vpop.f32.mrb[0].mxu0
    %v5327 = vadd.f32 0.0, %v5326
    %v5328 = vpop.f32.mrb[0].mxu0
    %v5329 = vadd.f32 0.0, %v5328
    %5330 = vdwg.mxu0
    %v5331 = vadd.f32 %v5226, %v5315
    %v5332 = vadd.f32 %v5228, %v5317
    %v5333 = vadd.f32 %v5232, %v5321
    %v5334 = vadd.f32 %v5234, %v5323
    %v5335 = vadd.f32 %v5238, %v5327
    %v5336 = vadd.f32 %v5240, %v5329
    %s5337 = scalar_lea.vmem %s6, 240
    %v5338 = vld [vmem:[%s5337] sm:$0xff]
    %v5339 = vld [vmem:[%s5337 + $0x8] sm:$0xff]
    %v5340 = vld [vmem:[%s5337 + $0x10] sm:$0xff]
    %v5341 = vld [vmem:[%s5337 + $0x18] sm:$0xff]
    %v5342 = vld [vmem:[%s5337 + $0x20] sm:$0xf]
    %v5343 = vld [vmem:[%s5337 + $0x28] sm:$0xf]
    %v5344 = vadd.f32 %v5331, %v5338
    %v5345 = vadd.f32 %v5332, %v5339
    %v5346 = vadd.f32 %v5333, %v5340
    %v5347 = vadd.f32 %v5334, %v5341
    %v5348 = vadd.f32 %v5335, %v5342
    %v5349 = vadd.f32 %v5336, %v5343
    %v5350 = vmax.f32 %v5344, 0.0
    %v5351 = vmax.f32 %v5345, 0.0
    %v5352 = vmax.f32 %v5346, 0.0
    %v5353 = vmax.f32 %v5347, 0.0
    %v5354 = vmax.f32 %v5348, 0.0
    %v5355 = vmax.f32 %v5349, 0.0
    %s5356 = scalar_lea.vmem %s7, 320
    %v5357 = vld [vmem:[%s5356] sm:$0xff]
    %v5358 = vld [vmem:[%s5356 + $0x8] sm:$0xff]
    %v5359 = vld [vmem:[%s5356 + $0x10] sm:$0xff]
    %v5360 = vld [vmem:[%s5356 + $0x18] sm:$0xff]
    %v5361 = vld [vmem:[%s5356 + $0x20] sm:$0xff]
    %v5362 = vld [vmem:[%s5356 + $0x28] sm:$0xff]
    %v5363 = vld [vmem:[%s5356 + $0x30] sm:$0xff]
    %v5364 = vld [vmem:[%s5356 + $0x38] sm:$0xff]
    %v5365 = vld [vmem:[%s5356 + $0x40] sm:$0xff]
    %v5366 = vld [vmem:[%s5356 + $0x48] sm:$0xff]
    %v5367 = vld [vmem:[%s5356 + $0x50] sm:$0xff]
    %v5368 = vld [vmem:[%s5356 + $0x58] sm:$0xff]
    %v5369 = vld [vmem:[%s5356 + $0x60] sm:$0xff]
    %v5370 = vld [vmem:[%s5356 + $0x68] sm:$0xff]
    %v5371 = vld [vmem:[%s5356 + $0x70] sm:$0xff]
    %v5372 = vld [vmem:[%s5356 + $0x78] sm:$0xff]
    %v5373 = vld [vmem:[%s5356 + $0x80] sm:$0xff]
    %v5374 = vld [vmem:[%s5356 + $0x88] sm:$0xff]
    %v5375 = vld [vmem:[%s5356 + $0x90] sm:$0xff]
    %v5376 = vld [vmem:[%s5356 + $0x98] sm:$0xff]
    %s5377 = scalar_lea.vmem %s8, 2
    %v5378 = vld [vmem:[%s5377] sm:$0x1]
    %v5380 = vlaneseq
    %v5381 = vshrl.u32 %v5380, 7
    %v5382 = vsub.s32 0, %v5381
    %v5383 = vrot.slane %v5378, %v5382
    %v5386 = vsel %vm262, %v5351, 0
    %v5389 = vsel %vm262, %v5353, 0
    %v5392 = vsel %vm262, %v5355, 0
    %5394 = vmatprep.subr.mxu0 0.0
    %5395 = vmatpush1.msra.mxu0 %v5357
    %5396 = vmatprep.subr.mxu0 0.0
    %5397 = vmatpush1.msra.mxu0 %v5358
    %5398 = vmatprep.subr.mxu0 0.0
    %5399 = vmatpush1.msra.mxu0 %v5359
    %5400 = vmatprep.subr.mxu0 0.0
    %5401 = vmatpush1.msra.mxu0 %v5360
    %5402 = vmatprep.subr.mxu0 0.0
    %5403 = vmatpush1.msra.mxu0 %v5361
    %5404 = vmatprep.subr.mxu0 0.0
    %5405 = vmatpush1.msra.mxu0 %v5362
    %5406 = vmatprep.subr.mxu0 0.0
    %5407 = vmatpush1.msra.mxu0 %v5363
    %5408 = vmatprep.subr.mxu0 0.0
    %5409 = vmatpush1.msra.mxu0 %v5364
    %5410 = vmatprep.subr.mxu0 0.0
    %5411 = vmatpush1.msra.mxu0 %v5365
    %5412 = vmatprep.subr.mxu0 0.0
    %5413 = vmatpush1.msra.mxu0 %v5366
    %5414 = vmatprep.subr.mxu0 0.0
    %5415 = vmatpush1.msra.mxu0 %v5367
    %5416 = vmatprep.subr.mxu0 0.0
    %5417 = vmatpush1.msra.mxu0 %v5368
    %5418 = vmatprep.subr.mxu0 0.0
    %5419 = vmatpush1.msra.mxu0 %v5369
    %5420 = vmatprep.subr.mxu0 0.0
    %5421 = vmatpush1.msra.mxu0 %v5370
    %5422 = vmatprep.subr.mxu0 0.0
    %5423 = vmatpush1.msra.mxu0 %v5371
    %5424 = vmatprep.subr.mxu0 0.0
    %5425 = vmatpush1.msra.mxu0 %v5372
    %5426 = vmatprep.subr.mxu0 0.0
    %5427 = vmatpush1.msra.mxu0 %v5373
    %5428 = vmatprep.subr.mxu0 0.0
    %5429 = vmatpush1.msra.mxu0 %v5374
    %5430 = vmatprep.subr.mxu0 0.0
    %5431 = vmatpush1.msra.mxu0 %v5375
    %5432 = vmatprep.subr.mxu0 0.0
    %5433 = vmatpush1.msra.mxu0 %v5376
    %5434 = vmatprep.subr.mxu0 0.0
    %5435 = vmatpush1.msra.mxu0 0.0
    %5436 = vmatprep.subr.mxu0 0.0
    %5437 = vmatpush1.msra.mxu0 0.0
    %5438 = vmatprep.subr.mxu0 0.0
    %5439 = vmatpush1.msra.mxu0 0.0
    %5440 = vmatprep.subr.mxu0 0.0
    %5441 = vmatpush1.msra.mxu0 0.0
    %5442 = vmatprep.subr.mxu0 0.0
    %5443 = vmatpush1.msra.mxu0 0.0
    %5444 = vmatprep.subr.mxu0 0.0
    %5445 = vmatpush1.msra.mxu0 0.0
    %5446 = vmatprep.subr.mxu0 0.0
    %5447 = vmatpush1.msra.mxu0 0.0
    %5448 = vmatprep.subr.mxu0 0.0
    %5449 = vmatpush1.msra.mxu0 0.0
    %5450 = vmatprep.subr.mxu0 0.0
    %5451 = vmatpush1.msra.mxu0 0.0
    %5452 = vmatprep.subr.mxu0 0.0
    %5453 = vmatpush1.msra.mxu0 0.0
    %5454 = vmatprep.subr.mxu0 0.0
    %5455 = vmatpush1.msra.mxu0 0.0
    %5456 = vmatprep.subr.mxu0 0.0
    %5457 = vmatpush1.msra.mxu0 0.0
    %5458 = vmatprep.mubr.f32.mxu0 %v5386
    %5459 = vmatmul.mubr.f32.gmra.mrb[0].mxu0 %v5350
    %v5460 = vpop.f32.mrb[0].mxu0
    %v5461 = vadd.f32 %v5383, %v5460
    %v5462 = vpop.f32.mrb[0].mxu0
    %5463 = vmatprep.mubr.f32.mxu0 %v5389
    %5464 = vmatmul.mubr.f32.gmra.mrb[0].mxu0 %v5352
    %v5465 = vpop.f32.mrb[0].mxu0
    %v5466 = vadd.f32 %v5383, %v5465
    %v5467 = vpop.f32.mrb[0].mxu0
    %5468 = vmatprep.mubr.f32.mxu0 %v5392
    %5469 = vmatmul.mubr.f32.gmra.mrb[0].mxu0 %v5354
    %v5470 = vpop.f32.mrb[0].mxu0
    %v5471 = vadd.f32 %v5383, %v5470
    %v5472 = vpop.f32.mrb[0].mxu0
    %5473 = vdwg.mxu0
    %v5474 = vmax.f32 %v5461, 0.0
    %v5475 = vmax.f32 %v5466, 0.0
    %v5476 = vmax.f32 %v5471, 0.0
    %v5478 = vsel %vm613, %v5476, 0
    %5480 = vmatprep.subr.mxu0 0.0
    %5481 = vmatpush1.msra.mxu0 %v5474
    %5482 = vmatprep.subr.mxu0 0.0
    %5483 = vmatpush1.msra.mxu0 %v5475
    %5484 = vmatprep.subr.mxu0 0.0
    %5485 = vmatpush1.msra.mxu0 %v5478
    %5486 = vmatprep.subr.mxu0 0.0
    %5487 = vmatpush1.msra.mxu0 0.0
    %5488 = vmatprep.subr.mxu0 0.0
    %5489 = vmatpush1.msra.mxu0 0.0
    %5490 = vmatprep.subr.mxu0 0.0
    %5491 = vmatpush1.msra.mxu0 0.0
    %5492 = vmatprep.subr.mxu0 0.0
    %5493 = vmatpush1.msra.mxu0 0.0
    %5494 = vmatprep.subr.mxu0 0.0
    %5495 = vmatpush1.msra.mxu0 0.0
    %5496 = vmatprep.subr.mxu0 0.0
    %5497 = vmatpush1.msra.mxu0 0.0
    %5498 = vmatprep.subr.mxu0 0.0
    %5499 = vmatpush1.msra.mxu0 0.0
    %5500 = vmatprep.subr.mxu0 0.0
    %5501 = vmatpush1.msra.mxu0 0.0
    %5502 = vmatprep.subr.mxu0 0.0
    %5503 = vmatpush1.msra.mxu0 0.0
    %5504 = vmatprep.subr.mxu0 0.0
    %5505 = vmatpush1.msra.mxu0 0.0
    %5506 = vmatprep.subr.mxu0 0.0
    %5507 = vmatpush1.msra.mxu0 0.0
    %5508 = vmatprep.subr.mxu0 0.0
    %5509 = vmatpush1.msra.mxu0 0.0
    %5510 = vmatprep.subr.mxu0 0.0
    %5511 = vmatpush1.msra.mxu0 0.0
    %5512 = vmatprep.subr.mxu0 0.0
    %5513 = vmatpush1.msra.mxu0 0.0
    %5514 = vmatprep.subr.mxu0 0.0
    %5515 = vmatpush1.msra.mxu0 0.0
    %5516 = vmatprep.subr.mxu0 0.0
    %5517 = vmatpush1.msra.mxu0 0.0
    %5518 = vmatprep.subr.mxu0 0.0
    %5519 = vmatpush1.msra.mxu0 0.0
    %5520 = vmatprep.subr.mxu0 0.0
    %5521 = vmatpush1.msra.mxu0 0.0
    %5522 = vmatprep.subr.mxu0 0.0
    %5523 = vmatpush1.msra.mxu0 0.0
    %5524 = vmatprep.subr.mxu0 0.0
    %5525 = vmatpush1.msra.mxu0 0.0
    %5526 = vmatprep.subr.mxu0 0.0
    %5527 = vmatpush1.msra.mxu0 0.0
    %5528 = vmatprep.subr.mxu0 0.0
    %5529 = vmatpush1.msra.mxu0 0.0
    %5530 = vmatprep.subr.mxu0 0.0
    %5531 = vmatpush1.msra.mxu0 0.0
    %5532 = vmatprep.subr.mxu0 0.0
    %5533 = vmatpush1.msra.mxu0 0.0
    %5534 = vmatprep.subr.mxu0 0.0
    %5535 = vmatpush1.msra.mxu0 0.0
    %5536 = vmatprep.subr.mxu0 0.0
    %5537 = vmatpush1.msra.mxu0 0.0
    %5538 = vmatprep.subr.mxu0 0.0
    %5539 = vmatpush1.msra.mxu0 0.0
    %5540 = vmatprep.subr.mxu0 0.0
    %5541 = vmatpush1.msra.mxu0 0.0
    %5542 = vmatprep.subr.mxu0 0.0
    %5543 = vmatpush1.msra.mxu0 0.0
    %5544 = vmatprep.mubr.f32.mxu0 0.0
    %5545 = vmatmul.mubr.f32.gmra.mrb[0].mxu0 %v1716
    %v5546 = vpop.f32.mrb[0].mxu0
    %v5547 = vadd.f32 0.0, %v5546
    %v5548 = vpop.f32.mrb[0].mxu0
    %5549 = vdwg.mxu0
    %s5550 = scalar_lea.vmem %s9, 256
    %v5551 = vld [vmem:[%s5550] sm:$0xff]
    %v5552 = vld [vmem:[%s5550 + $0x8] sm:$0xff]
    %v5553 = vld [vmem:[%s5550 + $0x10] sm:$0xff]
    %v5554 = vld [vmem:[%s5550 + $0x18] sm:$0xff]
    %v5555 = vld [vmem:[%s5550 + $0x20] sm:$0xff]
    %v5556 = vld [vmem:[%s5550 + $0x28] sm:$0xff]
    %v5557 = vld [vmem:[%s5550 + $0x30] sm:$0xff]
    %v5558 = vld [vmem:[%s5550 + $0x38] sm:$0xff]
    %v5559 = vld [vmem:[%s5550 + $0x40] sm:$0xff]
    %v5560 = vld [vmem:[%s5550 + $0x48] sm:$0xff]
    %v5561 = vld [vmem:[%s5550 + $0x50] sm:$0xff]
    %v5562 = vld [vmem:[%s5550 + $0x58] sm:$0xff]
    %v5563 = vld [vmem:[%s5550 + $0x60] sm:$0xff]
    %v5564 = vld [vmem:[%s5550 + $0x68] sm:$0xff]
    %v5565 = vld [vmem:[%s5550 + $0x70] sm:$0xff]
    %v5566 = vld [vmem:[%s5550 + $0x78] sm:$0xff]
    %s5567 = scalar_lea.vmem %s10, 2
    %v5568 = vld [vmem:[%s5567] sm:$0x1]
    %v5570 = vlaneseq
    %v5571 = vshrl.u32 %v5570, 7
    %v5572 = vsub.s32 0, %v5571
    %v5573 = vrot.slane %v5568, %v5572
    %5575 = vmatprep.subr.mxu0 0.0
    %5576 = vmatpush1.msra.mxu0 %v5551
    %5577 = vmatprep.subr.mxu0 0.0
    %5578 = vmatpush1.msra.mxu0 %v5552
    %5579 = vmatprep.subr.mxu0 0.0
    %5580 = vmatpush1.msra.mxu0 %v5553
    %5581 = vmatprep.subr.mxu0 0.0
    %5582 = vmatpush1.msra.mxu0 %v5554
    %5583 = vmatprep.subr.mxu0 0.0
    %5584 = vmatpush1.msra.mxu0 %v5555
    %5585 = vmatprep.subr.mxu0 0.0
    %5586 = vmatpush1.msra.mxu0 %v5556
    %5587 = vmatprep.subr.mxu0 0.0
    %5588 = vmatpush1.msra.mxu0 %v5557
    %5589 = vmatprep.subr.mxu0 0.0
    %5590 = vmatpush1.msra.mxu0 %v5558
    %5591 = vmatprep.subr.mxu0 0.0
    %5592 = vmatpush1.msra.mxu0 %v5559
    %5593 = vmatprep.subr.mxu0 0.0
    %5594 = vmatpush1.msra.mxu0 %v5560
    %5595 = vmatprep.subr.mxu0 0.0
    %5596 = vmatpush1.msra.mxu0 %v5561
    %5597 = vmatprep.subr.mxu0 0.0
    %5598 = vmatpush1.msra.mxu0 %v5562
    %5599 = vmatprep.subr.mxu0 0.0
    %5600 = vmatpush1.msra.mxu0 %v5563
    %5601 = vmatprep.subr.mxu0 0.0
    %5602 = vmatpush1.msra.mxu0 %v5564
    %5603 = vmatprep.subr.mxu0 0.0
    %5604 = vmatpush1.msra.mxu0 %v5565
    %5605 = vmatprep.subr.mxu0 0.0
    %5606 = vmatpush1.msra.mxu0 %v5566
    %5607 = vmatprep.subr.mxu0 0.0
    %5608 = vmatpush1.msra.mxu0 0.0
    %5609 = vmatprep.subr.mxu0 0.0
    %5610 = vmatpush1.msra.mxu0 0.0
    %5611 = vmatprep.subr.mxu0 0.0
    %5612 = vmatpush1.msra.mxu0 0.0
    %5613 = vmatprep.subr.mxu0 0.0
    %5614 = vmatpush1.msra.mxu0 0.0
    %5615 = vmatprep.subr.mxu0 0.0
    %5616 = vmatpush1.msra.mxu0 0.0
    %5617 = vmatprep.subr.mxu0 0.0
    %5618 = vmatpush1.msra.mxu0 0.0
    %5619 = vmatprep.subr.mxu0 0.0
    %5620 = vmatpush1.msra.mxu0 0.0
    %5621 = vmatprep.subr.mxu0 0.0
    %5622 = vmatpush1.msra.mxu0 0.0
    %5623 = vmatprep.subr.mxu0 0.0
    %5624 = vmatpush1.msra.mxu0 0.0
    %5625 = vmatprep.subr.mxu0 0.0
    %5626 = vmatpush1.msra.mxu0 0.0
    %5627 = vmatprep.subr.mxu0 0.0
    %5628 = vmatpush1.msra.mxu0 0.0
    %5629 = vmatprep.subr.mxu0 0.0
    %5630 = vmatpush1.msra.mxu0 0.0
    %5631 = vmatprep.subr.mxu0 0.0
    %5632 = vmatpush1.msra.mxu0 0.0
    %5633 = vmatprep.subr.mxu0 0.0
    %5634 = vmatpush1.msra.mxu0 0.0
    %5635 = vmatprep.subr.mxu0 0.0
    %5636 = vmatpush1.msra.mxu0 0.0
    %5637 = vmatprep.subr.mxu0 0.0
    %5638 = vmatpush1.msra.mxu0 0.0
    %5639 = vmatprep.mubr.f32.mxu0 0.0
    %5640 = vmatmul.mubr.f32.gmra.mrb[0].mxu0 %v5547
    %v5641 = vpop.f32.mrb[0].mxu0
    %v5642 = vadd.f32 %v5573, %v5641
    %v5643 = vpop.f32.mrb[0].mxu0
    %5644 = vdwg.mxu0
    %v5645 = vmax.f32 %v5642, 0.0
    %s5646 = scalar_lea.vmem %s11, 64
    %v5647 = vld [vmem:[%s5646] sm:$0xff]
    %v5648 = vld [vmem:[%s5646 + $0x8] sm:$0xff]
    %v5649 = vld [vmem:[%s5646 + $0x10] sm:$0xff]
    %v5650 = vld [vmem:[%s5646 + $0x18] sm:$0xff]
    %v5652 = vsel %vm262, %v5645, 0
    %5654 = vmatprep.subr.mxu0 0.0
    %5655 = vmatpush1.msra.mxu0 %v5647
    %5656 = vmatprep.subr.mxu0 0.0
    %5657 = vmatpush1.msra.mxu0 %v5648
    %5658 = vmatprep.subr.mxu0 0.0
    %5659 = vmatpush1.msra.mxu0 %v5649
    %5660 = vmatprep.subr.mxu0 0.0
    %5661 = vmatpush1.msra.mxu0 %v5650
    %5662 = vmatprep.subr.mxu0 0.0
    %5663 = vmatpush1.msra.mxu0 0.0
    %5664 = vmatprep.subr.mxu0 0.0
    %5665 = vmatpush1.msra.mxu0 0.0
    %5666 = vmatprep.subr.mxu0 0.0
    %5667 = vmatpush1.msra.mxu0 0.0
    %5668 = vmatprep.subr.mxu0 0.0
    %5669 = vmatpush1.msra.mxu0 0.0
    %5670 = vmatprep.subr.mxu0 0.0
    %5671 = vmatpush1.msra.mxu0 0.0
    %5672 = vmatprep.subr.mxu0 0.0
    %5673 = vmatpush1.msra.mxu0 0.0
    %5674 = vmatprep.subr.mxu0 0.0
    %5675 = vmatpush1.msra.mxu0 0.0
    %5676 = vmatprep.subr.mxu0 0.0
    %5677 = vmatpush1.msra.mxu0 0.0
    %5678 = vmatprep.subr.mxu0 0.0
    %5679 = vmatpush1.msra.mxu0 0.0
    %5680 = vmatprep.subr.mxu0 0.0
    %5681 = vmatpush1.msra.mxu0 0.0
    %5682 = vmatprep.subr.mxu0 0.0
    %5683 = vmatpush1.msra.mxu0 0.0
    %5684 = vmatprep.subr.mxu0 0.0
    %5685 = vmatpush1.msra.mxu0 0.0
    %5686 = vmatprep.subr.mxu0 0.0
    %5687 = vmatpush1.msra.mxu0 0.0
    %5688 = vmatprep.subr.mxu0 0.0
    %5689 = vmatpush1.msra.mxu0 0.0
    %5690 = vmatprep.subr.mxu0 0.0
    %5691 = vmatpush1.msra.mxu0 0.0
    %5692 = vmatprep.subr.mxu0 0.0
    %5693 = vmatpush1.msra.mxu0 0.0
    %5694 = vmatprep.subr.mxu0 0.0
    %5695 = vmatpush1.msra.mxu0 0.0
    %5696 = vmatprep.subr.mxu0 0.0
    %5697 = vmatpush1.msra.mxu0 0.0
    %5698 = vmatprep.subr.mxu0 0.0
    %5699 = vmatpush1.msra.mxu0 0.0
    %5700 = vmatprep.subr.mxu0 0.0
    %5701 = vmatpush1.msra.mxu0 0.0
    %5702 = vmatprep.subr.mxu0 0.0
    %5703 = vmatpush1.msra.mxu0 0.0
    %5704 = vmatprep.subr.mxu0 0.0
    %5705 = vmatpush1.msra.mxu0 0.0
    %5706 = vmatprep.subr.mxu0 0.0
    %5707 = vmatpush1.msra.mxu0 0.0
    %5708 = vmatprep.subr.mxu0 0.0
    %5709 = vmatpush1.msra.mxu0 0.0
    %5710 = vmatprep.subr.mxu0 0.0
    %5711 = vmatpush1.msra.mxu0 0.0
    %5712 = vmatprep.subr.mxu0 0.0
    %5713 = vmatpush1.msra.mxu0 0.0
    %5714 = vmatprep.subr.mxu0 0.0
    %5715 = vmatpush1.msra.mxu0 0.0
    %5716 = vmatprep.subr.mxu0 0.0
    %5717 = vmatpush1.msra.mxu0 0.0
    %5718 = vmatprep.mubr.f32.mxu0 0.0
    %5719 = vmatmul.mubr.f32.gmra.mrb[0].mxu0 %v5652
    %v5720 = vpop.f32.mrb[0].mxu0
    %v5721 = vadd.f32 0.0, %v5720
    %v5722 = vpop.f32.mrb[0].mxu0
    %5723 = vdwg.mxu0
    %v5724 = vadd.f32 %v3840, %v5721
    %v5725 = vld [vmem:[%s12] sm:$0x1]
    %v5727 = vlaneseq
    %v5728 = vshrl.u32 %v5727, 7
    %v5729 = vsub.s32 0, %v5728
    %v5730 = vrot.slane %v5725, %v5729
    %v5732 = vadd.f32 %v5724, %v5730
    %vm5733 = vcmask 74752
    %v5734 = vsel %vm5733, %v5732, -inf
    %5735 = vmax.xlane.f32.xlu0 %v5734
    %v5736 = vpop.xlane.xlu0 %5735
    %v5737 = vsub.f32 %v5732, %v5736
    %v5738 = vmul.f32 %v5737, 1.442695
    %v5739 = vpow.pop %v5738
    %v5740 = vsel %vm5733, %v5739, 0.0
    %5741 = vadd.xlane.f32.xlu0 %v5740
    %v5742 = vpop.xlane.xlu0 %5741
    %v5743 = vrcp.pop %v5742
    %v5744 = vmul.f32 %v5739, %v5743
    %5745 = vst.msk [vmem:[#allocation2] sm:$0x3] %vm5733, %v5744
    // Predicated region
    $region54: #{triple_etmonas_forward.1} parent=1 // pred_check
      _
    $region55: #{triple_etmonas_forward.1} parent=1 // pred_check_branch
      %5747 = sbr.rel (0) target = $region57
    $region56: #{triple_etmonas_forward.1} parent=1 // pred_region
      %s5749 = ssub.s32 32, 32
      %5750 = vsyncadd [#allocation3], %s5749
      %s5752 = sshll.u32 [#allocation2], 4
      %s5753 = int_to_ptr.vmem [resolvable:$true] %s5752
      %5755 = dma.vmem_to_hbm [thread:$0]  %s5753, 32, %s13, [#allocation3]
    $region57: #{triple_etmonas_forward.1} parent=1 // pred_fallthru
      _
    // Predicated region
    $region58: #{triple_etmonas_forward.1} parent=1 // pred_check
      _
    $region59: #{triple_etmonas_forward.1} parent=1 // pred_check_branch
      %5757 = sbr.rel (0) target = $region61
    $region60: #{triple_etmonas_forward.1} parent=1 // pred_region
      %5758 = dma.done [#allocation3], 32
    $region61: #{triple_etmonas_forward.1} parent=1 // pred_fallthru
      _
    %5759 = vsyncpa [#allocation3], 1

</llo_original>
